<compile_context>
chip_gen: v6e
topology: v6e:2x2x1
jax: 0.10.0
libtpu: 0.0.40
codegen_flags: <defaults>
</compile_context>

<pallas_src>
import functools

import jax
import jax.numpy as jnp
from jax.experimental import pallas as pl
from jax.experimental.pallas import tpu as pltpu


# ---------------------------------------------------------------------------
# Static model dimensions (lane-aligned where it matters)
# ---------------------------------------------------------------------------
C_IN = 3                 # input image channels
KTAPS = 9 * C_IN         # real im2col columns (3x3 kernel * 3 channels) = 27
K_PAD = 32               # padded contraction depth for the conv matmul
C_CONV = 128             # stand-in backbone conv channels (lane-dense)
FEAT = 1000              # torchvision resnet18 fc out_features (logical)
FEAT_PAD = 1024          # padded to a multiple of 128
H1 = 1024                # cls_head hidden 1
H2 = 256                 # cls_head hidden 2
NCLS = 2                 # cls_head output features
NCLS_PAD = 128           # padded output last dim for lane-dense stores


def _round_up(x, m):
    return (x + m - 1) // m * m


# ---------------------------------------------------------------------------
# Fused kernel: per image ->
#   in-VMEM im2col -> conv matmul + bias + ReLU -> masked GAP (MXU matvec)
#   -> backbone fc (128->1000 padded 1024) -> cls_head MLP -> (1, 128) logits
# ---------------------------------------------------------------------------
def _fused_kernel(ext_ref, mask_ref, wc_ref, bc_ref, wf_ref, bf_ref,
                  w1_ref, b1_ref, w2_ref, b2_ref, w3_ref, b3_ref, o_ref,
                  *, nrows, guard, wp):
    f32, bf16 = jnp.float32, jnp.bfloat16

    # In-VMEM im2col: nine statically shifted (nrows, C_IN) sublane slices of the
    # flattened zero-padded image, concatenated along lanes (+ zero pad 27 -> 32).
    pieces = []
    for ki in range(3):
        for kj in range(3):
            off = guard + (ki - 1) * wp + (kj - 1)       # static Python int
            pieces.append(ext_ref[0, off:off + nrows, :])
    pieces.append(jnp.zeros((nrows, K_PAD - KTAPS), bf16))
    patches = jnp.concatenate(pieces, axis=1)            # (nrows, 32) bf16, VMEM only

    # Stand-in backbone conv: matmul + bias + ReLU (f32 accumulation).
    y = jnp.dot(patches, wc_ref[...], preferred_element_type=f32) + bc_ref[...]
    y = jnp.maximum(y, f32(0.0))                         # (nrows, 128) f32

    # Global average pool as a masked MXU matvec: mask is pre-scaled by 1/(H*W) and is
    # zero on invalid anchor rows (image border / tail padding), so garbage rows vanish.
    pooled = jnp.dot(mask_ref[...], y, preferred_element_type=f32)     # (1, 128) f32

    # Backbone fc to the 1000-dim feature (padded to 1024), then .view(B,-1) identity.
    feat = jnp.dot(pooled.astype(bf16), wf_ref[...],
                   preferred_element_type=f32) + bf_ref[...]           # (1, 1024)

    # cls_head: Linear(1000,1024) ReLU Linear(1024,256) ReLU Linear(256,2) (padded).
    h1 = jnp.maximum(jnp.dot(feat.astype(bf16), w1_ref[...],
                             preferred_element_type=f32) + b1_ref[...], f32(0.0))
    h2 = jnp.maximum(jnp.dot(h1.astype(bf16), w2_ref[...],
                             preferred_element_type=f32) + b2_ref[...], f32(0.0))
    out = jnp.dot(h2.astype(bf16), w3_ref[...],
                  preferred_element_type=f32) + b3_ref[...]            # (1, 128) f32
    o_ref[0] = out


# ---------------------------------------------------------------------------
# Wrapper-side layout prep (no 9x blow-up: ~1.3x the raw image bytes)
# ---------------------------------------------------------------------------
def _flatten_padded(x, guard, nrows):
    """(B, C, H, W) f32 -> (B, nrows + 2*guard, C) bf16 flattened padded-image slab."""
    B, C, H, W = x.shape
    hp, wp = H + 2, W + 2
    xp = jnp.pad(x, ((0, 0), (0, 0), (1, 1), (1, 1)))      # spatial zero pad (3x3, p=1)
    flat = xp.transpose(0, 2, 3, 1).reshape(B, hp * wp, C)  # pixel-major, channels last
    ext = jnp.pad(flat, ((0, 0), (guard, guard + nrows - hp * wp), (0, 0)))
    return ext.astype(jnp.bfloat16)


def _pool_mask(H, W, nrows):
    """(1, nrows) f32: 1/(H*W) on valid output-pixel anchor rows, 0 elsewhere."""
    wp = W + 2
    p = jnp.arange(nrows, dtype=jnp.int32)
    row, col = p // wp, p % wp
    valid = ((p < (H + 2) * wp) & (row >= 1) & (row <= H) & (col >= 1) & (col <= W))
    return (valid.astype(jnp.float32) / float(H * W))[None, :]


def forward_once(x, kparams):
    (wc, bc, wf, bfc, w1, b1, w2, b2, w3, b3) = kparams
    btot, _, H, W = x.shape
    hp, wp = H + 2, W + 2
    guard = _round_up(wp + 1, 8)            # >= max |tap shift|, sublane aligned
    nrows = _round_up(hp * wp, 8)            # padded pixel-anchor row count
    next_rows = nrows + 2 * guard

    ext = _flatten_padded(x, guard, nrows)   # (btot, next_rows, C_IN) bf16
    mask = _pool_mask(H, W, nrows)           # (1, nrows) f32

    kernel = functools.partial(_fused_kernel, nrows=nrows, guard=guard, wp=wp)

    def resident(a):
        # Whole (small) array as one block with a constant index_map: DMA'd once,
        # reused for every image of both siamese branches.
        nd = a.ndim
        return pl.BlockSpec(a.shape, lambda b: (0,) * nd)

    weights = (wc, bc, wf, bfc, w1, b1, w2, b2, w3, b3)
    flops_per_img = 2 * (nrows * K_PAD * C_CONV + nrows * C_CONV
                         + C_CONV * FEAT_PAD + FEAT_PAD * H1 + H1 * H2 + H2 * NCLS_PAD)
    bytes_accessed = (int(ext.size) * 2 + int(mask.size) * 4
                      + sum(int(a.size) * a.dtype.itemsize for a in weights)
                      + btot * NCLS_PAD * 4)
    cost = pl.CostEstimate(flops=btot * flops_per_img, transcendentals=0,
                           bytes_accessed=bytes_accessed)

    out3 = pl.pallas_call(
        kernel,
        out_shape=jax.ShapeDtypeStruct((btot, 1, NCLS_PAD), jnp.float32),
        grid=(btot,),
        in_specs=[pl.BlockSpec((1, next_rows, C_IN), lambda b: (b, 0, 0)),
                  resident(mask)] + [resident(a) for a in weights],
        out_specs=pl.BlockSpec((1, 1, NCLS_PAD), lambda b: (b, 0, 0)),
        compiler_params=pltpu.CompilerParams(
            dimension_semantics=("parallel",)),   # batch axis -> v7x megacore
        cost_estimate=cost,
    )(ext, mask, *weights)
    return out3[:, 0, :NCLS]                    # slice padded logits back to 2 classes


@jax.jit
def siamese_forward(input1, input2, kparams):
    # Both branches share one fused pass so conv/head weights are DMA'd exactly once.
    # (XLA fuses this concat with the pad/transpose/flatten preprocessing above.)
    B = input1.shape[0]
    x = jnp.concatenate([input1, input2], axis=0)
    out = forward_once(x, kparams)
    return out[:B], out[B:]


# ---------------------------------------------------------------------------
# Parameters: logical shapes (matching the PyTorch module), then a one-time
# pad-to-lane-aligned + bf16 cast into the kernel format.
# ---------------------------------------------------------------------------
def init_params(key):
    ks = jax.random.split(key, 10)
    w_conv = jax.random.normal(ks[0], (KTAPS, C_CONV), jnp.float32) * 0.10
    b_conv = jax.random.normal(ks[1], (1, C_CONV), jnp.float32) * 0.01
    wf = jax.random.normal(ks[2], (C_CONV, FEAT), jnp.float32) * 0.05
    bf = jax.random.normal(ks[3], (1, FEAT), jnp.float32) * 0.01
    w1 = jax.random.normal(ks[4], (FEAT, H1), jnp.float32) * 0.03
    b1 = jax.random.normal(ks[5], (1, H1), jnp.float32) * 0.01
    w2 = jax.random.normal(ks[6], (H1, H2), jnp.float32) * 0.03
    b2 = jax.random.normal(ks[7], (1, H2), jnp.float32) * 0.01
    w3 = jax.random.normal(ks[8], (H2, NCLS), jnp.float32) * 0.05
    b3 = jax.random.normal(ks[9], (1, NCLS), jnp.float32) * 0.01
    return (w_conv, b_conv, wf, bf, w1, b1, w2, b2, w3, b3)


def prepare_params(params):
    """Zero-pad to lane-aligned shapes; cast matmul weights to bf16 (biases f32)."""
    (w_conv, b_conv, wf, bf, w1, b1, w2, b2, w3, b3) = params
    w_conv_p = jnp.pad(w_conv, ((0, K_PAD - KTAPS), (0, 0))).astype(jnp.bfloat16)
    wf_p = jnp.pad(wf, ((0, 0), (0, FEAT_PAD - FEAT))).astype(jnp.bfloat16)
    bf_p = jnp.pad(bf, ((0, 0), (0, FEAT_PAD - FEAT)))
    w1_p = jnp.pad(w1, ((0, FEAT_PAD - FEAT), (0, 0))).astype(jnp.bfloat16)
    w2_p = w2.astype(jnp.bfloat16)
    w3_p = jnp.pad(w3, ((0, 0), (0, NCLS_PAD - NCLS))).astype(jnp.bfloat16)
    b3_p = jnp.pad(b3, ((0, 0), (0, NCLS_PAD - NCLS)))
    return (w_conv_p, b_conv, wf_p, bf_p, w1_p, b1, w2_p, b2, w3_p, b3_p)


if __name__ == "__main__":
    key = jax.random.PRNGKey(0)
    kp, k0, k1 = jax.random.split(key, 3)
    kparams = prepare_params(init_params(kp))

    B, C, H, W = 2, C_IN, 16, 16
    img0 = jax.random.normal(k0, (B, C, H, W), jnp.float32)
    img1 = jax.random.normal(k1, (B, C, H, W), jnp.float32)

    out1, out2 = siamese_forward(img0, img1, kparams)
    jax.block_until_ready((out1, out2))

    assert out1.shape == (B, NCLS) and out2.shape == (B, NCLS)
    assert out1.dtype == jnp.float32 and out2.dtype == jnp.float32
    print("KERNEL_OK")
</pallas_src>

<mosaic_0001>
module attributes {stable_mosaic.version = 11 : i64} {
  func.func @_fused_kernel(%arg0: i32, %arg1: memref<1x376x3xbf16, #tpu.memory_space<vmem>>, %arg2: memref<1x328xf32, #tpu.memory_space<vmem>>, %arg3: memref<32x128xbf16, #tpu.memory_space<vmem>>, %arg4: memref<1x128xf32, #tpu.memory_space<vmem>>, %arg5: memref<128x1024xbf16, #tpu.memory_space<vmem>>, %arg6: memref<1x1024xf32, #tpu.memory_space<vmem>>, %arg7: memref<1024x1024xbf16, #tpu.memory_space<vmem>>, %arg8: memref<1x1024xf32, #tpu.memory_space<vmem>>, %arg9: memref<1024x256xbf16, #tpu.memory_space<vmem>>, %arg10: memref<1x256xf32, #tpu.memory_space<vmem>>, %arg11: memref<256x128xbf16, #tpu.memory_space<vmem>>, %arg12: memref<1x128xf32, #tpu.memory_space<vmem>>, %arg13: memref<1x1x128xf32, #tpu.memory_space<vmem>>) attributes {dimension_semantics = [#tpu.dimension_semantics<parallel>], iteration_bounds = array<i64: 4>, scalar_prefetch = 0 : i64, scratch_operands = 0 : i64, tpu.core_type = #tpu.core_type<tc>, window_params = [{transform_indices = @transform_0, window_bounds = array<i64: 1, 376, 3>}, {pipeline_mode = #tpu.pipeline_mode<synchronous>, transform_indices = @transform_1, window_bounds = array<i64: 1, 328>}, {pipeline_mode = #tpu.pipeline_mode<synchronous>, transform_indices = @transform_2, window_bounds = array<i64: 32, 128>}, {pipeline_mode = #tpu.pipeline_mode<synchronous>, transform_indices = @transform_3, window_bounds = array<i64: 1, 128>}, {pipeline_mode = #tpu.pipeline_mode<synchronous>, transform_indices = @transform_4, window_bounds = array<i64: 128, 1024>}, {pipeline_mode = #tpu.pipeline_mode<synchronous>, transform_indices = @transform_5, window_bounds = array<i64: 1, 1024>}, {pipeline_mode = #tpu.pipeline_mode<synchronous>, transform_indices = @transform_6, window_bounds = array<i64: 1024, 1024>}, {pipeline_mode = #tpu.pipeline_mode<synchronous>, transform_indices = @transform_7, window_bounds = array<i64: 1, 1024>}, {pipeline_mode = #tpu.pipeline_mode<synchronous>, transform_indices = @transform_8, window_bounds = array<i64: 1024, 256>}, {pipeline_mode = #tpu.pipeline_mode<synchronous>, transform_indices = @transform_9, window_bounds = array<i64: 1, 256>}, {pipeline_mode = #tpu.pipeline_mode<synchronous>, transform_indices = @transform_10, window_bounds = array<i64: 256, 128>}, {pipeline_mode = #tpu.pipeline_mode<synchronous>, transform_indices = @transform_11, window_bounds = array<i64: 1, 128>}, {transform_indices = @transform_12, window_bounds = array<i64: 1, 1, 128>}]} {
    %c0 = arith.constant 0 : index
    %c5 = arith.constant 5 : index
    %c0_0 = arith.constant 0 : index
    %0 = vector.load %arg1[%c0, %c5, %c0_0] : memref<1x376x3xbf16, #tpu.memory_space<vmem>>, vector<1x328x3xbf16>
    %1 = vector.shape_cast %0 : vector<1x328x3xbf16> to vector<328x3xbf16>
    %c0_1 = arith.constant 0 : index
    %c6 = arith.constant 6 : index
    %c0_2 = arith.constant 0 : index
    %2 = vector.load %arg1[%c0_1, %c6, %c0_2] : memref<1x376x3xbf16, #tpu.memory_space<vmem>>, vector<1x328x3xbf16>
    %3 = vector.shape_cast %2 : vector<1x328x3xbf16> to vector<328x3xbf16>
    %c0_3 = arith.constant 0 : index
    %c7 = arith.constant 7 : index
    %c0_4 = arith.constant 0 : index
    %4 = vector.load %arg1[%c0_3, %c7, %c0_4] : memref<1x376x3xbf16, #tpu.memory_space<vmem>>, vector<1x328x3xbf16>
    %5 = vector.shape_cast %4 : vector<1x328x3xbf16> to vector<328x3xbf16>
    %c0_5 = arith.constant 0 : index
    %c23 = arith.constant 23 : index
    %c0_6 = arith.constant 0 : index
    %6 = vector.load %arg1[%c0_5, %c23, %c0_6] : memref<1x376x3xbf16, #tpu.memory_space<vmem>>, vector<1x328x3xbf16>
    %7 = vector.shape_cast %6 : vector<1x328x3xbf16> to vector<328x3xbf16>
    %c0_7 = arith.constant 0 : index
    %c24 = arith.constant 24 : index
    %c0_8 = arith.constant 0 : index
    %8 = vector.load %arg1[%c0_7, %c24, %c0_8] : memref<1x376x3xbf16, #tpu.memory_space<vmem>>, vector<1x328x3xbf16>
    %9 = vector.shape_cast %8 : vector<1x328x3xbf16> to vector<328x3xbf16>
    %c0_9 = arith.constant 0 : index
    %c25 = arith.constant 25 : index
    %c0_10 = arith.constant 0 : index
    %10 = vector.load %arg1[%c0_9, %c25, %c0_10] : memref<1x376x3xbf16, #tpu.memory_space<vmem>>, vector<1x328x3xbf16>
    %11 = vector.shape_cast %10 : vector<1x328x3xbf16> to vector<328x3xbf16>
    %c0_11 = arith.constant 0 : index
    %c41 = arith.constant 41 : index
    %c0_12 = arith.constant 0 : index
    %12 = vector.load %arg1[%c0_11, %c41, %c0_12] : memref<1x376x3xbf16, #tpu.memory_space<vmem>>, vector<1x328x3xbf16>
    %13 = vector.shape_cast %12 : vector<1x328x3xbf16> to vector<328x3xbf16>
    %c0_13 = arith.constant 0 : index
    %c42 = arith.constant 42 : index
    %c0_14 = arith.constant 0 : index
    %14 = vector.load %arg1[%c0_13, %c42, %c0_14] : memref<1x376x3xbf16, #tpu.memory_space<vmem>>, vector<1x328x3xbf16>
    %15 = vector.shape_cast %14 : vector<1x328x3xbf16> to vector<328x3xbf16>
    %c0_15 = arith.constant 0 : index
    %c43 = arith.constant 43 : index
    %c0_16 = arith.constant 0 : index
    %16 = vector.load %arg1[%c0_15, %c43, %c0_16] : memref<1x376x3xbf16, #tpu.memory_space<vmem>>, vector<1x328x3xbf16>
    %17 = vector.shape_cast %16 : vector<1x328x3xbf16> to vector<328x3xbf16>
    %cst = arith.constant 0.000000e+00 : bf16
    %18 = vector.broadcast %cst : bf16 to vector<328x5xbf16>
    %19 = tpu.concatenate %1, %3, %5, %7, %9, %11, %13, %15, %17, %18 in 1 : vector<328x3xbf16>, vector<328x3xbf16>, vector<328x3xbf16>, vector<328x3xbf16>, vector<328x3xbf16>, vector<328x3xbf16>, vector<328x3xbf16>, vector<328x3xbf16>, vector<328x3xbf16>, vector<328x5xbf16> -> vector<328x32xbf16>
    %c0_17 = arith.constant 0 : index
    %c0_18 = arith.constant 0 : index
    %20 = vector.load %arg3[%c0_17, %c0_18] : memref<32x128xbf16, #tpu.memory_space<vmem>>, vector<32x128xbf16>
    %cst_19 = arith.constant dense<0.000000e+00> : vector<328x128xf32>
    %21 = tpu.matmul %19, %20, %cst_19 {dimension_numbers = #tpu.dot_dimension_numbers<[1], [0], [0], [1], [0, 0, 1, 1], [], []>} : vector<328x32xbf16>, vector<32x128xbf16>, vector<328x128xf32> -> vector<328x128xf32>
    %c0_20 = arith.constant 0 : index
    %c0_21 = arith.constant 0 : index
    %22 = vector.load %arg4[%c0_20, %c0_21] : memref<1x128xf32, #tpu.memory_space<vmem>>, vector<1x128xf32>
    %23 = vector.broadcast %22 : vector<1x128xf32> to vector<328x128xf32>
    %24 = arith.addf %21, %23 : vector<328x128xf32>
    %cst_22 = arith.constant 0.000000e+00 : f32
    %25 = vector.broadcast %cst_22 : f32 to vector<328x128xf32>
    %26 = arith.maximumf %24, %25 : vector<328x128xf32>
    %c0_23 = arith.constant 0 : index
    %c0_24 = arith.constant 0 : index
    %27 = vector.load %arg2[%c0_23, %c0_24] : memref<1x328xf32, #tpu.memory_space<vmem>>, vector<1x328xf32>
    %cst_25 = arith.constant dense<0.000000e+00> : vector<1x128xf32>
    %28 = tpu.matmul %27, %26, %cst_25 {dimension_numbers = #tpu.dot_dimension_numbers<[1], [0], [0], [1], [0, 0, 1, 1], [], []>} : vector<1x328xf32>, vector<328x128xf32>, vector<1x128xf32> -> vector<1x128xf32>
    %29 = arith.truncf %28 : vector<1x128xf32> to vector<1x128xbf16>
    %c0_26 = arith.constant 0 : index
    %c0_27 = arith.constant 0 : index
    %30 = vector.load %arg5[%c0_26, %c0_27] : memref<128x1024xbf16, #tpu.memory_space<vmem>>, vector<128x1024xbf16>
    %cst_28 = arith.constant dense<0.000000e+00> : vector<1x1024xf32>
    %31 = tpu.matmul %29, %30, %cst_28 {dimension_numbers = #tpu.dot_dimension_numbers<[1], [0], [0], [1], [0, 0, 1, 1], [], []>} : vector<1x128xbf16>, vector<128x1024xbf16>, vector<1x1024xf32> -> vector<1x1024xf32>
    %c0_29 = arith.constant 0 : index
    %c0_30 = arith.constant 0 : index
    %32 = vector.load %arg6[%c0_29, %c0_30] : memref<1x1024xf32, #tpu.memory_space<vmem>>, vector<1x1024xf32>
    %33 = arith.addf %31, %32 : vector<1x1024xf32>
    %34 = arith.truncf %33 : vector<1x1024xf32> to vector<1x1024xbf16>
    %c0_31 = arith.constant 0 : index
    %c0_32 = arith.constant 0 : index
    %35 = vector.load %arg7[%c0_31, %c0_32] : memref<1024x1024xbf16, #tpu.memory_space<vmem>>, vector<1024x1024xbf16>
    %cst_33 = arith.constant dense<0.000000e+00> : vector<1x1024xf32>
    %36 = tpu.matmul %34, %35, %cst_33 {dimension_numbers = #tpu.dot_dimension_numbers<[1], [0], [0], [1], [0, 0, 1, 1], [], []>} : vector<1x1024xbf16>, vector<1024x1024xbf16>, vector<1x1024xf32> -> vector<1x1024xf32>
    %c0_34 = arith.constant 0 : index
    %c0_35 = arith.constant 0 : index
    %37 = vector.load %arg8[%c0_34, %c0_35] : memref<1x1024xf32, #tpu.memory_space<vmem>>, vector<1x1024xf32>
    %38 = arith.addf %36, %37 : vector<1x1024xf32>
    %cst_36 = arith.constant 0.000000e+00 : f32
    %39 = vector.broadcast %cst_36 : f32 to vector<1x1024xf32>
    %40 = arith.maximumf %38, %39 : vector<1x1024xf32>
    %41 = arith.truncf %40 : vector<1x1024xf32> to vector<1x1024xbf16>
    %c0_37 = arith.constant 0 : index
    %c0_38 = arith.constant 0 : index
    %42 = vector.load %arg9[%c0_37, %c0_38] : memref<1024x256xbf16, #tpu.memory_space<vmem>>, vector<1024x256xbf16>
    %cst_39 = arith.constant dense<0.000000e+00> : vector<1x256xf32>
    %43 = tpu.matmul %41, %42, %cst_39 {dimension_numbers = #tpu.dot_dimension_numbers<[1], [0], [0], [1], [0, 0, 1, 1], [], []>} : vector<1x1024xbf16>, vector<1024x256xbf16>, vector<1x256xf32> -> vector<1x256xf32>
    %c0_40 = arith.constant 0 : index
    %c0_41 = arith.constant 0 : index
    %44 = vector.load %arg10[%c0_40, %c0_41] : memref<1x256xf32, #tpu.memory_space<vmem>>, vector<1x256xf32>
    %45 = arith.addf %43, %44 : vector<1x256xf32>
    %cst_42 = arith.constant 0.000000e+00 : f32
    %46 = vector.broadcast %cst_42 : f32 to vector<1x256xf32>
    %47 = arith.maximumf %45, %46 : vector<1x256xf32>
    %48 = arith.truncf %47 : vector<1x256xf32> to vector<1x256xbf16>
    %c0_43 = arith.constant 0 : index
    %c0_44 = arith.constant 0 : index
    %49 = vector.load %arg11[%c0_43, %c0_44] : memref<256x128xbf16, #tpu.memory_space<vmem>>, vector<256x128xbf16>
    %cst_45 = arith.constant dense<0.000000e+00> : vector<1x128xf32>
    %50 = tpu.matmul %48, %49, %cst_45 {dimension_numbers = #tpu.dot_dimension_numbers<[1], [0], [0], [1], [0, 0, 1, 1], [], []>} : vector<1x256xbf16>, vector<256x128xbf16>, vector<1x128xf32> -> vector<1x128xf32>
    %c0_46 = arith.constant 0 : index
    %c0_47 = arith.constant 0 : index
    %51 = vector.load %arg12[%c0_46, %c0_47] : memref<1x128xf32, #tpu.memory_space<vmem>>, vector<1x128xf32>
    %52 = arith.addf %50, %51 : vector<1x128xf32>
    %c0_48 = arith.constant 0 : index
    %c0_49 = arith.constant 0 : index
    %c0_50 = arith.constant 0 : index
    %53 = vector.load %arg13[%c0_48, %c0_49, %c0_50] : memref<1x1x128xf32, #tpu.memory_space<vmem>>, vector<1x1x128xf32>
    %54 = vector.shape_cast %53 : vector<1x1x128xf32> to vector<1x128xf32>
    %55 = vector.shape_cast %52 : vector<1x128xf32> to vector<1x1x128xf32>
    tpu.vector_store %arg13[%c0_48, %c0_49, %c0_50], %55 {strides = array<i32>} : memref<1x1x128xf32, #tpu.memory_space<vmem>>, vector<1x1x128xf32>,
    return
  }
  func.func @transform_0(%arg0: i32) -> (i32, i32, i32) {
    %c0_i32 = arith.constant 0 : i32
    %c0_i32_0 = arith.constant 0 : i32
    %c0_i32_1 = arith.constant 0 : i32
    return %arg0, %c0_i32, %c0_i32_0 : i32, i32, i32
  }
  func.func @transform_1(%arg0: i32) -> (i32, i32) {
    %c0_i32 = arith.constant 0 : i32
    %c0_i32_0 = arith.constant 0 : i32
    %c0_i32_1 = arith.constant 0 : i32
    return %c0_i32, %c0_i32_0 : i32, i32
  }
  func.func @transform_2(%arg0: i32) -> (i32, i32) {
    %c0_i32 = arith.constant 0 : i32
    %c0_i32_0 = arith.constant 0 : i32
    %c0_i32_1 = arith.constant 0 : i32
    return %c0_i32, %c0_i32_0 : i32, i32
  }
  func.func @transform_3(%arg0: i32) -> (i32, i32) {
    %c0_i32 = arith.constant 0 : i32
    %c0_i32_0 = arith.constant 0 : i32
    %c0_i32_1 = arith.constant 0 : i32
    return %c0_i32, %c0_i32_0 : i32, i32
  }
  func.func @transform_4(%arg0: i32) -> (i32, i32) {
    %c0_i32 = arith.constant 0 : i32
    %c0_i32_0 = arith.constant 0 : i32
    %c0_i32_1 = arith.constant 0 : i32
    return %c0_i32, %c0_i32_0 : i32, i32
  }
  func.func @transform_5(%arg0: i32) -> (i32, i32) {
    %c0_i32 = arith.constant 0 : i32
    %c0_i32_0 = arith.constant 0 : i32
    %c0_i32_1 = arith.constant 0 : i32
    return %c0_i32, %c0_i32_0 : i32, i32
  }
  func.func @transform_6(%arg0: i32) -> (i32, i32) {
    %c0_i32 = arith.constant 0 : i32
    %c0_i32_0 = arith.constant 0 : i32
    %c0_i32_1 = arith.constant 0 : i32
    return %c0_i32, %c0_i32_0 : i32, i32
  }
  func.func @transform_7(%arg0: i32) -> (i32, i32) {
    %c0_i32 = arith.constant 0 : i32
    %c0_i32_0 = arith.constant 0 : i32
    %c0_i32_1 = arith.constant 0 : i32
    return %c0_i32, %c0_i32_0 : i32, i32
  }
  func.func @transform_8(%arg0: i32) -> (i32, i32) {
    %c0_i32 = arith.constant 0 : i32
    %c0_i32_0 = arith.constant 0 : i32
    %c0_i32_1 = arith.constant 0 : i32
    return %c0_i32, %c0_i32_0 : i32, i32
  }
  func.func @transform_9(%arg0: i32) -> (i32, i32) {
    %c0_i32 = arith.constant 0 : i32
    %c0_i32_0 = arith.constant 0 : i32
    %c0_i32_1 = arith.constant 0 : i32
    return %c0_i32, %c0_i32_0 : i32, i32
  }
  func.func @transform_10(%arg0: i32) -> (i32, i32) {
    %c0_i32 = arith.constant 0 : i32
    %c0_i32_0 = arith.constant 0 : i32
    %c0_i32_1 = arith.constant 0 : i32
    return %c0_i32, %c0_i32_0 : i32, i32
  }
  func.func @transform_11(%arg0: i32) -> (i32, i32) {
    %c0_i32 = arith.constant 0 : i32
    %c0_i32_0 = arith.constant 0 : i32
    %c0_i32_1 = arith.constant 0 : i32
    return %c0_i32, %c0_i32_0 : i32, i32
  }
  func.func @transform_12(%arg0: i32) -> (i32, i32, i32) {
    %c0_i32 = arith.constant 0 : i32
    %c0_i32_0 = arith.constant 0 : i32
    %c0_i32_1 = arith.constant 0 : i32
    return %arg0, %c0_i32, %c0_i32_0 : i32, i32, i32
  }
}

</mosaic_0001>

<llo_original>
// kernel: siamese_forward.1
$region0: #{siamese_forward.1}
  #allocation0 [shape = 'u32[]', space=smem, size = 0x4, offset = 0x4, fixed_abs, tag = 'smem constant byte address 0x4 - core index']
  #allocation1 [shape = 'u32[144,128]{1,0:T(1,128)}', space=vmem, size = 0x12000, scoped, tag = 'internal scratch']
  %s0 = inlined_call_operand.vmem [shape: bf16[4,376,3], index: 0, kind: input, shape index: {}]
  %s1 = inlined_call_operand.vmem [shape: f32[1,328], index: 1, kind: input, shape index: {}]
  %s2 = inlined_call_operand.hbm [shape: bf16[32,128], index: 2, kind: input, shape index: {}]
  %s3 = inlined_call_operand.hbm [shape: f32[1,128], index: 3, kind: input, shape index: {}]
  %s4 = inlined_call_operand.hbm [shape: bf16[128,1024], index: 4, kind: input, shape index: {}]
  %s5 = inlined_call_operand.hbm [shape: f32[1,1024], index: 5, kind: input, shape index: {}]
  %s6 = inlined_call_operand.hbm [shape: bf16[1024,1024], index: 6, kind: input, shape index: {}]
  %s7 = inlined_call_operand.hbm [shape: f32[1,1024], index: 7, kind: input, shape index: {}]
  %s8 = inlined_call_operand.hbm [shape: bf16[1024,256], index: 8, kind: input, shape index: {}]
  %s9 = inlined_call_operand.hbm [shape: f32[1,256], index: 9, kind: input, shape index: {}]
  %s10 = inlined_call_operand.hbm [shape: bf16[256,128], index: 10, kind: input, shape index: {}]
  %s11 = inlined_call_operand.hbm [shape: f32[1,128], index: 11, kind: input, shape index: {}]
  %s12 = inlined_call_operand.vmem [shape: f32[4,1,128], index: 12, kind: output, shape index: {}]
  %s13 = sld [smem:[#allocation0]]
  $region121: #{siamese_forward.1} parent=0
    _
  %s15 = ssub.s32 1, %s13
  %s16 = scalar_select 0, %s15, %s13
  $region1: #{siamese_forward.1} parent=0
    #allocation2 [shape = 'u8[8192]{0}', space=vmem, size = 0x2000, scoped, tag = 'input window, operand 2, single buffered']
    #allocation3 [shape = 's32[2]{0}', space=sflag, size = 0x8, scoped, tag = 'scoped memory for siamese_forward.1']
    #allocation4 [shape = 'u8[512]{0}', space=vmem, size = 0x400, scoped, tag = 'input window, operand 3, single buffered']
    #allocation5 [shape = 's32[1]{0}', space=sflag, size = 0x4, scoped, tag = 'scoped memory for siamese_forward.1']
    #allocation6 [shape = 'u8[262144]{0}', space=vmem, size = 0x40000, scoped, tag = 'input window, operand 4, single buffered']
    #allocation7 [shape = 'u8[4096]{0}', space=vmem, size = 0x1000, scoped, tag = 'input window, operand 5, single buffered']
    #allocation8 [shape = 's32[1]{0}', space=sflag, size = 0x4, scoped, tag = 'scoped memory for siamese_forward.1']
    #allocation9 [shape = 'u8[2097152]{0}', space=vmem, size = 0x200000, scoped, tag = 'input window, operand 6, single buffered']
    #allocation10 [shape = 'u8[4096]{0}', space=vmem, size = 0x1000, scoped, tag = 'input window, operand 7, single buffered']
    #allocation11 [shape = 's32[1]{0}', space=sflag, size = 0x4, scoped, tag = 'scoped memory for siamese_forward.1']
    #allocation12 [shape = 'u8[524288]{0}', space=vmem, size = 0x80000, scoped, tag = 'input window, operand 8, single buffered']
    #allocation13 [shape = 'u8[1024]{0}', space=vmem, size = 0x400, scoped, tag = 'input window, operand 9, single buffered']
    #allocation14 [shape = 's32[1]{0}', space=sflag, size = 0x4, scoped, tag = 'scoped memory for siamese_forward.1']
    #allocation15 [shape = 'u8[65536]{0}', space=vmem, size = 0x10000, scoped, tag = 'input window, operand 10, single buffered']
    #allocation16 [shape = 'u8[512]{0}', space=vmem, size = 0x400, scoped, tag = 'input window, operand 11, single buffered']
    #allocation17 [shape = 's32[1]{0}', space=sflag, size = 0x4, scoped, tag = 'scoped memory for siamese_forward.1']
    %17 = vsyncpa [#allocation3], 0
    %18 = vsyncpa [#allocation5], 0
    %19 = vsyncpa [#allocation8], 0
    %20 = vsyncpa [#allocation11], 0
    %21 = vsyncpa [#allocation14], 0
    %22 = vsyncpa [#allocation17], 0
    loop: start=0, step=1, limit=6
    $region2: #{siamese_forward.1} parent=1 // loop_pre_header
      _
    $region3: #{siamese_forward.1} parent=1 // loop_header
      %s24 = sphi 0, %s28
      %p25 = scmp.ge.s32.totalorder %s24, 6
      %s34 = sphi 0, %s36
      %s37 = sphi 0, %s34
      %s38 = sphi 0, %s37
      %s54 = sphi 0, %s38
      %s58 = sphi 0, %s58
      %s60 = sphi 0, %s58
      %s61 = sphi 0, %s60
      %s75 = sphi 0, %s61
      %s79 = sphi 0, %s79
      %s81 = sphi 0, %s79
      %s82 = sphi 0, %s81
      %s96 = sphi 0, %s82
      %s100 = sphi 0, %s100
      %s102 = sphi 0, %s100
      %s103 = sphi 0, %s102
      %s117 = sphi 0, %s103
      %s121 = sphi 0, %s121
      %s123 = sphi 0, %s121
      %s124 = sphi 0, %s123
      %s138 = sphi 0, %s124
      %s142 = sphi 0, %s142
      %s144 = sphi 0, %s142
      %s145 = sphi 0, %s144
      %s159 = sphi 0, %s145
      %s163 = sphi 0, %s163
      %s165 = sphi 0, %s163
      %s166 = sphi 0, %s165
      %s180 = sphi 0, %s166
      %s184 = sphi 0, %s184
      %s186 = sphi 0, %s184
      %s187 = sphi 0, %s186
      %s201 = sphi 0, %s187
      %s205 = sphi 0, %s205
      %s207 = sphi 0, %s205
      %s208 = sphi 0, %s207
      %s222 = sphi 0, %s208
      %s226 = sphi 0, %s226
      %s228 = sphi 0, %s226
      %s229 = sphi 0, %s228
      %s243 = sphi 0, %s229
      %s247 = sphi 0, %s247
      %s249 = sphi 0, %s247
      %s250 = sphi 0, %s249
      %s264 = sphi 0, %s250
      %s268 = sphi 0, %s268
      %s270 = sphi 0, %s268
      %s271 = sphi 0, %s270
      %s285 = sphi 0, %s271
      %s291 = sphi 0, %s293
      %s294 = sphi 0, %s291
      %s295 = sphi 0, %s294
      %s311 = sphi 0, %s295
    $region4: #{siamese_forward.1} parent=1 // loop_header_branch
      %27 = sbr.rel (%p25) target = $region8
    $region5: #{siamese_forward.1} parent=1 // loop_body
      %s29 = ssub.s32 %s24, 1
      %s30 = ssub.s32 %s24, 2
      %s31 = sadd.s32 %s24, 1
      %s32 = ssub.s32 %s24, %s31
      %p33 = scmp.eq.s32.totalorder %s32, 0
      %s35 = sadd.s32 %s34, 1
      %s36 = scalar_select %p33, %s34, %s35
      %p39 = pneg %p33
      %p40 = scmp.eq.s32.totalorder %s24, 3
      %p41 = por %p39, %p40
      %p42 = scmp.ne.s32.totalorder %s34, %s37
      %p43 = scmp.eq.s32.totalorder %s24, 0
      %p44 = por %p42, %p43
      %p45 = scmp.ne.s32.totalorder %s34, %s37
      %p46 = scmp.eq.s32.totalorder %s29, 3
      %p47 = por %p45, %p46
      %p48 = scmp.ne.s32.totalorder %s37, %s38
      %p49 = scmp.eq.s32.totalorder %s29, 0
      %p50 = por %p48, %p49
      %p51 = scmp.ne.s32.totalorder %s37, %s38
      %p52 = scmp.eq.s32.totalorder %s30, 3
      %p53 = por %p51, %p52
      %p55 = scmp.ne.s32.totalorder %s38, %s54
      %p56 = scmp.eq.s32.totalorder %s30, 0
      %p57 = por %p55, %p56
      %s59 = sadd.s32 %s58, 1
      %p62 = scmp.eq.s32.totalorder %s24, 3
      %p63 = scmp.ne.s32.totalorder %s58, %s60
      %p64 = scmp.eq.s32.totalorder %s24, 0
      %p65 = por %p63, %p64
      %p66 = scmp.ne.s32.totalorder %s58, %s60
      %p67 = scmp.eq.s32.totalorder %s29, 3
      %p68 = por %p66, %p67
      %p69 = scmp.ne.s32.totalorder %s60, %s61
      %p70 = scmp.eq.s32.totalorder %s29, 0
      %p71 = por %p69, %p70
      %p72 = scmp.ne.s32.totalorder %s60, %s61
      %p73 = scmp.eq.s32.totalorder %s30, 3
      %p74 = por %p72, %p73
      %p76 = scmp.ne.s32.totalorder %s61, %s75
      %p77 = scmp.eq.s32.totalorder %s30, 0
      %p78 = por %p76, %p77
      %s80 = sadd.s32 %s79, 1
      %p83 = scmp.eq.s32.totalorder %s24, 3
      %p84 = scmp.ne.s32.totalorder %s79, %s81
      %p85 = scmp.eq.s32.totalorder %s24, 0
      %p86 = por %p84, %p85
      %p87 = scmp.ne.s32.totalorder %s79, %s81
      %p88 = scmp.eq.s32.totalorder %s29, 3
      %p89 = por %p87, %p88
      %p90 = scmp.ne.s32.totalorder %s81, %s82
      %p91 = scmp.eq.s32.totalorder %s29, 0
      %p92 = por %p90, %p91
      %p93 = scmp.ne.s32.totalorder %s81, %s82
      %p94 = scmp.eq.s32.totalorder %s30, 3
      %p95 = por %p93, %p94
      %p97 = scmp.ne.s32.totalorder %s82, %s96
      %p98 = scmp.eq.s32.totalorder %s30, 0
      %p99 = por %p97, %p98
      %s101 = sadd.s32 %s100, 1
      %p104 = scmp.eq.s32.totalorder %s24, 3
      %p105 = scmp.ne.s32.totalorder %s100, %s102
      %p106 = scmp.eq.s32.totalorder %s24, 0
      %p107 = por %p105, %p106
      %p108 = scmp.ne.s32.totalorder %s100, %s102
      %p109 = scmp.eq.s32.totalorder %s29, 3
      %p110 = por %p108, %p109
      %p111 = scmp.ne.s32.totalorder %s102, %s103
      %p112 = scmp.eq.s32.totalorder %s29, 0
      %p113 = por %p111, %p112
      %p114 = scmp.ne.s32.totalorder %s102, %s103
      %p115 = scmp.eq.s32.totalorder %s30, 3
      %p116 = por %p114, %p115
      %p118 = scmp.ne.s32.totalorder %s103, %s117
      %p119 = scmp.eq.s32.totalorder %s30, 0
      %p120 = por %p118, %p119
      %s122 = sadd.s32 %s121, 1
      %p125 = scmp.eq.s32.totalorder %s24, 3
      %p126 = scmp.ne.s32.totalorder %s121, %s123
      %p127 = scmp.eq.s32.totalorder %s24, 0
      %p128 = por %p126, %p127
      %p129 = scmp.ne.s32.totalorder %s121, %s123
      %p130 = scmp.eq.s32.totalorder %s29, 3
      %p131 = por %p129, %p130
      %p132 = scmp.ne.s32.totalorder %s123, %s124
      %p133 = scmp.eq.s32.totalorder %s29, 0
      %p134 = por %p132, %p133
      %p135 = scmp.ne.s32.totalorder %s123, %s124
      %p136 = scmp.eq.s32.totalorder %s30, 3
      %p137 = por %p135, %p136
      %p139 = scmp.ne.s32.totalorder %s124, %s138
      %p140 = scmp.eq.s32.totalorder %s30, 0
      %p141 = por %p139, %p140
      %s143 = sadd.s32 %s142, 1
      %p146 = scmp.eq.s32.totalorder %s24, 3
      %p147 = scmp.ne.s32.totalorder %s142, %s144
      %p148 = scmp.eq.s32.totalorder %s24, 0
      %p149 = por %p147, %p148
      %p150 = scmp.ne.s32.totalorder %s142, %s144
      %p151 = scmp.eq.s32.totalorder %s29, 3
      %p152 = por %p150, %p151
      %p153 = scmp.ne.s32.totalorder %s144, %s145
      %p154 = scmp.eq.s32.totalorder %s29, 0
      %p155 = por %p153, %p154
      %p156 = scmp.ne.s32.totalorder %s144, %s145
      %p157 = scmp.eq.s32.totalorder %s30, 3
      %p158 = por %p156, %p157
      %p160 = scmp.ne.s32.totalorder %s145, %s159
      %p161 = scmp.eq.s32.totalorder %s30, 0
      %p162 = por %p160, %p161
      %s164 = sadd.s32 %s163, 1
      %p167 = scmp.eq.s32.totalorder %s24, 3
      %p168 = scmp.ne.s32.totalorder %s163, %s165
      %p169 = scmp.eq.s32.totalorder %s24, 0
      %p170 = por %p168, %p169
      %p171 = scmp.ne.s32.totalorder %s163, %s165
      %p172 = scmp.eq.s32.totalorder %s29, 3
      %p173 = por %p171, %p172
      %p174 = scmp.ne.s32.totalorder %s165, %s166
      %p175 = scmp.eq.s32.totalorder %s29, 0
      %p176 = por %p174, %p175
      %p177 = scmp.ne.s32.totalorder %s165, %s166
      %p178 = scmp.eq.s32.totalorder %s30, 3
      %p179 = por %p177, %p178
      %p181 = scmp.ne.s32.totalorder %s166, %s180
      %p182 = scmp.eq.s32.totalorder %s30, 0
      %p183 = por %p181, %p182
      %s185 = sadd.s32 %s184, 1
      %p188 = scmp.eq.s32.totalorder %s24, 3
      %p189 = scmp.ne.s32.totalorder %s184, %s186
      %p190 = scmp.eq.s32.totalorder %s24, 0
      %p191 = por %p189, %p190
      %p192 = scmp.ne.s32.totalorder %s184, %s186
      %p193 = scmp.eq.s32.totalorder %s29, 3
      %p194 = por %p192, %p193
      %p195 = scmp.ne.s32.totalorder %s186, %s187
      %p196 = scmp.eq.s32.totalorder %s29, 0
      %p197 = por %p195, %p196
      %p198 = scmp.ne.s32.totalorder %s186, %s187
      %p199 = scmp.eq.s32.totalorder %s30, 3
      %p200 = por %p198, %p199
      %p202 = scmp.ne.s32.totalorder %s187, %s201
      %p203 = scmp.eq.s32.totalorder %s30, 0
      %p204 = por %p202, %p203
      %s206 = sadd.s32 %s205, 1
      %p209 = scmp.eq.s32.totalorder %s24, 3
      %p210 = scmp.ne.s32.totalorder %s205, %s207
      %p211 = scmp.eq.s32.totalorder %s24, 0
      %p212 = por %p210, %p211
      %p213 = scmp.ne.s32.totalorder %s205, %s207
      %p214 = scmp.eq.s32.totalorder %s29, 3
      %p215 = por %p213, %p214
      %p216 = scmp.ne.s32.totalorder %s207, %s208
      %p217 = scmp.eq.s32.totalorder %s29, 0
      %p218 = por %p216, %p217
      %p219 = scmp.ne.s32.totalorder %s207, %s208
      %p220 = scmp.eq.s32.totalorder %s30, 3
      %p221 = por %p219, %p220
      %p223 = scmp.ne.s32.totalorder %s208, %s222
      %p224 = scmp.eq.s32.totalorder %s30, 0
      %p225 = por %p223, %p224
      %s227 = sadd.s32 %s226, 1
      %p230 = scmp.eq.s32.totalorder %s24, 3
      %p231 = scmp.ne.s32.totalorder %s226, %s228
      %p232 = scmp.eq.s32.totalorder %s24, 0
      %p233 = por %p231, %p232
      %p234 = scmp.ne.s32.totalorder %s226, %s228
      %p235 = scmp.eq.s32.totalorder %s29, 3
      %p236 = por %p234, %p235
      %p237 = scmp.ne.s32.totalorder %s228, %s229
      %p238 = scmp.eq.s32.totalorder %s29, 0
      %p239 = por %p237, %p238
      %p240 = scmp.ne.s32.totalorder %s228, %s229
      %p241 = scmp.eq.s32.totalorder %s30, 3
      %p242 = por %p240, %p241
      %p244 = scmp.ne.s32.totalorder %s229, %s243
      %p245 = scmp.eq.s32.totalorder %s30, 0
      %p246 = por %p244, %p245
      %s248 = sadd.s32 %s247, 1
      %p251 = scmp.eq.s32.totalorder %s24, 3
      %p252 = scmp.ne.s32.totalorder %s247, %s249
      %p253 = scmp.eq.s32.totalorder %s24, 0
      %p254 = por %p252, %p253
      %p255 = scmp.ne.s32.totalorder %s247, %s249
      %p256 = scmp.eq.s32.totalorder %s29, 3
      %p257 = por %p255, %p256
      %p258 = scmp.ne.s32.totalorder %s249, %s250
      %p259 = scmp.eq.s32.totalorder %s29, 0
      %p260 = por %p258, %p259
      %p261 = scmp.ne.s32.totalorder %s249, %s250
      %p262 = scmp.eq.s32.totalorder %s30, 3
      %p263 = por %p261, %p262
      %p265 = scmp.ne.s32.totalorder %s250, %s264
      %p266 = scmp.eq.s32.totalorder %s30, 0
      %p267 = por %p265, %p266
      %s269 = sadd.s32 %s268, 1
      %p272 = scmp.eq.s32.totalorder %s24, 3
      %p273 = scmp.ne.s32.totalorder %s268, %s270
      %p274 = scmp.eq.s32.totalorder %s24, 0
      %p275 = por %p273, %p274
      %p276 = scmp.ne.s32.totalorder %s268, %s270
      %p277 = scmp.eq.s32.totalorder %s29, 3
      %p278 = por %p276, %p277
      %p279 = scmp.ne.s32.totalorder %s270, %s271
      %p280 = scmp.eq.s32.totalorder %s29, 0
      %p281 = por %p279, %p280
      %p282 = scmp.ne.s32.totalorder %s270, %s271
      %p283 = scmp.eq.s32.totalorder %s30, 3
      %p284 = por %p282, %p283
      %p286 = scmp.ne.s32.totalorder %s271, %s285
      %p287 = scmp.eq.s32.totalorder %s30, 0
      %p288 = por %p286, %p287
      %s289 = ssub.s32 %s24, %s31
      %p290 = scmp.eq.s32.totalorder %s289, 0
      %s292 = sadd.s32 %s291, 1
      %s293 = scalar_select %p290, %s291, %s292
      %p296 = pneg %p290
      %p297 = scmp.eq.s32.totalorder %s24, 3
      %p298 = por %p296, %p297
      %p299 = scmp.ne.s32.totalorder %s291, %s294
      %p300 = scmp.eq.s32.totalorder %s24, 0
      %p301 = por %p299, %p300
      %p302 = scmp.ne.s32.totalorder %s291, %s294
      %p303 = scmp.eq.s32.totalorder %s29, 3
      %p304 = por %p302, %p303
      %p305 = scmp.ne.s32.totalorder %s294, %s295
      %p306 = scmp.eq.s32.totalorder %s29, 0
      %p307 = por %p305, %p306
      %p308 = scmp.ne.s32.totalorder %s294, %s295
      %p309 = scmp.eq.s32.totalorder %s30, 3
      %p310 = por %p308, %p309
      %p312 = scmp.ne.s32.totalorder %s295, %s311
      %p313 = scmp.eq.s32.totalorder %s30, 0
      %p314 = por %p312, %p313
      %p315 = scmp.le.s32.totalorder 1, %s24
      %p316 = scmp.lt.s32.totalorder %s24, 5
      %p317 = pnand %p315, %p316
      %p318 = pneg %p317
      // Predicated region
      $region9: #{siamese_forward.1} parent=5 // pred_check
        _
      $region10: #{siamese_forward.1} parent=5 // pred_check_branch
        %320 = sbr.rel (%p317) target = $region12
      $region11: #{siamese_forward.1} parent=5 // pred_region
        %s321 = ssub.s32 %s24, 1
        // Predicated region
        $region13: #{siamese_forward.1} parent=11 // pred_check
          %p322 = pneg %p71
        $region14: #{siamese_forward.1} parent=11 // pred_check_branch
          %324 = sbr.rel (%p322) target = $region16
        $region15: #{siamese_forward.1} parent=11 // pred_region
          _
        $region16: #{siamese_forward.1} parent=11 // pred_fallthru
          _
        // Predicated region
        $region17: #{siamese_forward.1} parent=11 // pred_check
          %p325 = pneg %p92
        $region18: #{siamese_forward.1} parent=11 // pred_check_branch
          %327 = sbr.rel (%p325) target = $region20
        $region19: #{siamese_forward.1} parent=11 // pred_region
          %s329 = ssub.s32 256, 256
          %330 = vsyncadd [#allocation3], %s329
          %s331 = sshll.u32 [#allocation2], 4
          %s332 = int_to_ptr.vmem [resolvable:$true] %s331
          %337 = dma.hbm_to_vmem [thread:$0]  %s2, 256, %s332, [#allocation3], 64, 64, 4
        $region20: #{siamese_forward.1} parent=11 // pred_fallthru
          _
        // Predicated region
        $region21: #{siamese_forward.1} parent=11 // pred_check
          %p338 = pneg %p113
        $region22: #{siamese_forward.1} parent=11 // pred_check_branch
          %340 = sbr.rel (%p338) target = $region24
        $region23: #{siamese_forward.1} parent=11 // pred_region
          %s342 = ssub.s32 16, 16
          %343 = vsyncadd [#allocation5], %s342
          %s345 = sshll.u32 [#allocation4], 4
          %s346 = int_to_ptr.vmem [resolvable:$true] %s345
          %348 = dma.hbm_to_vmem [thread:$0]  %s3, 16, %s346, [#allocation5]
        $region24: #{siamese_forward.1} parent=11 // pred_fallthru
          _
        // Predicated region
        $region25: #{siamese_forward.1} parent=11 // pred_check
          %p349 = pneg %p134
        $region26: #{siamese_forward.1} parent=11 // pred_check_branch
          %351 = sbr.rel (%p349) target = $region28
        $region27: #{siamese_forward.1} parent=11 // pred_region
          %s353 = ssub.s32 8192, 8192
          %354 = vsyncadd [#allocation5], %s353
          %s355 = sshll.u32 [#allocation6], 4
          %s356 = int_to_ptr.vmem [resolvable:$true] %s355
          %361 = dma.hbm_to_vmem [thread:$0]  %s4, 8192, %s356, [#allocation5], 512, 512, 32
        $region28: #{siamese_forward.1} parent=11 // pred_fallthru
          _
        // Predicated region
        $region29: #{siamese_forward.1} parent=11 // pred_check
          %p362 = pneg %p155
        $region30: #{siamese_forward.1} parent=11 // pred_check_branch
          %364 = sbr.rel (%p362) target = $region32
        $region31: #{siamese_forward.1} parent=11 // pred_region
          %s366 = ssub.s32 128, 128
          %367 = vsyncadd [#allocation8], %s366
          %s369 = sshll.u32 [#allocation7], 4
          %s370 = int_to_ptr.vmem [resolvable:$true] %s369
          %372 = dma.hbm_to_vmem [thread:$0]  %s5, 128, %s370, [#allocation8]
        $region32: #{siamese_forward.1} parent=11 // pred_fallthru
          _
        // Predicated region
        $region33: #{siamese_forward.1} parent=11 // pred_check
          %p373 = pneg %p176
        $region34: #{siamese_forward.1} parent=11 // pred_check_branch
          %375 = sbr.rel (%p373) target = $region36
        $region35: #{siamese_forward.1} parent=11 // pred_region
          %s377 = ssub.s32 65536, 65536
          %378 = vsyncadd [#allocation8], %s377
          %s379 = sshll.u32 [#allocation9], 4
          %s380 = int_to_ptr.vmem [resolvable:$true] %s379
          %385 = dma.hbm_to_vmem [thread:$0]  %s6, 65536, %s380, [#allocation8], 512, 512, 32
        $region36: #{siamese_forward.1} parent=11 // pred_fallthru
          _
        // Predicated region
        $region37: #{siamese_forward.1} parent=11 // pred_check
          %p386 = pneg %p197
        $region38: #{siamese_forward.1} parent=11 // pred_check_branch
          %388 = sbr.rel (%p386) target = $region40
        $region39: #{siamese_forward.1} parent=11 // pred_region
          %s390 = ssub.s32 128, 128
          %391 = vsyncadd [#allocation11], %s390
          %s393 = sshll.u32 [#allocation10], 4
          %s394 = int_to_ptr.vmem [resolvable:$true] %s393
          %396 = dma.hbm_to_vmem [thread:$0]  %s7, 128, %s394, [#allocation11]
        $region40: #{siamese_forward.1} parent=11 // pred_fallthru
          _
        // Predicated region
        $region41: #{siamese_forward.1} parent=11 // pred_check
          %p397 = pneg %p218
        $region42: #{siamese_forward.1} parent=11 // pred_check_branch
          %399 = sbr.rel (%p397) target = $region44
        $region43: #{siamese_forward.1} parent=11 // pred_region
          %s401 = ssub.s32 16384, 16384
          %402 = vsyncadd [#allocation11], %s401
          %s403 = sshll.u32 [#allocation12], 4
          %s404 = int_to_ptr.vmem [resolvable:$true] %s403
          %409 = dma.hbm_to_vmem [thread:$0]  %s8, 16384, %s404, [#allocation11], 128, 128, 8
        $region44: #{siamese_forward.1} parent=11 // pred_fallthru
          _
        // Predicated region
        $region45: #{siamese_forward.1} parent=11 // pred_check
          %p410 = pneg %p239
        $region46: #{siamese_forward.1} parent=11 // pred_check_branch
          %412 = sbr.rel (%p410) target = $region48
        $region47: #{siamese_forward.1} parent=11 // pred_region
          %s414 = ssub.s32 32, 32
          %415 = vsyncadd [#allocation14], %s414
          %s417 = sshll.u32 [#allocation13], 4
          %s418 = int_to_ptr.vmem [resolvable:$true] %s417
          %420 = dma.hbm_to_vmem [thread:$0]  %s9, 32, %s418, [#allocation14]
        $region48: #{siamese_forward.1} parent=11 // pred_fallthru
          _
        // Predicated region
        $region49: #{siamese_forward.1} parent=11 // pred_check
          %p421 = pneg %p260
        $region50: #{siamese_forward.1} parent=11 // pred_check_branch
          %423 = sbr.rel (%p421) target = $region52
        $region51: #{siamese_forward.1} parent=11 // pred_region
          %s425 = ssub.s32 2048, 2048
          %426 = vsyncadd [#allocation14], %s425
          %s427 = sshll.u32 [#allocation15], 4
          %s428 = int_to_ptr.vmem [resolvable:$true] %s427
          %433 = dma.hbm_to_vmem [thread:$0]  %s10, 2048, %s428, [#allocation14], 64, 64, 4
        $region52: #{siamese_forward.1} parent=11 // pred_fallthru
          _
        // Predicated region
        $region53: #{siamese_forward.1} parent=11 // pred_check
          %p434 = pneg %p281
        $region54: #{siamese_forward.1} parent=11 // pred_check_branch
          %436 = sbr.rel (%p434) target = $region56
        $region55: #{siamese_forward.1} parent=11 // pred_region
          %s438 = ssub.s32 16, 16
          %439 = vsyncadd [#allocation17], %s438
          %s441 = sshll.u32 [#allocation16], 4
          %s442 = int_to_ptr.vmem [resolvable:$true] %s441
          %444 = dma.hbm_to_vmem [thread:$0]  %s11, 16, %s442, [#allocation17]
        $region56: #{siamese_forward.1} parent=11 // pred_fallthru
          _
      $region12: #{siamese_forward.1} parent=5 // pred_fallthru
        _
      %p445 = scmp.lt.s32.totalorder %s24, 4
      // Predicated region
      $region57: #{siamese_forward.1} parent=5 // pred_check
        %p446 = pneg %p445
      $region58: #{siamese_forward.1} parent=5 // pred_check_branch
        %448 = sbr.rel (%p446) target = $region60
      $region59: #{siamese_forward.1} parent=5 // pred_region
        // Predicated region
        $region61: #{siamese_forward.1} parent=59 // pred_check
          %p449 = pneg %p44
        $region62: #{siamese_forward.1} parent=59 // pred_check_branch
          %451 = sbr.rel (%p449) target = $region64
        $region63: #{siamese_forward.1} parent=59 // pred_region
          %p452 = scmp.lt.s32.totalorder %s24, 3
          %s453 = scalar_select %p452, %s24, 3
          %s454 = smul.addr %s453, 47
          %s455 = smul.addr %s454, 4
          %s456 = scalar_lea.vmem %s0, %s455
        $region64: #{siamese_forward.1} parent=59 // pred_fallthru
          _
      $region60: #{siamese_forward.1} parent=5 // pred_fallthru
        _
      %p457 = scmp.le.s32.totalorder 1, %s24
      %p458 = scmp.lt.s32.totalorder %s24, 5
      %p459 = pnand %p457, %p458
      %p460 = pneg %p459
      // Predicated region
      $region65: #{siamese_forward.1} parent=5 // pred_check
        _
      $region66: #{siamese_forward.1} parent=5 // pred_check_branch
        %462 = sbr.rel (%p459) target = $region68
      $region67: #{siamese_forward.1} parent=5 // pred_region
        %s463 = ssub.s32 %s24, 1
        // Predicated region
        $region69: #{siamese_forward.1} parent=67 // pred_check
          %p464 = pneg %p92
        $region70: #{siamese_forward.1} parent=67 // pred_check_branch
          %466 = sbr.rel (%p464) target = $region72
        $region71: #{siamese_forward.1} parent=67 // pred_region
          %467 = dma.done [#allocation3], 256
        $region72: #{siamese_forward.1} parent=67 // pred_fallthru
          _
        // Predicated region
        $region73: #{siamese_forward.1} parent=67 // pred_check
          %p468 = pneg %p113
        $region74: #{siamese_forward.1} parent=67 // pred_check_branch
          %470 = sbr.rel (%p468) target = $region76
        $region75: #{siamese_forward.1} parent=67 // pred_region
          %471 = dma.done [#allocation5], 16
        $region76: #{siamese_forward.1} parent=67 // pred_fallthru
          _
        // Predicated region
        $region77: #{siamese_forward.1} parent=67 // pred_check
          %p472 = pneg %p134
        $region78: #{siamese_forward.1} parent=67 // pred_check_branch
          %474 = sbr.rel (%p472) target = $region80
        $region79: #{siamese_forward.1} parent=67 // pred_region
          %475 = dma.done [#allocation5], 8192
        $region80: #{siamese_forward.1} parent=67 // pred_fallthru
          _
        // Predicated region
        $region81: #{siamese_forward.1} parent=67 // pred_check
          %p476 = pneg %p155
        $region82: #{siamese_forward.1} parent=67 // pred_check_branch
          %478 = sbr.rel (%p476) target = $region84
        $region83: #{siamese_forward.1} parent=67 // pred_region
          %479 = dma.done [#allocation8], 128
        $region84: #{siamese_forward.1} parent=67 // pred_fallthru
          _
        // Predicated region
        $region85: #{siamese_forward.1} parent=67 // pred_check
          %p480 = pneg %p176
        $region86: #{siamese_forward.1} parent=67 // pred_check_branch
          %482 = sbr.rel (%p480) target = $region88
        $region87: #{siamese_forward.1} parent=67 // pred_region
          %483 = dma.done [#allocation8], 65536
        $region88: #{siamese_forward.1} parent=67 // pred_fallthru
          _
        // Predicated region
        $region89: #{siamese_forward.1} parent=67 // pred_check
          %p484 = pneg %p197
        $region90: #{siamese_forward.1} parent=67 // pred_check_branch
          %486 = sbr.rel (%p484) target = $region92
        $region91: #{siamese_forward.1} parent=67 // pred_region
          %487 = dma.done [#allocation11], 128
        $region92: #{siamese_forward.1} parent=67 // pred_fallthru
          _
        // Predicated region
        $region93: #{siamese_forward.1} parent=67 // pred_check
          %p488 = pneg %p218
        $region94: #{siamese_forward.1} parent=67 // pred_check_branch
          %490 = sbr.rel (%p488) target = $region96
        $region95: #{siamese_forward.1} parent=67 // pred_region
          %491 = dma.done [#allocation11], 16384
        $region96: #{siamese_forward.1} parent=67 // pred_fallthru
          _
        // Predicated region
        $region97: #{siamese_forward.1} parent=67 // pred_check
          %p492 = pneg %p239
        $region98: #{siamese_forward.1} parent=67 // pred_check_branch
          %494 = sbr.rel (%p492) target = $region100
        $region99: #{siamese_forward.1} parent=67 // pred_region
          %495 = dma.done [#allocation14], 32
        $region100: #{siamese_forward.1} parent=67 // pred_fallthru
          _
        // Predicated region
        $region101: #{siamese_forward.1} parent=67 // pred_check
          %p496 = pneg %p260
        $region102: #{siamese_forward.1} parent=67 // pred_check_branch
          %498 = sbr.rel (%p496) target = $region104
        $region103: #{siamese_forward.1} parent=67 // pred_region
          %499 = dma.done [#allocation14], 2048
        $region104: #{siamese_forward.1} parent=67 // pred_fallthru
          _
        // Predicated region
        $region105: #{siamese_forward.1} parent=67 // pred_check
          %p500 = pneg %p281
        $region106: #{siamese_forward.1} parent=67 // pred_check_branch
          %502 = sbr.rel (%p500) target = $region108
        $region107: #{siamese_forward.1} parent=67 // pred_region
          %503 = dma.done [#allocation17], 16
        $region108: #{siamese_forward.1} parent=67 // pred_fallthru
          _
        %p504 = scmp.lt.s32.totalorder %s29, 3
        %s505 = scalar_select %p504, %s29, 3
        %s506 = smul.addr %s505, 47
        %s507 = smul.addr %s506, 4
        %s508 = scalar_lea.vmem %s0, %s507
        %p509 = pneg %p50
        %p510 = pneg %p47
        %p511 = pneg %p71
        %p512 = pneg %p68
        %p513 = pneg %p92
        %p514 = pneg %p89
        %p515 = pneg %p113
        %p516 = pneg %p110
        %p517 = pneg %p134
        %p518 = pneg %p131
        %p519 = pneg %p155
        %p520 = pneg %p152
        %p521 = pneg %p176
        %p522 = pneg %p173
        %p523 = pneg %p197
        %p524 = pneg %p194
        %p525 = pneg %p218
        %p526 = pneg %p215
        %p527 = pneg %p239
        %p528 = pneg %p236
        %p529 = pneg %p260
        %p530 = pneg %p257
        %p531 = pneg %p281
        %p532 = pneg %p278
        %p533 = pneg %p307
        %p534 = pneg %p304
        %p535 = scmp.lt.s32.totalorder %s29, 3
        %s536 = scalar_select %p535, %s29, 3
        %s537 = scalar_lea.vmem %s12, %s536
        %p538 = scmp.lt.s32.totalorder %s29, 3
        %s539 = scalar_select %p538, %s29, 3
        %s540 = smul.addr %s539, 47
        %s541 = smul.addr %s540, 4
        %s542 = scalar_lea.vmem %s0, %s541
        %p543 = scmp.lt.s32.totalorder %s29, 3
        %s544 = scalar_select %p543, %s29, 3
        %s545 = scalar_lea.vmem %s12, %s544
        %v547 = vld [vmem:[%s542] sm:$0xc]
        %v548 = vld [vmem:[%s542 + $0x4] sm:$0xf]
        %v549 = vld [vmem:[%s542 + $0x8] sm:$0xf]
        %v550 = vld [vmem:[%s542 + $0xc] sm:$0xf]
        %v551 = vld [vmem:[%s542 + $0x10] sm:$0xf]
        %v552 = vld [vmem:[%s542 + $0x14] sm:$0xf]
        %v553 = vld [vmem:[%s542 + $0x18] sm:$0xf]
        %v554 = vld [vmem:[%s542 + $0x1c] sm:$0xf]
        %v555 = vld [vmem:[%s542 + $0x20] sm:$0xf]
        %v556 = vld [vmem:[%s542 + $0x24] sm:$0xf]
        %v557 = vld [vmem:[%s542 + $0x28] sm:$0xf]
        %v558 = vld [vmem:[%s542 + $0x2c] sm:$0xf]
        %v559 = vld [vmem:[%s542 + $0x30] sm:$0xf]
        %v560 = vld [vmem:[%s542 + $0x34] sm:$0xf]
        %v561 = vld [vmem:[%s542 + $0x38] sm:$0xf]
        %v562 = vld [vmem:[%s542 + $0x3c] sm:$0xf]
        %v563 = vld [vmem:[%s542 + $0x40] sm:$0xf]
        %v564 = vld [vmem:[%s542 + $0x44] sm:$0xf]
        %v565 = vld [vmem:[%s542 + $0x48] sm:$0xf]
        %v566 = vld [vmem:[%s542 + $0x4c] sm:$0xf]
        %v567 = vld [vmem:[%s542 + $0x50] sm:$0xf]
        %v568 = vld [vmem:[%s542 + $0x54] sm:$0xf]
        %v569 = vld [vmem:[%s542 + $0x58] sm:$0xf]
        %v570 = vld [vmem:[%s542 + $0x5c] sm:$0xf]
        %v571 = vld [vmem:[%s542 + $0x60] sm:$0xf]
        %v572 = vld [vmem:[%s542 + $0x64] sm:$0xf]
        %v573 = vld [vmem:[%s542 + $0x68] sm:$0xf]
        %v574 = vld [vmem:[%s542 + $0x6c] sm:$0xf]
        %v575 = vld [vmem:[%s542 + $0x70] sm:$0xf]
        %v576 = vld [vmem:[%s542 + $0x74] sm:$0xf]
        %v577 = vld [vmem:[%s542 + $0x78] sm:$0xf]
        %v578 = vld [vmem:[%s542 + $0x7c] sm:$0xf]
        %v579 = vld [vmem:[%s542 + $0x80] sm:$0xf]
        %v580 = vld [vmem:[%s542 + $0x84] sm:$0xf]
        %v581 = vld [vmem:[%s542 + $0x88] sm:$0xf]
        %v582 = vld [vmem:[%s542 + $0x8c] sm:$0xf]
        %v583 = vld [vmem:[%s542 + $0x90] sm:$0xf]
        %v584 = vld [vmem:[%s542 + $0x94] sm:$0xf]
        %v585 = vld [vmem:[%s542 + $0x98] sm:$0xf]
        %v586 = vld [vmem:[%s542 + $0x9c] sm:$0xf]
        %v587 = vld [vmem:[%s542 + $0xa0] sm:$0xf]
        %v588 = vld [vmem:[%s542 + $0xa4] sm:$0x7]
        %v589 = vld [vmem:[%s542] sm:$0x8]
        %v590 = vld [vmem:[%s542 + $0xa4] sm:$0xf]
        %v591 = vld [vmem:[%s542 + $0x8] sm:$0x8]
        %v592 = vld [vmem:[%s542 + $0xa8] sm:$0xf]
        %v593 = vld [vmem:[%s542 + $0xac] sm:$0xf]
        %v594 = vld [vmem:[%s542 + $0xb0] sm:$0x1]
        %v595 = vld [vmem:[%s542 + $0xb0] sm:$0xf]
        %v596 = vld [vmem:[%s542 + $0xb4] sm:$0xf]
        %v597 = vld [vmem:[%s542 + $0xb8] sm:$0x1]
        %v598 = vld [vmem:[%s542 + $0x14] sm:$0xe]
        %v599 = vld [vmem:[%s542 + $0xb8] sm:$0x3]
        %v642 = vunpack.c.l.b16 %v547
        %v643 = vunpack.c.l.b16 %v548
        %v644 = vunpack.c.l.b16 %v549
        %v645 = vunpack.c.l.b16 %v550
        %v646 = vunpack.c.l.b16 %v551
        %v647 = vunpack.c.l.b16 %v552
        %v648 = vunpack.c.l.b16 %v553
        %v649 = vunpack.c.l.b16 %v554
        %v650 = vunpack.c.l.b16 %v555
        %v651 = vunpack.c.l.b16 %v556
        %v652 = vunpack.c.l.b16 %v557
        %v653 = vunpack.c.l.b16 %v558
        %v654 = vunpack.c.l.b16 %v559
        %v655 = vunpack.c.l.b16 %v560
        %v656 = vunpack.c.l.b16 %v561
        %v657 = vunpack.c.l.b16 %v562
        %v658 = vunpack.c.l.b16 %v563
        %v659 = vunpack.c.l.b16 %v564
        %v660 = vunpack.c.l.b16 %v565
        %v661 = vunpack.c.l.b16 %v566
        %v662 = vunpack.c.l.b16 %v567
        %v663 = vunpack.c.l.b16 %v568
        %v664 = vunpack.c.l.b16 %v569
        %v665 = vunpack.c.l.b16 %v570
        %v666 = vunpack.c.l.b16 %v571
        %v667 = vunpack.c.l.b16 %v572
        %v668 = vunpack.c.l.b16 %v573
        %v669 = vunpack.c.l.b16 %v574
        %v670 = vunpack.c.l.b16 %v575
        %v671 = vunpack.c.l.b16 %v576
        %v672 = vunpack.c.l.b16 %v577
        %v673 = vunpack.c.l.b16 %v578
        %v674 = vunpack.c.l.b16 %v579
        %v675 = vunpack.c.l.b16 %v580
        %v676 = vunpack.c.l.b16 %v581
        %v677 = vunpack.c.l.b16 %v582
        %v678 = vunpack.c.l.b16 %v583
        %v679 = vunpack.c.l.b16 %v584
        %v680 = vunpack.c.l.b16 %v585
        %v681 = vunpack.c.l.b16 %v586
        %v682 = vunpack.c.l.b16 %v587
        %v683 = vunpack.c.l.b16 %v588
        %v684 = vpack.c.b16 %v643, %v642
        %v685 = vpack.c.b16 %v645, %v644
        %v686 = vpack.c.b16 %v647, %v646
        %v687 = vpack.c.b16 %v649, %v648
        %v688 = vpack.c.b16 %v651, %v650
        %v689 = vpack.c.b16 %v653, %v652
        %v690 = vpack.c.b16 %v655, %v654
        %v691 = vpack.c.b16 %v657, %v656
        %v692 = vpack.c.b16 %v659, %v658
        %v693 = vpack.c.b16 %v661, %v660
        %v694 = vpack.c.b16 %v663, %v662
        %v695 = vpack.c.b16 %v665, %v664
        %v696 = vpack.c.b16 %v667, %v666
        %v697 = vpack.c.b16 %v669, %v668
        %v698 = vpack.c.b16 %v671, %v670
        %v699 = vpack.c.b16 %v673, %v672
        %v700 = vpack.c.b16 %v675, %v674
        %v701 = vpack.c.b16 %v677, %v676
        %v702 = vpack.c.b16 %v679, %v678
        %v703 = vpack.c.b16 %v681, %v680
        %v704 = vpack.c.b16 %v683, %v682
        %v706 = vunpack.c.l.b16 %v589
        %v707 = vpack.c.b16 %v643, %v706
        %vm708 = vsmask.f32 7424
        %v710 = vshrl.u32 %v707, 16
        %v712 = vshll.u32 %v707, 16
        %v714 = vrot.slane %v712, 1
        %v715 = vor.u32 %v710, %v714
        %v717 = vshll.u32 %v685, 16
        %v719 = vrot.slane %v717, 1
        %v720 = vsel %vm708, %v715, %v719
        %v721 = vshrl.u32 %v685, 16
        %v723 = vor.u32 %v721, %v719
        %v725 = vshll.u32 %v686, 16
        %v727 = vrot.slane %v725, 1
        %v728 = vsel %vm708, %v723, %v727
        %v729 = vshrl.u32 %v686, 16
        %v731 = vor.u32 %v729, %v727
        %v733 = vshll.u32 %v687, 16
        %v735 = vrot.slane %v733, 1
        %v736 = vsel %vm708, %v731, %v735
        %v737 = vshrl.u32 %v687, 16
        %v739 = vor.u32 %v737, %v735
        %v741 = vshll.u32 %v688, 16
        %v743 = vrot.slane %v741, 1
        %v744 = vsel %vm708, %v739, %v743
        %v745 = vshrl.u32 %v688, 16
        %v747 = vor.u32 %v745, %v743
        %v749 = vshll.u32 %v689, 16
        %v751 = vrot.slane %v749, 1
        %v752 = vsel %vm708, %v747, %v751
        %v753 = vshrl.u32 %v689, 16
        %v755 = vor.u32 %v753, %v751
        %v757 = vshll.u32 %v690, 16
        %v759 = vrot.slane %v757, 1
        %v760 = vsel %vm708, %v755, %v759
        %v761 = vshrl.u32 %v690, 16
        %v763 = vor.u32 %v761, %v759
        %v765 = vshll.u32 %v691, 16
        %v767 = vrot.slane %v765, 1
        %v768 = vsel %vm708, %v763, %v767
        %v769 = vshrl.u32 %v691, 16
        %v771 = vor.u32 %v769, %v767
        %v773 = vshll.u32 %v692, 16
        %v775 = vrot.slane %v773, 1
        %v776 = vsel %vm708, %v771, %v775
        %v777 = vshrl.u32 %v692, 16
        %v779 = vor.u32 %v777, %v775
        %v781 = vshll.u32 %v693, 16
        %v783 = vrot.slane %v781, 1
        %v784 = vsel %vm708, %v779, %v783
        %v785 = vshrl.u32 %v693, 16
        %v787 = vor.u32 %v785, %v783
        %v789 = vshll.u32 %v694, 16
        %v791 = vrot.slane %v789, 1
        %v792 = vsel %vm708, %v787, %v791
        %v793 = vshrl.u32 %v694, 16
        %v795 = vor.u32 %v793, %v791
        %v797 = vshll.u32 %v695, 16
        %v799 = vrot.slane %v797, 1
        %v800 = vsel %vm708, %v795, %v799
        %v801 = vshrl.u32 %v695, 16
        %v803 = vor.u32 %v801, %v799
        %v805 = vshll.u32 %v696, 16
        %v807 = vrot.slane %v805, 1
        %v808 = vsel %vm708, %v803, %v807
        %v809 = vshrl.u32 %v696, 16
        %v811 = vor.u32 %v809, %v807
        %v813 = vshll.u32 %v697, 16
        %v815 = vrot.slane %v813, 1
        %v816 = vsel %vm708, %v811, %v815
        %v817 = vshrl.u32 %v697, 16
        %v819 = vor.u32 %v817, %v815
        %v821 = vshll.u32 %v698, 16
        %v823 = vrot.slane %v821, 1
        %v824 = vsel %vm708, %v819, %v823
        %v825 = vshrl.u32 %v698, 16
        %v827 = vor.u32 %v825, %v823
        %v829 = vshll.u32 %v699, 16
        %v831 = vrot.slane %v829, 1
        %v832 = vsel %vm708, %v827, %v831
        %v833 = vshrl.u32 %v699, 16
        %v835 = vor.u32 %v833, %v831
        %v837 = vshll.u32 %v700, 16
        %v839 = vrot.slane %v837, 1
        %v840 = vsel %vm708, %v835, %v839
        %v841 = vshrl.u32 %v700, 16
        %v843 = vor.u32 %v841, %v839
        %v845 = vshll.u32 %v701, 16
        %v847 = vrot.slane %v845, 1
        %v848 = vsel %vm708, %v843, %v847
        %v849 = vshrl.u32 %v701, 16
        %v851 = vor.u32 %v849, %v847
        %v853 = vshll.u32 %v702, 16
        %v855 = vrot.slane %v853, 1
        %v856 = vsel %vm708, %v851, %v855
        %v857 = vshrl.u32 %v702, 16
        %v859 = vor.u32 %v857, %v855
        %v861 = vshll.u32 %v703, 16
        %v863 = vrot.slane %v861, 1
        %v864 = vsel %vm708, %v859, %v863
        %v865 = vshrl.u32 %v703, 16
        %v867 = vor.u32 %v865, %v863
        %v869 = vshll.u32 %v704, 16
        %v871 = vrot.slane %v869, 1
        %v872 = vsel %vm708, %v867, %v871
        %v873 = vshrl.u32 %v704, 16
        %v875 = vor.u32 %v873, %v871
        %876 = vrot.lane.b32.xlu0 %v720, 3
        %v877 = vpop.permute.xlu0 %876
        %878 = vrot.lane.b32.xlu0 %v728, 3
        %v879 = vpop.permute.xlu0 %878
        %880 = vrot.lane.b32.xlu0 %v736, 3
        %v881 = vpop.permute.xlu0 %880
        %882 = vrot.lane.b32.xlu0 %v744, 3
        %v883 = vpop.permute.xlu0 %882
        %884 = vrot.lane.b32.xlu0 %v752, 3
        %v885 = vpop.permute.xlu0 %884
        %886 = vrot.lane.b32.xlu0 %v760, 3
        %v887 = vpop.permute.xlu0 %886
        %888 = vrot.lane.b32.xlu0 %v768, 3
        %v889 = vpop.permute.xlu0 %888
        %890 = vrot.lane.b32.xlu0 %v776, 3
        %v891 = vpop.permute.xlu0 %890
        %892 = vrot.lane.b32.xlu0 %v784, 3
        %v893 = vpop.permute.xlu0 %892
        %894 = vrot.lane.b32.xlu0 %v792, 3
        %v895 = vpop.permute.xlu0 %894
        %896 = vrot.lane.b32.xlu0 %v800, 3
        %v897 = vpop.permute.xlu0 %896
        %898 = vrot.lane.b32.xlu0 %v808, 3
        %v899 = vpop.permute.xlu0 %898
        %900 = vrot.lane.b32.xlu0 %v816, 3
        %v901 = vpop.permute.xlu0 %900
        %902 = vrot.lane.b32.xlu0 %v824, 3
        %v903 = vpop.permute.xlu0 %902
        %904 = vrot.lane.b32.xlu0 %v832, 3
        %v905 = vpop.permute.xlu0 %904
        %906 = vrot.lane.b32.xlu0 %v840, 3
        %v907 = vpop.permute.xlu0 %906
        %908 = vrot.lane.b32.xlu0 %v848, 3
        %v909 = vpop.permute.xlu0 %908
        %910 = vrot.lane.b32.xlu0 %v856, 3
        %v911 = vpop.permute.xlu0 %910
        %912 = vrot.lane.b32.xlu0 %v864, 3
        %v913 = vpop.permute.xlu0 %912
        %914 = vrot.lane.b32.xlu0 %v872, 3
        %v915 = vpop.permute.xlu0 %914
        %916 = vrot.lane.b32.xlu0 %v875, 3
        %v917 = vpop.permute.xlu0 %916
        %v919 = vunpack.c.l.b16 %v590
        %v920 = vpack.c.b16 %v919, %v682
        %vm921 = vcmask 1046528
        %v922 = vrot.slane %v707, 1
        %v923 = vrot.slane %v685, 1
        %v924 = vsel %vm921, %v922, %v923
        %v925 = vrot.slane %v686, 1
        %v926 = vsel %vm921, %v923, %v925
        %v927 = vrot.slane %v687, 1
        %v928 = vsel %vm921, %v925, %v927
        %v929 = vrot.slane %v688, 1
        %v930 = vsel %vm921, %v927, %v929
        %v931 = vrot.slane %v689, 1
        %v932 = vsel %vm921, %v929, %v931
        %v933 = vrot.slane %v690, 1
        %v934 = vsel %vm921, %v931, %v933
        %v935 = vrot.slane %v691, 1
        %v936 = vsel %vm921, %v933, %v935
        %v937 = vrot.slane %v692, 1
        %v938 = vsel %vm921, %v935, %v937
        %v939 = vrot.slane %v693, 1
        %v940 = vsel %vm921, %v937, %v939
        %v941 = vrot.slane %v694, 1
        %v942 = vsel %vm921, %v939, %v941
        %v943 = vrot.slane %v695, 1
        %v944 = vsel %vm921, %v941, %v943
        %v945 = vrot.slane %v696, 1
        %v946 = vsel %vm921, %v943, %v945
        %v947 = vrot.slane %v697, 1
        %v948 = vsel %vm921, %v945, %v947
        %v949 = vrot.slane %v698, 1
        %v950 = vsel %vm921, %v947, %v949
        %v951 = vrot.slane %v699, 1
        %v952 = vsel %vm921, %v949, %v951
        %v953 = vrot.slane %v700, 1
        %v954 = vsel %vm921, %v951, %v953
        %v955 = vrot.slane %v701, 1
        %v956 = vsel %vm921, %v953, %v955
        %v957 = vrot.slane %v702, 1
        %v958 = vsel %vm921, %v955, %v957
        %v959 = vrot.slane %v703, 1
        %v960 = vsel %vm921, %v957, %v959
        %v961 = vrot.slane %v920, 1
        %v962 = vsel %vm921, %v959, %v961
        %963 = vrot.lane.b32.xlu0 %v924, 6
        %v964 = vpop.permute.xlu0 %963
        %965 = vrot.lane.b32.xlu0 %v926, 6
        %v966 = vpop.permute.xlu0 %965
        %967 = vrot.lane.b32.xlu0 %v928, 6
        %v968 = vpop.permute.xlu0 %967
        %969 = vrot.lane.b32.xlu0 %v930, 6
        %v970 = vpop.permute.xlu0 %969
        %971 = vrot.lane.b32.xlu0 %v932, 6
        %v972 = vpop.permute.xlu0 %971
        %973 = vrot.lane.b32.xlu0 %v934, 6
        %v974 = vpop.permute.xlu0 %973
        %975 = vrot.lane.b32.xlu0 %v936, 6
        %v976 = vpop.permute.xlu0 %975
        %977 = vrot.lane.b32.xlu0 %v938, 6
        %v978 = vpop.permute.xlu0 %977
        %979 = vrot.lane.b32.xlu0 %v940, 6
        %v980 = vpop.permute.xlu0 %979
        %981 = vrot.lane.b32.xlu0 %v942, 6
        %v982 = vpop.permute.xlu0 %981
        %983 = vrot.lane.b32.xlu0 %v944, 6
        %v984 = vpop.permute.xlu0 %983
        %985 = vrot.lane.b32.xlu0 %v946, 6
        %v986 = vpop.permute.xlu0 %985
        %987 = vrot.lane.b32.xlu0 %v948, 6
        %v988 = vpop.permute.xlu0 %987
        %989 = vrot.lane.b32.xlu0 %v950, 6
        %v990 = vpop.permute.xlu0 %989
        %991 = vrot.lane.b32.xlu0 %v952, 6
        %v992 = vpop.permute.xlu0 %991
        %993 = vrot.lane.b32.xlu0 %v954, 6
        %v994 = vpop.permute.xlu0 %993
        %995 = vrot.lane.b32.xlu0 %v956, 6
        %v996 = vpop.permute.xlu0 %995
        %997 = vrot.lane.b32.xlu0 %v958, 6
        %v998 = vpop.permute.xlu0 %997
        %999 = vrot.lane.b32.xlu0 %v960, 6
        %v1000 = vpop.permute.xlu0 %999
        %1001 = vrot.lane.b32.xlu0 %v962, 6
        %v1002 = vpop.permute.xlu0 %1001
        %1003 = vrot.lane.b32.xlu0 %v961, 6
        %v1004 = vpop.permute.xlu0 %1003
        %v1008 = vunpack.c.l.b16 %v591
        %v1009 = vunpack.c.l.b16 %v592
        %v1010 = vunpack.c.l.b16 %v593
        %v1011 = vpack.c.b16 %v645, %v1008
        %v1012 = vpack.c.b16 %v1010, %v1009
        %v1013 = vrot.slane %v1011, 1
        %v1014 = vsel %vm921, %v1013, %v925
        %v1015 = vrot.slane %v1012, 1
        %v1016 = vsel %vm921, %v961, %v1015
        %1017 = vrot.lane.b32.xlu0 %v1014, 9
        %v1018 = vpop.permute.xlu0 %1017
        %1019 = vrot.lane.b32.xlu0 %v928, 9
        %v1020 = vpop.permute.xlu0 %1019
        %1021 = vrot.lane.b32.xlu0 %v930, 9
        %v1022 = vpop.permute.xlu0 %1021
        %1023 = vrot.lane.b32.xlu0 %v932, 9
        %v1024 = vpop.permute.xlu0 %1023
        %1025 = vrot.lane.b32.xlu0 %v934, 9
        %v1026 = vpop.permute.xlu0 %1025
        %1027 = vrot.lane.b32.xlu0 %v936, 9
        %v1028 = vpop.permute.xlu0 %1027
        %1029 = vrot.lane.b32.xlu0 %v938, 9
        %v1030 = vpop.permute.xlu0 %1029
        %1031 = vrot.lane.b32.xlu0 %v940, 9
        %v1032 = vpop.permute.xlu0 %1031
        %1033 = vrot.lane.b32.xlu0 %v942, 9
        %v1034 = vpop.permute.xlu0 %1033
        %1035 = vrot.lane.b32.xlu0 %v944, 9
        %v1036 = vpop.permute.xlu0 %1035
        %1037 = vrot.lane.b32.xlu0 %v946, 9
        %v1038 = vpop.permute.xlu0 %1037
        %1039 = vrot.lane.b32.xlu0 %v948, 9
        %v1040 = vpop.permute.xlu0 %1039
        %1041 = vrot.lane.b32.xlu0 %v950, 9
        %v1042 = vpop.permute.xlu0 %1041
        %1043 = vrot.lane.b32.xlu0 %v952, 9
        %v1044 = vpop.permute.xlu0 %1043
        %1045 = vrot.lane.b32.xlu0 %v954, 9
        %v1046 = vpop.permute.xlu0 %1045
        %1047 = vrot.lane.b32.xlu0 %v956, 9
        %v1048 = vpop.permute.xlu0 %1047
        %1049 = vrot.lane.b32.xlu0 %v958, 9
        %v1050 = vpop.permute.xlu0 %1049
        %1051 = vrot.lane.b32.xlu0 %v960, 9
        %v1052 = vpop.permute.xlu0 %1051
        %1053 = vrot.lane.b32.xlu0 %v962, 9
        %v1054 = vpop.permute.xlu0 %1053
        %1055 = vrot.lane.b32.xlu0 %v1016, 9
        %v1056 = vpop.permute.xlu0 %1055
        %1057 = vrot.lane.b32.xlu0 %v1015, 9
        %v1058 = vpop.permute.xlu0 %1057
        %v1059 = vpack.c.b16 %v646, %v645
        %v1060 = vpack.c.b16 %v648, %v647
        %v1061 = vpack.c.b16 %v650, %v649
        %v1062 = vpack.c.b16 %v652, %v651
        %v1063 = vpack.c.b16 %v654, %v653
        %v1064 = vpack.c.b16 %v656, %v655
        %v1065 = vpack.c.b16 %v658, %v657
        %v1066 = vpack.c.b16 %v660, %v659
        %v1067 = vpack.c.b16 %v662, %v661
        %v1068 = vpack.c.b16 %v664, %v663
        %v1069 = vpack.c.b16 %v666, %v665
        %v1070 = vpack.c.b16 %v668, %v667
        %v1071 = vpack.c.b16 %v670, %v669
        %v1072 = vpack.c.b16 %v672, %v671
        %v1073 = vpack.c.b16 %v674, %v673
        %v1074 = vpack.c.b16 %v676, %v675
        %v1075 = vpack.c.b16 %v678, %v677
        %v1076 = vpack.c.b16 %v680, %v679
        %v1077 = vpack.c.b16 %v682, %v681
        %v1078 = vpack.c.b16 %v1009, %v919
        %v1079 = vpack.c.b16 %v1010, %v1010
        %vm1080 = vsmask.f32 2304
        %v1082 = vshrl.u32 %v1059, 16
        %v1084 = vrot.slane %v1082, 5
        %v1085 = vshll.u32 %v1059, 16
        %v1087 = vrot.slane %v1085, 6
        %v1088 = vor.u32 %v1084, %v1087
        %v1090 = vshrl.u32 %v1060, 16
        %v1092 = vrot.slane %v1090, 5
        %v1093 = vshll.u32 %v1060, 16
        %v1095 = vrot.slane %v1093, 6
        %v1096 = vor.u32 %v1092, %v1095
        %v1097 = vsel %vm1080, %v1088, %v1096
        %v1099 = vshrl.u32 %v1061, 16
        %v1101 = vrot.slane %v1099, 5
        %v1102 = vshll.u32 %v1061, 16
        %v1104 = vrot.slane %v1102, 6
        %v1105 = vor.u32 %v1101, %v1104
        %v1106 = vsel %vm1080, %v1096, %v1105
        %v1108 = vshrl.u32 %v1062, 16
        %v1110 = vrot.slane %v1108, 5
        %v1111 = vshll.u32 %v1062, 16
        %v1113 = vrot.slane %v1111, 6
        %v1114 = vor.u32 %v1110, %v1113
        %v1115 = vsel %vm1080, %v1105, %v1114
        %v1117 = vshrl.u32 %v1063, 16
        %v1119 = vrot.slane %v1117, 5
        %v1120 = vshll.u32 %v1063, 16
        %v1122 = vrot.slane %v1120, 6
        %v1123 = vor.u32 %v1119, %v1122
        %v1124 = vsel %vm1080, %v1114, %v1123
        %v1126 = vshrl.u32 %v1064, 16
        %v1128 = vrot.slane %v1126, 5
        %v1129 = vshll.u32 %v1064, 16
        %v1131 = vrot.slane %v1129, 6
        %v1132 = vor.u32 %v1128, %v1131
        %v1133 = vsel %vm1080, %v1123, %v1132
        %v1135 = vshrl.u32 %v1065, 16
        %v1137 = vrot.slane %v1135, 5
        %v1138 = vshll.u32 %v1065, 16
        %v1140 = vrot.slane %v1138, 6
        %v1141 = vor.u32 %v1137, %v1140
        %v1142 = vsel %vm1080, %v1132, %v1141
        %v1144 = vshrl.u32 %v1066, 16
        %v1146 = vrot.slane %v1144, 5
        %v1147 = vshll.u32 %v1066, 16
        %v1149 = vrot.slane %v1147, 6
        %v1150 = vor.u32 %v1146, %v1149
        %v1151 = vsel %vm1080, %v1141, %v1150
        %v1153 = vshrl.u32 %v1067, 16
        %v1155 = vrot.slane %v1153, 5
        %v1156 = vshll.u32 %v1067, 16
        %v1158 = vrot.slane %v1156, 6
        %v1159 = vor.u32 %v1155, %v1158
        %v1160 = vsel %vm1080, %v1150, %v1159
        %v1162 = vshrl.u32 %v1068, 16
        %v1164 = vrot.slane %v1162, 5
        %v1165 = vshll.u32 %v1068, 16
        %v1167 = vrot.slane %v1165, 6
        %v1168 = vor.u32 %v1164, %v1167
        %v1169 = vsel %vm1080, %v1159, %v1168
        %v1171 = vshrl.u32 %v1069, 16
        %v1173 = vrot.slane %v1171, 5
        %v1174 = vshll.u32 %v1069, 16
        %v1176 = vrot.slane %v1174, 6
        %v1177 = vor.u32 %v1173, %v1176
        %v1178 = vsel %vm1080, %v1168, %v1177
        %v1180 = vshrl.u32 %v1070, 16
        %v1182 = vrot.slane %v1180, 5
        %v1183 = vshll.u32 %v1070, 16
        %v1185 = vrot.slane %v1183, 6
        %v1186 = vor.u32 %v1182, %v1185
        %v1187 = vsel %vm1080, %v1177, %v1186
        %v1189 = vshrl.u32 %v1071, 16
        %v1191 = vrot.slane %v1189, 5
        %v1192 = vshll.u32 %v1071, 16
        %v1194 = vrot.slane %v1192, 6
        %v1195 = vor.u32 %v1191, %v1194
        %v1196 = vsel %vm1080, %v1186, %v1195
        %v1198 = vshrl.u32 %v1072, 16
        %v1200 = vrot.slane %v1198, 5
        %v1201 = vshll.u32 %v1072, 16
        %v1203 = vrot.slane %v1201, 6
        %v1204 = vor.u32 %v1200, %v1203
        %v1205 = vsel %vm1080, %v1195, %v1204
        %v1207 = vshrl.u32 %v1073, 16
        %v1209 = vrot.slane %v1207, 5
        %v1210 = vshll.u32 %v1073, 16
        %v1212 = vrot.slane %v1210, 6
        %v1213 = vor.u32 %v1209, %v1212
        %v1214 = vsel %vm1080, %v1204, %v1213
        %v1216 = vshrl.u32 %v1074, 16
        %v1218 = vrot.slane %v1216, 5
        %v1219 = vshll.u32 %v1074, 16
        %v1221 = vrot.slane %v1219, 6
        %v1222 = vor.u32 %v1218, %v1221
        %v1223 = vsel %vm1080, %v1213, %v1222
        %v1225 = vshrl.u32 %v1075, 16
        %v1227 = vrot.slane %v1225, 5
        %v1228 = vshll.u32 %v1075, 16
        %v1230 = vrot.slane %v1228, 6
        %v1231 = vor.u32 %v1227, %v1230
        %v1232 = vsel %vm1080, %v1222, %v1231
        %v1234 = vshrl.u32 %v1076, 16
        %v1236 = vrot.slane %v1234, 5
        %v1237 = vshll.u32 %v1076, 16
        %v1239 = vrot.slane %v1237, 6
        %v1240 = vor.u32 %v1236, %v1239
        %v1241 = vsel %vm1080, %v1231, %v1240
        %v1243 = vshrl.u32 %v1077, 16
        %v1245 = vrot.slane %v1243, 5
        %v1246 = vshll.u32 %v1077, 16
        %v1248 = vrot.slane %v1246, 6
        %v1249 = vor.u32 %v1245, %v1248
        %v1250 = vsel %vm1080, %v1240, %v1249
        %v1252 = vshrl.u32 %v1078, 16
        %v1254 = vrot.slane %v1252, 5
        %v1255 = vshll.u32 %v1078, 16
        %v1257 = vrot.slane %v1255, 6
        %v1258 = vor.u32 %v1254, %v1257
        %v1259 = vsel %vm1080, %v1249, %v1258
        %v1261 = vshrl.u32 %v1079, 16
        %v1263 = vrot.slane %v1261, 5
        %v1264 = vshll.u32 %v1079, 16
        %v1266 = vrot.slane %v1264, 6
        %v1267 = vor.u32 %v1263, %v1266
        %v1268 = vsel %vm1080, %v1258, %v1267
        %1269 = vrot.lane.b32.xlu0 %v1088, 12
        %v1270 = vpop.permute.xlu0 %1269
        %1271 = vrot.lane.b32.xlu0 %v1097, 12
        %v1272 = vpop.permute.xlu0 %1271
        %1273 = vrot.lane.b32.xlu0 %v1106, 12
        %v1274 = vpop.permute.xlu0 %1273
        %1275 = vrot.lane.b32.xlu0 %v1115, 12
        %v1276 = vpop.permute.xlu0 %1275
        %1277 = vrot.lane.b32.xlu0 %v1124, 12
        %v1278 = vpop.permute.xlu0 %1277
        %1279 = vrot.lane.b32.xlu0 %v1133, 12
        %v1280 = vpop.permute.xlu0 %1279
        %1281 = vrot.lane.b32.xlu0 %v1142, 12
        %v1282 = vpop.permute.xlu0 %1281
        %1283 = vrot.lane.b32.xlu0 %v1151, 12
        %v1284 = vpop.permute.xlu0 %1283
        %1285 = vrot.lane.b32.xlu0 %v1160, 12
        %v1286 = vpop.permute.xlu0 %1285
        %1287 = vrot.lane.b32.xlu0 %v1169, 12
        %v1288 = vpop.permute.xlu0 %1287
        %1289 = vrot.lane.b32.xlu0 %v1178, 12
        %v1290 = vpop.permute.xlu0 %1289
        %1291 = vrot.lane.b32.xlu0 %v1187, 12
        %v1292 = vpop.permute.xlu0 %1291
        %1293 = vrot.lane.b32.xlu0 %v1196, 12
        %v1294 = vpop.permute.xlu0 %1293
        %1295 = vrot.lane.b32.xlu0 %v1205, 12
        %v1296 = vpop.permute.xlu0 %1295
        %1297 = vrot.lane.b32.xlu0 %v1214, 12
        %v1298 = vpop.permute.xlu0 %1297
        %1299 = vrot.lane.b32.xlu0 %v1223, 12
        %v1300 = vpop.permute.xlu0 %1299
        %1301 = vrot.lane.b32.xlu0 %v1232, 12
        %v1302 = vpop.permute.xlu0 %1301
        %1303 = vrot.lane.b32.xlu0 %v1241, 12
        %v1304 = vpop.permute.xlu0 %1303
        %1305 = vrot.lane.b32.xlu0 %v1250, 12
        %v1306 = vpop.permute.xlu0 %1305
        %1307 = vrot.lane.b32.xlu0 %v1259, 12
        %v1308 = vpop.permute.xlu0 %1307
        %1309 = vrot.lane.b32.xlu0 %v1268, 12
        %v1310 = vpop.permute.xlu0 %1309
        %v1312 = vunpack.c.l.b16 %v594
        %v1313 = vpack.c.b16 %v1312, %v1010
        %vm1314 = vcmask 1041408
        %v1315 = vrot.slane %v1059, 6
        %v1316 = vrot.slane %v1060, 6
        %v1317 = vsel %vm1314, %v1315, %v1316
        %v1318 = vrot.slane %v1061, 6
        %v1319 = vsel %vm1314, %v1316, %v1318
        %v1320 = vrot.slane %v1062, 6
        %v1321 = vsel %vm1314, %v1318, %v1320
        %v1322 = vrot.slane %v1063, 6
        %v1323 = vsel %vm1314, %v1320, %v1322
        %v1324 = vrot.slane %v1064, 6
        %v1325 = vsel %vm1314, %v1322, %v1324
        %v1326 = vrot.slane %v1065, 6
        %v1327 = vsel %vm1314, %v1324, %v1326
        %v1328 = vrot.slane %v1066, 6
        %v1329 = vsel %vm1314, %v1326, %v1328
        %v1330 = vrot.slane %v1067, 6
        %v1331 = vsel %vm1314, %v1328, %v1330
        %v1332 = vrot.slane %v1068, 6
        %v1333 = vsel %vm1314, %v1330, %v1332
        %v1334 = vrot.slane %v1069, 6
        %v1335 = vsel %vm1314, %v1332, %v1334
        %v1336 = vrot.slane %v1070, 6
        %v1337 = vsel %vm1314, %v1334, %v1336
        %v1338 = vrot.slane %v1071, 6
        %v1339 = vsel %vm1314, %v1336, %v1338
        %v1340 = vrot.slane %v1072, 6
        %v1341 = vsel %vm1314, %v1338, %v1340
        %v1342 = vrot.slane %v1073, 6
        %v1343 = vsel %vm1314, %v1340, %v1342
        %v1344 = vrot.slane %v1074, 6
        %v1345 = vsel %vm1314, %v1342, %v1344
        %v1346 = vrot.slane %v1075, 6
        %v1347 = vsel %vm1314, %v1344, %v1346
        %v1348 = vrot.slane %v1076, 6
        %v1349 = vsel %vm1314, %v1346, %v1348
        %v1350 = vrot.slane %v1077, 6
        %v1351 = vsel %vm1314, %v1348, %v1350
        %v1352 = vrot.slane %v1078, 6
        %v1353 = vsel %vm1314, %v1350, %v1352
        %v1354 = vrot.slane %v1313, 6
        %v1355 = vsel %vm1314, %v1352, %v1354
        %1356 = vrot.lane.b32.xlu0 %v1315, 15
        %v1357 = vpop.permute.xlu0 %1356
        %1358 = vrot.lane.b32.xlu0 %v1317, 15
        %v1359 = vpop.permute.xlu0 %1358
        %1360 = vrot.lane.b32.xlu0 %v1319, 15
        %v1361 = vpop.permute.xlu0 %1360
        %1362 = vrot.lane.b32.xlu0 %v1321, 15
        %v1363 = vpop.permute.xlu0 %1362
        %1364 = vrot.lane.b32.xlu0 %v1323, 15
        %v1365 = vpop.permute.xlu0 %1364
        %1366 = vrot.lane.b32.xlu0 %v1325, 15
        %v1367 = vpop.permute.xlu0 %1366
        %1368 = vrot.lane.b32.xlu0 %v1327, 15
        %v1369 = vpop.permute.xlu0 %1368
        %1370 = vrot.lane.b32.xlu0 %v1329, 15
        %v1371 = vpop.permute.xlu0 %1370
        %1372 = vrot.lane.b32.xlu0 %v1331, 15
        %v1373 = vpop.permute.xlu0 %1372
        %1374 = vrot.lane.b32.xlu0 %v1333, 15
        %v1375 = vpop.permute.xlu0 %1374
        %1376 = vrot.lane.b32.xlu0 %v1335, 15
        %v1377 = vpop.permute.xlu0 %1376
        %1378 = vrot.lane.b32.xlu0 %v1337, 15
        %v1379 = vpop.permute.xlu0 %1378
        %1380 = vrot.lane.b32.xlu0 %v1339, 15
        %v1381 = vpop.permute.xlu0 %1380
        %1382 = vrot.lane.b32.xlu0 %v1341, 15
        %v1383 = vpop.permute.xlu0 %1382
        %1384 = vrot.lane.b32.xlu0 %v1343, 15
        %v1385 = vpop.permute.xlu0 %1384
        %1386 = vrot.lane.b32.xlu0 %v1345, 15
        %v1387 = vpop.permute.xlu0 %1386
        %1388 = vrot.lane.b32.xlu0 %v1347, 15
        %v1389 = vpop.permute.xlu0 %1388
        %1390 = vrot.lane.b32.xlu0 %v1349, 15
        %v1391 = vpop.permute.xlu0 %1390
        %1392 = vrot.lane.b32.xlu0 %v1351, 15
        %v1393 = vpop.permute.xlu0 %1392
        %1394 = vrot.lane.b32.xlu0 %v1353, 15
        %v1395 = vpop.permute.xlu0 %1394
        %1396 = vrot.lane.b32.xlu0 %v1355, 15
        %v1397 = vpop.permute.xlu0 %1396
        %v1401 = vunpack.c.l.b16 %v595
        %v1402 = vunpack.c.l.b16 %v596
        %v1403 = vunpack.c.l.b16 %v597
        %v1404 = vpack.c.b16 %v1401, %v1010
        %v1405 = vpack.c.b16 %v1403, %v1402
        %v1406 = vrot.slane %v1404, 6
        %v1407 = vsel %vm1314, %v1352, %v1406
        %v1408 = vrot.slane %v1405, 6
        %v1409 = vsel %vm1314, %v1406, %v1408
        %1410 = vrot.lane.b32.xlu0 %v1316, 18
        %v1411 = vpop.permute.xlu0 %1410
        %1412 = vrot.lane.b32.xlu0 %v1319, 18
        %v1413 = vpop.permute.xlu0 %1412
        %1414 = vrot.lane.b32.xlu0 %v1321, 18
        %v1415 = vpop.permute.xlu0 %1414
        %1416 = vrot.lane.b32.xlu0 %v1323, 18
        %v1417 = vpop.permute.xlu0 %1416
        %1418 = vrot.lane.b32.xlu0 %v1325, 18
        %v1419 = vpop.permute.xlu0 %1418
        %1420 = vrot.lane.b32.xlu0 %v1327, 18
        %v1421 = vpop.permute.xlu0 %1420
        %1422 = vrot.lane.b32.xlu0 %v1329, 18
        %v1423 = vpop.permute.xlu0 %1422
        %1424 = vrot.lane.b32.xlu0 %v1331, 18
        %v1425 = vpop.permute.xlu0 %1424
        %1426 = vrot.lane.b32.xlu0 %v1333, 18
        %v1427 = vpop.permute.xlu0 %1426
        %1428 = vrot.lane.b32.xlu0 %v1335, 18
        %v1429 = vpop.permute.xlu0 %1428
        %1430 = vrot.lane.b32.xlu0 %v1337, 18
        %v1431 = vpop.permute.xlu0 %1430
        %1432 = vrot.lane.b32.xlu0 %v1339, 18
        %v1433 = vpop.permute.xlu0 %1432
        %1434 = vrot.lane.b32.xlu0 %v1341, 18
        %v1435 = vpop.permute.xlu0 %1434
        %1436 = vrot.lane.b32.xlu0 %v1343, 18
        %v1437 = vpop.permute.xlu0 %1436
        %1438 = vrot.lane.b32.xlu0 %v1345, 18
        %v1439 = vpop.permute.xlu0 %1438
        %1440 = vrot.lane.b32.xlu0 %v1347, 18
        %v1441 = vpop.permute.xlu0 %1440
        %1442 = vrot.lane.b32.xlu0 %v1349, 18
        %v1443 = vpop.permute.xlu0 %1442
        %1444 = vrot.lane.b32.xlu0 %v1351, 18
        %v1445 = vpop.permute.xlu0 %1444
        %1446 = vrot.lane.b32.xlu0 %v1353, 18
        %v1447 = vpop.permute.xlu0 %1446
        %1448 = vrot.lane.b32.xlu0 %v1407, 18
        %v1449 = vpop.permute.xlu0 %1448
        %1450 = vrot.lane.b32.xlu0 %v1409, 18
        %v1451 = vpop.permute.xlu0 %1450
        %v1453 = vunpack.c.l.b16 %v598
        %v1454 = vpack.c.b16 %v648, %v1453
        %vm1455 = vsmask.f32 1280
        %v1457 = vshrl.u32 %v1454, 16
        %v1459 = vrot.slane %v1457, 6
        %v1460 = vshll.u32 %v1454, 16
        %v1462 = vrot.slane %v1460, 7
        %v1463 = vor.u32 %v1459, %v1462
        %v1464 = vrot.slane %v1099, 6
        %v1465 = vrot.slane %v1102, 7
        %v1466 = vor.u32 %v1464, %v1465
        %v1467 = vsel %vm1455, %v1463, %v1466
        %v1468 = vrot.slane %v1108, 6
        %v1469 = vrot.slane %v1111, 7
        %v1470 = vor.u32 %v1468, %v1469
        %v1471 = vsel %vm1455, %v1466, %v1470
        %v1472 = vrot.slane %v1117, 6
        %v1473 = vrot.slane %v1120, 7
        %v1474 = vor.u32 %v1472, %v1473
        %v1475 = vsel %vm1455, %v1470, %v1474
        %v1476 = vrot.slane %v1126, 6
        %v1477 = vrot.slane %v1129, 7
        %v1478 = vor.u32 %v1476, %v1477
        %v1479 = vsel %vm1455, %v1474, %v1478
        %v1480 = vrot.slane %v1135, 6
        %v1481 = vrot.slane %v1138, 7
        %v1482 = vor.u32 %v1480, %v1481
        %v1483 = vsel %vm1455, %v1478, %v1482
        %v1484 = vrot.slane %v1144, 6
        %v1485 = vrot.slane %v1147, 7
        %v1486 = vor.u32 %v1484, %v1485
        %v1487 = vsel %vm1455, %v1482, %v1486
        %v1488 = vrot.slane %v1153, 6
        %v1489 = vrot.slane %v1156, 7
        %v1490 = vor.u32 %v1488, %v1489
        %v1491 = vsel %vm1455, %v1486, %v1490
        %v1492 = vrot.slane %v1162, 6
        %v1493 = vrot.slane %v1165, 7
        %v1494 = vor.u32 %v1492, %v1493
        %v1495 = vsel %vm1455, %v1490, %v1494
        %v1496 = vrot.slane %v1171, 6
        %v1497 = vrot.slane %v1174, 7
        %v1498 = vor.u32 %v1496, %v1497
        %v1499 = vsel %vm1455, %v1494, %v1498
        %v1500 = vrot.slane %v1180, 6
        %v1501 = vrot.slane %v1183, 7
        %v1502 = vor.u32 %v1500, %v1501
        %v1503 = vsel %vm1455, %v1498, %v1502
        %v1504 = vrot.slane %v1189, 6
        %v1505 = vrot.slane %v1192, 7
        %v1506 = vor.u32 %v1504, %v1505
        %v1507 = vsel %vm1455, %v1502, %v1506
        %v1508 = vrot.slane %v1198, 6
        %v1509 = vrot.slane %v1201, 7
        %v1510 = vor.u32 %v1508, %v1509
        %v1511 = vsel %vm1455, %v1506, %v1510
        %v1512 = vrot.slane %v1207, 6
        %v1513 = vrot.slane %v1210, 7
        %v1514 = vor.u32 %v1512, %v1513
        %v1515 = vsel %vm1455, %v1510, %v1514
        %v1516 = vrot.slane %v1216, 6
        %v1517 = vrot.slane %v1219, 7
        %v1518 = vor.u32 %v1516, %v1517
        %v1519 = vsel %vm1455, %v1514, %v1518
        %v1520 = vrot.slane %v1225, 6
        %v1521 = vrot.slane %v1228, 7
        %v1522 = vor.u32 %v1520, %v1521
        %v1523 = vsel %vm1455, %v1518, %v1522
        %v1524 = vrot.slane %v1234, 6
        %v1525 = vrot.slane %v1237, 7
        %v1526 = vor.u32 %v1524, %v1525
        %v1527 = vsel %vm1455, %v1522, %v1526
        %v1528 = vrot.slane %v1243, 6
        %v1529 = vrot.slane %v1246, 7
        %v1530 = vor.u32 %v1528, %v1529
        %v1531 = vsel %vm1455, %v1526, %v1530
        %v1532 = vrot.slane %v1252, 6
        %v1533 = vrot.slane %v1255, 7
        %v1534 = vor.u32 %v1532, %v1533
        %v1535 = vsel %vm1455, %v1530, %v1534
        %v1537 = vshrl.u32 %v1404, 16
        %v1539 = vrot.slane %v1537, 6
        %v1540 = vshll.u32 %v1404, 16
        %v1542 = vrot.slane %v1540, 7
        %v1543 = vor.u32 %v1539, %v1542
        %v1544 = vsel %vm1455, %v1534, %v1543
        %v1546 = vshrl.u32 %v1405, 16
        %v1548 = vrot.slane %v1546, 6
        %v1549 = vshll.u32 %v1405, 16
        %v1551 = vrot.slane %v1549, 7
        %v1552 = vor.u32 %v1548, %v1551
        %v1553 = vsel %vm1455, %v1543, %v1552
        %1554 = vrot.lane.b32.xlu0 %v1463, 21
        %v1555 = vpop.permute.xlu0 %1554
        %1556 = vrot.lane.b32.xlu0 %v1467, 21
        %v1557 = vpop.permute.xlu0 %1556
        %1558 = vrot.lane.b32.xlu0 %v1471, 21
        %v1559 = vpop.permute.xlu0 %1558
        %1560 = vrot.lane.b32.xlu0 %v1475, 21
        %v1561 = vpop.permute.xlu0 %1560
        %1562 = vrot.lane.b32.xlu0 %v1479, 21
        %v1563 = vpop.permute.xlu0 %1562
        %1564 = vrot.lane.b32.xlu0 %v1483, 21
        %v1565 = vpop.permute.xlu0 %1564
        %1566 = vrot.lane.b32.xlu0 %v1487, 21
        %v1567 = vpop.permute.xlu0 %1566
        %1568 = vrot.lane.b32.xlu0 %v1491, 21
        %v1569 = vpop.permute.xlu0 %1568
        %1570 = vrot.lane.b32.xlu0 %v1495, 21
        %v1571 = vpop.permute.xlu0 %1570
        %1572 = vrot.lane.b32.xlu0 %v1499, 21
        %v1573 = vpop.permute.xlu0 %1572
        %1574 = vrot.lane.b32.xlu0 %v1503, 21
        %v1575 = vpop.permute.xlu0 %1574
        %1576 = vrot.lane.b32.xlu0 %v1507, 21
        %v1577 = vpop.permute.xlu0 %1576
        %1578 = vrot.lane.b32.xlu0 %v1511, 21
        %v1579 = vpop.permute.xlu0 %1578
        %1580 = vrot.lane.b32.xlu0 %v1515, 21
        %v1581 = vpop.permute.xlu0 %1580
        %1582 = vrot.lane.b32.xlu0 %v1519, 21
        %v1583 = vpop.permute.xlu0 %1582
        %1584 = vrot.lane.b32.xlu0 %v1523, 21
        %v1585 = vpop.permute.xlu0 %1584
        %1586 = vrot.lane.b32.xlu0 %v1527, 21
        %v1587 = vpop.permute.xlu0 %1586
        %1588 = vrot.lane.b32.xlu0 %v1531, 21
        %v1589 = vpop.permute.xlu0 %1588
        %1590 = vrot.lane.b32.xlu0 %v1535, 21
        %v1591 = vpop.permute.xlu0 %1590
        %1592 = vrot.lane.b32.xlu0 %v1544, 21
        %v1593 = vpop.permute.xlu0 %1592
        %1594 = vrot.lane.b32.xlu0 %v1553, 21
        %v1595 = vpop.permute.xlu0 %1594
        %v1597 = vunpack.c.l.b16 %v599
        %v1598 = vpack.c.b16 %v1597, %v1402
        %vm1599 = vcmask 1040384
        %v1600 = vrot.slane %v1454, 7
        %v1601 = vrot.slane %v1061, 7
        %v1602 = vsel %vm1599, %v1600, %v1601
        %v1603 = vrot.slane %v1062, 7
        %v1604 = vsel %vm1599, %v1601, %v1603
        %v1605 = vrot.slane %v1063, 7
        %v1606 = vsel %vm1599, %v1603, %v1605
        %v1607 = vrot.slane %v1064, 7
        %v1608 = vsel %vm1599, %v1605, %v1607
        %v1609 = vrot.slane %v1065, 7
        %v1610 = vsel %vm1599, %v1607, %v1609
        %v1611 = vrot.slane %v1066, 7
        %v1612 = vsel %vm1599, %v1609, %v1611
        %v1613 = vrot.slane %v1067, 7
        %v1614 = vsel %vm1599, %v1611, %v1613
        %v1615 = vrot.slane %v1068, 7
        %v1616 = vsel %vm1599, %v1613, %v1615
        %v1617 = vrot.slane %v1069, 7
        %v1618 = vsel %vm1599, %v1615, %v1617
        %v1619 = vrot.slane %v1070, 7
        %v1620 = vsel %vm1599, %v1617, %v1619
        %v1621 = vrot.slane %v1071, 7
        %v1622 = vsel %vm1599, %v1619, %v1621
        %v1623 = vrot.slane %v1072, 7
        %v1624 = vsel %vm1599, %v1621, %v1623
        %v1625 = vrot.slane %v1073, 7
        %v1626 = vsel %vm1599, %v1623, %v1625
        %v1627 = vrot.slane %v1074, 7
        %v1628 = vsel %vm1599, %v1625, %v1627
        %v1629 = vrot.slane %v1075, 7
        %v1630 = vsel %vm1599, %v1627, %v1629
        %v1631 = vrot.slane %v1076, 7
        %v1632 = vsel %vm1599, %v1629, %v1631
        %v1633 = vrot.slane %v1077, 7
        %v1634 = vsel %vm1599, %v1631, %v1633
        %v1635 = vrot.slane %v1078, 7
        %v1636 = vsel %vm1599, %v1633, %v1635
        %v1637 = vrot.slane %v1404, 7
        %v1638 = vsel %vm1599, %v1635, %v1637
        %v1639 = vrot.slane %v1598, 7
        %v1640 = vsel %vm1599, %v1637, %v1639
        %1641 = vrot.lane.b32.xlu0 %v1600, 24
        %v1642 = vpop.permute.xlu0 %1641
        %1643 = vrot.lane.b32.xlu0 %v1602, 24
        %v1644 = vpop.permute.xlu0 %1643
        %1645 = vrot.lane.b32.xlu0 %v1604, 24
        %v1646 = vpop.permute.xlu0 %1645
        %1647 = vrot.lane.b32.xlu0 %v1606, 24
        %v1648 = vpop.permute.xlu0 %1647
        %1649 = vrot.lane.b32.xlu0 %v1608, 24
        %v1650 = vpop.permute.xlu0 %1649
        %1651 = vrot.lane.b32.xlu0 %v1610, 24
        %v1652 = vpop.permute.xlu0 %1651
        %1653 = vrot.lane.b32.xlu0 %v1612, 24
        %v1654 = vpop.permute.xlu0 %1653
        %1655 = vrot.lane.b32.xlu0 %v1614, 24
        %v1656 = vpop.permute.xlu0 %1655
        %1657 = vrot.lane.b32.xlu0 %v1616, 24
        %v1658 = vpop.permute.xlu0 %1657
        %1659 = vrot.lane.b32.xlu0 %v1618, 24
        %v1660 = vpop.permute.xlu0 %1659
        %1661 = vrot.lane.b32.xlu0 %v1620, 24
        %v1662 = vpop.permute.xlu0 %1661
        %1663 = vrot.lane.b32.xlu0 %v1622, 24
        %v1664 = vpop.permute.xlu0 %1663
        %1665 = vrot.lane.b32.xlu0 %v1624, 24
        %v1666 = vpop.permute.xlu0 %1665
        %1667 = vrot.lane.b32.xlu0 %v1626, 24
        %v1668 = vpop.permute.xlu0 %1667
        %1669 = vrot.lane.b32.xlu0 %v1628, 24
        %v1670 = vpop.permute.xlu0 %1669
        %1671 = vrot.lane.b32.xlu0 %v1630, 24
        %v1672 = vpop.permute.xlu0 %1671
        %1673 = vrot.lane.b32.xlu0 %v1632, 24
        %v1674 = vpop.permute.xlu0 %1673
        %1675 = vrot.lane.b32.xlu0 %v1634, 24
        %v1676 = vpop.permute.xlu0 %1675
        %1677 = vrot.lane.b32.xlu0 %v1636, 24
        %v1678 = vpop.permute.xlu0 %1677
        %1679 = vrot.lane.b32.xlu0 %v1638, 24
        %v1680 = vpop.permute.xlu0 %1679
        %1681 = vrot.lane.b32.xlu0 %v1640, 24
        %v1682 = vpop.permute.xlu0 %1681
        %vm1683 = vcmask 23552
        %v1686 = vsel %vm1683, %v684, %v877
        %v1688 = vsel %vm1683, %v685, %v879
        %v1690 = vsel %vm1683, %v686, %v881
        %v1692 = vsel %vm1683, %v687, %v883
        %v1694 = vsel %vm1683, %v688, %v885
        %v1696 = vsel %vm1683, %v689, %v887
        %v1698 = vsel %vm1683, %v690, %v889
        %v1700 = vsel %vm1683, %v691, %v891
        %v1702 = vsel %vm1683, %v692, %v893
        %v1704 = vsel %vm1683, %v693, %v895
        %v1706 = vsel %vm1683, %v694, %v897
        %v1708 = vsel %vm1683, %v695, %v899
        %v1710 = vsel %vm1683, %v696, %v901
        %v1712 = vsel %vm1683, %v697, %v903
        %v1714 = vsel %vm1683, %v698, %v905
        %v1716 = vsel %vm1683, %v699, %v907
        %v1718 = vsel %vm1683, %v700, %v909
        %v1720 = vsel %vm1683, %v701, %v911
        %v1722 = vsel %vm1683, %v702, %v913
        %v1724 = vsel %vm1683, %v703, %v915
        %v1726 = vsel %vm1683, %v704, %v917
        %vm1727 = vcmask 48128
        %v1729 = vsel %vm1727, %v1686, %v964
        %v1731 = vsel %vm1727, %v1688, %v966
        %v1733 = vsel %vm1727, %v1690, %v968
        %v1735 = vsel %vm1727, %v1692, %v970
        %v1737 = vsel %vm1727, %v1694, %v972
        %v1739 = vsel %vm1727, %v1696, %v974
        %v1741 = vsel %vm1727, %v1698, %v976
        %v1743 = vsel %vm1727, %v1700, %v978
        %v1745 = vsel %vm1727, %v1702, %v980
        %v1747 = vsel %vm1727, %v1704, %v982
        %v1749 = vsel %vm1727, %v1706, %v984
        %v1751 = vsel %vm1727, %v1708, %v986
        %v1753 = vsel %vm1727, %v1710, %v988
        %v1755 = vsel %vm1727, %v1712, %v990
        %v1757 = vsel %vm1727, %v1714, %v992
        %v1759 = vsel %vm1727, %v1716, %v994
        %v1761 = vsel %vm1727, %v1718, %v996
        %v1763 = vsel %vm1727, %v1720, %v998
        %v1765 = vsel %vm1727, %v1722, %v1000
        %v1767 = vsel %vm1727, %v1724, %v1002
        %v1769 = vsel %vm1727, %v1726, %v1004
        %vm1770 = vcmask 72704
        %v1772 = vsel %vm1770, %v1729, %v1018
        %v1774 = vsel %vm1770, %v1731, %v1020
        %v1776 = vsel %vm1770, %v1733, %v1022
        %v1778 = vsel %vm1770, %v1735, %v1024
        %v1780 = vsel %vm1770, %v1737, %v1026
        %v1782 = vsel %vm1770, %v1739, %v1028
        %v1784 = vsel %vm1770, %v1741, %v1030
        %v1786 = vsel %vm1770, %v1743, %v1032
        %v1788 = vsel %vm1770, %v1745, %v1034
        %v1790 = vsel %vm1770, %v1747, %v1036
        %v1792 = vsel %vm1770, %v1749, %v1038
        %v1794 = vsel %vm1770, %v1751, %v1040
        %v1796 = vsel %vm1770, %v1753, %v1042
        %v1798 = vsel %vm1770, %v1755, %v1044
        %v1800 = vsel %vm1770, %v1757, %v1046
        %v1802 = vsel %vm1770, %v1759, %v1048
        %v1804 = vsel %vm1770, %v1761, %v1050
        %v1806 = vsel %vm1770, %v1763, %v1052
        %v1808 = vsel %vm1770, %v1765, %v1054
        %v1810 = vsel %vm1770, %v1767, %v1056
        %v1812 = vsel %vm1770, %v1769, %v1058
        %vm1813 = vcmask 97280
        %v1815 = vsel %vm1813, %v1772, %v1270
        %v1817 = vsel %vm1813, %v1774, %v1272
        %v1819 = vsel %vm1813, %v1776, %v1274
        %v1821 = vsel %vm1813, %v1778, %v1276
        %v1823 = vsel %vm1813, %v1780, %v1278
        %v1825 = vsel %vm1813, %v1782, %v1280
        %v1827 = vsel %vm1813, %v1784, %v1282
        %v1829 = vsel %vm1813, %v1786, %v1284
        %v1831 = vsel %vm1813, %v1788, %v1286
        %v1833 = vsel %vm1813, %v1790, %v1288
        %v1835 = vsel %vm1813, %v1792, %v1290
        %v1837 = vsel %vm1813, %v1794, %v1292
        %v1839 = vsel %vm1813, %v1796, %v1294
        %v1841 = vsel %vm1813, %v1798, %v1296
        %v1843 = vsel %vm1813, %v1800, %v1298
        %v1845 = vsel %vm1813, %v1802, %v1300
        %v1847 = vsel %vm1813, %v1804, %v1302
        %v1849 = vsel %vm1813, %v1806, %v1304
        %v1851 = vsel %vm1813, %v1808, %v1306
        %v1853 = vsel %vm1813, %v1810, %v1308
        %v1855 = vsel %vm1813, %v1812, %v1310
        %vm1856 = vcmask 121856
        %v1858 = vsel %vm1856, %v1815, %v1357
        %v1860 = vsel %vm1856, %v1817, %v1359
        %v1862 = vsel %vm1856, %v1819, %v1361
        %v1864 = vsel %vm1856, %v1821, %v1363
        %v1866 = vsel %vm1856, %v1823, %v1365
        %v1868 = vsel %vm1856, %v1825, %v1367
        %v1870 = vsel %vm1856, %v1827, %v1369
        %v1872 = vsel %vm1856, %v1829, %v1371
        %v1874 = vsel %vm1856, %v1831, %v1373
        %v1876 = vsel %vm1856, %v1833, %v1375
        %v1878 = vsel %vm1856, %v1835, %v1377
        %v1880 = vsel %vm1856, %v1837, %v1379
        %v1882 = vsel %vm1856, %v1839, %v1381
        %v1884 = vsel %vm1856, %v1841, %v1383
        %v1886 = vsel %vm1856, %v1843, %v1385
        %v1888 = vsel %vm1856, %v1845, %v1387
        %v1890 = vsel %vm1856, %v1847, %v1389
        %v1892 = vsel %vm1856, %v1849, %v1391
        %v1894 = vsel %vm1856, %v1851, %v1393
        %v1896 = vsel %vm1856, %v1853, %v1395
        %v1898 = vsel %vm1856, %v1855, %v1397
        %vm1899 = vcmask 146432
        %v1901 = vsel %vm1899, %v1858, %v1411
        %v1903 = vsel %vm1899, %v1860, %v1413
        %v1905 = vsel %vm1899, %v1862, %v1415
        %v1907 = vsel %vm1899, %v1864, %v1417
        %v1909 = vsel %vm1899, %v1866, %v1419
        %v1911 = vsel %vm1899, %v1868, %v1421
        %v1913 = vsel %vm1899, %v1870, %v1423
        %v1915 = vsel %vm1899, %v1872, %v1425
        %v1917 = vsel %vm1899, %v1874, %v1427
        %v1919 = vsel %vm1899, %v1876, %v1429
        %v1921 = vsel %vm1899, %v1878, %v1431
        %v1923 = vsel %vm1899, %v1880, %v1433
        %v1925 = vsel %vm1899, %v1882, %v1435
        %v1927 = vsel %vm1899, %v1884, %v1437
        %v1929 = vsel %vm1899, %v1886, %v1439
        %v1931 = vsel %vm1899, %v1888, %v1441
        %v1933 = vsel %vm1899, %v1890, %v1443
        %v1935 = vsel %vm1899, %v1892, %v1445
        %v1937 = vsel %vm1899, %v1894, %v1447
        %v1939 = vsel %vm1899, %v1896, %v1449
        %v1941 = vsel %vm1899, %v1898, %v1451
        %vm1942 = vcmask 171008
        %v1944 = vsel %vm1942, %v1901, %v1555
        %v1946 = vsel %vm1942, %v1903, %v1557
        %v1948 = vsel %vm1942, %v1905, %v1559
        %v1950 = vsel %vm1942, %v1907, %v1561
        %v1952 = vsel %vm1942, %v1909, %v1563
        %v1954 = vsel %vm1942, %v1911, %v1565
        %v1956 = vsel %vm1942, %v1913, %v1567
        %v1958 = vsel %vm1942, %v1915, %v1569
        %v1960 = vsel %vm1942, %v1917, %v1571
        %v1962 = vsel %vm1942, %v1919, %v1573
        %v1964 = vsel %vm1942, %v1921, %v1575
        %v1966 = vsel %vm1942, %v1923, %v1577
        %v1968 = vsel %vm1942, %v1925, %v1579
        %v1970 = vsel %vm1942, %v1927, %v1581
        %v1972 = vsel %vm1942, %v1929, %v1583
        %v1974 = vsel %vm1942, %v1931, %v1585
        %v1976 = vsel %vm1942, %v1933, %v1587
        %v1978 = vsel %vm1942, %v1935, %v1589
        %v1980 = vsel %vm1942, %v1937, %v1591
        %v1982 = vsel %vm1942, %v1939, %v1593
        %v1984 = vsel %vm1942, %v1941, %v1595
        %vm1985 = vcmask 195584
        %v1987 = vsel %vm1985, %v1944, %v1642
        %v1989 = vsel %vm1985, %v1946, %v1644
        %v1991 = vsel %vm1985, %v1948, %v1646
        %v1993 = vsel %vm1985, %v1950, %v1648
        %v1995 = vsel %vm1985, %v1952, %v1650
        %v1997 = vsel %vm1985, %v1954, %v1652
        %v1999 = vsel %vm1985, %v1956, %v1654
        %v2001 = vsel %vm1985, %v1958, %v1656
        %v2003 = vsel %vm1985, %v1960, %v1658
        %v2005 = vsel %vm1985, %v1962, %v1660
        %v2007 = vsel %vm1985, %v1964, %v1662
        %v2009 = vsel %vm1985, %v1966, %v1664
        %v2011 = vsel %vm1985, %v1968, %v1666
        %v2013 = vsel %vm1985, %v1970, %v1668
        %v2015 = vsel %vm1985, %v1972, %v1670
        %v2017 = vsel %vm1985, %v1974, %v1672
        %v2019 = vsel %vm1985, %v1976, %v1674
        %v2021 = vsel %vm1985, %v1978, %v1676
        %v2023 = vsel %vm1985, %v1980, %v1678
        %v2025 = vsel %vm1985, %v1982, %v1680
        %v2027 = vsel %vm1985, %v1984, %v1682
        %vm2028 = vcmask 220160
        %v2030 = vsel %vm2028, %v1987, 0
        %v2031 = vsel %vm2028, %v1989, 0
        %v2032 = vsel %vm2028, %v1991, 0
        %v2033 = vsel %vm2028, %v1993, 0
        %v2034 = vsel %vm2028, %v1995, 0
        %v2035 = vsel %vm2028, %v1997, 0
        %v2036 = vsel %vm2028, %v1999, 0
        %v2037 = vsel %vm2028, %v2001, 0
        %v2038 = vsel %vm2028, %v2003, 0
        %v2039 = vsel %vm2028, %v2005, 0
        %v2040 = vsel %vm2028, %v2007, 0
        %v2041 = vsel %vm2028, %v2009, 0
        %v2042 = vsel %vm2028, %v2011, 0
        %v2043 = vsel %vm2028, %v2013, 0
        %v2044 = vsel %vm2028, %v2015, 0
        %v2045 = vsel %vm2028, %v2017, 0
        %v2046 = vsel %vm2028, %v2019, 0
        %v2047 = vsel %vm2028, %v2021, 0
        %v2048 = vsel %vm2028, %v2023, 0
        %v2049 = vsel %vm2028, %v2025, 0
        %v2050 = vsel %vm2028, %v2027, 0
        %v2051 = vld [vmem:[#allocation2] sm:$0xf]
        %v2052 = vld [vmem:[#allocation2 + $0x4] sm:$0xf]
        %v2053 = vld [vmem:[#allocation2 + $0x8] sm:$0xf]
        %v2054 = vld [vmem:[#allocation2 + $0xc] sm:$0xf]
        %v2055 = vld [vmem:[#allocation4] sm:$0x1]
        %v2057 = vlaneseq
        %v2058 = vshrl.u32 %v2057, 7
        %v2059 = vsub.s32 0, %v2058
        %v2060 = vrot.slane %v2055, %v2059
        %vm2062 = vsmask.f32 5376
        %v2063 = vshrl.u32 %v2030, 16
        %v2065 = vrot.slane %v2063, 2
        %v2066 = vshll.u32 %v2030, 16
        %v2068 = vrot.slane %v2066, 3
        %v2069 = vor.u32 %v2065, %v2068
        %v2070 = vshrl.u32 %v2031, 16
        %v2072 = vrot.slane %v2070, 2
        %v2073 = vshll.u32 %v2031, 16
        %v2075 = vrot.slane %v2073, 3
        %v2076 = vor.u32 %v2072, %v2075
        %v2077 = vsel %vm2062, %v2069, %v2076
        %v2078 = vshrl.u32 %v2032, 16
        %v2080 = vrot.slane %v2078, 2
        %v2081 = vshll.u32 %v2032, 16
        %v2083 = vrot.slane %v2081, 3
        %v2084 = vor.u32 %v2080, %v2083
        %v2085 = vsel %vm2062, %v2076, %v2084
        %v2086 = vshrl.u32 %v2033, 16
        %v2088 = vrot.slane %v2086, 2
        %v2089 = vshll.u32 %v2033, 16
        %v2091 = vrot.slane %v2089, 3
        %v2092 = vor.u32 %v2088, %v2091
        %v2093 = vsel %vm2062, %v2084, %v2092
        %v2094 = vshrl.u32 %v2034, 16
        %v2096 = vrot.slane %v2094, 2
        %v2097 = vshll.u32 %v2034, 16
        %v2099 = vrot.slane %v2097, 3
        %v2100 = vor.u32 %v2096, %v2099
        %v2101 = vsel %vm2062, %v2092, %v2100
        %v2102 = vshrl.u32 %v2035, 16
        %v2104 = vrot.slane %v2102, 2
        %v2105 = vshll.u32 %v2035, 16
        %v2107 = vrot.slane %v2105, 3
        %v2108 = vor.u32 %v2104, %v2107
        %v2109 = vsel %vm2062, %v2100, %v2108
        %v2110 = vshrl.u32 %v2036, 16
        %v2112 = vrot.slane %v2110, 2
        %v2113 = vshll.u32 %v2036, 16
        %v2115 = vrot.slane %v2113, 3
        %v2116 = vor.u32 %v2112, %v2115
        %v2117 = vsel %vm2062, %v2108, %v2116
        %v2118 = vshrl.u32 %v2037, 16
        %v2120 = vrot.slane %v2118, 2
        %v2121 = vshll.u32 %v2037, 16
        %v2123 = vrot.slane %v2121, 3
        %v2124 = vor.u32 %v2120, %v2123
        %v2125 = vsel %vm2062, %v2116, %v2124
        %v2126 = vshrl.u32 %v2038, 16
        %v2128 = vrot.slane %v2126, 2
        %v2129 = vshll.u32 %v2038, 16
        %v2131 = vrot.slane %v2129, 3
        %v2132 = vor.u32 %v2128, %v2131
        %v2133 = vsel %vm2062, %v2124, %v2132
        %v2134 = vshrl.u32 %v2039, 16
        %v2136 = vrot.slane %v2134, 2
        %v2137 = vshll.u32 %v2039, 16
        %v2139 = vrot.slane %v2137, 3
        %v2140 = vor.u32 %v2136, %v2139
        %v2141 = vsel %vm2062, %v2132, %v2140
        %v2142 = vshrl.u32 %v2040, 16
        %v2144 = vrot.slane %v2142, 2
        %v2145 = vshll.u32 %v2040, 16
        %v2147 = vrot.slane %v2145, 3
        %v2148 = vor.u32 %v2144, %v2147
        %v2149 = vsel %vm2062, %v2140, %v2148
        %v2150 = vshrl.u32 %v2041, 16
        %v2152 = vrot.slane %v2150, 2
        %v2153 = vshll.u32 %v2041, 16
        %v2155 = vrot.slane %v2153, 3
        %v2156 = vor.u32 %v2152, %v2155
        %v2157 = vsel %vm2062, %v2148, %v2156
        %v2158 = vshrl.u32 %v2042, 16
        %v2160 = vrot.slane %v2158, 2
        %v2161 = vshll.u32 %v2042, 16
        %v2163 = vrot.slane %v2161, 3
        %v2164 = vor.u32 %v2160, %v2163
        %v2165 = vsel %vm2062, %v2156, %v2164
        %v2166 = vshrl.u32 %v2043, 16
        %v2168 = vrot.slane %v2166, 2
        %v2169 = vshll.u32 %v2043, 16
        %v2171 = vrot.slane %v2169, 3
        %v2172 = vor.u32 %v2168, %v2171
        %v2173 = vsel %vm2062, %v2164, %v2172
        %v2174 = vshrl.u32 %v2044, 16
        %v2176 = vrot.slane %v2174, 2
        %v2177 = vshll.u32 %v2044, 16
        %v2179 = vrot.slane %v2177, 3
        %v2180 = vor.u32 %v2176, %v2179
        %v2181 = vsel %vm2062, %v2172, %v2180
        %v2182 = vshrl.u32 %v2045, 16
        %v2184 = vrot.slane %v2182, 2
        %v2185 = vshll.u32 %v2045, 16
        %v2187 = vrot.slane %v2185, 3
        %v2188 = vor.u32 %v2184, %v2187
        %v2189 = vsel %vm2062, %v2180, %v2188
        %v2190 = vshrl.u32 %v2046, 16
        %v2192 = vrot.slane %v2190, 2
        %v2193 = vshll.u32 %v2046, 16
        %v2195 = vrot.slane %v2193, 3
        %v2196 = vor.u32 %v2192, %v2195
        %v2197 = vsel %vm2062, %v2188, %v2196
        %v2198 = vshrl.u32 %v2047, 16
        %v2200 = vrot.slane %v2198, 2
        %v2201 = vshll.u32 %v2047, 16
        %v2203 = vrot.slane %v2201, 3
        %v2204 = vor.u32 %v2200, %v2203
        %v2205 = vsel %vm2062, %v2196, %v2204
        %v2206 = vshrl.u32 %v2048, 16
        %v2208 = vrot.slane %v2206, 2
        %v2209 = vshll.u32 %v2048, 16
        %v2211 = vrot.slane %v2209, 3
        %v2212 = vor.u32 %v2208, %v2211
        %v2213 = vsel %vm2062, %v2204, %v2212
        %v2214 = vshrl.u32 %v2049, 16
        %v2216 = vrot.slane %v2214, 2
        %v2217 = vshll.u32 %v2049, 16
        %v2219 = vrot.slane %v2217, 3
        %v2220 = vor.u32 %v2216, %v2219
        %v2221 = vsel %vm2062, %v2212, %v2220
        %v2222 = vshrl.u32 %v2050, 16
        %v2224 = vrot.slane %v2222, 2
        %v2225 = vshll.u32 %v2050, 16
        %v2227 = vrot.slane %v2225, 3
        %v2228 = vor.u32 %v2224, %v2227
        %v2229 = vsel %vm2062, %v2220, %v2228
        %v2234 = vunpack.c.l.b16 %v2051
        %v2235 = vunpack.c.l.b16 %v2052
        %v2236 = vunpack.c.l.b16 %v2053
        %v2237 = vunpack.c.l.b16 %v2054
        %v2238 = vpack.c.b16 %v2235, %v2234
        %v2239 = vpack.c.b16 %v2237, %v2236
        %vm2242 = vcmask 261120
        %v2244 = vsel %vm2242, %v2077, 0
        %v2247 = vsel %vm2242, %v2085, 0
        %v2250 = vsel %vm2242, %v2093, 0
        %v2253 = vsel %vm2242, %v2101, 0
        %v2256 = vsel %vm2242, %v2109, 0
        %v2259 = vsel %vm2242, %v2117, 0
        %v2262 = vsel %vm2242, %v2125, 0
        %v2265 = vsel %vm2242, %v2133, 0
        %v2268 = vsel %vm2242, %v2141, 0
        %v2271 = vsel %vm2242, %v2149, 0
        %v2274 = vsel %vm2242, %v2157, 0
        %v2277 = vsel %vm2242, %v2165, 0
        %v2280 = vsel %vm2242, %v2173, 0
        %v2283 = vsel %vm2242, %v2181, 0
        %v2286 = vsel %vm2242, %v2189, 0
        %v2289 = vsel %vm2242, %v2197, 0
        %v2292 = vsel %vm2242, %v2205, 0
        %v2295 = vsel %vm2242, %v2213, 0
        %v2298 = vsel %vm2242, %v2221, 0
        %v2301 = vsel %vm2242, %v2229, 0
        %v2304 = vsel %vm2242, %v2228, 0
        %2306 = vmatprep.subr.bf16.mxu0 0
        %2307 = vmatpush1.bf16.msra.mxu0 0
        %2308 = vmatprep.subr.bf16.mxu0 0
        %2309 = vmatpush1.bf16.msra.mxu0 0
        %2310 = vmatprep.subr.bf16.mxu0 0
        %2311 = vmatpush1.bf16.msra.mxu0 0
        %2312 = vmatprep.subr.bf16.mxu0 0
        %2313 = vmatpush1.bf16.msra.mxu0 0
        %2314 = vmatprep.subr.bf16.mxu0 0
        %2315 = vmatpush1.bf16.msra.mxu0 0
        %2316 = vmatprep.subr.bf16.mxu0 0
        %2317 = vmatpush1.bf16.msra.mxu0 0
        %2318 = vmatprep.subr.bf16.mxu0 0
        %2319 = vmatpush1.bf16.msra.mxu0 %v2239
        %2320 = vmatprep.subr.bf16.mxu0 0
        %2321 = vmatpush1.bf16.msra.mxu0 %v2238
        %2322 = vmatprep.subr.bf16.mxu0 0
        %2323 = vmatpush2.bf16.msra.mxu0 0
        %2324 = vmatprep.subr.bf16.mxu0 0
        %2325 = vmatpush2.bf16.msra.mxu0 0
        %2326 = vmatprep.subr.bf16.mxu0 0
        %2327 = vmatpush2.bf16.msra.mxu0 0
        %2328 = vmatprep.subr.bf16.mxu0 0
        %2329 = vmatpush2.bf16.msra.mxu0 0
        %2330 = vmatprep.subr.bf16.mxu0 0
        %2331 = vmatpush2.bf16.msra.mxu0 0
        %2332 = vmatprep.subr.bf16.mxu0 0
        %2333 = vmatpush2.bf16.msra.mxu0 0
        %2334 = vmatprep.subr.bf16.mxu0 0
        %2335 = vmatpush2.bf16.msra.mxu0 0
        %2336 = vmatprep.subr.bf16.mxu0 0
        %2337 = vmatpush2.bf16.msra.mxu0 0
        %2338 = vmatprep.mubr.bf16.mxu0 0
        %2339 = vmatmul.mubr.bf16.gmra.mxu0 %v2244
        %v2340 = vpop.f32.mrf.mxu0
        %v2341 = vadd.f32 %v2060, %v2340
        %v2342 = vpop.f32.mrf.mxu0
        %v2343 = vpop.f32.mrf.mxu0
        %v2344 = vadd.f32 %v2060, %v2343
        %v2345 = vpop.f32.mrf.mxu0
        %2346 = vmatprep.mubr.bf16.mxu0 0
        %2347 = vmatmul.mubr.bf16.gmra.mxu0 %v2247
        %v2348 = vpop.f32.mrf.mxu0
        %v2349 = vadd.f32 %v2060, %v2348
        %v2350 = vpop.f32.mrf.mxu0
        %v2351 = vpop.f32.mrf.mxu0
        %v2352 = vadd.f32 %v2060, %v2351
        %v2353 = vpop.f32.mrf.mxu0
        %2354 = vmatprep.mubr.bf16.mxu0 0
        %2355 = vmatmul.mubr.bf16.gmra.mxu0 %v2250
        %v2356 = vpop.f32.mrf.mxu0
        %v2357 = vadd.f32 %v2060, %v2356
        %v2358 = vpop.f32.mrf.mxu0
        %v2359 = vpop.f32.mrf.mxu0
        %v2360 = vadd.f32 %v2060, %v2359
        %v2361 = vpop.f32.mrf.mxu0
        %2362 = vmatprep.mubr.bf16.mxu0 0
        %2363 = vmatmul.mubr.bf16.gmra.mxu0 %v2253
        %v2364 = vpop.f32.mrf.mxu0
        %v2365 = vadd.f32 %v2060, %v2364
        %v2366 = vpop.f32.mrf.mxu0
        %v2367 = vpop.f32.mrf.mxu0
        %v2368 = vadd.f32 %v2060, %v2367
        %v2369 = vpop.f32.mrf.mxu0
        %2370 = vmatprep.mubr.bf16.mxu0 0
        %2371 = vmatmul.mubr.bf16.gmra.mxu0 %v2256
        %v2372 = vpop.f32.mrf.mxu0
        %v2373 = vadd.f32 %v2060, %v2372
        %v2374 = vpop.f32.mrf.mxu0
        %v2375 = vpop.f32.mrf.mxu0
        %v2376 = vadd.f32 %v2060, %v2375
        %v2377 = vpop.f32.mrf.mxu0
        %2378 = vmatprep.mubr.bf16.mxu0 0
        %2379 = vmatmul.mubr.bf16.gmra.mxu0 %v2259
        %v2380 = vpop.f32.mrf.mxu0
        %v2381 = vadd.f32 %v2060, %v2380
        %v2382 = vpop.f32.mrf.mxu0
        %v2383 = vpop.f32.mrf.mxu0
        %v2384 = vadd.f32 %v2060, %v2383
        %v2385 = vpop.f32.mrf.mxu0
        %2386 = vmatprep.mubr.bf16.mxu0 0
        %2387 = vmatmul.mubr.bf16.gmra.mxu0 %v2262
        %v2388 = vpop.f32.mrf.mxu0
        %v2389 = vadd.f32 %v2060, %v2388
        %v2390 = vpop.f32.mrf.mxu0
        %v2391 = vpop.f32.mrf.mxu0
        %v2392 = vadd.f32 %v2060, %v2391
        %v2393 = vpop.f32.mrf.mxu0
        %2394 = vmatprep.mubr.bf16.mxu0 0
        %2395 = vmatmul.mubr.bf16.gmra.mxu0 %v2265
        %v2396 = vpop.f32.mrf.mxu0
        %v2397 = vadd.f32 %v2060, %v2396
        %v2398 = vpop.f32.mrf.mxu0
        %v2399 = vpop.f32.mrf.mxu0
        %v2400 = vadd.f32 %v2060, %v2399
        %v2401 = vpop.f32.mrf.mxu0
        %2402 = vmatprep.mubr.bf16.mxu0 0
        %2403 = vmatmul.mubr.bf16.gmra.mxu0 %v2268
        %v2404 = vpop.f32.mrf.mxu0
        %v2405 = vadd.f32 %v2060, %v2404
        %v2406 = vpop.f32.mrf.mxu0
        %v2407 = vpop.f32.mrf.mxu0
        %v2408 = vadd.f32 %v2060, %v2407
        %v2409 = vpop.f32.mrf.mxu0
        %2410 = vmatprep.mubr.bf16.mxu0 0
        %2411 = vmatmul.mubr.bf16.gmra.mxu0 %v2271
        %v2412 = vpop.f32.mrf.mxu0
        %v2413 = vadd.f32 %v2060, %v2412
        %v2414 = vpop.f32.mrf.mxu0
        %v2415 = vpop.f32.mrf.mxu0
        %v2416 = vadd.f32 %v2060, %v2415
        %v2417 = vpop.f32.mrf.mxu0
        %2418 = vmatprep.mubr.bf16.mxu0 0
        %2419 = vmatmul.mubr.bf16.gmra.mxu0 %v2274
        %v2420 = vpop.f32.mrf.mxu0
        %v2421 = vadd.f32 %v2060, %v2420
        %v2422 = vpop.f32.mrf.mxu0
        %v2423 = vpop.f32.mrf.mxu0
        %v2424 = vadd.f32 %v2060, %v2423
        %v2425 = vpop.f32.mrf.mxu0
        %2426 = vmatprep.mubr.bf16.mxu0 0
        %2427 = vmatmul.mubr.bf16.gmra.mxu0 %v2277
        %v2428 = vpop.f32.mrf.mxu0
        %v2429 = vadd.f32 %v2060, %v2428
        %v2430 = vpop.f32.mrf.mxu0
        %v2431 = vpop.f32.mrf.mxu0
        %v2432 = vadd.f32 %v2060, %v2431
        %v2433 = vpop.f32.mrf.mxu0
        %2434 = vmatprep.mubr.bf16.mxu0 0
        %2435 = vmatmul.mubr.bf16.gmra.mxu0 %v2280
        %v2436 = vpop.f32.mrf.mxu0
        %v2437 = vadd.f32 %v2060, %v2436
        %v2438 = vpop.f32.mrf.mxu0
        %v2439 = vpop.f32.mrf.mxu0
        %v2440 = vadd.f32 %v2060, %v2439
        %v2441 = vpop.f32.mrf.mxu0
        %2442 = vmatprep.mubr.bf16.mxu0 0
        %2443 = vmatmul.mubr.bf16.gmra.mxu0 %v2283
        %v2444 = vpop.f32.mrf.mxu0
        %v2445 = vadd.f32 %v2060, %v2444
        %v2446 = vpop.f32.mrf.mxu0
        %v2447 = vpop.f32.mrf.mxu0
        %v2448 = vadd.f32 %v2060, %v2447
        %v2449 = vpop.f32.mrf.mxu0
        %2450 = vmatprep.mubr.bf16.mxu0 0
        %2451 = vmatmul.mubr.bf16.gmra.mxu0 %v2286
        %v2452 = vpop.f32.mrf.mxu0
        %v2453 = vadd.f32 %v2060, %v2452
        %v2454 = vpop.f32.mrf.mxu0
        %v2455 = vpop.f32.mrf.mxu0
        %v2456 = vadd.f32 %v2060, %v2455
        %v2457 = vpop.f32.mrf.mxu0
        %2458 = vmatprep.mubr.bf16.mxu0 0
        %2459 = vmatmul.mubr.bf16.gmra.mxu0 %v2289
        %v2460 = vpop.f32.mrf.mxu0
        %v2461 = vadd.f32 %v2060, %v2460
        %v2462 = vpop.f32.mrf.mxu0
        %v2463 = vpop.f32.mrf.mxu0
        %v2464 = vadd.f32 %v2060, %v2463
        %v2465 = vpop.f32.mrf.mxu0
        %2466 = vmatprep.mubr.bf16.mxu0 0
        %2467 = vmatmul.mubr.bf16.gmra.mxu0 %v2292
        %v2468 = vpop.f32.mrf.mxu0
        %v2469 = vadd.f32 %v2060, %v2468
        %v2470 = vpop.f32.mrf.mxu0
        %v2471 = vpop.f32.mrf.mxu0
        %v2472 = vadd.f32 %v2060, %v2471
        %v2473 = vpop.f32.mrf.mxu0
        %2474 = vmatprep.mubr.bf16.mxu0 0
        %2475 = vmatmul.mubr.bf16.gmra.mxu0 %v2295
        %v2476 = vpop.f32.mrf.mxu0
        %v2477 = vadd.f32 %v2060, %v2476
        %v2478 = vpop.f32.mrf.mxu0
        %v2479 = vpop.f32.mrf.mxu0
        %v2480 = vadd.f32 %v2060, %v2479
        %v2481 = vpop.f32.mrf.mxu0
        %2482 = vmatprep.mubr.bf16.mxu0 0
        %2483 = vmatmul.mubr.bf16.gmra.mxu0 %v2298
        %v2484 = vpop.f32.mrf.mxu0
        %v2485 = vadd.f32 %v2060, %v2484
        %v2486 = vpop.f32.mrf.mxu0
        %v2487 = vpop.f32.mrf.mxu0
        %v2488 = vadd.f32 %v2060, %v2487
        %v2489 = vpop.f32.mrf.mxu0
        %2490 = vmatprep.mubr.bf16.mxu0 0
        %2491 = vmatmul.mubr.bf16.gmra.mxu0 %v2301
        %v2492 = vpop.f32.mrf.mxu0
        %v2493 = vadd.f32 %v2060, %v2492
        %v2494 = vpop.f32.mrf.mxu0
        %v2495 = vpop.f32.mrf.mxu0
        %v2496 = vadd.f32 %v2060, %v2495
        %v2497 = vpop.f32.mrf.mxu0
        %2498 = vmatprep.mubr.bf16.mxu0 0
        %2499 = vmatmul.mubr.bf16.gmra.mxu0 %v2304
        %v2500 = vpop.f32.mrf.mxu0
        %v2501 = vadd.f32 %v2060, %v2500
        %v2502 = vpop.f32.mrf.mxu0
        %v2503 = vpop.f32.mrf.mxu0
        %v2504 = vpop.f32.mrf.mxu0
        %2505 = vdwg.mxu0
        %v2506 = vmax.f32 %v2341, 0.0
        %v2507 = vmax.f32 %v2344, 0.0
        %v2508 = vmax.f32 %v2349, 0.0
        %v2509 = vmax.f32 %v2352, 0.0
        %v2510 = vmax.f32 %v2357, 0.0
        %v2511 = vmax.f32 %v2360, 0.0
        %v2512 = vmax.f32 %v2365, 0.0
        %v2513 = vmax.f32 %v2368, 0.0
        %v2514 = vmax.f32 %v2373, 0.0
        %v2515 = vmax.f32 %v2376, 0.0
        %v2516 = vmax.f32 %v2381, 0.0
        %v2517 = vmax.f32 %v2384, 0.0
        %v2518 = vmax.f32 %v2389, 0.0
        %v2519 = vmax.f32 %v2392, 0.0
        %v2520 = vmax.f32 %v2397, 0.0
        %v2521 = vmax.f32 %v2400, 0.0
        %v2522 = vmax.f32 %v2405, 0.0
        %v2523 = vmax.f32 %v2408, 0.0
        %v2524 = vmax.f32 %v2413, 0.0
        %v2525 = vmax.f32 %v2416, 0.0
        %v2526 = vmax.f32 %v2421, 0.0
        %v2527 = vmax.f32 %v2424, 0.0
        %v2528 = vmax.f32 %v2429, 0.0
        %v2529 = vmax.f32 %v2432, 0.0
        %v2530 = vmax.f32 %v2437, 0.0
        %v2531 = vmax.f32 %v2440, 0.0
        %v2532 = vmax.f32 %v2445, 0.0
        %v2533 = vmax.f32 %v2448, 0.0
        %v2534 = vmax.f32 %v2453, 0.0
        %v2535 = vmax.f32 %v2456, 0.0
        %v2536 = vmax.f32 %v2461, 0.0
        %v2537 = vmax.f32 %v2464, 0.0
        %v2538 = vmax.f32 %v2469, 0.0
        %v2539 = vmax.f32 %v2472, 0.0
        %v2540 = vmax.f32 %v2477, 0.0
        %v2541 = vmax.f32 %v2480, 0.0
        %v2542 = vmax.f32 %v2485, 0.0
        %v2543 = vmax.f32 %v2488, 0.0
        %v2544 = vmax.f32 %v2493, 0.0
        %v2545 = vmax.f32 %v2496, 0.0
        %v2546 = vmax.f32 %v2501, 0.0
        %v2547 = vld [vmem:[%s1] sm:$0x7]
        %v2549 = vlaneseq
        %v2550 = vshrl.u32 %v2549, 7
        %v2551 = vsub.s32 0, %v2550
        %v2552 = vrot.slane %v2547, %v2551
        %v2553 = vlaneseq
        %v2554 = vshrl.u32 %v2553, 7
        %v2555 = vsub.s32 1, %v2554
        %v2556 = vrot.slane %v2547, %v2555
        %v2557 = vlaneseq
        %v2558 = vshrl.u32 %v2557, 7
        %v2559 = vsub.s32 2, %v2558
        %v2560 = vrot.slane %v2547, %v2559
        %vm2563 = vcmask 588800
        %v2564 = vsel %vm2563, %v2560, 0
        %2566 = vmatprep.subr.mxu0 0.0
        %2567 = vmatpush1.msra.mxu0 %v2521
        %2568 = vmatprep.subr.mxu0 0.0
        %2569 = vmatpush1.msra.mxu0 %v2520
        %2570 = vmatprep.subr.mxu0 0.0
        %2571 = vmatpush1.msra.mxu0 %v2519
        %2572 = vmatprep.subr.mxu0 0.0
        %2573 = vmatpush1.msra.mxu0 %v2518
        %2574 = vmatprep.subr.mxu0 0.0
        %2575 = vmatpush1.msra.mxu0 %v2517
        %2576 = vmatprep.subr.mxu0 0.0
        %2577 = vmatpush1.msra.mxu0 %v2516
        %2578 = vmatprep.subr.mxu0 0.0
        %2579 = vmatpush1.msra.mxu0 %v2515
        %2580 = vmatprep.subr.mxu0 0.0
        %2581 = vmatpush1.msra.mxu0 %v2514
        %2582 = vmatprep.subr.mxu0 0.0
        %2583 = vmatpush1.msra.mxu0 %v2513
        %2584 = vmatprep.subr.mxu0 0.0
        %2585 = vmatpush1.msra.mxu0 %v2512
        %2586 = vmatprep.subr.mxu0 0.0
        %2587 = vmatpush1.msra.mxu0 %v2511
        %2588 = vmatprep.subr.mxu0 0.0
        %2589 = vmatpush1.msra.mxu0 %v2510
        %2590 = vmatprep.subr.mxu0 0.0
        %2591 = vmatpush1.msra.mxu0 %v2509
        %2592 = vmatprep.subr.mxu0 0.0
        %2593 = vmatpush1.msra.mxu0 %v2508
        %2594 = vmatprep.subr.mxu0 0.0
        %2595 = vmatpush1.msra.mxu0 %v2507
        %2596 = vmatprep.subr.mxu0 0.0
        %2597 = vmatpush1.msra.mxu0 %v2506
        %2598 = vmatprep.subr.mxu0 0.0
        %2599 = vmatpush2.msra.mxu0 %v2537
        %2600 = vmatprep.subr.mxu0 0.0
        %2601 = vmatpush2.msra.mxu0 %v2536
        %2602 = vmatprep.subr.mxu0 0.0
        %2603 = vmatpush2.msra.mxu0 %v2535
        %2604 = vmatprep.subr.mxu0 0.0
        %2605 = vmatpush2.msra.mxu0 %v2534
        %2606 = vmatprep.subr.mxu0 0.0
        %2607 = vmatpush2.msra.mxu0 %v2533
        %2608 = vmatprep.subr.mxu0 0.0
        %2609 = vmatpush2.msra.mxu0 %v2532
        %2610 = vmatprep.subr.mxu0 0.0
        %2611 = vmatpush2.msra.mxu0 %v2531
        %2612 = vmatprep.subr.mxu0 0.0
        %2613 = vmatpush2.msra.mxu0 %v2530
        %2614 = vmatprep.subr.mxu0 0.0
        %2615 = vmatpush2.msra.mxu0 %v2529
        %2616 = vmatprep.subr.mxu0 0.0
        %2617 = vmatpush2.msra.mxu0 %v2528
        %2618 = vmatprep.subr.mxu0 0.0
        %2619 = vmatpush2.msra.mxu0 %v2527
        %2620 = vmatprep.subr.mxu0 0.0
        %2621 = vmatpush2.msra.mxu0 %v2526
        %2622 = vmatprep.subr.mxu0 0.0
        %2623 = vmatpush2.msra.mxu0 %v2525
        %2624 = vmatprep.subr.mxu0 0.0
        %2625 = vmatpush2.msra.mxu0 %v2524
        %2626 = vmatprep.subr.mxu0 0.0
        %2627 = vmatpush2.msra.mxu0 %v2523
        %2628 = vmatprep.subr.mxu0 0.0
        %2629 = vmatpush2.msra.mxu0 %v2522
        %2630 = vmatprep.mubr.f32.mxu0 %v2556
        %2631 = vmatmul.mubr.f32.gmra.mxu0 %v2552
        %v2632 = vpop.f32.mrf.mxu0
        %v2633 = vadd.f32 0.0, %v2632
        %v2634 = vpop.f32.mrf.mxu0
        %2635 = vdwg.mxu0
        %2636 = vmatprep.subr.mxu0 0.0
        %2637 = vmatpush1.msra.mxu0 0.0
        %2638 = vmatprep.subr.mxu0 0.0
        %2639 = vmatpush1.msra.mxu0 0.0
        %2640 = vmatprep.subr.mxu0 0.0
        %2641 = vmatpush1.msra.mxu0 0.0
        %2642 = vmatprep.subr.mxu0 0.0
        %2643 = vmatpush1.msra.mxu0 0.0
        %2644 = vmatprep.subr.mxu0 0.0
        %2645 = vmatpush1.msra.mxu0 0.0
        %2646 = vmatprep.subr.mxu0 0.0
        %2647 = vmatpush1.msra.mxu0 0.0
        %2648 = vmatprep.subr.mxu0 0.0
        %2649 = vmatpush1.msra.mxu0 0.0
        %2650 = vmatprep.subr.mxu0 0.0
        %2651 = vmatpush1.msra.mxu0 %v2546
        %2652 = vmatprep.subr.mxu0 0.0
        %2653 = vmatpush1.msra.mxu0 %v2545
        %2654 = vmatprep.subr.mxu0 0.0
        %2655 = vmatpush1.msra.mxu0 %v2544
        %2656 = vmatprep.subr.mxu0 0.0
        %2657 = vmatpush1.msra.mxu0 %v2543
        %2658 = vmatprep.subr.mxu0 0.0
        %2659 = vmatpush1.msra.mxu0 %v2542
        %2660 = vmatprep.subr.mxu0 0.0
        %2661 = vmatpush1.msra.mxu0 %v2541
        %2662 = vmatprep.subr.mxu0 0.0
        %2663 = vmatpush1.msra.mxu0 %v2540
        %2664 = vmatprep.subr.mxu0 0.0
        %2665 = vmatpush1.msra.mxu0 %v2539
        %2666 = vmatprep.subr.mxu0 0.0
        %2667 = vmatpush1.msra.mxu0 %v2538
        %2668 = vmatprep.subr.mxu0 0.0
        %2669 = vmatpush2.msra.mxu0 0.0
        %2670 = vmatprep.subr.mxu0 0.0
        %2671 = vmatpush2.msra.mxu0 0.0
        %2672 = vmatprep.subr.mxu0 0.0
        %2673 = vmatpush2.msra.mxu0 0.0
        %2674 = vmatprep.subr.mxu0 0.0
        %2675 = vmatpush2.msra.mxu0 0.0
        %2676 = vmatprep.subr.mxu0 0.0
        %2677 = vmatpush2.msra.mxu0 0.0
        %2678 = vmatprep.subr.mxu0 0.0
        %2679 = vmatpush2.msra.mxu0 0.0
        %2680 = vmatprep.subr.mxu0 0.0
        %2681 = vmatpush2.msra.mxu0 0.0
        %2682 = vmatprep.subr.mxu0 0.0
        %2683 = vmatpush2.msra.mxu0 0.0
        %2684 = vmatprep.subr.mxu0 0.0
        %2685 = vmatpush2.msra.mxu0 0.0
        %2686 = vmatprep.subr.mxu0 0.0
        %2687 = vmatpush2.msra.mxu0 0.0
        %2688 = vmatprep.subr.mxu0 0.0
        %2689 = vmatpush2.msra.mxu0 0.0
        %2690 = vmatprep.subr.mxu0 0.0
        %2691 = vmatpush2.msra.mxu0 0.0
        %2692 = vmatprep.subr.mxu0 0.0
        %2693 = vmatpush2.msra.mxu0 0.0
        %2694 = vmatprep.subr.mxu0 0.0
        %2695 = vmatpush2.msra.mxu0 0.0
        %2696 = vmatprep.subr.mxu0 0.0
        %2697 = vmatpush2.msra.mxu0 0.0
        %2698 = vmatprep.subr.mxu0 0.0
        %2699 = vmatpush2.msra.mxu0 0.0
        %2700 = vmatprep.mubr.f32.mxu0 0.0
        %2701 = vmatmul.mubr.f32.gmra.mxu0 %v2564
        %v2702 = vpop.f32.mrf.mxu0
        %v2703 = vadd.f32 %v2633, %v2702
        %v2704 = vpop.f32.mrf.mxu0
        %2705 = vdwg.mxu0
        %v2706 = vpack.c.bf16 %v2703, %v2703
        %v2707 = vld [vmem:[#allocation6] sm:$0xff]
        %v2708 = vld [vmem:[#allocation6 + $0x8] sm:$0xff]
        %v2709 = vld [vmem:[#allocation6 + $0x10] sm:$0xff]
        %v2710 = vld [vmem:[#allocation6 + $0x18] sm:$0xff]
        %v2711 = vld [vmem:[#allocation6 + $0x20] sm:$0xff]
        %v2712 = vld [vmem:[#allocation6 + $0x28] sm:$0xff]
        %v2713 = vld [vmem:[#allocation6 + $0x30] sm:$0xff]
        %v2714 = vld [vmem:[#allocation6 + $0x38] sm:$0xff]
        %v2715 = vld [vmem:[#allocation6 + $0x40] sm:$0xff]
        %v2716 = vld [vmem:[#allocation6 + $0x48] sm:$0xff]
        %v2717 = vld [vmem:[#allocation6 + $0x50] sm:$0xff]
        %v2718 = vld [vmem:[#allocation6 + $0x58] sm:$0xff]
        %v2719 = vld [vmem:[#allocation6 + $0x60] sm:$0xff]
        %v2720 = vld [vmem:[#allocation6 + $0x68] sm:$0xff]
        %v2721 = vld [vmem:[#allocation6 + $0x70] sm:$0xff]
        %v2722 = vld [vmem:[#allocation6 + $0x78] sm:$0xff]
        %v2723 = vld [vmem:[#allocation6 + $0x80] sm:$0xff]
        %v2724 = vld [vmem:[#allocation6 + $0x88] sm:$0xff]
        %v2725 = vld [vmem:[#allocation6 + $0x90] sm:$0xff]
        %v2726 = vld [vmem:[#allocation6 + $0x98] sm:$0xff]
        %v2727 = vld [vmem:[#allocation6 + $0xa0] sm:$0xff]
        %v2728 = vld [vmem:[#allocation6 + $0xa8] sm:$0xff]
        %v2729 = vld [vmem:[#allocation6 + $0xb0] sm:$0xff]
        %v2730 = vld [vmem:[#allocation6 + $0xb8] sm:$0xff]
        %v2731 = vld [vmem:[#allocation6 + $0xc0] sm:$0xff]
        %v2732 = vld [vmem:[#allocation6 + $0xc8] sm:$0xff]
        %v2733 = vld [vmem:[#allocation6 + $0xd0] sm:$0xff]
        %v2734 = vld [vmem:[#allocation6 + $0xd8] sm:$0xff]
        %v2735 = vld [vmem:[#allocation6 + $0xe0] sm:$0xff]
        %v2736 = vld [vmem:[#allocation6 + $0xe8] sm:$0xff]
        %v2737 = vld [vmem:[#allocation6 + $0xf0] sm:$0xff]
        %v2738 = vld [vmem:[#allocation6 + $0xf8] sm:$0xff]
        %v2739 = vld [vmem:[#allocation6 + $0x100] sm:$0xff]
        %v2740 = vld [vmem:[#allocation6 + $0x108] sm:$0xff]
        %v2741 = vld [vmem:[#allocation6 + $0x110] sm:$0xff]
        %v2742 = vld [vmem:[#allocation6 + $0x118] sm:$0xff]
        %v2743 = vld [vmem:[#allocation6 + $0x120] sm:$0xff]
        %v2744 = vld [vmem:[#allocation6 + $0x128] sm:$0xff]
        %v2745 = vld [vmem:[#allocation6 + $0x130] sm:$0xff]
        %v2746 = vld [vmem:[#allocation6 + $0x138] sm:$0xff]
        %v2747 = vld [vmem:[#allocation6 + $0x140] sm:$0xff]
        %v2748 = vld [vmem:[#allocation6 + $0x148] sm:$0xff]
        %v2749 = vld [vmem:[#allocation6 + $0x150] sm:$0xff]
        %v2750 = vld [vmem:[#allocation6 + $0x158] sm:$0xff]
        %v2751 = vld [vmem:[#allocation6 + $0x160] sm:$0xff]
        %v2752 = vld [vmem:[#allocation6 + $0x168] sm:$0xff]
        %v2753 = vld [vmem:[#allocation6 + $0x170] sm:$0xff]
        %v2754 = vld [vmem:[#allocation6 + $0x178] sm:$0xff]
        %v2755 = vld [vmem:[#allocation6 + $0x180] sm:$0xff]
        %v2756 = vld [vmem:[#allocation6 + $0x188] sm:$0xff]
        %v2757 = vld [vmem:[#allocation6 + $0x190] sm:$0xff]
        %v2758 = vld [vmem:[#allocation6 + $0x198] sm:$0xff]
        %v2759 = vld [vmem:[#allocation6 + $0x1a0] sm:$0xff]
        %v2760 = vld [vmem:[#allocation6 + $0x1a8] sm:$0xff]
        %v2761 = vld [vmem:[#allocation6 + $0x1b0] sm:$0xff]
        %v2762 = vld [vmem:[#allocation6 + $0x1b8] sm:$0xff]
        %v2763 = vld [vmem:[#allocation6 + $0x1c0] sm:$0xff]
        %v2764 = vld [vmem:[#allocation6 + $0x1c8] sm:$0xff]
        %v2765 = vld [vmem:[#allocation6 + $0x1d0] sm:$0xff]
        %v2766 = vld [vmem:[#allocation6 + $0x1d8] sm:$0xff]
        %v2767 = vld [vmem:[#allocation6 + $0x1e0] sm:$0xff]
        %v2768 = vld [vmem:[#allocation6 + $0x1e8] sm:$0xff]
        %v2769 = vld [vmem:[#allocation6 + $0x1f0] sm:$0xff]
        %v2770 = vld [vmem:[#allocation6 + $0x1f8] sm:$0xff]
        %v2771 = vld [vmem:[#allocation7] sm:$0xff]
        %v2836 = vunpack.c.l.b16 %v2707
        %v2837 = vunpack.c.h.b16 %v2707
        %v2838 = vunpack.c.l.b16 %v2708
        %v2839 = vunpack.c.h.b16 %v2708
        %v2840 = vunpack.c.l.b16 %v2709
        %v2841 = vunpack.c.h.b16 %v2709
        %v2842 = vunpack.c.l.b16 %v2710
        %v2843 = vunpack.c.h.b16 %v2710
        %v2844 = vunpack.c.l.b16 %v2711
        %v2845 = vunpack.c.h.b16 %v2711
        %v2846 = vunpack.c.l.b16 %v2712
        %v2847 = vunpack.c.h.b16 %v2712
        %v2848 = vunpack.c.l.b16 %v2713
        %v2849 = vunpack.c.h.b16 %v2713
        %v2850 = vunpack.c.l.b16 %v2714
        %v2851 = vunpack.c.h.b16 %v2714
        %v2852 = vunpack.c.l.b16 %v2715
        %v2853 = vunpack.c.h.b16 %v2715
        %v2854 = vunpack.c.l.b16 %v2716
        %v2855 = vunpack.c.h.b16 %v2716
        %v2856 = vunpack.c.l.b16 %v2717
        %v2857 = vunpack.c.h.b16 %v2717
        %v2858 = vunpack.c.l.b16 %v2718
        %v2859 = vunpack.c.h.b16 %v2718
        %v2860 = vunpack.c.l.b16 %v2719
        %v2861 = vunpack.c.h.b16 %v2719
        %v2862 = vunpack.c.l.b16 %v2720
        %v2863 = vunpack.c.h.b16 %v2720
        %v2864 = vunpack.c.l.b16 %v2721
        %v2865 = vunpack.c.h.b16 %v2721
        %v2866 = vunpack.c.l.b16 %v2722
        %v2867 = vunpack.c.h.b16 %v2722
        %v2868 = vunpack.c.l.b16 %v2723
        %v2869 = vunpack.c.h.b16 %v2723
        %v2870 = vunpack.c.l.b16 %v2724
        %v2871 = vunpack.c.h.b16 %v2724
        %v2872 = vunpack.c.l.b16 %v2725
        %v2873 = vunpack.c.h.b16 %v2725
        %v2874 = vunpack.c.l.b16 %v2726
        %v2875 = vunpack.c.h.b16 %v2726
        %v2876 = vunpack.c.l.b16 %v2727
        %v2877 = vunpack.c.h.b16 %v2727
        %v2878 = vunpack.c.l.b16 %v2728
        %v2879 = vunpack.c.h.b16 %v2728
        %v2880 = vunpack.c.l.b16 %v2729
        %v2881 = vunpack.c.h.b16 %v2729
        %v2882 = vunpack.c.l.b16 %v2730
        %v2883 = vunpack.c.h.b16 %v2730
        %v2884 = vunpack.c.l.b16 %v2731
        %v2885 = vunpack.c.h.b16 %v2731
        %v2886 = vunpack.c.l.b16 %v2732
        %v2887 = vunpack.c.h.b16 %v2732
        %v2888 = vunpack.c.l.b16 %v2733
        %v2889 = vunpack.c.h.b16 %v2733
        %v2890 = vunpack.c.l.b16 %v2734
        %v2891 = vunpack.c.h.b16 %v2734
        %v2892 = vunpack.c.l.b16 %v2735
        %v2893 = vunpack.c.h.b16 %v2735
        %v2894 = vunpack.c.l.b16 %v2736
        %v2895 = vunpack.c.h.b16 %v2736
        %v2896 = vunpack.c.l.b16 %v2737
        %v2897 = vunpack.c.h.b16 %v2737
        %v2898 = vunpack.c.l.b16 %v2738
        %v2899 = vunpack.c.h.b16 %v2738
        %v2900 = vunpack.c.l.b16 %v2739
        %v2901 = vunpack.c.h.b16 %v2739
        %v2902 = vunpack.c.l.b16 %v2740
        %v2903 = vunpack.c.h.b16 %v2740
        %v2904 = vunpack.c.l.b16 %v2741
        %v2905 = vunpack.c.h.b16 %v2741
        %v2906 = vunpack.c.l.b16 %v2742
        %v2907 = vunpack.c.h.b16 %v2742
        %v2908 = vunpack.c.l.b16 %v2743
        %v2909 = vunpack.c.h.b16 %v2743
        %v2910 = vunpack.c.l.b16 %v2744
        %v2911 = vunpack.c.h.b16 %v2744
        %v2912 = vunpack.c.l.b16 %v2745
        %v2913 = vunpack.c.h.b16 %v2745
        %v2914 = vunpack.c.l.b16 %v2746
        %v2915 = vunpack.c.h.b16 %v2746
        %v2916 = vunpack.c.l.b16 %v2747
        %v2917 = vunpack.c.h.b16 %v2747
        %v2918 = vunpack.c.l.b16 %v2748
        %v2919 = vunpack.c.h.b16 %v2748
        %v2920 = vunpack.c.l.b16 %v2749
        %v2921 = vunpack.c.h.b16 %v2749
        %v2922 = vunpack.c.l.b16 %v2750
        %v2923 = vunpack.c.h.b16 %v2750
        %v2924 = vunpack.c.l.b16 %v2751
        %v2925 = vunpack.c.h.b16 %v2751
        %v2926 = vunpack.c.l.b16 %v2752
        %v2927 = vunpack.c.h.b16 %v2752
        %v2928 = vunpack.c.l.b16 %v2753
        %v2929 = vunpack.c.h.b16 %v2753
        %v2930 = vunpack.c.l.b16 %v2754
        %v2931 = vunpack.c.h.b16 %v2754
        %v2932 = vunpack.c.l.b16 %v2755
        %v2933 = vunpack.c.h.b16 %v2755
        %v2934 = vunpack.c.l.b16 %v2756
        %v2935 = vunpack.c.h.b16 %v2756
        %v2936 = vunpack.c.l.b16 %v2757
        %v2937 = vunpack.c.h.b16 %v2757
        %v2938 = vunpack.c.l.b16 %v2758
        %v2939 = vunpack.c.h.b16 %v2758
        %v2940 = vunpack.c.l.b16 %v2759
        %v2941 = vunpack.c.h.b16 %v2759
        %v2942 = vunpack.c.l.b16 %v2760
        %v2943 = vunpack.c.h.b16 %v2760
        %v2944 = vunpack.c.l.b16 %v2761
        %v2945 = vunpack.c.h.b16 %v2761
        %v2946 = vunpack.c.l.b16 %v2762
        %v2947 = vunpack.c.h.b16 %v2762
        %v2948 = vunpack.c.l.b16 %v2763
        %v2949 = vunpack.c.h.b16 %v2763
        %v2950 = vunpack.c.l.b16 %v2764
        %v2951 = vunpack.c.h.b16 %v2764
        %v2952 = vunpack.c.l.b16 %v2765
        %v2953 = vunpack.c.h.b16 %v2765
        %v2954 = vunpack.c.l.b16 %v2766
        %v2955 = vunpack.c.h.b16 %v2766
        %v2956 = vunpack.c.l.b16 %v2767
        %v2957 = vunpack.c.h.b16 %v2767
        %v2958 = vunpack.c.l.b16 %v2768
        %v2959 = vunpack.c.h.b16 %v2768
        %v2960 = vunpack.c.l.b16 %v2769
        %v2961 = vunpack.c.h.b16 %v2769
        %v2962 = vunpack.c.l.b16 %v2770
        %v2963 = vunpack.c.h.b16 %v2770
        %v2964 = vpack.c.b16 %v2844, %v2836
        %v2965 = vpack.c.b16 %v2845, %v2837
        %v2966 = vpack.c.b16 %v2846, %v2838
        %v2967 = vpack.c.b16 %v2847, %v2839
        %v2968 = vpack.c.b16 %v2848, %v2840
        %v2969 = vpack.c.b16 %v2849, %v2841
        %v2970 = vpack.c.b16 %v2850, %v2842
        %v2971 = vpack.c.b16 %v2851, %v2843
        %v2972 = vpack.c.b16 %v2860, %v2852
        %v2973 = vpack.c.b16 %v2861, %v2853
        %v2974 = vpack.c.b16 %v2862, %v2854
        %v2975 = vpack.c.b16 %v2863, %v2855
        %v2976 = vpack.c.b16 %v2864, %v2856
        %v2977 = vpack.c.b16 %v2865, %v2857
        %v2978 = vpack.c.b16 %v2866, %v2858
        %v2979 = vpack.c.b16 %v2867, %v2859
        %v2980 = vpack.c.b16 %v2876, %v2868
        %v2981 = vpack.c.b16 %v2877, %v2869
        %v2982 = vpack.c.b16 %v2878, %v2870
        %v2983 = vpack.c.b16 %v2879, %v2871
        %v2984 = vpack.c.b16 %v2880, %v2872
        %v2985 = vpack.c.b16 %v2881, %v2873
        %v2986 = vpack.c.b16 %v2882, %v2874
        %v2987 = vpack.c.b16 %v2883, %v2875
        %v2988 = vpack.c.b16 %v2892, %v2884
        %v2989 = vpack.c.b16 %v2893, %v2885
        %v2990 = vpack.c.b16 %v2894, %v2886
        %v2991 = vpack.c.b16 %v2895, %v2887
        %v2992 = vpack.c.b16 %v2896, %v2888
        %v2993 = vpack.c.b16 %v2897, %v2889
        %v2994 = vpack.c.b16 %v2898, %v2890
        %v2995 = vpack.c.b16 %v2899, %v2891
        %v2996 = vpack.c.b16 %v2908, %v2900
        %v2997 = vpack.c.b16 %v2909, %v2901
        %v2998 = vpack.c.b16 %v2910, %v2902
        %v2999 = vpack.c.b16 %v2911, %v2903
        %v3000 = vpack.c.b16 %v2912, %v2904
        %v3001 = vpack.c.b16 %v2913, %v2905
        %v3002 = vpack.c.b16 %v2914, %v2906
        %v3003 = vpack.c.b16 %v2915, %v2907
        %v3004 = vpack.c.b16 %v2924, %v2916
        %v3005 = vpack.c.b16 %v2925, %v2917
        %v3006 = vpack.c.b16 %v2926, %v2918
        %v3007 = vpack.c.b16 %v2927, %v2919
        %v3008 = vpack.c.b16 %v2928, %v2920
        %v3009 = vpack.c.b16 %v2929, %v2921
        %v3010 = vpack.c.b16 %v2930, %v2922
        %v3011 = vpack.c.b16 %v2931, %v2923
        %v3012 = vpack.c.b16 %v2940, %v2932
        %v3013 = vpack.c.b16 %v2941, %v2933
        %v3014 = vpack.c.b16 %v2942, %v2934
        %v3015 = vpack.c.b16 %v2943, %v2935
        %v3016 = vpack.c.b16 %v2944, %v2936
        %v3017 = vpack.c.b16 %v2945, %v2937
        %v3018 = vpack.c.b16 %v2946, %v2938
        %v3019 = vpack.c.b16 %v2947, %v2939
        %v3020 = vpack.c.b16 %v2956, %v2948
        %v3021 = vpack.c.b16 %v2957, %v2949
        %v3022 = vpack.c.b16 %v2958, %v2950
        %v3023 = vpack.c.b16 %v2959, %v2951
        %v3024 = vpack.c.b16 %v2960, %v2952
        %v3025 = vpack.c.b16 %v2961, %v2953
        %v3026 = vpack.c.b16 %v2962, %v2954
        %v3027 = vpack.c.b16 %v2963, %v2955
        %v3093 = vlaneseq
        %v3094 = vshrl.u32 %v3093, 7
        %v3095 = vsub.s32 0, %v3094
        %v3096 = vrot.slane %v2771, %v3095
        %v3097 = vlaneseq
        %v3098 = vshrl.u32 %v3097, 7
        %v3099 = vsub.s32 1, %v3098
        %v3100 = vrot.slane %v2771, %v3099
        %v3101 = vlaneseq
        %v3102 = vshrl.u32 %v3101, 7
        %v3103 = vsub.s32 2, %v3102
        %v3104 = vrot.slane %v2771, %v3103
        %v3105 = vlaneseq
        %v3106 = vshrl.u32 %v3105, 7
        %v3107 = vsub.s32 3, %v3106
        %v3108 = vrot.slane %v2771, %v3107
        %v3109 = vlaneseq
        %v3110 = vshrl.u32 %v3109, 7
        %v3111 = vsub.s32 4, %v3110
        %v3112 = vrot.slane %v2771, %v3111
        %v3113 = vlaneseq
        %v3114 = vshrl.u32 %v3113, 7
        %v3115 = vsub.s32 5, %v3114
        %v3116 = vrot.slane %v2771, %v3115
        %v3117 = vlaneseq
        %v3118 = vshrl.u32 %v3117, 7
        %v3119 = vsub.s32 6, %v3118
        %v3120 = vrot.slane %v2771, %v3119
        %v3121 = vlaneseq
        %v3122 = vshrl.u32 %v3121, 7
        %v3123 = vsub.s32 7, %v3122
        %v3124 = vrot.slane %v2771, %v3123
        %3133 = vmatprep.subr.bf16.mxu0 %v3021
        %3134 = vmatpush1.bf16.msra.mxu0 %v3020
        %3135 = vmatprep.subr.bf16.mxu0 %v3013
        %3136 = vmatpush1.bf16.msra.mxu0 %v3012
        %3137 = vmatprep.subr.bf16.mxu0 %v3005
        %3138 = vmatpush1.bf16.msra.mxu0 %v3004
        %3139 = vmatprep.subr.bf16.mxu0 %v2997
        %3140 = vmatpush1.bf16.msra.mxu0 %v2996
        %3141 = vmatprep.subr.bf16.mxu0 %v2989
        %3142 = vmatpush1.bf16.msra.mxu0 %v2988
        %3143 = vmatprep.subr.bf16.mxu0 %v2981
        %3144 = vmatpush1.bf16.msra.mxu0 %v2980
        %3145 = vmatprep.subr.bf16.mxu0 %v2973
        %3146 = vmatpush1.bf16.msra.mxu0 %v2972
        %3147 = vmatprep.subr.bf16.mxu0 %v2965
        %3148 = vmatpush1.bf16.msra.mxu0 %v2964
        %3149 = vmatprep.subr.bf16.mxu0 0
        %3150 = vmatpush2.bf16.msra.mxu0 0
        %3151 = vmatprep.subr.bf16.mxu0 0
        %3152 = vmatpush2.bf16.msra.mxu0 0
        %3153 = vmatprep.subr.bf16.mxu0 0
        %3154 = vmatpush2.bf16.msra.mxu0 0
        %3155 = vmatprep.subr.bf16.mxu0 0
        %3156 = vmatpush2.bf16.msra.mxu0 0
        %3157 = vmatprep.subr.bf16.mxu0 0
        %3158 = vmatpush2.bf16.msra.mxu0 0
        %3159 = vmatprep.subr.bf16.mxu0 0
        %3160 = vmatpush2.bf16.msra.mxu0 0
        %3161 = vmatprep.subr.bf16.mxu0 0
        %3162 = vmatpush2.bf16.msra.mxu0 0
        %3163 = vmatprep.subr.bf16.mxu0 0
        %3164 = vmatpush2.bf16.msra.mxu0 0
        %3165 = vmatprep.mubr.bf16.mxu0 0
        %3166 = vmatmul.mubr.bf16.gmra.mxu0 %v2706
        %v3167 = vpop.f32.mrf.mxu0
        %v3168 = vadd.f32 %v3096, %v3167
        %v3169 = vpop.f32.mrf.mxu0
        %v3170 = vadd.f32 %v3100, %v3169
        %v3171 = vpop.f32.mrf.mxu0
        %v3172 = vpop.f32.mrf.mxu0
        %3173 = vdwg.mxu0
        %3174 = vmatprep.subr.bf16.mxu0 %v3023
        %3175 = vmatpush1.bf16.msra.mxu0 %v3022
        %3176 = vmatprep.subr.bf16.mxu0 %v3015
        %3177 = vmatpush1.bf16.msra.mxu0 %v3014
        %3178 = vmatprep.subr.bf16.mxu0 %v3007
        %3179 = vmatpush1.bf16.msra.mxu0 %v3006
        %3180 = vmatprep.subr.bf16.mxu0 %v2999
        %3181 = vmatpush1.bf16.msra.mxu0 %v2998
        %3182 = vmatprep.subr.bf16.mxu0 %v2991
        %3183 = vmatpush1.bf16.msra.mxu0 %v2990
        %3184 = vmatprep.subr.bf16.mxu0 %v2983
        %3185 = vmatpush1.bf16.msra.mxu0 %v2982
        %3186 = vmatprep.subr.bf16.mxu0 %v2975
        %3187 = vmatpush1.bf16.msra.mxu0 %v2974
        %3188 = vmatprep.subr.bf16.mxu0 %v2967
        %3189 = vmatpush1.bf16.msra.mxu0 %v2966
        %3190 = vmatprep.subr.bf16.mxu0 0
        %3191 = vmatpush2.bf16.msra.mxu0 0
        %3192 = vmatprep.subr.bf16.mxu0 0
        %3193 = vmatpush2.bf16.msra.mxu0 0
        %3194 = vmatprep.subr.bf16.mxu0 0
        %3195 = vmatpush2.bf16.msra.mxu0 0
        %3196 = vmatprep.subr.bf16.mxu0 0
        %3197 = vmatpush2.bf16.msra.mxu0 0
        %3198 = vmatprep.subr.bf16.mxu0 0
        %3199 = vmatpush2.bf16.msra.mxu0 0
        %3200 = vmatprep.subr.bf16.mxu0 0
        %3201 = vmatpush2.bf16.msra.mxu0 0
        %3202 = vmatprep.subr.bf16.mxu0 0
        %3203 = vmatpush2.bf16.msra.mxu0 0
        %3204 = vmatprep.subr.bf16.mxu0 0
        %3205 = vmatpush2.bf16.msra.mxu0 0
        %3206 = vmatprep.mubr.bf16.mxu0 0
        %3207 = vmatmul.mubr.bf16.gmra.mxu0 %v2706
        %v3208 = vpop.f32.mrf.mxu0
        %v3209 = vadd.f32 %v3104, %v3208
        %v3210 = vpop.f32.mrf.mxu0
        %v3211 = vadd.f32 %v3108, %v3210
        %v3212 = vpop.f32.mrf.mxu0
        %v3213 = vpop.f32.mrf.mxu0
        %3214 = vdwg.mxu0
        %3215 = vmatprep.subr.bf16.mxu0 %v3025
        %3216 = vmatpush1.bf16.msra.mxu0 %v3024
        %3217 = vmatprep.subr.bf16.mxu0 %v3017
        %3218 = vmatpush1.bf16.msra.mxu0 %v3016
        %3219 = vmatprep.subr.bf16.mxu0 %v3009
        %3220 = vmatpush1.bf16.msra.mxu0 %v3008
        %3221 = vmatprep.subr.bf16.mxu0 %v3001
        %3222 = vmatpush1.bf16.msra.mxu0 %v3000
        %3223 = vmatprep.subr.bf16.mxu0 %v2993
        %3224 = vmatpush1.bf16.msra.mxu0 %v2992
        %3225 = vmatprep.subr.bf16.mxu0 %v2985
        %3226 = vmatpush1.bf16.msra.mxu0 %v2984
        %3227 = vmatprep.subr.bf16.mxu0 %v2977
        %3228 = vmatpush1.bf16.msra.mxu0 %v2976
        %3229 = vmatprep.subr.bf16.mxu0 %v2969
        %3230 = vmatpush1.bf16.msra.mxu0 %v2968
        %3231 = vmatprep.subr.bf16.mxu0 0
        %3232 = vmatpush2.bf16.msra.mxu0 0
        %3233 = vmatprep.subr.bf16.mxu0 0
        %3234 = vmatpush2.bf16.msra.mxu0 0
        %3235 = vmatprep.subr.bf16.mxu0 0
        %3236 = vmatpush2.bf16.msra.mxu0 0
        %3237 = vmatprep.subr.bf16.mxu0 0
        %3238 = vmatpush2.bf16.msra.mxu0 0
        %3239 = vmatprep.subr.bf16.mxu0 0
        %3240 = vmatpush2.bf16.msra.mxu0 0
        %3241 = vmatprep.subr.bf16.mxu0 0
        %3242 = vmatpush2.bf16.msra.mxu0 0
        %3243 = vmatprep.subr.bf16.mxu0 0
        %3244 = vmatpush2.bf16.msra.mxu0 0
        %3245 = vmatprep.subr.bf16.mxu0 0
        %3246 = vmatpush2.bf16.msra.mxu0 0
        %3247 = vmatprep.mubr.bf16.mxu0 0
        %3248 = vmatmul.mubr.bf16.gmra.mxu0 %v2706
        %v3249 = vpop.f32.mrf.mxu0
        %v3250 = vadd.f32 %v3112, %v3249
        %v3251 = vpop.f32.mrf.mxu0
        %v3252 = vadd.f32 %v3116, %v3251
        %v3253 = vpop.f32.mrf.mxu0
        %v3254 = vpop.f32.mrf.mxu0
        %3255 = vdwg.mxu0
        %3256 = vmatprep.subr.bf16.mxu0 %v3027
        %3257 = vmatpush1.bf16.msra.mxu0 %v3026
        %3258 = vmatprep.subr.bf16.mxu0 %v3019
        %3259 = vmatpush1.bf16.msra.mxu0 %v3018
        %3260 = vmatprep.subr.bf16.mxu0 %v3011
        %3261 = vmatpush1.bf16.msra.mxu0 %v3010
        %3262 = vmatprep.subr.bf16.mxu0 %v3003
        %3263 = vmatpush1.bf16.msra.mxu0 %v3002
        %3264 = vmatprep.subr.bf16.mxu0 %v2995
        %3265 = vmatpush1.bf16.msra.mxu0 %v2994
        %3266 = vmatprep.subr.bf16.mxu0 %v2987
        %3267 = vmatpush1.bf16.msra.mxu0 %v2986
        %3268 = vmatprep.subr.bf16.mxu0 %v2979
        %3269 = vmatpush1.bf16.msra.mxu0 %v2978
        %3270 = vmatprep.subr.bf16.mxu0 %v2971
        %3271 = vmatpush1.bf16.msra.mxu0 %v2970
        %3272 = vmatprep.subr.bf16.mxu0 0
        %3273 = vmatpush2.bf16.msra.mxu0 0
        %3274 = vmatprep.subr.bf16.mxu0 0
        %3275 = vmatpush2.bf16.msra.mxu0 0
        %3276 = vmatprep.subr.bf16.mxu0 0
        %3277 = vmatpush2.bf16.msra.mxu0 0
        %3278 = vmatprep.subr.bf16.mxu0 0
        %3279 = vmatpush2.bf16.msra.mxu0 0
        %3280 = vmatprep.subr.bf16.mxu0 0
        %3281 = vmatpush2.bf16.msra.mxu0 0
        %3282 = vmatprep.subr.bf16.mxu0 0
        %3283 = vmatpush2.bf16.msra.mxu0 0
        %3284 = vmatprep.subr.bf16.mxu0 0
        %3285 = vmatpush2.bf16.msra.mxu0 0
        %3286 = vmatprep.subr.bf16.mxu0 0
        %3287 = vmatpush2.bf16.msra.mxu0 0
        %3288 = vmatprep.mubr.bf16.mxu0 0
        %3289 = vmatmul.mubr.bf16.gmra.mxu0 %v2706
        %v3290 = vpop.f32.mrf.mxu0
        %v3291 = vadd.f32 %v3120, %v3290
        %v3292 = vpop.f32.mrf.mxu0
        %v3293 = vadd.f32 %v3124, %v3292
        %v3294 = vpop.f32.mrf.mxu0
        %v3295 = vpop.f32.mrf.mxu0
        %3296 = vdwg.mxu0
        %v3297 = vpack.c.bf16 %v3168, %v3168
        %v3298 = vpack.c.bf16 %v3170, %v3170
        %v3299 = vpack.c.bf16 %v3209, %v3209
        %v3300 = vpack.c.bf16 %v3211, %v3211
        %v3301 = vpack.c.bf16 %v3250, %v3250
        %v3302 = vpack.c.bf16 %v3252, %v3252
        %v3303 = vpack.c.bf16 %v3291, %v3291
        %v3304 = vpack.c.bf16 %v3293, %v3293
        %v3305 = vld [vmem:[#allocation9] sm:$0xff]
        %v3306 = vld [vmem:[#allocation9 + $0x8] sm:$0xff]
        %v3307 = vld [vmem:[#allocation9 + $0x10] sm:$0xff]
        %v3308 = vld [vmem:[#allocation9 + $0x18] sm:$0xff]
        %v3309 = vld [vmem:[#allocation9 + $0x20] sm:$0xff]
        %v3310 = vld [vmem:[#allocation9 + $0x28] sm:$0xff]
        %v3311 = vld [vmem:[#allocation9 + $0x30] sm:$0xff]
        %v3312 = vld [vmem:[#allocation9 + $0x38] sm:$0xff]
        %v3313 = vld [vmem:[#allocation9 + $0x40] sm:$0xff]
        %v3314 = vld [vmem:[#allocation9 + $0x48] sm:$0xff]
        %v3315 = vld [vmem:[#allocation9 + $0x50] sm:$0xff]
        %v3316 = vld [vmem:[#allocation9 + $0x58] sm:$0xff]
        %v3317 = vld [vmem:[#allocation9 + $0x60] sm:$0xff]
        %v3318 = vld [vmem:[#allocation9 + $0x68] sm:$0xff]
        %v3319 = vld [vmem:[#allocation9 + $0x70] sm:$0xff]
        %v3320 = vld [vmem:[#allocation9 + $0x78] sm:$0xff]
        %v3321 = vld [vmem:[#allocation9 + $0x80] sm:$0xff]
        %v3322 = vld [vmem:[#allocation9 + $0x88] sm:$0xff]
        %v3323 = vld [vmem:[#allocation9 + $0x90] sm:$0xff]
        %v3324 = vld [vmem:[#allocation9 + $0x98] sm:$0xff]
        %v3325 = vld [vmem:[#allocation9 + $0xa0] sm:$0xff]
        %v3326 = vld [vmem:[#allocation9 + $0xa8] sm:$0xff]
        %v3327 = vld [vmem:[#allocation9 + $0xb0] sm:$0xff]
        %v3328 = vld [vmem:[#allocation9 + $0xb8] sm:$0xff]
        %v3329 = vld [vmem:[#allocation9 + $0xc0] sm:$0xff]
        %v3330 = vld [vmem:[#allocation9 + $0xc8] sm:$0xff]
        %v3331 = vld [vmem:[#allocation9 + $0xd0] sm:$0xff]
        %v3332 = vld [vmem:[#allocation9 + $0xd8] sm:$0xff]
        %v3333 = vld [vmem:[#allocation9 + $0xe0] sm:$0xff]
        %v3334 = vld [vmem:[#allocation9 + $0xe8] sm:$0xff]
        %v3335 = vld [vmem:[#allocation9 + $0xf0] sm:$0xff]
        %v3336 = vld [vmem:[#allocation9 + $0xf8] sm:$0xff]
        %v3337 = vld [vmem:[#allocation9 + $0x100] sm:$0xff]
        %v3338 = vld [vmem:[#allocation9 + $0x108] sm:$0xff]
        %v3339 = vld [vmem:[#allocation9 + $0x110] sm:$0xff]
        %v3340 = vld [vmem:[#allocation9 + $0x118] sm:$0xff]
        %v3341 = vld [vmem:[#allocation9 + $0x120] sm:$0xff]
        %v3342 = vld [vmem:[#allocation9 + $0x128] sm:$0xff]
        %v3343 = vld [vmem:[#allocation9 + $0x130] sm:$0xff]
        %v3344 = vld [vmem:[#allocation9 + $0x138] sm:$0xff]
        %v3345 = vld [vmem:[#allocation9 + $0x140] sm:$0xff]
        %v3346 = vld [vmem:[#allocation9 + $0x148] sm:$0xff]
        %v3347 = vld [vmem:[#allocation9 + $0x150] sm:$0xff]
        %v3348 = vld [vmem:[#allocation9 + $0x158] sm:$0xff]
        %v3349 = vld [vmem:[#allocation9 + $0x160] sm:$0xff]
        %v3350 = vld [vmem:[#allocation9 + $0x168] sm:$0xff]
        %v3351 = vld [vmem:[#allocation9 + $0x170] sm:$0xff]
        %v3352 = vld [vmem:[#allocation9 + $0x178] sm:$0xff]
        %v3353 = vld [vmem:[#allocation9 + $0x180] sm:$0xff]
        %v3354 = vld [vmem:[#allocation9 + $0x188] sm:$0xff]
        %v3355 = vld [vmem:[#allocation9 + $0x190] sm:$0xff]
        %v3356 = vld [vmem:[#allocation9 + $0x198] sm:$0xff]
        %v3357 = vld [vmem:[#allocation9 + $0x1a0] sm:$0xff]
        %v3358 = vld [vmem:[#allocation9 + $0x1a8] sm:$0xff]
        %v3359 = vld [vmem:[#allocation9 + $0x1b0] sm:$0xff]
        %v3360 = vld [vmem:[#allocation9 + $0x1b8] sm:$0xff]
        %v3361 = vld [vmem:[#allocation9 + $0x1c0] sm:$0xff]
        %v3362 = vld [vmem:[#allocation9 + $0x1c8] sm:$0xff]
        %v3363 = vld [vmem:[#allocation9 + $0x1d0] sm:$0xff]
        %v3364 = vld [vmem:[#allocation9 + $0x1d8] sm:$0xff]
        %v3365 = vld [vmem:[#allocation9 + $0x1e0] sm:$0xff]
        %v3366 = vld [vmem:[#allocation9 + $0x1e8] sm:$0xff]
        %v3367 = vld [vmem:[#allocation9 + $0x1f0] sm:$0xff]
        %v3368 = vld [vmem:[#allocation9 + $0x1f8] sm:$0xff]
        %v3369 = vld [vmem:[#allocation9 + $0x200] sm:$0xff]
        %v3370 = vld [vmem:[#allocation9 + $0x208] sm:$0xff]
        %v3371 = vld [vmem:[#allocation9 + $0x210] sm:$0xff]
        %v3372 = vld [vmem:[#allocation9 + $0x218] sm:$0xff]
        %v3373 = vld [vmem:[#allocation9 + $0x220] sm:$0xff]
        %v3374 = vld [vmem:[#allocation9 + $0x228] sm:$0xff]
        %v3375 = vld [vmem:[#allocation9 + $0x230] sm:$0xff]
        %v3376 = vld [vmem:[#allocation9 + $0x238] sm:$0xff]
        %v3377 = vld [vmem:[#allocation9 + $0x240] sm:$0xff]
        %v3378 = vld [vmem:[#allocation9 + $0x248] sm:$0xff]
        %v3379 = vld [vmem:[#allocation9 + $0x250] sm:$0xff]
        %v3380 = vld [vmem:[#allocation9 + $0x258] sm:$0xff]
        %v3381 = vld [vmem:[#allocation9 + $0x260] sm:$0xff]
        %v3382 = vld [vmem:[#allocation9 + $0x268] sm:$0xff]
        %v3383 = vld [vmem:[#allocation9 + $0x270] sm:$0xff]
        %v3384 = vld [vmem:[#allocation9 + $0x278] sm:$0xff]
        %v3385 = vld [vmem:[#allocation9 + $0x280] sm:$0xff]
        %v3386 = vld [vmem:[#allocation9 + $0x288] sm:$0xff]
        %v3387 = vld [vmem:[#allocation9 + $0x290] sm:$0xff]
        %v3388 = vld [vmem:[#allocation9 + $0x298] sm:$0xff]
        %v3389 = vld [vmem:[#allocation9 + $0x2a0] sm:$0xff]
        %v3390 = vld [vmem:[#allocation9 + $0x2a8] sm:$0xff]
        %v3391 = vld [vmem:[#allocation9 + $0x2b0] sm:$0xff]
        %v3392 = vld [vmem:[#allocation9 + $0x2b8] sm:$0xff]
        %v3393 = vld [vmem:[#allocation9 + $0x2c0] sm:$0xff]
        %v3394 = vld [vmem:[#allocation9 + $0x2c8] sm:$0xff]
        %v3395 = vld [vmem:[#allocation9 + $0x2d0] sm:$0xff]
        %v3396 = vld [vmem:[#allocation9 + $0x2d8] sm:$0xff]
        %v3397 = vld [vmem:[#allocation9 + $0x2e0] sm:$0xff]
        %v3398 = vld [vmem:[#allocation9 + $0x2e8] sm:$0xff]
        %v3399 = vld [vmem:[#allocation9 + $0x2f0] sm:$0xff]
        %v3400 = vld [vmem:[#allocation9 + $0x2f8] sm:$0xff]
        %v3401 = vld [vmem:[#allocation9 + $0x300] sm:$0xff]
        %v3402 = vld [vmem:[#allocation9 + $0x308] sm:$0xff]
        %v3403 = vld [vmem:[#allocation9 + $0x310] sm:$0xff]
        %v3404 = vld [vmem:[#allocation9 + $0x318] sm:$0xff]
        %v3405 = vld [vmem:[#allocation9 + $0x320] sm:$0xff]
        %v3406 = vld [vmem:[#allocation9 + $0x328] sm:$0xff]
        %v3407 = vld [vmem:[#allocation9 + $0x330] sm:$0xff]
        %v3408 = vld [vmem:[#allocation9 + $0x338] sm:$0xff]
        %v3409 = vld [vmem:[#allocation9 + $0x340] sm:$0xff]
        %v3410 = vld [vmem:[#allocation9 + $0x348] sm:$0xff]
        %v3411 = vld [vmem:[#allocation9 + $0x350] sm:$0xff]
        %v3412 = vld [vmem:[#allocation9 + $0x358] sm:$0xff]
        %v3413 = vld [vmem:[#allocation9 + $0x360] sm:$0xff]
        %v3414 = vld [vmem:[#allocation9 + $0x368] sm:$0xff]
        %v3415 = vld [vmem:[#allocation9 + $0x370] sm:$0xff]
        %v3416 = vld [vmem:[#allocation9 + $0x378] sm:$0xff]
        %v3417 = vld [vmem:[#allocation9 + $0x380] sm:$0xff]
        %v3418 = vld [vmem:[#allocation9 + $0x388] sm:$0xff]
        %v3419 = vld [vmem:[#allocation9 + $0x390] sm:$0xff]
        %v3420 = vld [vmem:[#allocation9 + $0x398] sm:$0xff]
        %v3421 = vld [vmem:[#allocation9 + $0x3a0] sm:$0xff]
        %v3422 = vld [vmem:[#allocation9 + $0x3a8] sm:$0xff]
        %v3423 = vld [vmem:[#allocation9 + $0x3b0] sm:$0xff]
        %v3424 = vld [vmem:[#allocation9 + $0x3b8] sm:$0xff]
        %v3425 = vld [vmem:[#allocation9 + $0x3c0] sm:$0xff]
        %v3426 = vld [vmem:[#allocation9 + $0x3c8] sm:$0xff]
        %v3427 = vld [vmem:[#allocation9 + $0x3d0] sm:$0xff]
        %v3428 = vld [vmem:[#allocation9 + $0x3d8] sm:$0xff]
        %v3429 = vld [vmem:[#allocation9 + $0x3e0] sm:$0xff]
        %v3430 = vld [vmem:[#allocation9 + $0x3e8] sm:$0xff]
        %v3431 = vld [vmem:[#allocation9 + $0x3f0] sm:$0xff]
        %v3432 = vld [vmem:[#allocation9 + $0x3f8] sm:$0xff]
        %v3433 = vld [vmem:[#allocation9 + $0x400] sm:$0xff]
        %v3434 = vld [vmem:[#allocation9 + $0x408] sm:$0xff]
        %v3435 = vld [vmem:[#allocation9 + $0x410] sm:$0xff]
        %v3436 = vld [vmem:[#allocation9 + $0x418] sm:$0xff]
        %v3437 = vld [vmem:[#allocation9 + $0x420] sm:$0xff]
        %v3438 = vld [vmem:[#allocation9 + $0x428] sm:$0xff]
        %v3439 = vld [vmem:[#allocation9 + $0x430] sm:$0xff]
        %v3440 = vld [vmem:[#allocation9 + $0x438] sm:$0xff]
        %v3441 = vld [vmem:[#allocation9 + $0x440] sm:$0xff]
        %v3442 = vld [vmem:[#allocation9 + $0x448] sm:$0xff]
        %v3443 = vld [vmem:[#allocation9 + $0x450] sm:$0xff]
        %v3444 = vld [vmem:[#allocation9 + $0x458] sm:$0xff]
        %v3445 = vld [vmem:[#allocation9 + $0x460] sm:$0xff]
        %v3446 = vld [vmem:[#allocation9 + $0x468] sm:$0xff]
        %v3447 = vld [vmem:[#allocation9 + $0x470] sm:$0xff]
        %v3448 = vld [vmem:[#allocation9 + $0x478] sm:$0xff]
        %v3449 = vld [vmem:[#allocation9 + $0x480] sm:$0xff]
        %v3450 = vld [vmem:[#allocation9 + $0x488] sm:$0xff]
        %v3451 = vld [vmem:[#allocation9 + $0x490] sm:$0xff]
        %v3452 = vld [vmem:[#allocation9 + $0x498] sm:$0xff]
        %v3453 = vld [vmem:[#allocation9 + $0x4a0] sm:$0xff]
        %v3454 = vld [vmem:[#allocation9 + $0x4a8] sm:$0xff]
        %v3455 = vld [vmem:[#allocation9 + $0x4b0] sm:$0xff]
        %v3456 = vld [vmem:[#allocation9 + $0x4b8] sm:$0xff]
        %v3457 = vld [vmem:[#allocation9 + $0x4c0] sm:$0xff]
        %v3458 = vld [vmem:[#allocation9 + $0x4c8] sm:$0xff]
        %v3459 = vld [vmem:[#allocation9 + $0x4d0] sm:$0xff]
        %v3460 = vld [vmem:[#allocation9 + $0x4d8] sm:$0xff]
        %v3461 = vld [vmem:[#allocation9 + $0x4e0] sm:$0xff]
        %v3462 = vld [vmem:[#allocation9 + $0x4e8] sm:$0xff]
        %v3463 = vld [vmem:[#allocation9 + $0x4f0] sm:$0xff]
        %v3464 = vld [vmem:[#allocation9 + $0x4f8] sm:$0xff]
        %v3465 = vld [vmem:[#allocation9 + $0x500] sm:$0xff]
        %v3466 = vld [vmem:[#allocation9 + $0x508] sm:$0xff]
        %v3467 = vld [vmem:[#allocation9 + $0x510] sm:$0xff]
        %v3468 = vld [vmem:[#allocation9 + $0x518] sm:$0xff]
        %v3469 = vld [vmem:[#allocation9 + $0x520] sm:$0xff]
        %v3470 = vld [vmem:[#allocation9 + $0x528] sm:$0xff]
        %v3471 = vld [vmem:[#allocation9 + $0x530] sm:$0xff]
        %v3472 = vld [vmem:[#allocation9 + $0x538] sm:$0xff]
        %v3473 = vld [vmem:[#allocation9 + $0x540] sm:$0xff]
        %v3474 = vld [vmem:[#allocation9 + $0x548] sm:$0xff]
        %v3475 = vld [vmem:[#allocation9 + $0x550] sm:$0xff]
        %v3476 = vld [vmem:[#allocation9 + $0x558] sm:$0xff]
        %v3477 = vld [vmem:[#allocation9 + $0x560] sm:$0xff]
        %v3478 = vld [vmem:[#allocation9 + $0x568] sm:$0xff]
        %v3479 = vld [vmem:[#allocation9 + $0x570] sm:$0xff]
        %v3480 = vld [vmem:[#allocation9 + $0x578] sm:$0xff]
        %v3481 = vld [vmem:[#allocation9 + $0x580] sm:$0xff]
        %v3482 = vld [vmem:[#allocation9 + $0x588] sm:$0xff]
        %v3483 = vld [vmem:[#allocation9 + $0x590] sm:$0xff]
        %v3484 = vld [vmem:[#allocation9 + $0x598] sm:$0xff]
        %v3485 = vld [vmem:[#allocation9 + $0x5a0] sm:$0xff]
        %v3486 = vld [vmem:[#allocation9 + $0x5a8] sm:$0xff]
        %v3487 = vld [vmem:[#allocation9 + $0x5b0] sm:$0xff]
        %v3488 = vld [vmem:[#allocation9 + $0x5b8] sm:$0xff]
        %v3489 = vld [vmem:[#allocation9 + $0x5c0] sm:$0xff]
        %v3490 = vld [vmem:[#allocation9 + $0x5c8] sm:$0xff]
        %v3491 = vld [vmem:[#allocation9 + $0x5d0] sm:$0xff]
        %v3492 = vld [vmem:[#allocation9 + $0x5d8] sm:$0xff]
        %v3493 = vld [vmem:[#allocation9 + $0x5e0] sm:$0xff]
        %v3494 = vld [vmem:[#allocation9 + $0x5e8] sm:$0xff]
        %v3495 = vld [vmem:[#allocation9 + $0x5f0] sm:$0xff]
        %v3496 = vld [vmem:[#allocation9 + $0x5f8] sm:$0xff]
        %v3497 = vld [vmem:[#allocation9 + $0x600] sm:$0xff]
        %v3498 = vld [vmem:[#allocation9 + $0x608] sm:$0xff]
        %v3499 = vld [vmem:[#allocation9 + $0x610] sm:$0xff]
        %v3500 = vld [vmem:[#allocation9 + $0x618] sm:$0xff]
        %v3501 = vld [vmem:[#allocation9 + $0x620] sm:$0xff]
        %v3502 = vld [vmem:[#allocation9 + $0x628] sm:$0xff]
        %v3503 = vld [vmem:[#allocation9 + $0x630] sm:$0xff]
        %v3504 = vld [vmem:[#allocation9 + $0x638] sm:$0xff]
        %v3505 = vld [vmem:[#allocation9 + $0x640] sm:$0xff]
        %v3506 = vld [vmem:[#allocation9 + $0x648] sm:$0xff]
        %v3507 = vld [vmem:[#allocation9 + $0x650] sm:$0xff]
        %v3508 = vld [vmem:[#allocation9 + $0x658] sm:$0xff]
        %v3509 = vld [vmem:[#allocation9 + $0x660] sm:$0xff]
        %v3510 = vld [vmem:[#allocation9 + $0x668] sm:$0xff]
        %v3511 = vld [vmem:[#allocation9 + $0x670] sm:$0xff]
        %v3512 = vld [vmem:[#allocation9 + $0x678] sm:$0xff]
        %v3513 = vld [vmem:[#allocation9 + $0x680] sm:$0xff]
        %v3514 = vld [vmem:[#allocation9 + $0x688] sm:$0xff]
        %v3515 = vld [vmem:[#allocation9 + $0x690] sm:$0xff]
        %v3516 = vld [vmem:[#allocation9 + $0x698] sm:$0xff]
        %v3517 = vld [vmem:[#allocation9 + $0x6a0] sm:$0xff]
        %v3518 = vld [vmem:[#allocation9 + $0x6a8] sm:$0xff]
        %v3519 = vld [vmem:[#allocation9 + $0x6b0] sm:$0xff]
        %v3520 = vld [vmem:[#allocation9 + $0x6b8] sm:$0xff]
        %v3521 = vld [vmem:[#allocation9 + $0x6c0] sm:$0xff]
        %v3522 = vld [vmem:[#allocation9 + $0x6c8] sm:$0xff]
        %v3523 = vld [vmem:[#allocation9 + $0x6d0] sm:$0xff]
        %v3524 = vld [vmem:[#allocation9 + $0x6d8] sm:$0xff]
        %v3525 = vld [vmem:[#allocation9 + $0x6e0] sm:$0xff]
        %v3526 = vld [vmem:[#allocation9 + $0x6e8] sm:$0xff]
        %v3527 = vld [vmem:[#allocation9 + $0x6f0] sm:$0xff]
        %v3528 = vld [vmem:[#allocation9 + $0x6f8] sm:$0xff]
        %v3529 = vld [vmem:[#allocation9 + $0x700] sm:$0xff]
        %v3530 = vld [vmem:[#allocation9 + $0x708] sm:$0xff]
        %v3531 = vld [vmem:[#allocation9 + $0x710] sm:$0xff]
        %v3532 = vld [vmem:[#allocation9 + $0x718] sm:$0xff]
        %v3533 = vld [vmem:[#allocation9 + $0x720] sm:$0xff]
        %v3534 = vld [vmem:[#allocation9 + $0x728] sm:$0xff]
        %v3535 = vld [vmem:[#allocation9 + $0x730] sm:$0xff]
        %v3536 = vld [vmem:[#allocation9 + $0x738] sm:$0xff]
        %v3537 = vld [vmem:[#allocation9 + $0x740] sm:$0xff]
        %v3538 = vld [vmem:[#allocation9 + $0x748] sm:$0xff]
        %v3539 = vld [vmem:[#allocation9 + $0x750] sm:$0xff]
        %v3540 = vld [vmem:[#allocation9 + $0x758] sm:$0xff]
        %v3541 = vld [vmem:[#allocation9 + $0x760] sm:$0xff]
        %v3542 = vld [vmem:[#allocation9 + $0x768] sm:$0xff]
        %v3543 = vld [vmem:[#allocation9 + $0x770] sm:$0xff]
        %v3544 = vld [vmem:[#allocation9 + $0x778] sm:$0xff]
        %v3545 = vld [vmem:[#allocation9 + $0x780] sm:$0xff]
        %v3546 = vld [vmem:[#allocation9 + $0x788] sm:$0xff]
        %v3547 = vld [vmem:[#allocation9 + $0x790] sm:$0xff]
        %v3548 = vld [vmem:[#allocation9 + $0x798] sm:$0xff]
        %v3549 = vld [vmem:[#allocation9 + $0x7a0] sm:$0xff]
        %v3550 = vld [vmem:[#allocation9 + $0x7a8] sm:$0xff]
        %v3551 = vld [vmem:[#allocation9 + $0x7b0] sm:$0xff]
        %v3552 = vld [vmem:[#allocation9 + $0x7b8] sm:$0xff]
        %v3553 = vld [vmem:[#allocation9 + $0x7c0] sm:$0xff]
        %v3554 = vld [vmem:[#allocation9 + $0x7c8] sm:$0xff]
        %v3555 = vld [vmem:[#allocation9 + $0x7d0] sm:$0xff]
        %v3556 = vld [vmem:[#allocation9 + $0x7d8] sm:$0xff]
        %v3557 = vld [vmem:[#allocation9 + $0x7e0] sm:$0xff]
        %v3558 = vld [vmem:[#allocation9 + $0x7e8] sm:$0xff]
        %v3559 = vld [vmem:[#allocation9 + $0x7f0] sm:$0xff]
        %v3560 = vld [vmem:[#allocation9 + $0x7f8] sm:$0xff]
        %v3561 = vld [vmem:[#allocation9 + $0x800] sm:$0xff]
        %v3562 = vld [vmem:[#allocation9 + $0x808] sm:$0xff]
        %v3563 = vld [vmem:[#allocation9 + $0x810] sm:$0xff]
        %v3564 = vld [vmem:[#allocation9 + $0x818] sm:$0xff]
        %v3565 = vld [vmem:[#allocation9 + $0x820] sm:$0xff]
        %v3566 = vld [vmem:[#allocation9 + $0x828] sm:$0xff]
        %v3567 = vld [vmem:[#allocation9 + $0x830] sm:$0xff]
        %v3568 = vld [vmem:[#allocation9 + $0x838] sm:$0xff]
        %v3569 = vld [vmem:[#allocation9 + $0x840] sm:$0xff]
        %v3570 = vld [vmem:[#allocation9 + $0x848] sm:$0xff]
        %v3571 = vld [vmem:[#allocation9 + $0x850] sm:$0xff]
        %v3572 = vld [vmem:[#allocation9 + $0x858] sm:$0xff]
        %v3573 = vld [vmem:[#allocation9 + $0x860] sm:$0xff]
        %v3574 = vld [vmem:[#allocation9 + $0x868] sm:$0xff]
        %v3575 = vld [vmem:[#allocation9 + $0x870] sm:$0xff]
        %v3576 = vld [vmem:[#allocation9 + $0x878] sm:$0xff]
        %v3577 = vld [vmem:[#allocation9 + $0x880] sm:$0xff]
        %v3578 = vld [vmem:[#allocation9 + $0x888] sm:$0xff]
        %v3579 = vld [vmem:[#allocation9 + $0x890] sm:$0xff]
        %v3580 = vld [vmem:[#allocation9 + $0x898] sm:$0xff]
        %v3581 = vld [vmem:[#allocation9 + $0x8a0] sm:$0xff]
        %v3582 = vld [vmem:[#allocation9 + $0x8a8] sm:$0xff]
        %v3583 = vld [vmem:[#allocation9 + $0x8b0] sm:$0xff]
        %v3584 = vld [vmem:[#allocation9 + $0x8b8] sm:$0xff]
        %v3585 = vld [vmem:[#allocation9 + $0x8c0] sm:$0xff]
        %v3586 = vld [vmem:[#allocation9 + $0x8c8] sm:$0xff]
        %v3587 = vld [vmem:[#allocation9 + $0x8d0] sm:$0xff]
        %v3588 = vld [vmem:[#allocation9 + $0x8d8] sm:$0xff]
        %v3589 = vld [vmem:[#allocation9 + $0x8e0] sm:$0xff]
        %v3590 = vld [vmem:[#allocation9 + $0x8e8] sm:$0xff]
        %v3591 = vld [vmem:[#allocation9 + $0x8f0] sm:$0xff]
        %v3592 = vld [vmem:[#allocation9 + $0x8f8] sm:$0xff]
        %v3593 = vld [vmem:[#allocation9 + $0x900] sm:$0xff]
        %v3594 = vld [vmem:[#allocation9 + $0x908] sm:$0xff]
        %v3595 = vld [vmem:[#allocation9 + $0x910] sm:$0xff]
        %v3596 = vld [vmem:[#allocation9 + $0x918] sm:$0xff]
        %v3597 = vld [vmem:[#allocation9 + $0x920] sm:$0xff]
        %v3598 = vld [vmem:[#allocation9 + $0x928] sm:$0xff]
        %v3599 = vld [vmem:[#allocation9 + $0x930] sm:$0xff]
        %v3600 = vld [vmem:[#allocation9 + $0x938] sm:$0xff]
        %v3601 = vld [vmem:[#allocation9 + $0x940] sm:$0xff]
        %v3602 = vld [vmem:[#allocation9 + $0x948] sm:$0xff]
        %v3603 = vld [vmem:[#allocation9 + $0x950] sm:$0xff]
        %v3604 = vld [vmem:[#allocation9 + $0x958] sm:$0xff]
        %v3605 = vld [vmem:[#allocation9 + $0x960] sm:$0xff]
        %v3606 = vld [vmem:[#allocation9 + $0x968] sm:$0xff]
        %v3607 = vld [vmem:[#allocation9 + $0x970] sm:$0xff]
        %v3608 = vld [vmem:[#allocation9 + $0x978] sm:$0xff]
        %v3609 = vld [vmem:[#allocation9 + $0x980] sm:$0xff]
        %v3610 = vld [vmem:[#allocation9 + $0x988] sm:$0xff]
        %v3611 = vld [vmem:[#allocation9 + $0x990] sm:$0xff]
        %v3612 = vld [vmem:[#allocation9 + $0x998] sm:$0xff]
        %v3613 = vld [vmem:[#allocation9 + $0x9a0] sm:$0xff]
        %v3614 = vld [vmem:[#allocation9 + $0x9a8] sm:$0xff]
        %v3615 = vld [vmem:[#allocation9 + $0x9b0] sm:$0xff]
        %v3616 = vld [vmem:[#allocation9 + $0x9b8] sm:$0xff]
        %v3617 = vld [vmem:[#allocation9 + $0x9c0] sm:$0xff]
        %v3618 = vld [vmem:[#allocation9 + $0x9c8] sm:$0xff]
        %v3619 = vld [vmem:[#allocation9 + $0x9d0] sm:$0xff]
        %v3620 = vld [vmem:[#allocation9 + $0x9d8] sm:$0xff]
        %v3621 = vld [vmem:[#allocation9 + $0x9e0] sm:$0xff]
        %v3622 = vld [vmem:[#allocation9 + $0x9e8] sm:$0xff]
        %v3623 = vld [vmem:[#allocation9 + $0x9f0] sm:$0xff]
        %v3624 = vld [vmem:[#allocation9 + $0x9f8] sm:$0xff]
        %v3625 = vld [vmem:[#allocation9 + $0xa00] sm:$0xff]
        %v3626 = vld [vmem:[#allocation9 + $0xa08] sm:$0xff]
        %v3627 = vld [vmem:[#allocation9 + $0xa10] sm:$0xff]
        %v3628 = vld [vmem:[#allocation9 + $0xa18] sm:$0xff]
        %v3629 = vld [vmem:[#allocation9 + $0xa20] sm:$0xff]
        %v3630 = vld [vmem:[#allocation9 + $0xa28] sm:$0xff]
        %v3631 = vld [vmem:[#allocation9 + $0xa30] sm:$0xff]
        %v3632 = vld [vmem:[#allocation9 + $0xa38] sm:$0xff]
        %v3633 = vld [vmem:[#allocation9 + $0xa40] sm:$0xff]
        %v3634 = vld [vmem:[#allocation9 + $0xa48] sm:$0xff]
        %v3635 = vld [vmem:[#allocation9 + $0xa50] sm:$0xff]
        %v3636 = vld [vmem:[#allocation9 + $0xa58] sm:$0xff]
        %v3637 = vld [vmem:[#allocation9 + $0xa60] sm:$0xff]
        %v3638 = vld [vmem:[#allocation9 + $0xa68] sm:$0xff]
        %v3639 = vld [vmem:[#allocation9 + $0xa70] sm:$0xff]
        %v3640 = vld [vmem:[#allocation9 + $0xa78] sm:$0xff]
        %v3641 = vld [vmem:[#allocation9 + $0xa80] sm:$0xff]
        %v3642 = vld [vmem:[#allocation9 + $0xa88] sm:$0xff]
        %v3643 = vld [vmem:[#allocation9 + $0xa90] sm:$0xff]
        %v3644 = vld [vmem:[#allocation9 + $0xa98] sm:$0xff]
        %v3645 = vld [vmem:[#allocation9 + $0xaa0] sm:$0xff]
        %v3646 = vld [vmem:[#allocation9 + $0xaa8] sm:$0xff]
        %v3647 = vld [vmem:[#allocation9 + $0xab0] sm:$0xff]
        %v3648 = vld [vmem:[#allocation9 + $0xab8] sm:$0xff]
        %v3649 = vld [vmem:[#allocation9 + $0xac0] sm:$0xff]
        %v3650 = vld [vmem:[#allocation9 + $0xac8] sm:$0xff]
        %v3651 = vld [vmem:[#allocation9 + $0xad0] sm:$0xff]
        %v3652 = vld [vmem:[#allocation9 + $0xad8] sm:$0xff]
        %v3653 = vld [vmem:[#allocation9 + $0xae0] sm:$0xff]
        %v3654 = vld [vmem:[#allocation9 + $0xae8] sm:$0xff]
        %v3655 = vld [vmem:[#allocation9 + $0xaf0] sm:$0xff]
        %v3656 = vld [vmem:[#allocation9 + $0xaf8] sm:$0xff]
        %v3657 = vld [vmem:[#allocation9 + $0xb00] sm:$0xff]
        %v3658 = vld [vmem:[#allocation9 + $0xb08] sm:$0xff]
        %v3659 = vld [vmem:[#allocation9 + $0xb10] sm:$0xff]
        %v3660 = vld [vmem:[#allocation9 + $0xb18] sm:$0xff]
        %v3661 = vld [vmem:[#allocation9 + $0xb20] sm:$0xff]
        %v3662 = vld [vmem:[#allocation9 + $0xb28] sm:$0xff]
        %v3663 = vld [vmem:[#allocation9 + $0xb30] sm:$0xff]
        %v3664 = vld [vmem:[#allocation9 + $0xb38] sm:$0xff]
        %v3665 = vld [vmem:[#allocation9 + $0xb40] sm:$0xff]
        %v3666 = vld [vmem:[#allocation9 + $0xb48] sm:$0xff]
        %v3667 = vld [vmem:[#allocation9 + $0xb50] sm:$0xff]
        %v3668 = vld [vmem:[#allocation9 + $0xb58] sm:$0xff]
        %v3669 = vld [vmem:[#allocation9 + $0xb60] sm:$0xff]
        %v3670 = vld [vmem:[#allocation9 + $0xb68] sm:$0xff]
        %v3671 = vld [vmem:[#allocation9 + $0xb70] sm:$0xff]
        %v3672 = vld [vmem:[#allocation9 + $0xb78] sm:$0xff]
        %v3673 = vld [vmem:[#allocation9 + $0xb80] sm:$0xff]
        %v3674 = vld [vmem:[#allocation9 + $0xb88] sm:$0xff]
        %v3675 = vld [vmem:[#allocation9 + $0xb90] sm:$0xff]
        %v3676 = vld [vmem:[#allocation9 + $0xb98] sm:$0xff]
        %v3677 = vld [vmem:[#allocation9 + $0xba0] sm:$0xff]
        %v3678 = vld [vmem:[#allocation9 + $0xba8] sm:$0xff]
        %v3679 = vld [vmem:[#allocation9 + $0xbb0] sm:$0xff]
        %v3680 = vld [vmem:[#allocation9 + $0xbb8] sm:$0xff]
        %v3681 = vld [vmem:[#allocation9 + $0xbc0] sm:$0xff]
        %v3682 = vld [vmem:[#allocation9 + $0xbc8] sm:$0xff]
        %v3683 = vld [vmem:[#allocation9 + $0xbd0] sm:$0xff]
        %v3684 = vld [vmem:[#allocation9 + $0xbd8] sm:$0xff]
        %v3685 = vld [vmem:[#allocation9 + $0xbe0] sm:$0xff]
        %v3686 = vld [vmem:[#allocation9 + $0xbe8] sm:$0xff]
        %v3687 = vld [vmem:[#allocation9 + $0xbf0] sm:$0xff]
        %v3688 = vld [vmem:[#allocation9 + $0xbf8] sm:$0xff]
        %v3689 = vld [vmem:[#allocation9 + $0xc00] sm:$0xff]
        %v3690 = vld [vmem:[#allocation9 + $0xc08] sm:$0xff]
        %v3691 = vld [vmem:[#allocation9 + $0xc10] sm:$0xff]
        %v3692 = vld [vmem:[#allocation9 + $0xc18] sm:$0xff]
        %v3693 = vld [vmem:[#allocation9 + $0xc20] sm:$0xff]
        %v3694 = vld [vmem:[#allocation9 + $0xc28] sm:$0xff]
        %v3695 = vld [vmem:[#allocation9 + $0xc30] sm:$0xff]
        %v3696 = vld [vmem:[#allocation9 + $0xc38] sm:$0xff]
        %v3697 = vld [vmem:[#allocation9 + $0xc40] sm:$0xff]
        %v3698 = vld [vmem:[#allocation9 + $0xc48] sm:$0xff]
        %v3699 = vld [vmem:[#allocation9 + $0xc50] sm:$0xff]
        %v3700 = vld [vmem:[#allocation9 + $0xc58] sm:$0xff]
        %v3701 = vld [vmem:[#allocation9 + $0xc60] sm:$0xff]
        %v3702 = vld [vmem:[#allocation9 + $0xc68] sm:$0xff]
        %v3703 = vld [vmem:[#allocation9 + $0xc70] sm:$0xff]
        %v3704 = vld [vmem:[#allocation9 + $0xc78] sm:$0xff]
        %v3705 = vld [vmem:[#allocation9 + $0xc80] sm:$0xff]
        %v3706 = vld [vmem:[#allocation9 + $0xc88] sm:$0xff]
        %v3707 = vld [vmem:[#allocation9 + $0xc90] sm:$0xff]
        %v3708 = vld [vmem:[#allocation9 + $0xc98] sm:$0xff]
        %v3709 = vld [vmem:[#allocation9 + $0xca0] sm:$0xff]
        %v3710 = vld [vmem:[#allocation9 + $0xca8] sm:$0xff]
        %v3711 = vld [vmem:[#allocation9 + $0xcb0] sm:$0xff]
        %v3712 = vld [vmem:[#allocation9 + $0xcb8] sm:$0xff]
        %v3713 = vld [vmem:[#allocation9 + $0xcc0] sm:$0xff]
        %v3714 = vld [vmem:[#allocation9 + $0xcc8] sm:$0xff]
        %v3715 = vld [vmem:[#allocation9 + $0xcd0] sm:$0xff]
        %v3716 = vld [vmem:[#allocation9 + $0xcd8] sm:$0xff]
        %v3717 = vld [vmem:[#allocation9 + $0xce0] sm:$0xff]
        %v3718 = vld [vmem:[#allocation9 + $0xce8] sm:$0xff]
        %v3719 = vld [vmem:[#allocation9 + $0xcf0] sm:$0xff]
        %v3720 = vld [vmem:[#allocation9 + $0xcf8] sm:$0xff]
        %v3721 = vld [vmem:[#allocation9 + $0xd00] sm:$0xff]
        %v3722 = vld [vmem:[#allocation9 + $0xd08] sm:$0xff]
        %v3723 = vld [vmem:[#allocation9 + $0xd10] sm:$0xff]
        %v3724 = vld [vmem:[#allocation9 + $0xd18] sm:$0xff]
        %v3725 = vld [vmem:[#allocation9 + $0xd20] sm:$0xff]
        %v3726 = vld [vmem:[#allocation9 + $0xd28] sm:$0xff]
        %v3727 = vld [vmem:[#allocation9 + $0xd30] sm:$0xff]
        %v3728 = vld [vmem:[#allocation9 + $0xd38] sm:$0xff]
        %v3729 = vld [vmem:[#allocation9 + $0xd40] sm:$0xff]
        %v3730 = vld [vmem:[#allocation9 + $0xd48] sm:$0xff]
        %v3731 = vld [vmem:[#allocation9 + $0xd50] sm:$0xff]
        %v3732 = vld [vmem:[#allocation9 + $0xd58] sm:$0xff]
        %v3733 = vld [vmem:[#allocation9 + $0xd60] sm:$0xff]
        %v3734 = vld [vmem:[#allocation9 + $0xd68] sm:$0xff]
        %v3735 = vld [vmem:[#allocation9 + $0xd70] sm:$0xff]
        %v3736 = vld [vmem:[#allocation9 + $0xd78] sm:$0xff]
        %v3737 = vld [vmem:[#allocation9 + $0xd80] sm:$0xff]
        %v3738 = vld [vmem:[#allocation9 + $0xd88] sm:$0xff]
        %v3739 = vld [vmem:[#allocation9 + $0xd90] sm:$0xff]
        %v3740 = vld [vmem:[#allocation9 + $0xd98] sm:$0xff]
        %v3741 = vld [vmem:[#allocation9 + $0xda0] sm:$0xff]
        %v3742 = vld [vmem:[#allocation9 + $0xda8] sm:$0xff]
        %v3743 = vld [vmem:[#allocation9 + $0xdb0] sm:$0xff]
        %v3744 = vld [vmem:[#allocation9 + $0xdb8] sm:$0xff]
        %v3745 = vld [vmem:[#allocation9 + $0xdc0] sm:$0xff]
        %v3746 = vld [vmem:[#allocation9 + $0xdc8] sm:$0xff]
        %v3747 = vld [vmem:[#allocation9 + $0xdd0] sm:$0xff]
        %v3748 = vld [vmem:[#allocation9 + $0xdd8] sm:$0xff]
        %v3749 = vld [vmem:[#allocation9 + $0xde0] sm:$0xff]
        %v3750 = vld [vmem:[#allocation9 + $0xde8] sm:$0xff]
        %v3751 = vld [vmem:[#allocation9 + $0xdf0] sm:$0xff]
        %v3752 = vld [vmem:[#allocation9 + $0xdf8] sm:$0xff]
        %v3753 = vld [vmem:[#allocation9 + $0xe00] sm:$0xff]
        %v3754 = vld [vmem:[#allocation9 + $0xe08] sm:$0xff]
        %v3755 = vld [vmem:[#allocation9 + $0xe10] sm:$0xff]
        %v3756 = vld [vmem:[#allocation9 + $0xe18] sm:$0xff]
        %v3757 = vld [vmem:[#allocation9 + $0xe20] sm:$0xff]
        %v3758 = vld [vmem:[#allocation9 + $0xe28] sm:$0xff]
        %v3759 = vld [vmem:[#allocation9 + $0xe30] sm:$0xff]
        %v3760 = vld [vmem:[#allocation9 + $0xe38] sm:$0xff]
        %v3761 = vld [vmem:[#allocation9 + $0xe40] sm:$0xff]
        %v3762 = vld [vmem:[#allocation9 + $0xe48] sm:$0xff]
        %v3763 = vld [vmem:[#allocation9 + $0xe50] sm:$0xff]
        %v3764 = vld [vmem:[#allocation9 + $0xe58] sm:$0xff]
        %v3765 = vld [vmem:[#allocation9 + $0xe60] sm:$0xff]
        %v3766 = vld [vmem:[#allocation9 + $0xe68] sm:$0xff]
        %v3767 = vld [vmem:[#allocation9 + $0xe70] sm:$0xff]
        %v3768 = vld [vmem:[#allocation9 + $0xe78] sm:$0xff]
        %v3769 = vld [vmem:[#allocation9 + $0xe80] sm:$0xff]
        %v3770 = vld [vmem:[#allocation9 + $0xe88] sm:$0xff]
        %v3771 = vld [vmem:[#allocation9 + $0xe90] sm:$0xff]
        %v3772 = vld [vmem:[#allocation9 + $0xe98] sm:$0xff]
        %v3773 = vld [vmem:[#allocation9 + $0xea0] sm:$0xff]
        %v3774 = vld [vmem:[#allocation9 + $0xea8] sm:$0xff]
        %v3775 = vld [vmem:[#allocation9 + $0xeb0] sm:$0xff]
        %v3776 = vld [vmem:[#allocation9 + $0xeb8] sm:$0xff]
        %v3777 = vld [vmem:[#allocation9 + $0xec0] sm:$0xff]
        %v3778 = vld [vmem:[#allocation9 + $0xec8] sm:$0xff]
        %v3779 = vld [vmem:[#allocation9 + $0xed0] sm:$0xff]
        %v3780 = vld [vmem:[#allocation9 + $0xed8] sm:$0xff]
        %v3781 = vld [vmem:[#allocation9 + $0xee0] sm:$0xff]
        %v3782 = vld [vmem:[#allocation9 + $0xee8] sm:$0xff]
        %v3783 = vld [vmem:[#allocation9 + $0xef0] sm:$0xff]
        %v3784 = vld [vmem:[#allocation9 + $0xef8] sm:$0xff]
        %v3785 = vld [vmem:[#allocation9 + $0xf00] sm:$0xff]
        %v3786 = vld [vmem:[#allocation9 + $0xf08] sm:$0xff]
        %v3787 = vld [vmem:[#allocation9 + $0xf10] sm:$0xff]
        %v3788 = vld [vmem:[#allocation9 + $0xf18] sm:$0xff]
        %v3789 = vld [vmem:[#allocation9 + $0xf20] sm:$0xff]
        %v3790 = vld [vmem:[#allocation9 + $0xf28] sm:$0xff]
        %v3791 = vld [vmem:[#allocation9 + $0xf30] sm:$0xff]
        %v3792 = vld [vmem:[#allocation9 + $0xf38] sm:$0xff]
        %v3793 = vld [vmem:[#allocation9 + $0xf40] sm:$0xff]
        %v3794 = vld [vmem:[#allocation9 + $0xf48] sm:$0xff]
        %v3795 = vld [vmem:[#allocation9 + $0xf50] sm:$0xff]
        %v3796 = vld [vmem:[#allocation9 + $0xf58] sm:$0xff]
        %v3797 = vld [vmem:[#allocation9 + $0xf60] sm:$0xff]
        %v3798 = vld [vmem:[#allocation9 + $0xf68] sm:$0xff]
        %v3799 = vld [vmem:[#allocation9 + $0xf70] sm:$0xff]
        %v3800 = vld [vmem:[#allocation9 + $0xf78] sm:$0xff]
        %v3801 = vld [vmem:[#allocation9 + $0xf80] sm:$0xff]
        %v3802 = vld [vmem:[#allocation9 + $0xf88] sm:$0xff]
        %v3803 = vld [vmem:[#allocation9 + $0xf90] sm:$0xff]
        %v3804 = vld [vmem:[#allocation9 + $0xf98] sm:$0xff]
        %v3805 = vld [vmem:[#allocation9 + $0xfa0] sm:$0xff]
        %v3806 = vld [vmem:[#allocation9 + $0xfa8] sm:$0xff]
        %v3807 = vld [vmem:[#allocation9 + $0xfb0] sm:$0xff]
        %v3808 = vld [vmem:[#allocation9 + $0xfb8] sm:$0xff]
        %v3809 = vld [vmem:[#allocation9 + $0xfc0] sm:$0xff]
        %v3810 = vld [vmem:[#allocation9 + $0xfc8] sm:$0xff]
        %v3811 = vld [vmem:[#allocation9 + $0xfd0] sm:$0xff]
        %v3812 = vld [vmem:[#allocation9 + $0xfd8] sm:$0xff]
        %v3813 = vld [vmem:[#allocation9 + $0xfe0] sm:$0xff]
        %v3814 = vld [vmem:[#allocation9 + $0xfe8] sm:$0xff]
        %v3815 = vld [vmem:[#allocation9 + $0xff0] sm:$0xff]
        %v3816 = vld [vmem:[#allocation9 + $0xff8] sm:$0xff]
        %v3817 = vld [vmem:[#allocation10] sm:$0xff]
        %v4330 = vunpack.c.l.b16 %v3305
        %v4331 = vunpack.c.h.b16 %v3305
        %v4332 = vunpack.c.l.b16 %v3306
        %v4333 = vunpack.c.h.b16 %v3306
        %v4334 = vunpack.c.l.b16 %v3307
        %v4335 = vunpack.c.h.b16 %v3307
        %v4336 = vunpack.c.l.b16 %v3308
        %v4337 = vunpack.c.h.b16 %v3308
        %v4338 = vunpack.c.l.b16 %v3309
        %v4339 = vunpack.c.h.b16 %v3309
        %v4340 = vunpack.c.l.b16 %v3310
        %v4341 = vunpack.c.h.b16 %v3310
        %v4342 = vunpack.c.l.b16 %v3311
        %v4343 = vunpack.c.h.b16 %v3311
        %v4344 = vunpack.c.l.b16 %v3312
        %v4345 = vunpack.c.h.b16 %v3312
        %v4346 = vunpack.c.l.b16 %v3313
        %v4347 = vunpack.c.h.b16 %v3313
        %v4348 = vunpack.c.l.b16 %v3314
        %v4349 = vunpack.c.h.b16 %v3314
        %v4350 = vunpack.c.l.b16 %v3315
        %v4351 = vunpack.c.h.b16 %v3315
        %v4352 = vunpack.c.l.b16 %v3316
        %v4353 = vunpack.c.h.b16 %v3316
        %v4354 = vunpack.c.l.b16 %v3317
        %v4355 = vunpack.c.h.b16 %v3317
        %v4356 = vunpack.c.l.b16 %v3318
        %v4357 = vunpack.c.h.b16 %v3318
        %v4358 = vunpack.c.l.b16 %v3319
        %v4359 = vunpack.c.h.b16 %v3319
        %v4360 = vunpack.c.l.b16 %v3320
        %v4361 = vunpack.c.h.b16 %v3320
        %v4362 = vunpack.c.l.b16 %v3321
        %v4363 = vunpack.c.h.b16 %v3321
        %v4364 = vunpack.c.l.b16 %v3322
        %v4365 = vunpack.c.h.b16 %v3322
        %v4366 = vunpack.c.l.b16 %v3323
        %v4367 = vunpack.c.h.b16 %v3323
        %v4368 = vunpack.c.l.b16 %v3324
        %v4369 = vunpack.c.h.b16 %v3324
        %v4370 = vunpack.c.l.b16 %v3325
        %v4371 = vunpack.c.h.b16 %v3325
        %v4372 = vunpack.c.l.b16 %v3326
        %v4373 = vunpack.c.h.b16 %v3326
        %v4374 = vunpack.c.l.b16 %v3327
        %v4375 = vunpack.c.h.b16 %v3327
        %v4376 = vunpack.c.l.b16 %v3328
        %v4377 = vunpack.c.h.b16 %v3328
        %v4378 = vunpack.c.l.b16 %v3329
        %v4379 = vunpack.c.h.b16 %v3329
        %v4380 = vunpack.c.l.b16 %v3330
        %v4381 = vunpack.c.h.b16 %v3330
        %v4382 = vunpack.c.l.b16 %v3331
        %v4383 = vunpack.c.h.b16 %v3331
        %v4384 = vunpack.c.l.b16 %v3332
        %v4385 = vunpack.c.h.b16 %v3332
        %v4386 = vunpack.c.l.b16 %v3333
        %v4387 = vunpack.c.h.b16 %v3333
        %v4388 = vunpack.c.l.b16 %v3334
        %v4389 = vunpack.c.h.b16 %v3334
        %v4390 = vunpack.c.l.b16 %v3335
        %v4391 = vunpack.c.h.b16 %v3335
        %v4392 = vunpack.c.l.b16 %v3336
        %v4393 = vunpack.c.h.b16 %v3336
        %v4394 = vunpack.c.l.b16 %v3337
        %v4395 = vunpack.c.h.b16 %v3337
        %v4396 = vunpack.c.l.b16 %v3338
        %v4397 = vunpack.c.h.b16 %v3338
        %v4398 = vunpack.c.l.b16 %v3339
        %v4399 = vunpack.c.h.b16 %v3339
        %v4400 = vunpack.c.l.b16 %v3340
        %v4401 = vunpack.c.h.b16 %v3340
        %v4402 = vunpack.c.l.b16 %v3341
        %v4403 = vunpack.c.h.b16 %v3341
        %v4404 = vunpack.c.l.b16 %v3342
        %v4405 = vunpack.c.h.b16 %v3342
        %v4406 = vunpack.c.l.b16 %v3343
        %v4407 = vunpack.c.h.b16 %v3343
        %v4408 = vunpack.c.l.b16 %v3344
        %v4409 = vunpack.c.h.b16 %v3344
        %v4410 = vunpack.c.l.b16 %v3345
        %v4411 = vunpack.c.h.b16 %v3345
        %v4412 = vunpack.c.l.b16 %v3346
        %v4413 = vunpack.c.h.b16 %v3346
        %v4414 = vunpack.c.l.b16 %v3347
        %v4415 = vunpack.c.h.b16 %v3347
        %v4416 = vunpack.c.l.b16 %v3348
        %v4417 = vunpack.c.h.b16 %v3348
        %v4418 = vunpack.c.l.b16 %v3349
        %v4419 = vunpack.c.h.b16 %v3349
        %v4420 = vunpack.c.l.b16 %v3350
        %v4421 = vunpack.c.h.b16 %v3350
        %v4422 = vunpack.c.l.b16 %v3351
        %v4423 = vunpack.c.h.b16 %v3351
        %v4424 = vunpack.c.l.b16 %v3352
        %v4425 = vunpack.c.h.b16 %v3352
        %v4426 = vunpack.c.l.b16 %v3353
        %v4427 = vunpack.c.h.b16 %v3353
        %v4428 = vunpack.c.l.b16 %v3354
        %v4429 = vunpack.c.h.b16 %v3354
        %v4430 = vunpack.c.l.b16 %v3355
        %v4431 = vunpack.c.h.b16 %v3355
        %v4432 = vunpack.c.l.b16 %v3356
        %v4433 = vunpack.c.h.b16 %v3356
        %v4434 = vunpack.c.l.b16 %v3357
        %v4435 = vunpack.c.h.b16 %v3357
        %v4436 = vunpack.c.l.b16 %v3358
        %v4437 = vunpack.c.h.b16 %v3358
        %v4438 = vunpack.c.l.b16 %v3359
        %v4439 = vunpack.c.h.b16 %v3359
        %v4440 = vunpack.c.l.b16 %v3360
        %v4441 = vunpack.c.h.b16 %v3360
        %v4442 = vunpack.c.l.b16 %v3361
        %v4443 = vunpack.c.h.b16 %v3361
        %v4444 = vunpack.c.l.b16 %v3362
        %v4445 = vunpack.c.h.b16 %v3362
        %v4446 = vunpack.c.l.b16 %v3363
        %v4447 = vunpack.c.h.b16 %v3363
        %v4448 = vunpack.c.l.b16 %v3364
        %v4449 = vunpack.c.h.b16 %v3364
        %v4450 = vunpack.c.l.b16 %v3365
        %v4451 = vunpack.c.h.b16 %v3365
        %v4452 = vunpack.c.l.b16 %v3366
        %v4453 = vunpack.c.h.b16 %v3366
        %v4454 = vunpack.c.l.b16 %v3367
        %v4455 = vunpack.c.h.b16 %v3367
        %v4456 = vunpack.c.l.b16 %v3368
        %v4457 = vunpack.c.h.b16 %v3368
        %v4458 = vunpack.c.l.b16 %v3369
        %v4459 = vunpack.c.h.b16 %v3369
        %v4460 = vunpack.c.l.b16 %v3370
        %v4461 = vunpack.c.h.b16 %v3370
        %v4462 = vunpack.c.l.b16 %v3371
        %v4463 = vunpack.c.h.b16 %v3371
        %v4464 = vunpack.c.l.b16 %v3372
        %v4465 = vunpack.c.h.b16 %v3372
        %v4466 = vunpack.c.l.b16 %v3373
        %v4467 = vunpack.c.h.b16 %v3373
        %v4468 = vunpack.c.l.b16 %v3374
        %v4469 = vunpack.c.h.b16 %v3374
        %v4470 = vunpack.c.l.b16 %v3375
        %v4471 = vunpack.c.h.b16 %v3375
        %v4472 = vunpack.c.l.b16 %v3376
        %v4473 = vunpack.c.h.b16 %v3376
        %v4474 = vunpack.c.l.b16 %v3377
        %v4475 = vunpack.c.h.b16 %v3377
        %v4476 = vunpack.c.l.b16 %v3378
        %v4477 = vunpack.c.h.b16 %v3378
        %v4478 = vunpack.c.l.b16 %v3379
        %v4479 = vunpack.c.h.b16 %v3379
        %v4480 = vunpack.c.l.b16 %v3380
        %v4481 = vunpack.c.h.b16 %v3380
        %v4482 = vunpack.c.l.b16 %v3381
        %v4483 = vunpack.c.h.b16 %v3381
        %v4484 = vunpack.c.l.b16 %v3382
        %v4485 = vunpack.c.h.b16 %v3382
        %v4486 = vunpack.c.l.b16 %v3383
        %v4487 = vunpack.c.h.b16 %v3383
        %v4488 = vunpack.c.l.b16 %v3384
        %v4489 = vunpack.c.h.b16 %v3384
        %v4490 = vunpack.c.l.b16 %v3385
        %v4491 = vunpack.c.h.b16 %v3385
        %v4492 = vunpack.c.l.b16 %v3386
        %v4493 = vunpack.c.h.b16 %v3386
        %v4494 = vunpack.c.l.b16 %v3387
        %v4495 = vunpack.c.h.b16 %v3387
        %v4496 = vunpack.c.l.b16 %v3388
        %v4497 = vunpack.c.h.b16 %v3388
        %v4498 = vunpack.c.l.b16 %v3389
        %v4499 = vunpack.c.h.b16 %v3389
        %v4500 = vunpack.c.l.b16 %v3390
        %v4501 = vunpack.c.h.b16 %v3390
        %v4502 = vunpack.c.l.b16 %v3391
        %v4503 = vunpack.c.h.b16 %v3391
        %v4504 = vunpack.c.l.b16 %v3392
        %v4505 = vunpack.c.h.b16 %v3392
        %v4506 = vunpack.c.l.b16 %v3393
        %v4507 = vunpack.c.h.b16 %v3393
        %v4508 = vunpack.c.l.b16 %v3394
        %v4509 = vunpack.c.h.b16 %v3394
        %v4510 = vunpack.c.l.b16 %v3395
        %v4511 = vunpack.c.h.b16 %v3395
        %v4512 = vunpack.c.l.b16 %v3396
        %v4513 = vunpack.c.h.b16 %v3396
        %v4514 = vunpack.c.l.b16 %v3397
        %v4515 = vunpack.c.h.b16 %v3397
        %v4516 = vunpack.c.l.b16 %v3398
        %v4517 = vunpack.c.h.b16 %v3398
        %v4518 = vunpack.c.l.b16 %v3399
        %v4519 = vunpack.c.h.b16 %v3399
        %v4520 = vunpack.c.l.b16 %v3400
        %v4521 = vunpack.c.h.b16 %v3400
        %v4522 = vunpack.c.l.b16 %v3401
        %v4523 = vunpack.c.h.b16 %v3401
        %v4524 = vunpack.c.l.b16 %v3402
        %v4525 = vunpack.c.h.b16 %v3402
        %v4526 = vunpack.c.l.b16 %v3403
        %v4527 = vunpack.c.h.b16 %v3403
        %v4528 = vunpack.c.l.b16 %v3404
        %v4529 = vunpack.c.h.b16 %v3404
        %v4530 = vunpack.c.l.b16 %v3405
        %v4531 = vunpack.c.h.b16 %v3405
        %v4532 = vunpack.c.l.b16 %v3406
        %v4533 = vunpack.c.h.b16 %v3406
        %v4534 = vunpack.c.l.b16 %v3407
        %v4535 = vunpack.c.h.b16 %v3407
        %v4536 = vunpack.c.l.b16 %v3408
        %v4537 = vunpack.c.h.b16 %v3408
        %v4538 = vunpack.c.l.b16 %v3409
        %v4539 = vunpack.c.h.b16 %v3409
        %v4540 = vunpack.c.l.b16 %v3410
        %v4541 = vunpack.c.h.b16 %v3410
        %v4542 = vunpack.c.l.b16 %v3411
        %v4543 = vunpack.c.h.b16 %v3411
        %v4544 = vunpack.c.l.b16 %v3412
        %v4545 = vunpack.c.h.b16 %v3412
        %v4546 = vunpack.c.l.b16 %v3413
        %v4547 = vunpack.c.h.b16 %v3413
        %v4548 = vunpack.c.l.b16 %v3414
        %v4549 = vunpack.c.h.b16 %v3414
        %v4550 = vunpack.c.l.b16 %v3415
        %v4551 = vunpack.c.h.b16 %v3415
        %v4552 = vunpack.c.l.b16 %v3416
        %v4553 = vunpack.c.h.b16 %v3416
        %v4554 = vunpack.c.l.b16 %v3417
        %v4555 = vunpack.c.h.b16 %v3417
        %v4556 = vunpack.c.l.b16 %v3418
        %v4557 = vunpack.c.h.b16 %v3418
        %v4558 = vunpack.c.l.b16 %v3419
        %v4559 = vunpack.c.h.b16 %v3419
        %v4560 = vunpack.c.l.b16 %v3420
        %v4561 = vunpack.c.h.b16 %v3420
        %v4562 = vunpack.c.l.b16 %v3421
        %v4563 = vunpack.c.h.b16 %v3421
        %v4564 = vunpack.c.l.b16 %v3422
        %v4565 = vunpack.c.h.b16 %v3422
        %v4566 = vunpack.c.l.b16 %v3423
        %v4567 = vunpack.c.h.b16 %v3423
        %v4568 = vunpack.c.l.b16 %v3424
        %v4569 = vunpack.c.h.b16 %v3424
        %v4570 = vunpack.c.l.b16 %v3425
        %v4571 = vunpack.c.h.b16 %v3425
        %v4572 = vunpack.c.l.b16 %v3426
        %v4573 = vunpack.c.h.b16 %v3426
        %v4574 = vunpack.c.l.b16 %v3427
        %v4575 = vunpack.c.h.b16 %v3427
        %v4576 = vunpack.c.l.b16 %v3428
        %v4577 = vunpack.c.h.b16 %v3428
        %v4578 = vunpack.c.l.b16 %v3429
        %v4579 = vunpack.c.h.b16 %v3429
        %v4580 = vunpack.c.l.b16 %v3430
        %v4581 = vunpack.c.h.b16 %v3430
        %v4582 = vunpack.c.l.b16 %v3431
        %v4583 = vunpack.c.h.b16 %v3431
        %v4584 = vunpack.c.l.b16 %v3432
        %v4585 = vunpack.c.h.b16 %v3432
        %v4586 = vunpack.c.l.b16 %v3433
        %v4587 = vunpack.c.h.b16 %v3433
        %v4588 = vunpack.c.l.b16 %v3434
        %v4589 = vunpack.c.h.b16 %v3434
        %v4590 = vunpack.c.l.b16 %v3435
        %v4591 = vunpack.c.h.b16 %v3435
        %v4592 = vunpack.c.l.b16 %v3436
        %v4593 = vunpack.c.h.b16 %v3436
        %v4594 = vunpack.c.l.b16 %v3437
        %v4595 = vunpack.c.h.b16 %v3437
        %v4596 = vunpack.c.l.b16 %v3438
        %v4597 = vunpack.c.h.b16 %v3438
        %v4598 = vunpack.c.l.b16 %v3439
        %v4599 = vunpack.c.h.b16 %v3439
        %v4600 = vunpack.c.l.b16 %v3440
        %v4601 = vunpack.c.h.b16 %v3440
        %v4602 = vunpack.c.l.b16 %v3441
        %v4603 = vunpack.c.h.b16 %v3441
        %v4604 = vunpack.c.l.b16 %v3442
        %v4605 = vunpack.c.h.b16 %v3442
        %v4606 = vunpack.c.l.b16 %v3443
        %v4607 = vunpack.c.h.b16 %v3443
        %v4608 = vunpack.c.l.b16 %v3444
        %v4609 = vunpack.c.h.b16 %v3444
        %v4610 = vunpack.c.l.b16 %v3445
        %v4611 = vunpack.c.h.b16 %v3445
        %v4612 = vunpack.c.l.b16 %v3446
        %v4613 = vunpack.c.h.b16 %v3446
        %v4614 = vunpack.c.l.b16 %v3447
        %v4615 = vunpack.c.h.b16 %v3447
        %v4616 = vunpack.c.l.b16 %v3448
        %v4617 = vunpack.c.h.b16 %v3448
        %v4618 = vunpack.c.l.b16 %v3449
        %v4619 = vunpack.c.h.b16 %v3449
        %v4620 = vunpack.c.l.b16 %v3450
        %v4621 = vunpack.c.h.b16 %v3450
        %v4622 = vunpack.c.l.b16 %v3451
        %v4623 = vunpack.c.h.b16 %v3451
        %v4624 = vunpack.c.l.b16 %v3452
        %v4625 = vunpack.c.h.b16 %v3452
        %v4626 = vunpack.c.l.b16 %v3453
        %v4627 = vunpack.c.h.b16 %v3453
        %v4628 = vunpack.c.l.b16 %v3454
        %v4629 = vunpack.c.h.b16 %v3454
        %v4630 = vunpack.c.l.b16 %v3455
        %v4631 = vunpack.c.h.b16 %v3455
        %v4632 = vunpack.c.l.b16 %v3456
        %v4633 = vunpack.c.h.b16 %v3456
        %v4634 = vunpack.c.l.b16 %v3457
        %v4635 = vunpack.c.h.b16 %v3457
        %v4636 = vunpack.c.l.b16 %v3458
        %v4637 = vunpack.c.h.b16 %v3458
        %v4638 = vunpack.c.l.b16 %v3459
        %v4639 = vunpack.c.h.b16 %v3459
        %v4640 = vunpack.c.l.b16 %v3460
        %v4641 = vunpack.c.h.b16 %v3460
        %v4642 = vunpack.c.l.b16 %v3461
        %v4643 = vunpack.c.h.b16 %v3461
        %v4644 = vunpack.c.l.b16 %v3462
        %v4645 = vunpack.c.h.b16 %v3462
        %v4646 = vunpack.c.l.b16 %v3463
        %v4647 = vunpack.c.h.b16 %v3463
        %v4648 = vunpack.c.l.b16 %v3464
        %v4649 = vunpack.c.h.b16 %v3464
        %v4650 = vunpack.c.l.b16 %v3465
        %v4651 = vunpack.c.h.b16 %v3465
        %v4652 = vunpack.c.l.b16 %v3466
        %v4653 = vunpack.c.h.b16 %v3466
        %v4654 = vunpack.c.l.b16 %v3467
        %v4655 = vunpack.c.h.b16 %v3467
        %v4656 = vunpack.c.l.b16 %v3468
        %v4657 = vunpack.c.h.b16 %v3468
        %v4658 = vunpack.c.l.b16 %v3469
        %v4659 = vunpack.c.h.b16 %v3469
        %v4660 = vunpack.c.l.b16 %v3470
        %v4661 = vunpack.c.h.b16 %v3470
        %v4662 = vunpack.c.l.b16 %v3471
        %v4663 = vunpack.c.h.b16 %v3471
        %v4664 = vunpack.c.l.b16 %v3472
        %v4665 = vunpack.c.h.b16 %v3472
        %v4666 = vunpack.c.l.b16 %v3473
        %v4667 = vunpack.c.h.b16 %v3473
        %v4668 = vunpack.c.l.b16 %v3474
        %v4669 = vunpack.c.h.b16 %v3474
        %v4670 = vunpack.c.l.b16 %v3475
        %v4671 = vunpack.c.h.b16 %v3475
        %v4672 = vunpack.c.l.b16 %v3476
        %v4673 = vunpack.c.h.b16 %v3476
        %v4674 = vunpack.c.l.b16 %v3477
        %v4675 = vunpack.c.h.b16 %v3477
        %v4676 = vunpack.c.l.b16 %v3478
        %v4677 = vunpack.c.h.b16 %v3478
        %v4678 = vunpack.c.l.b16 %v3479
        %v4679 = vunpack.c.h.b16 %v3479
        %v4680 = vunpack.c.l.b16 %v3480
        %v4681 = vunpack.c.h.b16 %v3480
        %v4682 = vunpack.c.l.b16 %v3481
        %v4683 = vunpack.c.h.b16 %v3481
        %v4684 = vunpack.c.l.b16 %v3482
        %v4685 = vunpack.c.h.b16 %v3482
        %v4686 = vunpack.c.l.b16 %v3483
        %v4687 = vunpack.c.h.b16 %v3483
        %v4688 = vunpack.c.l.b16 %v3484
        %v4689 = vunpack.c.h.b16 %v3484
        %v4690 = vunpack.c.l.b16 %v3485
        %v4691 = vunpack.c.h.b16 %v3485
        %v4692 = vunpack.c.l.b16 %v3486
        %v4693 = vunpack.c.h.b16 %v3486
        %v4694 = vunpack.c.l.b16 %v3487
        %v4695 = vunpack.c.h.b16 %v3487
        %v4696 = vunpack.c.l.b16 %v3488
        %v4697 = vunpack.c.h.b16 %v3488
        %v4698 = vunpack.c.l.b16 %v3489
        %v4699 = vunpack.c.h.b16 %v3489
        %v4700 = vunpack.c.l.b16 %v3490
        %v4701 = vunpack.c.h.b16 %v3490
        %v4702 = vunpack.c.l.b16 %v3491
        %v4703 = vunpack.c.h.b16 %v3491
        %v4704 = vunpack.c.l.b16 %v3492
        %v4705 = vunpack.c.h.b16 %v3492
        %v4706 = vunpack.c.l.b16 %v3493
        %v4707 = vunpack.c.h.b16 %v3493
        %v4708 = vunpack.c.l.b16 %v3494
        %v4709 = vunpack.c.h.b16 %v3494
        %v4710 = vunpack.c.l.b16 %v3495
        %v4711 = vunpack.c.h.b16 %v3495
        %v4712 = vunpack.c.l.b16 %v3496
        %v4713 = vunpack.c.h.b16 %v3496
        %v4714 = vunpack.c.l.b16 %v3497
        %v4715 = vunpack.c.h.b16 %v3497
        %v4716 = vunpack.c.l.b16 %v3498
        %v4717 = vunpack.c.h.b16 %v3498
        %v4718 = vunpack.c.l.b16 %v3499
        %v4719 = vunpack.c.h.b16 %v3499
        %v4720 = vunpack.c.l.b16 %v3500
        %v4721 = vunpack.c.h.b16 %v3500
        %v4722 = vunpack.c.l.b16 %v3501
        %v4723 = vunpack.c.h.b16 %v3501
        %v4724 = vunpack.c.l.b16 %v3502
        %v4725 = vunpack.c.h.b16 %v3502
        %v4726 = vunpack.c.l.b16 %v3503
        %v4727 = vunpack.c.h.b16 %v3503
        %v4728 = vunpack.c.l.b16 %v3504
        %v4729 = vunpack.c.h.b16 %v3504
        %v4730 = vunpack.c.l.b16 %v3505
        %v4731 = vunpack.c.h.b16 %v3505
        %v4732 = vunpack.c.l.b16 %v3506
        %v4733 = vunpack.c.h.b16 %v3506
        %v4734 = vunpack.c.l.b16 %v3507
        %v4735 = vunpack.c.h.b16 %v3507
        %v4736 = vunpack.c.l.b16 %v3508
        %v4737 = vunpack.c.h.b16 %v3508
        %v4738 = vunpack.c.l.b16 %v3509
        %v4739 = vunpack.c.h.b16 %v3509
        %v4740 = vunpack.c.l.b16 %v3510
        %v4741 = vunpack.c.h.b16 %v3510
        %v4742 = vunpack.c.l.b16 %v3511
        %v4743 = vunpack.c.h.b16 %v3511
        %v4744 = vunpack.c.l.b16 %v3512
        %v4745 = vunpack.c.h.b16 %v3512
        %v4746 = vunpack.c.l.b16 %v3513
        %v4747 = vunpack.c.h.b16 %v3513
        %v4748 = vunpack.c.l.b16 %v3514
        %v4749 = vunpack.c.h.b16 %v3514
        %v4750 = vunpack.c.l.b16 %v3515
        %v4751 = vunpack.c.h.b16 %v3515
        %v4752 = vunpack.c.l.b16 %v3516
        %v4753 = vunpack.c.h.b16 %v3516
        %v4754 = vunpack.c.l.b16 %v3517
        %v4755 = vunpack.c.h.b16 %v3517
        %v4756 = vunpack.c.l.b16 %v3518
        %v4757 = vunpack.c.h.b16 %v3518
        %v4758 = vunpack.c.l.b16 %v3519
        %v4759 = vunpack.c.h.b16 %v3519
        %v4760 = vunpack.c.l.b16 %v3520
        %v4761 = vunpack.c.h.b16 %v3520
        %v4762 = vunpack.c.l.b16 %v3521
        %v4763 = vunpack.c.h.b16 %v3521
        %v4764 = vunpack.c.l.b16 %v3522
        %v4765 = vunpack.c.h.b16 %v3522
        %v4766 = vunpack.c.l.b16 %v3523
        %v4767 = vunpack.c.h.b16 %v3523
        %v4768 = vunpack.c.l.b16 %v3524
        %v4769 = vunpack.c.h.b16 %v3524
        %v4770 = vunpack.c.l.b16 %v3525
        %v4771 = vunpack.c.h.b16 %v3525
        %v4772 = vunpack.c.l.b16 %v3526
        %v4773 = vunpack.c.h.b16 %v3526
        %v4774 = vunpack.c.l.b16 %v3527
        %v4775 = vunpack.c.h.b16 %v3527
        %v4776 = vunpack.c.l.b16 %v3528
        %v4777 = vunpack.c.h.b16 %v3528
        %v4778 = vunpack.c.l.b16 %v3529
        %v4779 = vunpack.c.h.b16 %v3529
        %v4780 = vunpack.c.l.b16 %v3530
        %v4781 = vunpack.c.h.b16 %v3530
        %v4782 = vunpack.c.l.b16 %v3531
        %v4783 = vunpack.c.h.b16 %v3531
        %v4784 = vunpack.c.l.b16 %v3532
        %v4785 = vunpack.c.h.b16 %v3532
        %v4786 = vunpack.c.l.b16 %v3533
        %v4787 = vunpack.c.h.b16 %v3533
        %v4788 = vunpack.c.l.b16 %v3534
        %v4789 = vunpack.c.h.b16 %v3534
        %v4790 = vunpack.c.l.b16 %v3535
        %v4791 = vunpack.c.h.b16 %v3535
        %v4792 = vunpack.c.l.b16 %v3536
        %v4793 = vunpack.c.h.b16 %v3536
        %v4794 = vunpack.c.l.b16 %v3537
        %v4795 = vunpack.c.h.b16 %v3537
        %v4796 = vunpack.c.l.b16 %v3538
        %v4797 = vunpack.c.h.b16 %v3538
        %v4798 = vunpack.c.l.b16 %v3539
        %v4799 = vunpack.c.h.b16 %v3539
        %v4800 = vunpack.c.l.b16 %v3540
        %v4801 = vunpack.c.h.b16 %v3540
        %v4802 = vunpack.c.l.b16 %v3541
        %v4803 = vunpack.c.h.b16 %v3541
        %v4804 = vunpack.c.l.b16 %v3542
        %v4805 = vunpack.c.h.b16 %v3542
        %v4806 = vunpack.c.l.b16 %v3543
        %v4807 = vunpack.c.h.b16 %v3543
        %v4808 = vunpack.c.l.b16 %v3544
        %v4809 = vunpack.c.h.b16 %v3544
        %v4810 = vunpack.c.l.b16 %v3545
        %v4811 = vunpack.c.h.b16 %v3545
        %v4812 = vunpack.c.l.b16 %v3546
        %v4813 = vunpack.c.h.b16 %v3546
        %v4814 = vunpack.c.l.b16 %v3547
        %v4815 = vunpack.c.h.b16 %v3547
        %v4816 = vunpack.c.l.b16 %v3548
        %v4817 = vunpack.c.h.b16 %v3548
        %v4818 = vunpack.c.l.b16 %v3549
        %v4819 = vunpack.c.h.b16 %v3549
        %v4820 = vunpack.c.l.b16 %v3550
        %v4821 = vunpack.c.h.b16 %v3550
        %v4822 = vunpack.c.l.b16 %v3551
        %v4823 = vunpack.c.h.b16 %v3551
        %v4824 = vunpack.c.l.b16 %v3552
        %v4825 = vunpack.c.h.b16 %v3552
        %v4826 = vunpack.c.l.b16 %v3553
        %v4827 = vunpack.c.h.b16 %v3553
        %v4828 = vunpack.c.l.b16 %v3554
        %v4829 = vunpack.c.h.b16 %v3554
        %v4830 = vunpack.c.l.b16 %v3555
        %v4831 = vunpack.c.h.b16 %v3555
        %v4832 = vunpack.c.l.b16 %v3556
        %v4833 = vunpack.c.h.b16 %v3556
        %v4834 = vunpack.c.l.b16 %v3557
        %v4835 = vunpack.c.h.b16 %v3557
        %v4836 = vunpack.c.l.b16 %v3558
        %v4837 = vunpack.c.h.b16 %v3558
        %v4838 = vunpack.c.l.b16 %v3559
        %v4839 = vunpack.c.h.b16 %v3559
        %v4840 = vunpack.c.l.b16 %v3560
        %v4841 = vunpack.c.h.b16 %v3560
        %v4842 = vunpack.c.l.b16 %v3561
        %v4843 = vunpack.c.h.b16 %v3561
        %v4844 = vunpack.c.l.b16 %v3562
        %v4845 = vunpack.c.h.b16 %v3562
        %v4846 = vunpack.c.l.b16 %v3563
        %v4847 = vunpack.c.h.b16 %v3563
        %v4848 = vunpack.c.l.b16 %v3564
        %v4849 = vunpack.c.h.b16 %v3564
        %v4850 = vunpack.c.l.b16 %v3565
        %v4851 = vunpack.c.h.b16 %v3565
        %v4852 = vunpack.c.l.b16 %v3566
        %v4853 = vunpack.c.h.b16 %v3566
        %v4854 = vunpack.c.l.b16 %v3567
        %v4855 = vunpack.c.h.b16 %v3567
        %v4856 = vunpack.c.l.b16 %v3568
        %v4857 = vunpack.c.h.b16 %v3568
        %v4858 = vunpack.c.l.b16 %v3569
        %v4859 = vunpack.c.h.b16 %v3569
        %v4860 = vunpack.c.l.b16 %v3570
        %v4861 = vunpack.c.h.b16 %v3570
        %v4862 = vunpack.c.l.b16 %v3571
        %v4863 = vunpack.c.h.b16 %v3571
        %v4864 = vunpack.c.l.b16 %v3572
        %v4865 = vunpack.c.h.b16 %v3572
        %v4866 = vunpack.c.l.b16 %v3573
        %v4867 = vunpack.c.h.b16 %v3573
        %v4868 = vunpack.c.l.b16 %v3574
        %v4869 = vunpack.c.h.b16 %v3574
        %v4870 = vunpack.c.l.b16 %v3575
        %v4871 = vunpack.c.h.b16 %v3575
        %v4872 = vunpack.c.l.b16 %v3576
        %v4873 = vunpack.c.h.b16 %v3576
        %v4874 = vunpack.c.l.b16 %v3577
        %v4875 = vunpack.c.h.b16 %v3577
        %v4876 = vunpack.c.l.b16 %v3578
        %v4877 = vunpack.c.h.b16 %v3578
        %v4878 = vunpack.c.l.b16 %v3579
        %v4879 = vunpack.c.h.b16 %v3579
        %v4880 = vunpack.c.l.b16 %v3580
        %v4881 = vunpack.c.h.b16 %v3580
        %v4882 = vunpack.c.l.b16 %v3581
        %v4883 = vunpack.c.h.b16 %v3581
        %v4884 = vunpack.c.l.b16 %v3582
        %v4885 = vunpack.c.h.b16 %v3582
        %v4886 = vunpack.c.l.b16 %v3583
        %v4887 = vunpack.c.h.b16 %v3583
        %v4888 = vunpack.c.l.b16 %v3584
        %v4889 = vunpack.c.h.b16 %v3584
        %v4890 = vunpack.c.l.b16 %v3585
        %v4891 = vunpack.c.h.b16 %v3585
        %v4892 = vunpack.c.l.b16 %v3586
        %v4893 = vunpack.c.h.b16 %v3586
        %v4894 = vunpack.c.l.b16 %v3587
        %v4895 = vunpack.c.h.b16 %v3587
        %v4896 = vunpack.c.l.b16 %v3588
        %v4897 = vunpack.c.h.b16 %v3588
        %v4898 = vunpack.c.l.b16 %v3589
        %v4899 = vunpack.c.h.b16 %v3589
        %v4900 = vunpack.c.l.b16 %v3590
        %v4901 = vunpack.c.h.b16 %v3590
        %v4902 = vunpack.c.l.b16 %v3591
        %v4903 = vunpack.c.h.b16 %v3591
        %v4904 = vunpack.c.l.b16 %v3592
        %v4905 = vunpack.c.h.b16 %v3592
        %v4906 = vunpack.c.l.b16 %v3593
        %v4907 = vunpack.c.h.b16 %v3593
        %v4908 = vunpack.c.l.b16 %v3594
        %v4909 = vunpack.c.h.b16 %v3594
        %v4910 = vunpack.c.l.b16 %v3595
        %v4911 = vunpack.c.h.b16 %v3595
        %v4912 = vunpack.c.l.b16 %v3596
        %v4913 = vunpack.c.h.b16 %v3596
        %v4914 = vunpack.c.l.b16 %v3597
        %v4915 = vunpack.c.h.b16 %v3597
        %v4916 = vunpack.c.l.b16 %v3598
        %v4917 = vunpack.c.h.b16 %v3598
        %v4918 = vunpack.c.l.b16 %v3599
        %v4919 = vunpack.c.h.b16 %v3599
        %v4920 = vunpack.c.l.b16 %v3600
        %v4921 = vunpack.c.h.b16 %v3600
        %v4922 = vunpack.c.l.b16 %v3601
        %v4923 = vunpack.c.h.b16 %v3601
        %v4924 = vunpack.c.l.b16 %v3602
        %v4925 = vunpack.c.h.b16 %v3602
        %v4926 = vunpack.c.l.b16 %v3603
        %v4927 = vunpack.c.h.b16 %v3603
        %v4928 = vunpack.c.l.b16 %v3604
        %v4929 = vunpack.c.h.b16 %v3604
        %v4930 = vunpack.c.l.b16 %v3605
        %v4931 = vunpack.c.h.b16 %v3605
        %v4932 = vunpack.c.l.b16 %v3606
        %v4933 = vunpack.c.h.b16 %v3606
        %v4934 = vunpack.c.l.b16 %v3607
        %v4935 = vunpack.c.h.b16 %v3607
        %v4936 = vunpack.c.l.b16 %v3608
        %v4937 = vunpack.c.h.b16 %v3608
        %v4938 = vunpack.c.l.b16 %v3609
        %v4939 = vunpack.c.h.b16 %v3609
        %v4940 = vunpack.c.l.b16 %v3610
        %v4941 = vunpack.c.h.b16 %v3610
        %v4942 = vunpack.c.l.b16 %v3611
        %v4943 = vunpack.c.h.b16 %v3611
        %v4944 = vunpack.c.l.b16 %v3612
        %v4945 = vunpack.c.h.b16 %v3612
        %v4946 = vunpack.c.l.b16 %v3613
        %v4947 = vunpack.c.h.b16 %v3613
        %v4948 = vunpack.c.l.b16 %v3614
        %v4949 = vunpack.c.h.b16 %v3614
        %v4950 = vunpack.c.l.b16 %v3615
        %v4951 = vunpack.c.h.b16 %v3615
        %v4952 = vunpack.c.l.b16 %v3616
        %v4953 = vunpack.c.h.b16 %v3616
        %v4954 = vunpack.c.l.b16 %v3617
        %v4955 = vunpack.c.h.b16 %v3617
        %v4956 = vunpack.c.l.b16 %v3618
        %v4957 = vunpack.c.h.b16 %v3618
        %v4958 = vunpack.c.l.b16 %v3619
        %v4959 = vunpack.c.h.b16 %v3619
        %v4960 = vunpack.c.l.b16 %v3620
        %v4961 = vunpack.c.h.b16 %v3620
        %v4962 = vunpack.c.l.b16 %v3621
        %v4963 = vunpack.c.h.b16 %v3621
        %v4964 = vunpack.c.l.b16 %v3622
        %v4965 = vunpack.c.h.b16 %v3622
        %v4966 = vunpack.c.l.b16 %v3623
        %v4967 = vunpack.c.h.b16 %v3623
        %v4968 = vunpack.c.l.b16 %v3624
        %v4969 = vunpack.c.h.b16 %v3624
        %v4970 = vunpack.c.l.b16 %v3625
        %v4971 = vunpack.c.h.b16 %v3625
        %v4972 = vunpack.c.l.b16 %v3626
        %v4973 = vunpack.c.h.b16 %v3626
        %v4974 = vunpack.c.l.b16 %v3627
        %v4975 = vunpack.c.h.b16 %v3627
        %v4976 = vunpack.c.l.b16 %v3628
        %v4977 = vunpack.c.h.b16 %v3628
        %v4978 = vunpack.c.l.b16 %v3629
        %v4979 = vunpack.c.h.b16 %v3629
        %v4980 = vunpack.c.l.b16 %v3630
        %v4981 = vunpack.c.h.b16 %v3630
        %v4982 = vunpack.c.l.b16 %v3631
        %v4983 = vunpack.c.h.b16 %v3631
        %v4984 = vunpack.c.l.b16 %v3632
        %v4985 = vunpack.c.h.b16 %v3632
        %v4986 = vunpack.c.l.b16 %v3633
        %v4987 = vunpack.c.h.b16 %v3633
        %v4988 = vunpack.c.l.b16 %v3634
        %v4989 = vunpack.c.h.b16 %v3634
        %v4990 = vunpack.c.l.b16 %v3635
        %v4991 = vunpack.c.h.b16 %v3635
        %v4992 = vunpack.c.l.b16 %v3636
        %v4993 = vunpack.c.h.b16 %v3636
        %v4994 = vunpack.c.l.b16 %v3637
        %v4995 = vunpack.c.h.b16 %v3637
        %v4996 = vunpack.c.l.b16 %v3638
        %v4997 = vunpack.c.h.b16 %v3638
        %v4998 = vunpack.c.l.b16 %v3639
        %v4999 = vunpack.c.h.b16 %v3639
        %v5000 = vunpack.c.l.b16 %v3640
        %v5001 = vunpack.c.h.b16 %v3640
        %v5002 = vunpack.c.l.b16 %v3641
        %v5003 = vunpack.c.h.b16 %v3641
        %v5004 = vunpack.c.l.b16 %v3642
        %v5005 = vunpack.c.h.b16 %v3642
        %v5006 = vunpack.c.l.b16 %v3643
        %v5007 = vunpack.c.h.b16 %v3643
        %v5008 = vunpack.c.l.b16 %v3644
        %v5009 = vunpack.c.h.b16 %v3644
        %v5010 = vunpack.c.l.b16 %v3645
        %v5011 = vunpack.c.h.b16 %v3645
        %v5012 = vunpack.c.l.b16 %v3646
        %v5013 = vunpack.c.h.b16 %v3646
        %v5014 = vunpack.c.l.b16 %v3647
        %v5015 = vunpack.c.h.b16 %v3647
        %v5016 = vunpack.c.l.b16 %v3648
        %v5017 = vunpack.c.h.b16 %v3648
        %v5018 = vunpack.c.l.b16 %v3649
        %v5019 = vunpack.c.h.b16 %v3649
        %v5020 = vunpack.c.l.b16 %v3650
        %v5021 = vunpack.c.h.b16 %v3650
        %v5022 = vunpack.c.l.b16 %v3651
        %v5023 = vunpack.c.h.b16 %v3651
        %v5024 = vunpack.c.l.b16 %v3652
        %v5025 = vunpack.c.h.b16 %v3652
        %v5026 = vunpack.c.l.b16 %v3653
        %v5027 = vunpack.c.h.b16 %v3653
        %v5028 = vunpack.c.l.b16 %v3654
        %v5029 = vunpack.c.h.b16 %v3654
        %v5030 = vunpack.c.l.b16 %v3655
        %v5031 = vunpack.c.h.b16 %v3655
        %v5032 = vunpack.c.l.b16 %v3656
        %v5033 = vunpack.c.h.b16 %v3656
        %v5034 = vunpack.c.l.b16 %v3657
        %v5035 = vunpack.c.h.b16 %v3657
        %v5036 = vunpack.c.l.b16 %v3658
        %v5037 = vunpack.c.h.b16 %v3658
        %v5038 = vunpack.c.l.b16 %v3659
        %v5039 = vunpack.c.h.b16 %v3659
        %v5040 = vunpack.c.l.b16 %v3660
        %v5041 = vunpack.c.h.b16 %v3660
        %v5042 = vunpack.c.l.b16 %v3661
        %v5043 = vunpack.c.h.b16 %v3661
        %v5044 = vunpack.c.l.b16 %v3662
        %v5045 = vunpack.c.h.b16 %v3662
        %v5046 = vunpack.c.l.b16 %v3663
        %v5047 = vunpack.c.h.b16 %v3663
        %v5048 = vunpack.c.l.b16 %v3664
        %v5049 = vunpack.c.h.b16 %v3664
        %v5050 = vunpack.c.l.b16 %v3665
        %v5051 = vunpack.c.h.b16 %v3665
        %v5052 = vunpack.c.l.b16 %v3666
        %v5053 = vunpack.c.h.b16 %v3666
        %v5054 = vunpack.c.l.b16 %v3667
        %v5055 = vunpack.c.h.b16 %v3667
        %v5056 = vunpack.c.l.b16 %v3668
        %v5057 = vunpack.c.h.b16 %v3668
        %v5058 = vunpack.c.l.b16 %v3669
        %v5059 = vunpack.c.h.b16 %v3669
        %v5060 = vunpack.c.l.b16 %v3670
        %v5061 = vunpack.c.h.b16 %v3670
        %v5062 = vunpack.c.l.b16 %v3671
        %v5063 = vunpack.c.h.b16 %v3671
        %v5064 = vunpack.c.l.b16 %v3672
        %v5065 = vunpack.c.h.b16 %v3672
        %v5066 = vunpack.c.l.b16 %v3673
        %v5067 = vunpack.c.h.b16 %v3673
        %v5068 = vunpack.c.l.b16 %v3674
        %v5069 = vunpack.c.h.b16 %v3674
        %v5070 = vunpack.c.l.b16 %v3675
        %v5071 = vunpack.c.h.b16 %v3675
        %v5072 = vunpack.c.l.b16 %v3676
        %v5073 = vunpack.c.h.b16 %v3676
        %v5074 = vunpack.c.l.b16 %v3677
        %v5075 = vunpack.c.h.b16 %v3677
        %v5076 = vunpack.c.l.b16 %v3678
        %v5077 = vunpack.c.h.b16 %v3678
        %v5078 = vunpack.c.l.b16 %v3679
        %v5079 = vunpack.c.h.b16 %v3679
        %v5080 = vunpack.c.l.b16 %v3680
        %v5081 = vunpack.c.h.b16 %v3680
        %v5082 = vunpack.c.l.b16 %v3681
        %v5083 = vunpack.c.h.b16 %v3681
        %v5084 = vunpack.c.l.b16 %v3682
        %v5085 = vunpack.c.h.b16 %v3682
        %v5086 = vunpack.c.l.b16 %v3683
        %v5087 = vunpack.c.h.b16 %v3683
        %v5088 = vunpack.c.l.b16 %v3684
        %v5089 = vunpack.c.h.b16 %v3684
        %v5090 = vunpack.c.l.b16 %v3685
        %v5091 = vunpack.c.h.b16 %v3685
        %v5092 = vunpack.c.l.b16 %v3686
        %v5093 = vunpack.c.h.b16 %v3686
        %v5094 = vunpack.c.l.b16 %v3687
        %v5095 = vunpack.c.h.b16 %v3687
        %v5096 = vunpack.c.l.b16 %v3688
        %v5097 = vunpack.c.h.b16 %v3688
        %v5098 = vunpack.c.l.b16 %v3689
        %v5099 = vunpack.c.h.b16 %v3689
        %v5100 = vunpack.c.l.b16 %v3690
        %v5101 = vunpack.c.h.b16 %v3690
        %v5102 = vunpack.c.l.b16 %v3691
        %v5103 = vunpack.c.h.b16 %v3691
        %v5104 = vunpack.c.l.b16 %v3692
        %v5105 = vunpack.c.h.b16 %v3692
        %v5106 = vunpack.c.l.b16 %v3693
        %v5107 = vunpack.c.h.b16 %v3693
        %v5108 = vunpack.c.l.b16 %v3694
        %v5109 = vunpack.c.h.b16 %v3694
        %v5110 = vunpack.c.l.b16 %v3695
        %v5111 = vunpack.c.h.b16 %v3695
        %v5112 = vunpack.c.l.b16 %v3696
        %v5113 = vunpack.c.h.b16 %v3696
        %v5114 = vunpack.c.l.b16 %v3697
        %v5115 = vunpack.c.h.b16 %v3697
        %v5116 = vunpack.c.l.b16 %v3698
        %v5117 = vunpack.c.h.b16 %v3698
        %v5118 = vunpack.c.l.b16 %v3699
        %v5119 = vunpack.c.h.b16 %v3699
        %v5120 = vunpack.c.l.b16 %v3700
        %v5121 = vunpack.c.h.b16 %v3700
        %v5122 = vunpack.c.l.b16 %v3701
        %v5123 = vunpack.c.h.b16 %v3701
        %v5124 = vunpack.c.l.b16 %v3702
        %v5125 = vunpack.c.h.b16 %v3702
        %v5126 = vunpack.c.l.b16 %v3703
        %v5127 = vunpack.c.h.b16 %v3703
        %v5128 = vunpack.c.l.b16 %v3704
        %v5129 = vunpack.c.h.b16 %v3704
        %v5130 = vunpack.c.l.b16 %v3705
        %v5131 = vunpack.c.h.b16 %v3705
        %v5132 = vunpack.c.l.b16 %v3706
        %v5133 = vunpack.c.h.b16 %v3706
        %v5134 = vunpack.c.l.b16 %v3707
        %v5135 = vunpack.c.h.b16 %v3707
        %v5136 = vunpack.c.l.b16 %v3708
        %v5137 = vunpack.c.h.b16 %v3708
        %v5138 = vunpack.c.l.b16 %v3709
        %v5139 = vunpack.c.h.b16 %v3709
        %v5140 = vunpack.c.l.b16 %v3710
        %v5141 = vunpack.c.h.b16 %v3710
        %v5142 = vunpack.c.l.b16 %v3711
        %v5143 = vunpack.c.h.b16 %v3711
        %v5144 = vunpack.c.l.b16 %v3712
        %v5145 = vunpack.c.h.b16 %v3712
        %v5146 = vunpack.c.l.b16 %v3713
        %v5147 = vunpack.c.h.b16 %v3713
        %v5148 = vunpack.c.l.b16 %v3714
        %v5149 = vunpack.c.h.b16 %v3714
        %v5150 = vunpack.c.l.b16 %v3715
        %v5151 = vunpack.c.h.b16 %v3715
        %v5152 = vunpack.c.l.b16 %v3716
        %v5153 = vunpack.c.h.b16 %v3716
        %v5154 = vunpack.c.l.b16 %v3717
        %v5155 = vunpack.c.h.b16 %v3717
        %v5156 = vunpack.c.l.b16 %v3718
        %v5157 = vunpack.c.h.b16 %v3718
        %v5158 = vunpack.c.l.b16 %v3719
        %v5159 = vunpack.c.h.b16 %v3719
        %v5160 = vunpack.c.l.b16 %v3720
        %v5161 = vunpack.c.h.b16 %v3720
        %v5162 = vunpack.c.l.b16 %v3721
        %v5163 = vunpack.c.h.b16 %v3721
        %v5164 = vunpack.c.l.b16 %v3722
        %v5165 = vunpack.c.h.b16 %v3722
        %v5166 = vunpack.c.l.b16 %v3723
        %v5167 = vunpack.c.h.b16 %v3723
        %v5168 = vunpack.c.l.b16 %v3724
        %v5169 = vunpack.c.h.b16 %v3724
        %v5170 = vunpack.c.l.b16 %v3725
        %v5171 = vunpack.c.h.b16 %v3725
        %v5172 = vunpack.c.l.b16 %v3726
        %v5173 = vunpack.c.h.b16 %v3726
        %v5174 = vunpack.c.l.b16 %v3727
        %v5175 = vunpack.c.h.b16 %v3727
        %v5176 = vunpack.c.l.b16 %v3728
        %v5177 = vunpack.c.h.b16 %v3728
        %v5178 = vunpack.c.l.b16 %v3729
        %v5179 = vunpack.c.h.b16 %v3729
        %v5180 = vunpack.c.l.b16 %v3730
        %v5181 = vunpack.c.h.b16 %v3730
        %v5182 = vunpack.c.l.b16 %v3731
        %v5183 = vunpack.c.h.b16 %v3731
        %v5184 = vunpack.c.l.b16 %v3732
        %v5185 = vunpack.c.h.b16 %v3732
        %v5186 = vunpack.c.l.b16 %v3733
        %v5187 = vunpack.c.h.b16 %v3733
        %v5188 = vunpack.c.l.b16 %v3734
        %v5189 = vunpack.c.h.b16 %v3734
        %v5190 = vunpack.c.l.b16 %v3735
        %v5191 = vunpack.c.h.b16 %v3735
        %v5192 = vunpack.c.l.b16 %v3736
        %v5193 = vunpack.c.h.b16 %v3736
        %v5194 = vunpack.c.l.b16 %v3737
        %v5195 = vunpack.c.h.b16 %v3737
        %v5196 = vunpack.c.l.b16 %v3738
        %v5197 = vunpack.c.h.b16 %v3738
        %v5198 = vunpack.c.l.b16 %v3739
        %v5199 = vunpack.c.h.b16 %v3739
        %v5200 = vunpack.c.l.b16 %v3740
        %v5201 = vunpack.c.h.b16 %v3740
        %v5202 = vunpack.c.l.b16 %v3741
        %v5203 = vunpack.c.h.b16 %v3741
        %v5204 = vunpack.c.l.b16 %v3742
        %v5205 = vunpack.c.h.b16 %v3742
        %v5206 = vunpack.c.l.b16 %v3743
        %v5207 = vunpack.c.h.b16 %v3743
        %v5208 = vunpack.c.l.b16 %v3744
        %v5209 = vunpack.c.h.b16 %v3744
        %v5210 = vunpack.c.l.b16 %v3745
        %v5211 = vunpack.c.h.b16 %v3745
        %v5212 = vunpack.c.l.b16 %v3746
        %v5213 = vunpack.c.h.b16 %v3746
        %v5214 = vunpack.c.l.b16 %v3747
        %v5215 = vunpack.c.h.b16 %v3747
        %v5216 = vunpack.c.l.b16 %v3748
        %v5217 = vunpack.c.h.b16 %v3748
        %v5218 = vunpack.c.l.b16 %v3749
        %v5219 = vunpack.c.h.b16 %v3749
        %v5220 = vunpack.c.l.b16 %v3750
        %v5221 = vunpack.c.h.b16 %v3750
        %v5222 = vunpack.c.l.b16 %v3751
        %v5223 = vunpack.c.h.b16 %v3751
        %v5224 = vunpack.c.l.b16 %v3752
        %v5225 = vunpack.c.h.b16 %v3752
        %v5226 = vunpack.c.l.b16 %v3753
        %v5227 = vunpack.c.h.b16 %v3753
        %v5228 = vunpack.c.l.b16 %v3754
        %v5229 = vunpack.c.h.b16 %v3754
        %v5230 = vunpack.c.l.b16 %v3755
        %v5231 = vunpack.c.h.b16 %v3755
        %v5232 = vunpack.c.l.b16 %v3756
        %v5233 = vunpack.c.h.b16 %v3756
        %v5234 = vunpack.c.l.b16 %v3757
        %v5235 = vunpack.c.h.b16 %v3757
        %v5236 = vunpack.c.l.b16 %v3758
        %v5237 = vunpack.c.h.b16 %v3758
        %v5238 = vunpack.c.l.b16 %v3759
        %v5239 = vunpack.c.h.b16 %v3759
        %v5240 = vunpack.c.l.b16 %v3760
        %v5241 = vunpack.c.h.b16 %v3760
        %v5242 = vunpack.c.l.b16 %v3761
        %v5243 = vunpack.c.h.b16 %v3761
        %v5244 = vunpack.c.l.b16 %v3762
        %v5245 = vunpack.c.h.b16 %v3762
        %v5246 = vunpack.c.l.b16 %v3763
        %v5247 = vunpack.c.h.b16 %v3763
        %v5248 = vunpack.c.l.b16 %v3764
        %v5249 = vunpack.c.h.b16 %v3764
        %v5250 = vunpack.c.l.b16 %v3765
        %v5251 = vunpack.c.h.b16 %v3765
        %v5252 = vunpack.c.l.b16 %v3766
        %v5253 = vunpack.c.h.b16 %v3766
        %v5254 = vunpack.c.l.b16 %v3767
        %v5255 = vunpack.c.h.b16 %v3767
        %v5256 = vunpack.c.l.b16 %v3768
        %v5257 = vunpack.c.h.b16 %v3768
        %v5258 = vunpack.c.l.b16 %v3769
        %v5259 = vunpack.c.h.b16 %v3769
        %v5260 = vunpack.c.l.b16 %v3770
        %v5261 = vunpack.c.h.b16 %v3770
        %v5262 = vunpack.c.l.b16 %v3771
        %v5263 = vunpack.c.h.b16 %v3771
        %v5264 = vunpack.c.l.b16 %v3772
        %v5265 = vunpack.c.h.b16 %v3772
        %v5266 = vunpack.c.l.b16 %v3773
        %v5267 = vunpack.c.h.b16 %v3773
        %v5268 = vunpack.c.l.b16 %v3774
        %v5269 = vunpack.c.h.b16 %v3774
        %v5270 = vunpack.c.l.b16 %v3775
        %v5271 = vunpack.c.h.b16 %v3775
        %v5272 = vunpack.c.l.b16 %v3776
        %v5273 = vunpack.c.h.b16 %v3776
        %v5274 = vunpack.c.l.b16 %v3777
        %v5275 = vunpack.c.h.b16 %v3777
        %v5276 = vunpack.c.l.b16 %v3778
        %v5277 = vunpack.c.h.b16 %v3778
        %v5278 = vunpack.c.l.b16 %v3779
        %v5279 = vunpack.c.h.b16 %v3779
        %v5280 = vunpack.c.l.b16 %v3780
        %v5281 = vunpack.c.h.b16 %v3780
        %v5282 = vunpack.c.l.b16 %v3781
        %v5283 = vunpack.c.h.b16 %v3781
        %v5284 = vunpack.c.l.b16 %v3782
        %v5285 = vunpack.c.h.b16 %v3782
        %v5286 = vunpack.c.l.b16 %v3783
        %v5287 = vunpack.c.h.b16 %v3783
        %v5288 = vunpack.c.l.b16 %v3784
        %v5289 = vunpack.c.h.b16 %v3784
        %v5290 = vunpack.c.l.b16 %v3785
        %v5291 = vunpack.c.h.b16 %v3785
        %v5292 = vunpack.c.l.b16 %v3786
        %v5293 = vunpack.c.h.b16 %v3786
        %v5294 = vunpack.c.l.b16 %v3787
        %v5295 = vunpack.c.h.b16 %v3787
        %v5296 = vunpack.c.l.b16 %v3788
        %v5297 = vunpack.c.h.b16 %v3788
        %v5298 = vunpack.c.l.b16 %v3789
        %v5299 = vunpack.c.h.b16 %v3789
        %v5300 = vunpack.c.l.b16 %v3790
        %v5301 = vunpack.c.h.b16 %v3790
        %v5302 = vunpack.c.l.b16 %v3791
        %v5303 = vunpack.c.h.b16 %v3791
        %v5304 = vunpack.c.l.b16 %v3792
        %v5305 = vunpack.c.h.b16 %v3792
        %v5306 = vunpack.c.l.b16 %v3793
        %v5307 = vunpack.c.h.b16 %v3793
        %v5308 = vunpack.c.l.b16 %v3794
        %v5309 = vunpack.c.h.b16 %v3794
        %v5310 = vunpack.c.l.b16 %v3795
        %v5311 = vunpack.c.h.b16 %v3795
        %v5312 = vunpack.c.l.b16 %v3796
        %v5313 = vunpack.c.h.b16 %v3796
        %v5314 = vunpack.c.l.b16 %v3797
        %v5315 = vunpack.c.h.b16 %v3797
        %v5316 = vunpack.c.l.b16 %v3798
        %v5317 = vunpack.c.h.b16 %v3798
        %v5318 = vunpack.c.l.b16 %v3799
        %v5319 = vunpack.c.h.b16 %v3799
        %v5320 = vunpack.c.l.b16 %v3800
        %v5321 = vunpack.c.h.b16 %v3800
        %v5322 = vunpack.c.l.b16 %v3801
        %v5323 = vunpack.c.h.b16 %v3801
        %v5324 = vunpack.c.l.b16 %v3802
        %v5325 = vunpack.c.h.b16 %v3802
        %v5326 = vunpack.c.l.b16 %v3803
        %v5327 = vunpack.c.h.b16 %v3803
        %v5328 = vunpack.c.l.b16 %v3804
        %v5329 = vunpack.c.h.b16 %v3804
        %v5330 = vunpack.c.l.b16 %v3805
        %v5331 = vunpack.c.h.b16 %v3805
        %v5332 = vunpack.c.l.b16 %v3806
        %v5333 = vunpack.c.h.b16 %v3806
        %v5334 = vunpack.c.l.b16 %v3807
        %v5335 = vunpack.c.h.b16 %v3807
        %v5336 = vunpack.c.l.b16 %v3808
        %v5337 = vunpack.c.h.b16 %v3808
        %v5338 = vunpack.c.l.b16 %v3809
        %v5339 = vunpack.c.h.b16 %v3809
        %v5340 = vunpack.c.l.b16 %v3810
        %v5341 = vunpack.c.h.b16 %v3810
        %v5342 = vunpack.c.l.b16 %v3811
        %v5343 = vunpack.c.h.b16 %v3811
        %v5344 = vunpack.c.l.b16 %v3812
        %v5345 = vunpack.c.h.b16 %v3812
        %v5346 = vunpack.c.l.b16 %v3813
        %v5347 = vunpack.c.h.b16 %v3813
        %v5348 = vunpack.c.l.b16 %v3814
        %v5349 = vunpack.c.h.b16 %v3814
        %v5350 = vunpack.c.l.b16 %v3815
        %v5351 = vunpack.c.h.b16 %v3815
        %v5352 = vunpack.c.l.b16 %v3816
        %v5353 = vunpack.c.h.b16 %v3816
        %v5354 = vpack.c.b16 %v4338, %v4330
        %v5355 = vpack.c.b16 %v4339, %v4331
        %v5356 = vpack.c.b16 %v4340, %v4332
        %v5357 = vpack.c.b16 %v4341, %v4333
        %v5358 = vpack.c.b16 %v4342, %v4334
        %v5359 = vpack.c.b16 %v4343, %v4335
        %v5360 = vpack.c.b16 %v4344, %v4336
        %v5361 = vpack.c.b16 %v4345, %v4337
        %v5362 = vpack.c.b16 %v4354, %v4346
        %v5363 = vpack.c.b16 %v4355, %v4347
        %v5364 = vpack.c.b16 %v4356, %v4348
        %v5365 = vpack.c.b16 %v4357, %v4349
        %v5366 = vpack.c.b16 %v4358, %v4350
        %v5367 = vpack.c.b16 %v4359, %v4351
        %v5368 = vpack.c.b16 %v4360, %v4352
        %v5369 = vpack.c.b16 %v4361, %v4353
        %v5370 = vpack.c.b16 %v4370, %v4362
        %v5371 = vpack.c.b16 %v4371, %v4363
        %v5372 = vpack.c.b16 %v4372, %v4364
        %v5373 = vpack.c.b16 %v4373, %v4365
        %v5374 = vpack.c.b16 %v4374, %v4366
        %v5375 = vpack.c.b16 %v4375, %v4367
        %v5376 = vpack.c.b16 %v4376, %v4368
        %v5377 = vpack.c.b16 %v4377, %v4369
        %v5378 = vpack.c.b16 %v4386, %v4378
        %v5379 = vpack.c.b16 %v4387, %v4379
        %v5380 = vpack.c.b16 %v4388, %v4380
        %v5381 = vpack.c.b16 %v4389, %v4381
        %v5382 = vpack.c.b16 %v4390, %v4382
        %v5383 = vpack.c.b16 %v4391, %v4383
        %v5384 = vpack.c.b16 %v4392, %v4384
        %v5385 = vpack.c.b16 %v4393, %v4385
        %v5386 = vpack.c.b16 %v4402, %v4394
        %v5387 = vpack.c.b16 %v4403, %v4395
        %v5388 = vpack.c.b16 %v4404, %v4396
        %v5389 = vpack.c.b16 %v4405, %v4397
        %v5390 = vpack.c.b16 %v4406, %v4398
        %v5391 = vpack.c.b16 %v4407, %v4399
        %v5392 = vpack.c.b16 %v4408, %v4400
        %v5393 = vpack.c.b16 %v4409, %v4401
        %v5394 = vpack.c.b16 %v4418, %v4410
        %v5395 = vpack.c.b16 %v4419, %v4411
        %v5396 = vpack.c.b16 %v4420, %v4412
        %v5397 = vpack.c.b16 %v4421, %v4413
        %v5398 = vpack.c.b16 %v4422, %v4414
        %v5399 = vpack.c.b16 %v4423, %v4415
        %v5400 = vpack.c.b16 %v4424, %v4416
        %v5401 = vpack.c.b16 %v4425, %v4417
        %v5402 = vpack.c.b16 %v4434, %v4426
        %v5403 = vpack.c.b16 %v4435, %v4427
        %v5404 = vpack.c.b16 %v4436, %v4428
        %v5405 = vpack.c.b16 %v4437, %v4429
        %v5406 = vpack.c.b16 %v4438, %v4430
        %v5407 = vpack.c.b16 %v4439, %v4431
        %v5408 = vpack.c.b16 %v4440, %v4432
        %v5409 = vpack.c.b16 %v4441, %v4433
        %v5410 = vpack.c.b16 %v4450, %v4442
        %v5411 = vpack.c.b16 %v4451, %v4443
        %v5412 = vpack.c.b16 %v4452, %v4444
        %v5413 = vpack.c.b16 %v4453, %v4445
        %v5414 = vpack.c.b16 %v4454, %v4446
        %v5415 = vpack.c.b16 %v4455, %v4447
        %v5416 = vpack.c.b16 %v4456, %v4448
        %v5417 = vpack.c.b16 %v4457, %v4449
        %v5418 = vpack.c.b16 %v4466, %v4458
        %v5419 = vpack.c.b16 %v4467, %v4459
        %v5420 = vpack.c.b16 %v4468, %v4460
        %v5421 = vpack.c.b16 %v4469, %v4461
        %v5422 = vpack.c.b16 %v4470, %v4462
        %v5423 = vpack.c.b16 %v4471, %v4463
        %v5424 = vpack.c.b16 %v4472, %v4464
        %v5425 = vpack.c.b16 %v4473, %v4465
        %v5426 = vpack.c.b16 %v4482, %v4474
        %v5427 = vpack.c.b16 %v4483, %v4475
        %v5428 = vpack.c.b16 %v4484, %v4476
        %v5429 = vpack.c.b16 %v4485, %v4477
        %v5430 = vpack.c.b16 %v4486, %v4478
        %v5431 = vpack.c.b16 %v4487, %v4479
        %v5432 = vpack.c.b16 %v4488, %v4480
        %v5433 = vpack.c.b16 %v4489, %v4481
        %v5434 = vpack.c.b16 %v4498, %v4490
        %v5435 = vpack.c.b16 %v4499, %v4491
        %v5436 = vpack.c.b16 %v4500, %v4492
        %v5437 = vpack.c.b16 %v4501, %v4493
        %v5438 = vpack.c.b16 %v4502, %v4494
        %v5439 = vpack.c.b16 %v4503, %v4495
        %v5440 = vpack.c.b16 %v4504, %v4496
        %v5441 = vpack.c.b16 %v4505, %v4497
        %v5442 = vpack.c.b16 %v4514, %v4506
        %v5443 = vpack.c.b16 %v4515, %v4507
        %v5444 = vpack.c.b16 %v4516, %v4508
        %v5445 = vpack.c.b16 %v4517, %v4509
        %v5446 = vpack.c.b16 %v4518, %v4510
        %v5447 = vpack.c.b16 %v4519, %v4511
        %v5448 = vpack.c.b16 %v4520, %v4512
        %v5449 = vpack.c.b16 %v4521, %v4513
        %v5450 = vpack.c.b16 %v4530, %v4522
        %v5451 = vpack.c.b16 %v4531, %v4523
        %v5452 = vpack.c.b16 %v4532, %v4524
        %v5453 = vpack.c.b16 %v4533, %v4525
        %v5454 = vpack.c.b16 %v4534, %v4526
        %v5455 = vpack.c.b16 %v4535, %v4527
        %v5456 = vpack.c.b16 %v4536, %v4528
        %v5457 = vpack.c.b16 %v4537, %v4529
        %v5458 = vpack.c.b16 %v4546, %v4538
        %v5459 = vpack.c.b16 %v4547, %v4539
        %v5460 = vpack.c.b16 %v4548, %v4540
        %v5461 = vpack.c.b16 %v4549, %v4541
        %v5462 = vpack.c.b16 %v4550, %v4542
        %v5463 = vpack.c.b16 %v4551, %v4543
        %v5464 = vpack.c.b16 %v4552, %v4544
        %v5465 = vpack.c.b16 %v4553, %v4545
        %v5466 = vpack.c.b16 %v4562, %v4554
        %v5467 = vpack.c.b16 %v4563, %v4555
        %v5468 = vpack.c.b16 %v4564, %v4556
        %v5469 = vpack.c.b16 %v4565, %v4557
        %v5470 = vpack.c.b16 %v4566, %v4558
        %v5471 = vpack.c.b16 %v4567, %v4559
        %v5472 = vpack.c.b16 %v4568, %v4560
        %v5473 = vpack.c.b16 %v4569, %v4561
        %v5474 = vpack.c.b16 %v4578, %v4570
        %v5475 = vpack.c.b16 %v4579, %v4571
        %v5476 = vpack.c.b16 %v4580, %v4572
        %v5477 = vpack.c.b16 %v4581, %v4573
        %v5478 = vpack.c.b16 %v4582, %v4574
        %v5479 = vpack.c.b16 %v4583, %v4575
        %v5480 = vpack.c.b16 %v4584, %v4576
        %v5481 = vpack.c.b16 %v4585, %v4577
        %v5482 = vpack.c.b16 %v4594, %v4586
        %v5483 = vpack.c.b16 %v4595, %v4587
        %v5484 = vpack.c.b16 %v4596, %v4588
        %v5485 = vpack.c.b16 %v4597, %v4589
        %v5486 = vpack.c.b16 %v4598, %v4590
        %v5487 = vpack.c.b16 %v4599, %v4591
        %v5488 = vpack.c.b16 %v4600, %v4592
        %v5489 = vpack.c.b16 %v4601, %v4593
        %v5490 = vpack.c.b16 %v4610, %v4602
        %v5491 = vpack.c.b16 %v4611, %v4603
        %v5492 = vpack.c.b16 %v4612, %v4604
        %v5493 = vpack.c.b16 %v4613, %v4605
        %v5494 = vpack.c.b16 %v4614, %v4606
        %v5495 = vpack.c.b16 %v4615, %v4607
        %v5496 = vpack.c.b16 %v4616, %v4608
        %v5497 = vpack.c.b16 %v4617, %v4609
        %v5498 = vpack.c.b16 %v4626, %v4618
        %v5499 = vpack.c.b16 %v4627, %v4619
        %v5500 = vpack.c.b16 %v4628, %v4620
        %v5501 = vpack.c.b16 %v4629, %v4621
        %v5502 = vpack.c.b16 %v4630, %v4622
        %v5503 = vpack.c.b16 %v4631, %v4623
        %v5504 = vpack.c.b16 %v4632, %v4624
        %v5505 = vpack.c.b16 %v4633, %v4625
        %v5506 = vpack.c.b16 %v4642, %v4634
        %v5507 = vpack.c.b16 %v4643, %v4635
        %v5508 = vpack.c.b16 %v4644, %v4636
        %v5509 = vpack.c.b16 %v4645, %v4637
        %v5510 = vpack.c.b16 %v4646, %v4638
        %v5511 = vpack.c.b16 %v4647, %v4639
        %v5512 = vpack.c.b16 %v4648, %v4640
        %v5513 = vpack.c.b16 %v4649, %v4641
        %v5514 = vpack.c.b16 %v4658, %v4650
        %v5515 = vpack.c.b16 %v4659, %v4651
        %v5516 = vpack.c.b16 %v4660, %v4652
        %v5517 = vpack.c.b16 %v4661, %v4653
        %v5518 = vpack.c.b16 %v4662, %v4654
        %v5519 = vpack.c.b16 %v4663, %v4655
        %v5520 = vpack.c.b16 %v4664, %v4656
        %v5521 = vpack.c.b16 %v4665, %v4657
        %v5522 = vpack.c.b16 %v4674, %v4666
        %v5523 = vpack.c.b16 %v4675, %v4667
        %v5524 = vpack.c.b16 %v4676, %v4668
        %v5525 = vpack.c.b16 %v4677, %v4669
        %v5526 = vpack.c.b16 %v4678, %v4670
        %v5527 = vpack.c.b16 %v4679, %v4671
        %v5528 = vpack.c.b16 %v4680, %v4672
        %v5529 = vpack.c.b16 %v4681, %v4673
        %v5530 = vpack.c.b16 %v4690, %v4682
        %v5531 = vpack.c.b16 %v4691, %v4683
        %v5532 = vpack.c.b16 %v4692, %v4684
        %v5533 = vpack.c.b16 %v4693, %v4685
        %v5534 = vpack.c.b16 %v4694, %v4686
        %v5535 = vpack.c.b16 %v4695, %v4687
        %v5536 = vpack.c.b16 %v4696, %v4688
        %v5537 = vpack.c.b16 %v4697, %v4689
        %v5538 = vpack.c.b16 %v4706, %v4698
        %v5539 = vpack.c.b16 %v4707, %v4699
        %v5540 = vpack.c.b16 %v4708, %v4700
        %v5541 = vpack.c.b16 %v4709, %v4701
        %v5542 = vpack.c.b16 %v4710, %v4702
        %v5543 = vpack.c.b16 %v4711, %v4703
        %v5544 = vpack.c.b16 %v4712, %v4704
        %v5545 = vpack.c.b16 %v4713, %v4705
        %v5546 = vpack.c.b16 %v4722, %v4714
        %v5547 = vpack.c.b16 %v4723, %v4715
        %v5548 = vpack.c.b16 %v4724, %v4716
        %v5549 = vpack.c.b16 %v4725, %v4717
        %v5550 = vpack.c.b16 %v4726, %v4718
        %v5551 = vpack.c.b16 %v4727, %v4719
        %v5552 = vpack.c.b16 %v4728, %v4720
        %v5553 = vpack.c.b16 %v4729, %v4721
        %v5554 = vpack.c.b16 %v4738, %v4730
        %v5555 = vpack.c.b16 %v4739, %v4731
        %v5556 = vpack.c.b16 %v4740, %v4732
        %v5557 = vpack.c.b16 %v4741, %v4733
        %v5558 = vpack.c.b16 %v4742, %v4734
        %v5559 = vpack.c.b16 %v4743, %v4735
        %v5560 = vpack.c.b16 %v4744, %v4736
        %v5561 = vpack.c.b16 %v4745, %v4737
        %v5562 = vpack.c.b16 %v4754, %v4746
        %v5563 = vpack.c.b16 %v4755, %v4747
        %v5564 = vpack.c.b16 %v4756, %v4748
        %v5565 = vpack.c.b16 %v4757, %v4749
        %v5566 = vpack.c.b16 %v4758, %v4750
        %v5567 = vpack.c.b16 %v4759, %v4751
        %v5568 = vpack.c.b16 %v4760, %v4752
        %v5569 = vpack.c.b16 %v4761, %v4753
        %v5570 = vpack.c.b16 %v4770, %v4762
        %v5571 = vpack.c.b16 %v4771, %v4763
        %v5572 = vpack.c.b16 %v4772, %v4764
        %v5573 = vpack.c.b16 %v4773, %v4765
        %v5574 = vpack.c.b16 %v4774, %v4766
        %v5575 = vpack.c.b16 %v4775, %v4767
        %v5576 = vpack.c.b16 %v4776, %v4768
        %v5577 = vpack.c.b16 %v4777, %v4769
        %v5578 = vpack.c.b16 %v4786, %v4778
        %v5579 = vpack.c.b16 %v4787, %v4779
        %v5580 = vpack.c.b16 %v4788, %v4780
        %v5581 = vpack.c.b16 %v4789, %v4781
        %v5582 = vpack.c.b16 %v4790, %v4782
        %v5583 = vpack.c.b16 %v4791, %v4783
        %v5584 = vpack.c.b16 %v4792, %v4784
        %v5585 = vpack.c.b16 %v4793, %v4785
        %v5586 = vpack.c.b16 %v4802, %v4794
        %v5587 = vpack.c.b16 %v4803, %v4795
        %v5588 = vpack.c.b16 %v4804, %v4796
        %v5589 = vpack.c.b16 %v4805, %v4797
        %v5590 = vpack.c.b16 %v4806, %v4798
        %v5591 = vpack.c.b16 %v4807, %v4799
        %v5592 = vpack.c.b16 %v4808, %v4800
        %v5593 = vpack.c.b16 %v4809, %v4801
        %v5594 = vpack.c.b16 %v4818, %v4810
        %v5595 = vpack.c.b16 %v4819, %v4811
        %v5596 = vpack.c.b16 %v4820, %v4812
        %v5597 = vpack.c.b16 %v4821, %v4813
        %v5598 = vpack.c.b16 %v4822, %v4814
        %v5599 = vpack.c.b16 %v4823, %v4815
        %v5600 = vpack.c.b16 %v4824, %v4816
        %v5601 = vpack.c.b16 %v4825, %v4817
        %v5602 = vpack.c.b16 %v4834, %v4826
        %v5603 = vpack.c.b16 %v4835, %v4827
        %v5604 = vpack.c.b16 %v4836, %v4828
        %v5605 = vpack.c.b16 %v4837, %v4829
        %v5606 = vpack.c.b16 %v4838, %v4830
        %v5607 = vpack.c.b16 %v4839, %v4831
        %v5608 = vpack.c.b16 %v4840, %v4832
        %v5609 = vpack.c.b16 %v4841, %v4833
        %v5610 = vpack.c.b16 %v4850, %v4842
        %v5611 = vpack.c.b16 %v4851, %v4843
        %v5612 = vpack.c.b16 %v4852, %v4844
        %v5613 = vpack.c.b16 %v4853, %v4845
        %v5614 = vpack.c.b16 %v4854, %v4846
        %v5615 = vpack.c.b16 %v4855, %v4847
        %v5616 = vpack.c.b16 %v4856, %v4848
        %v5617 = vpack.c.b16 %v4857, %v4849
        %v5618 = vpack.c.b16 %v4866, %v4858
        %v5619 = vpack.c.b16 %v4867, %v4859
        %v5620 = vpack.c.b16 %v4868, %v4860
        %v5621 = vpack.c.b16 %v4869, %v4861
        %v5622 = vpack.c.b16 %v4870, %v4862
        %v5623 = vpack.c.b16 %v4871, %v4863
        %v5624 = vpack.c.b16 %v4872, %v4864
        %v5625 = vpack.c.b16 %v4873, %v4865
        %v5626 = vpack.c.b16 %v4882, %v4874
        %v5627 = vpack.c.b16 %v4883, %v4875
        %v5628 = vpack.c.b16 %v4884, %v4876
        %v5629 = vpack.c.b16 %v4885, %v4877
        %v5630 = vpack.c.b16 %v4886, %v4878
        %v5631 = vpack.c.b16 %v4887, %v4879
        %v5632 = vpack.c.b16 %v4888, %v4880
        %v5633 = vpack.c.b16 %v4889, %v4881
        %v5634 = vpack.c.b16 %v4898, %v4890
        %v5635 = vpack.c.b16 %v4899, %v4891
        %v5636 = vpack.c.b16 %v4900, %v4892
        %v5637 = vpack.c.b16 %v4901, %v4893
        %v5638 = vpack.c.b16 %v4902, %v4894
        %v5639 = vpack.c.b16 %v4903, %v4895
        %v5640 = vpack.c.b16 %v4904, %v4896
        %v5641 = vpack.c.b16 %v4905, %v4897
        %v5642 = vpack.c.b16 %v4914, %v4906
        %v5643 = vpack.c.b16 %v4915, %v4907
        %v5644 = vpack.c.b16 %v4916, %v4908
        %v5645 = vpack.c.b16 %v4917, %v4909
        %v5646 = vpack.c.b16 %v4918, %v4910
        %v5647 = vpack.c.b16 %v4919, %v4911
        %v5648 = vpack.c.b16 %v4920, %v4912
        %v5649 = vpack.c.b16 %v4921, %v4913
        %v5650 = vpack.c.b16 %v4930, %v4922
        %v5651 = vpack.c.b16 %v4931, %v4923
        %v5652 = vpack.c.b16 %v4932, %v4924
        %v5653 = vpack.c.b16 %v4933, %v4925
        %v5654 = vpack.c.b16 %v4934, %v4926
        %v5655 = vpack.c.b16 %v4935, %v4927
        %v5656 = vpack.c.b16 %v4936, %v4928
        %v5657 = vpack.c.b16 %v4937, %v4929
        %v5658 = vpack.c.b16 %v4946, %v4938
        %v5659 = vpack.c.b16 %v4947, %v4939
        %v5660 = vpack.c.b16 %v4948, %v4940
        %v5661 = vpack.c.b16 %v4949, %v4941
        %v5662 = vpack.c.b16 %v4950, %v4942
        %v5663 = vpack.c.b16 %v4951, %v4943
        %v5664 = vpack.c.b16 %v4952, %v4944
        %v5665 = vpack.c.b16 %v4953, %v4945
        %v5666 = vpack.c.b16 %v4962, %v4954
        %v5667 = vpack.c.b16 %v4963, %v4955
        %v5668 = vpack.c.b16 %v4964, %v4956
        %v5669 = vpack.c.b16 %v4965, %v4957
        %v5670 = vpack.c.b16 %v4966, %v4958
        %v5671 = vpack.c.b16 %v4967, %v4959
        %v5672 = vpack.c.b16 %v4968, %v4960
        %v5673 = vpack.c.b16 %v4969, %v4961
        %v5674 = vpack.c.b16 %v4978, %v4970
        %v5675 = vpack.c.b16 %v4979, %v4971
        %v5676 = vpack.c.b16 %v4980, %v4972
        %v5677 = vpack.c.b16 %v4981, %v4973
        %v5678 = vpack.c.b16 %v4982, %v4974
        %v5679 = vpack.c.b16 %v4983, %v4975
        %v5680 = vpack.c.b16 %v4984, %v4976
        %v5681 = vpack.c.b16 %v4985, %v4977
        %v5682 = vpack.c.b16 %v4994, %v4986
        %v5683 = vpack.c.b16 %v4995, %v4987
        %v5684 = vpack.c.b16 %v4996, %v4988
        %v5685 = vpack.c.b16 %v4997, %v4989
        %v5686 = vpack.c.b16 %v4998, %v4990
        %v5687 = vpack.c.b16 %v4999, %v4991
        %v5688 = vpack.c.b16 %v5000, %v4992
        %v5689 = vpack.c.b16 %v5001, %v4993
        %v5690 = vpack.c.b16 %v5010, %v5002
        %v5691 = vpack.c.b16 %v5011, %v5003
        %v5692 = vpack.c.b16 %v5012, %v5004
        %v5693 = vpack.c.b16 %v5013, %v5005
        %v5694 = vpack.c.b16 %v5014, %v5006
        %v5695 = vpack.c.b16 %v5015, %v5007
        %v5696 = vpack.c.b16 %v5016, %v5008
        %v5697 = vpack.c.b16 %v5017, %v5009
        %v5698 = vpack.c.b16 %v5026, %v5018
        %v5699 = vpack.c.b16 %v5027, %v5019
        %v5700 = vpack.c.b16 %v5028, %v5020
        %v5701 = vpack.c.b16 %v5029, %v5021
        %v5702 = vpack.c.b16 %v5030, %v5022
        %v5703 = vpack.c.b16 %v5031, %v5023
        %v5704 = vpack.c.b16 %v5032, %v5024
        %v5705 = vpack.c.b16 %v5033, %v5025
        %v5706 = vpack.c.b16 %v5042, %v5034
        %v5707 = vpack.c.b16 %v5043, %v5035
        %v5708 = vpack.c.b16 %v5044, %v5036
        %v5709 = vpack.c.b16 %v5045, %v5037
        %v5710 = vpack.c.b16 %v5046, %v5038
        %v5711 = vpack.c.b16 %v5047, %v5039
        %v5712 = vpack.c.b16 %v5048, %v5040
        %v5713 = vpack.c.b16 %v5049, %v5041
        %v5714 = vpack.c.b16 %v5058, %v5050
        %v5715 = vpack.c.b16 %v5059, %v5051
        %v5716 = vpack.c.b16 %v5060, %v5052
        %v5717 = vpack.c.b16 %v5061, %v5053
        %v5718 = vpack.c.b16 %v5062, %v5054
        %v5719 = vpack.c.b16 %v5063, %v5055
        %v5720 = vpack.c.b16 %v5064, %v5056
        %v5721 = vpack.c.b16 %v5065, %v5057
        %v5722 = vpack.c.b16 %v5074, %v5066
        %v5723 = vpack.c.b16 %v5075, %v5067
        %v5724 = vpack.c.b16 %v5076, %v5068
        %v5725 = vpack.c.b16 %v5077, %v5069
        %v5726 = vpack.c.b16 %v5078, %v5070
        %v5727 = vpack.c.b16 %v5079, %v5071
        %v5728 = vpack.c.b16 %v5080, %v5072
        %v5729 = vpack.c.b16 %v5081, %v5073
        %v5730 = vpack.c.b16 %v5090, %v5082
        %v5731 = vpack.c.b16 %v5091, %v5083
        %v5732 = vpack.c.b16 %v5092, %v5084
        %v5733 = vpack.c.b16 %v5093, %v5085
        %v5734 = vpack.c.b16 %v5094, %v5086
        %v5735 = vpack.c.b16 %v5095, %v5087
        %v5736 = vpack.c.b16 %v5096, %v5088
        %v5737 = vpack.c.b16 %v5097, %v5089
        %v5738 = vpack.c.b16 %v5106, %v5098
        %v5739 = vpack.c.b16 %v5107, %v5099
        %v5740 = vpack.c.b16 %v5108, %v5100
        %v5741 = vpack.c.b16 %v5109, %v5101
        %v5742 = vpack.c.b16 %v5110, %v5102
        %v5743 = vpack.c.b16 %v5111, %v5103
        %v5744 = vpack.c.b16 %v5112, %v5104
        %v5745 = vpack.c.b16 %v5113, %v5105
        %v5746 = vpack.c.b16 %v5122, %v5114
        %v5747 = vpack.c.b16 %v5123, %v5115
        %v5748 = vpack.c.b16 %v5124, %v5116
        %v5749 = vpack.c.b16 %v5125, %v5117
        %v5750 = vpack.c.b16 %v5126, %v5118
        %v5751 = vpack.c.b16 %v5127, %v5119
        %v5752 = vpack.c.b16 %v5128, %v5120
        %v5753 = vpack.c.b16 %v5129, %v5121
        %v5754 = vpack.c.b16 %v5138, %v5130
        %v5755 = vpack.c.b16 %v5139, %v5131
        %v5756 = vpack.c.b16 %v5140, %v5132
        %v5757 = vpack.c.b16 %v5141, %v5133
        %v5758 = vpack.c.b16 %v5142, %v5134
        %v5759 = vpack.c.b16 %v5143, %v5135
        %v5760 = vpack.c.b16 %v5144, %v5136
        %v5761 = vpack.c.b16 %v5145, %v5137
        %v5762 = vpack.c.b16 %v5154, %v5146
        %v5763 = vpack.c.b16 %v5155, %v5147
        %v5764 = vpack.c.b16 %v5156, %v5148
        %v5765 = vpack.c.b16 %v5157, %v5149
        %v5766 = vpack.c.b16 %v5158, %v5150
        %v5767 = vpack.c.b16 %v5159, %v5151
        %v5768 = vpack.c.b16 %v5160, %v5152
        %v5769 = vpack.c.b16 %v5161, %v5153
        %v5770 = vpack.c.b16 %v5170, %v5162
        %v5771 = vpack.c.b16 %v5171, %v5163
        %v5772 = vpack.c.b16 %v5172, %v5164
        %v5773 = vpack.c.b16 %v5173, %v5165
        %v5774 = vpack.c.b16 %v5174, %v5166
        %v5775 = vpack.c.b16 %v5175, %v5167
        %v5776 = vpack.c.b16 %v5176, %v5168
        %v5777 = vpack.c.b16 %v5177, %v5169
        %v5778 = vpack.c.b16 %v5186, %v5178
        %v5779 = vpack.c.b16 %v5187, %v5179
        %v5780 = vpack.c.b16 %v5188, %v5180
        %v5781 = vpack.c.b16 %v5189, %v5181
        %v5782 = vpack.c.b16 %v5190, %v5182
        %v5783 = vpack.c.b16 %v5191, %v5183
        %v5784 = vpack.c.b16 %v5192, %v5184
        %v5785 = vpack.c.b16 %v5193, %v5185
        %v5786 = vpack.c.b16 %v5202, %v5194
        %v5787 = vpack.c.b16 %v5203, %v5195
        %v5788 = vpack.c.b16 %v5204, %v5196
        %v5789 = vpack.c.b16 %v5205, %v5197
        %v5790 = vpack.c.b16 %v5206, %v5198
        %v5791 = vpack.c.b16 %v5207, %v5199
        %v5792 = vpack.c.b16 %v5208, %v5200
        %v5793 = vpack.c.b16 %v5209, %v5201
        %v5794 = vpack.c.b16 %v5218, %v5210
        %v5795 = vpack.c.b16 %v5219, %v5211
        %v5796 = vpack.c.b16 %v5220, %v5212
        %v5797 = vpack.c.b16 %v5221, %v5213
        %v5798 = vpack.c.b16 %v5222, %v5214
        %v5799 = vpack.c.b16 %v5223, %v5215
        %v5800 = vpack.c.b16 %v5224, %v5216
        %v5801 = vpack.c.b16 %v5225, %v5217
        %v5802 = vpack.c.b16 %v5234, %v5226
        %v5803 = vpack.c.b16 %v5235, %v5227
        %v5804 = vpack.c.b16 %v5236, %v5228
        %v5805 = vpack.c.b16 %v5237, %v5229
        %v5806 = vpack.c.b16 %v5238, %v5230
        %v5807 = vpack.c.b16 %v5239, %v5231
        %v5808 = vpack.c.b16 %v5240, %v5232
        %v5809 = vpack.c.b16 %v5241, %v5233
        %v5810 = vpack.c.b16 %v5250, %v5242
        %v5811 = vpack.c.b16 %v5251, %v5243
        %v5812 = vpack.c.b16 %v5252, %v5244
        %v5813 = vpack.c.b16 %v5253, %v5245
        %v5814 = vpack.c.b16 %v5254, %v5246
        %v5815 = vpack.c.b16 %v5255, %v5247
        %v5816 = vpack.c.b16 %v5256, %v5248
        %v5817 = vpack.c.b16 %v5257, %v5249
        %v5818 = vpack.c.b16 %v5266, %v5258
        %v5819 = vpack.c.b16 %v5267, %v5259
        %v5820 = vpack.c.b16 %v5268, %v5260
        %v5821 = vpack.c.b16 %v5269, %v5261
        %v5822 = vpack.c.b16 %v5270, %v5262
        %v5823 = vpack.c.b16 %v5271, %v5263
        %v5824 = vpack.c.b16 %v5272, %v5264
        %v5825 = vpack.c.b16 %v5273, %v5265
        %v5826 = vpack.c.b16 %v5282, %v5274
        %v5827 = vpack.c.b16 %v5283, %v5275
        %v5828 = vpack.c.b16 %v5284, %v5276
        %v5829 = vpack.c.b16 %v5285, %v5277
        %v5830 = vpack.c.b16 %v5286, %v5278
        %v5831 = vpack.c.b16 %v5287, %v5279
        %v5832 = vpack.c.b16 %v5288, %v5280
        %v5833 = vpack.c.b16 %v5289, %v5281
        %v5834 = vpack.c.b16 %v5298, %v5290
        %v5835 = vpack.c.b16 %v5299, %v5291
        %v5836 = vpack.c.b16 %v5300, %v5292
        %v5837 = vpack.c.b16 %v5301, %v5293
        %v5838 = vpack.c.b16 %v5302, %v5294
        %v5839 = vpack.c.b16 %v5303, %v5295
        %v5840 = vpack.c.b16 %v5304, %v5296
        %v5841 = vpack.c.b16 %v5305, %v5297
        %v5842 = vpack.c.b16 %v5314, %v5306
        %v5843 = vpack.c.b16 %v5315, %v5307
        %v5844 = vpack.c.b16 %v5316, %v5308
        %v5845 = vpack.c.b16 %v5317, %v5309
        %v5846 = vpack.c.b16 %v5318, %v5310
        %v5847 = vpack.c.b16 %v5319, %v5311
        %v5848 = vpack.c.b16 %v5320, %v5312
        %v5849 = vpack.c.b16 %v5321, %v5313
        %v5850 = vpack.c.b16 %v5330, %v5322
        %v5851 = vpack.c.b16 %v5331, %v5323
        %v5852 = vpack.c.b16 %v5332, %v5324
        %v5853 = vpack.c.b16 %v5333, %v5325
        %v5854 = vpack.c.b16 %v5334, %v5326
        %v5855 = vpack.c.b16 %v5335, %v5327
        %v5856 = vpack.c.b16 %v5336, %v5328
        %v5857 = vpack.c.b16 %v5337, %v5329
        %v5858 = vpack.c.b16 %v5346, %v5338
        %v5859 = vpack.c.b16 %v5347, %v5339
        %v5860 = vpack.c.b16 %v5348, %v5340
        %v5861 = vpack.c.b16 %v5349, %v5341
        %v5862 = vpack.c.b16 %v5350, %v5342
        %v5863 = vpack.c.b16 %v5351, %v5343
        %v5864 = vpack.c.b16 %v5352, %v5344
        %v5865 = vpack.c.b16 %v5353, %v5345
        %v6379 = vlaneseq
        %v6380 = vshrl.u32 %v6379, 7
        %v6381 = vsub.s32 0, %v6380
        %v6382 = vrot.slane %v3817, %v6381
        %v6383 = vlaneseq
        %v6384 = vshrl.u32 %v6383, 7
        %v6385 = vsub.s32 1, %v6384
        %v6386 = vrot.slane %v3817, %v6385
        %v6387 = vlaneseq
        %v6388 = vshrl.u32 %v6387, 7
        %v6389 = vsub.s32 2, %v6388
        %v6390 = vrot.slane %v3817, %v6389
        %v6391 = vlaneseq
        %v6392 = vshrl.u32 %v6391, 7
        %v6393 = vsub.s32 3, %v6392
        %v6394 = vrot.slane %v3817, %v6393
        %v6395 = vlaneseq
        %v6396 = vshrl.u32 %v6395, 7
        %v6397 = vsub.s32 4, %v6396
        %v6398 = vrot.slane %v3817, %v6397
        %v6399 = vlaneseq
        %v6400 = vshrl.u32 %v6399, 7
        %v6401 = vsub.s32 5, %v6400
        %v6402 = vrot.slane %v3817, %v6401
        %v6403 = vlaneseq
        %v6404 = vshrl.u32 %v6403, 7
        %v6405 = vsub.s32 6, %v6404
        %v6406 = vrot.slane %v3817, %v6405
        %v6407 = vlaneseq
        %v6408 = vshrl.u32 %v6407, 7
        %v6409 = vsub.s32 7, %v6408
        %v6410 = vrot.slane %v3817, %v6409
        %6419 = vmatprep.subr.bf16.mxu0 %v5411
        %6420 = vmatpush1.bf16.msra.mxu0 %v5410
        %6421 = vmatprep.subr.bf16.mxu0 %v5403
        %6422 = vmatpush1.bf16.msra.mxu0 %v5402
        %6423 = vmatprep.subr.bf16.mxu0 %v5395
        %6424 = vmatpush1.bf16.msra.mxu0 %v5394
        %6425 = vmatprep.subr.bf16.mxu0 %v5387
        %6426 = vmatpush1.bf16.msra.mxu0 %v5386
        %6427 = vmatprep.subr.bf16.mxu0 %v5379
        %6428 = vmatpush1.bf16.msra.mxu0 %v5378
        %6429 = vmatprep.subr.bf16.mxu0 %v5371
        %6430 = vmatpush1.bf16.msra.mxu0 %v5370
        %6431 = vmatprep.subr.bf16.mxu0 %v5363
        %6432 = vmatpush1.bf16.msra.mxu0 %v5362
        %6433 = vmatprep.subr.bf16.mxu0 %v5355
        %6434 = vmatpush1.bf16.msra.mxu0 %v5354
        %6435 = vmatprep.subr.bf16.mxu0 %v5475
        %6436 = vmatpush2.bf16.msra.mxu0 %v5474
        %6437 = vmatprep.subr.bf16.mxu0 %v5467
        %6438 = vmatpush2.bf16.msra.mxu0 %v5466
        %6439 = vmatprep.subr.bf16.mxu0 %v5459
        %6440 = vmatpush2.bf16.msra.mxu0 %v5458
        %6441 = vmatprep.subr.bf16.mxu0 %v5451
        %6442 = vmatpush2.bf16.msra.mxu0 %v5450
        %6443 = vmatprep.subr.bf16.mxu0 %v5443
        %6444 = vmatpush2.bf16.msra.mxu0 %v5442
        %6445 = vmatprep.subr.bf16.mxu0 %v5435
        %6446 = vmatpush2.bf16.msra.mxu0 %v5434
        %6447 = vmatprep.subr.bf16.mxu0 %v5427
        %6448 = vmatpush2.bf16.msra.mxu0 %v5426
        %6449 = vmatprep.subr.bf16.mxu0 %v5419
        %6450 = vmatpush2.bf16.msra.mxu0 %v5418
        %6451 = vmatprep.mubr.bf16.mxu0 %v3298
        %6452 = vmatmul.mubr.bf16.gmra.mxu0 %v3297
        %v6453 = vpop.f32.mrf.mxu0
        %v6454 = vadd.f32 %v6382, %v6453
        %v6455 = vpop.f32.mrf.mxu0
        %v6456 = vadd.f32 %v6386, %v6455
        %v6457 = vpop.f32.mrf.mxu0
        %v6458 = vpop.f32.mrf.mxu0
        %6459 = vdwg.mxu0
        %6460 = vmatprep.subr.bf16.mxu0 %v5539
        %6461 = vmatpush1.bf16.msra.mxu0 %v5538
        %6462 = vmatprep.subr.bf16.mxu0 %v5531
        %6463 = vmatpush1.bf16.msra.mxu0 %v5530
        %6464 = vmatprep.subr.bf16.mxu0 %v5523
        %6465 = vmatpush1.bf16.msra.mxu0 %v5522
        %6466 = vmatprep.subr.bf16.mxu0 %v5515
        %6467 = vmatpush1.bf16.msra.mxu0 %v5514
        %6468 = vmatprep.subr.bf16.mxu0 %v5507
        %6469 = vmatpush1.bf16.msra.mxu0 %v5506
        %6470 = vmatprep.subr.bf16.mxu0 %v5499
        %6471 = vmatpush1.bf16.msra.mxu0 %v5498
        %6472 = vmatprep.subr.bf16.mxu0 %v5491
        %6473 = vmatpush1.bf16.msra.mxu0 %v5490
        %6474 = vmatprep.subr.bf16.mxu0 %v5483
        %6475 = vmatpush1.bf16.msra.mxu0 %v5482
        %6476 = vmatprep.subr.bf16.mxu0 %v5603
        %6477 = vmatpush2.bf16.msra.mxu0 %v5602
        %6478 = vmatprep.subr.bf16.mxu0 %v5595
        %6479 = vmatpush2.bf16.msra.mxu0 %v5594
        %6480 = vmatprep.subr.bf16.mxu0 %v5587
        %6481 = vmatpush2.bf16.msra.mxu0 %v5586
        %6482 = vmatprep.subr.bf16.mxu0 %v5579
        %6483 = vmatpush2.bf16.msra.mxu0 %v5578
        %6484 = vmatprep.subr.bf16.mxu0 %v5571
        %6485 = vmatpush2.bf16.msra.mxu0 %v5570
        %6486 = vmatprep.subr.bf16.mxu0 %v5563
        %6487 = vmatpush2.bf16.msra.mxu0 %v5562
        %6488 = vmatprep.subr.bf16.mxu0 %v5555
        %6489 = vmatpush2.bf16.msra.mxu0 %v5554
        %6490 = vmatprep.subr.bf16.mxu0 %v5547
        %6491 = vmatpush2.bf16.msra.mxu0 %v5546
        %6492 = vmatprep.mubr.bf16.mxu0 %v3300
        %6493 = vmatmul.mubr.bf16.gmra.mxu0 %v3299
        %v6494 = vpop.f32.mrf.mxu0
        %v6495 = vadd.f32 %v6454, %v6494
        %v6496 = vpop.f32.mrf.mxu0
        %v6497 = vadd.f32 %v6456, %v6496
        %v6498 = vpop.f32.mrf.mxu0
        %v6499 = vpop.f32.mrf.mxu0
        %6500 = vdwg.mxu0
        %6501 = vmatprep.subr.bf16.mxu0 %v5667
        %6502 = vmatpush1.bf16.msra.mxu0 %v5666
        %6503 = vmatprep.subr.bf16.mxu0 %v5659
        %6504 = vmatpush1.bf16.msra.mxu0 %v5658
        %6505 = vmatprep.subr.bf16.mxu0 %v5651
        %6506 = vmatpush1.bf16.msra.mxu0 %v5650
        %6507 = vmatprep.subr.bf16.mxu0 %v5643
        %6508 = vmatpush1.bf16.msra.mxu0 %v5642
        %6509 = vmatprep.subr.bf16.mxu0 %v5635
        %6510 = vmatpush1.bf16.msra.mxu0 %v5634
        %6511 = vmatprep.subr.bf16.mxu0 %v5627
        %6512 = vmatpush1.bf16.msra.mxu0 %v5626
        %6513 = vmatprep.subr.bf16.mxu0 %v5619
        %6514 = vmatpush1.bf16.msra.mxu0 %v5618
        %6515 = vmatprep.subr.bf16.mxu0 %v5611
        %6516 = vmatpush1.bf16.msra.mxu0 %v5610
        %6517 = vmatprep.subr.bf16.mxu0 %v5731
        %6518 = vmatpush2.bf16.msra.mxu0 %v5730
        %6519 = vmatprep.subr.bf16.mxu0 %v5723
        %6520 = vmatpush2.bf16.msra.mxu0 %v5722
        %6521 = vmatprep.subr.bf16.mxu0 %v5715
        %6522 = vmatpush2.bf16.msra.mxu0 %v5714
        %6523 = vmatprep.subr.bf16.mxu0 %v5707
        %6524 = vmatpush2.bf16.msra.mxu0 %v5706
        %6525 = vmatprep.subr.bf16.mxu0 %v5699
        %6526 = vmatpush2.bf16.msra.mxu0 %v5698
        %6527 = vmatprep.subr.bf16.mxu0 %v5691
        %6528 = vmatpush2.bf16.msra.mxu0 %v5690
        %6529 = vmatprep.subr.bf16.mxu0 %v5683
        %6530 = vmatpush2.bf16.msra.mxu0 %v5682
        %6531 = vmatprep.subr.bf16.mxu0 %v5675
        %6532 = vmatpush2.bf16.msra.mxu0 %v5674
        %6533 = vmatprep.mubr.bf16.mxu0 %v3302
        %6534 = vmatmul.mubr.bf16.gmra.mxu0 %v3301
        %v6535 = vpop.f32.mrf.mxu0
        %v6536 = vadd.f32 %v6495, %v6535
        %v6537 = vpop.f32.mrf.mxu0
        %v6538 = vadd.f32 %v6497, %v6537
        %v6539 = vpop.f32.mrf.mxu0
        %v6540 = vpop.f32.mrf.mxu0
        %6541 = vdwg.mxu0
        %6542 = vmatprep.subr.bf16.mxu0 %v5795
        %6543 = vmatpush1.bf16.msra.mxu0 %v5794
        %6544 = vmatprep.subr.bf16.mxu0 %v5787
        %6545 = vmatpush1.bf16.msra.mxu0 %v5786
        %6546 = vmatprep.subr.bf16.mxu0 %v5779
        %6547 = vmatpush1.bf16.msra.mxu0 %v5778
        %6548 = vmatprep.subr.bf16.mxu0 %v5771
        %6549 = vmatpush1.bf16.msra.mxu0 %v5770
        %6550 = vmatprep.subr.bf16.mxu0 %v5763
        %6551 = vmatpush1.bf16.msra.mxu0 %v5762
        %6552 = vmatprep.subr.bf16.mxu0 %v5755
        %6553 = vmatpush1.bf16.msra.mxu0 %v5754
        %6554 = vmatprep.subr.bf16.mxu0 %v5747
        %6555 = vmatpush1.bf16.msra.mxu0 %v5746
        %6556 = vmatprep.subr.bf16.mxu0 %v5739
        %6557 = vmatpush1.bf16.msra.mxu0 %v5738
        %6558 = vmatprep.subr.bf16.mxu0 %v5859
        %6559 = vmatpush2.bf16.msra.mxu0 %v5858
        %6560 = vmatprep.subr.bf16.mxu0 %v5851
        %6561 = vmatpush2.bf16.msra.mxu0 %v5850
        %6562 = vmatprep.subr.bf16.mxu0 %v5843
        %6563 = vmatpush2.bf16.msra.mxu0 %v5842
        %6564 = vmatprep.subr.bf16.mxu0 %v5835
        %6565 = vmatpush2.bf16.msra.mxu0 %v5834
        %6566 = vmatprep.subr.bf16.mxu0 %v5827
        %6567 = vmatpush2.bf16.msra.mxu0 %v5826
        %6568 = vmatprep.subr.bf16.mxu0 %v5819
        %6569 = vmatpush2.bf16.msra.mxu0 %v5818
        %6570 = vmatprep.subr.bf16.mxu0 %v5811
        %6571 = vmatpush2.bf16.msra.mxu0 %v5810
        %6572 = vmatprep.subr.bf16.mxu0 %v5803
        %6573 = vmatpush2.bf16.msra.mxu0 %v5802
        %6574 = vmatprep.mubr.bf16.mxu0 %v3304
        %6575 = vmatmul.mubr.bf16.gmra.mxu0 %v3303
        %v6576 = vpop.f32.mrf.mxu0
        %v6577 = vadd.f32 %v6536, %v6576
        %v6578 = vpop.f32.mrf.mxu0
        %v6579 = vadd.f32 %v6538, %v6578
        %v6580 = vpop.f32.mrf.mxu0
        %v6581 = vpop.f32.mrf.mxu0
        %6582 = vdwg.mxu0
        %6583 = vmatprep.subr.bf16.mxu0 %v5413
        %6584 = vmatpush1.bf16.msra.mxu0 %v5412
        %6585 = vmatprep.subr.bf16.mxu0 %v5405
        %6586 = vmatpush1.bf16.msra.mxu0 %v5404
        %6587 = vmatprep.subr.bf16.mxu0 %v5397
        %6588 = vmatpush1.bf16.msra.mxu0 %v5396
        %6589 = vmatprep.subr.bf16.mxu0 %v5389
        %6590 = vmatpush1.bf16.msra.mxu0 %v5388
        %6591 = vmatprep.subr.bf16.mxu0 %v5381
        %6592 = vmatpush1.bf16.msra.mxu0 %v5380
        %6593 = vmatprep.subr.bf16.mxu0 %v5373
        %6594 = vmatpush1.bf16.msra.mxu0 %v5372
        %6595 = vmatprep.subr.bf16.mxu0 %v5365
        %6596 = vmatpush1.bf16.msra.mxu0 %v5364
        %6597 = vmatprep.subr.bf16.mxu0 %v5357
        %6598 = vmatpush1.bf16.msra.mxu0 %v5356
        %6599 = vmatprep.subr.bf16.mxu0 %v5477
        %6600 = vmatpush2.bf16.msra.mxu0 %v5476
        %6601 = vmatprep.subr.bf16.mxu0 %v5469
        %6602 = vmatpush2.bf16.msra.mxu0 %v5468
        %6603 = vmatprep.subr.bf16.mxu0 %v5461
        %6604 = vmatpush2.bf16.msra.mxu0 %v5460
        %6605 = vmatprep.subr.bf16.mxu0 %v5453
        %6606 = vmatpush2.bf16.msra.mxu0 %v5452
        %6607 = vmatprep.subr.bf16.mxu0 %v5445
        %6608 = vmatpush2.bf16.msra.mxu0 %v5444
        %6609 = vmatprep.subr.bf16.mxu0 %v5437
        %6610 = vmatpush2.bf16.msra.mxu0 %v5436
        %6611 = vmatprep.subr.bf16.mxu0 %v5429
        %6612 = vmatpush2.bf16.msra.mxu0 %v5428
        %6613 = vmatprep.subr.bf16.mxu0 %v5421
        %6614 = vmatpush2.bf16.msra.mxu0 %v5420
        %6615 = vmatprep.mubr.bf16.mxu0 %v3298
        %6616 = vmatmul.mubr.bf16.gmra.mxu0 %v3297
        %v6617 = vpop.f32.mrf.mxu0
        %v6618 = vadd.f32 %v6390, %v6617
        %v6619 = vpop.f32.mrf.mxu0
        %v6620 = vadd.f32 %v6394, %v6619
        %v6621 = vpop.f32.mrf.mxu0
        %v6622 = vpop.f32.mrf.mxu0
        %6623 = vdwg.mxu0
        %6624 = vmatprep.subr.bf16.mxu0 %v5541
        %6625 = vmatpush1.bf16.msra.mxu0 %v5540
        %6626 = vmatprep.subr.bf16.mxu0 %v5533
        %6627 = vmatpush1.bf16.msra.mxu0 %v5532
        %6628 = vmatprep.subr.bf16.mxu0 %v5525
        %6629 = vmatpush1.bf16.msra.mxu0 %v5524
        %6630 = vmatprep.subr.bf16.mxu0 %v5517
        %6631 = vmatpush1.bf16.msra.mxu0 %v5516
        %6632 = vmatprep.subr.bf16.mxu0 %v5509
        %6633 = vmatpush1.bf16.msra.mxu0 %v5508
        %6634 = vmatprep.subr.bf16.mxu0 %v5501
        %6635 = vmatpush1.bf16.msra.mxu0 %v5500
        %6636 = vmatprep.subr.bf16.mxu0 %v5493
        %6637 = vmatpush1.bf16.msra.mxu0 %v5492
        %6638 = vmatprep.subr.bf16.mxu0 %v5485
        %6639 = vmatpush1.bf16.msra.mxu0 %v5484
        %6640 = vmatprep.subr.bf16.mxu0 %v5605
        %6641 = vmatpush2.bf16.msra.mxu0 %v5604
        %6642 = vmatprep.subr.bf16.mxu0 %v5597
        %6643 = vmatpush2.bf16.msra.mxu0 %v5596
        %6644 = vmatprep.subr.bf16.mxu0 %v5589
        %6645 = vmatpush2.bf16.msra.mxu0 %v5588
        %6646 = vmatprep.subr.bf16.mxu0 %v5581
        %6647 = vmatpush2.bf16.msra.mxu0 %v5580
        %6648 = vmatprep.subr.bf16.mxu0 %v5573
        %6649 = vmatpush2.bf16.msra.mxu0 %v5572
        %6650 = vmatprep.subr.bf16.mxu0 %v5565
        %6651 = vmatpush2.bf16.msra.mxu0 %v5564
        %6652 = vmatprep.subr.bf16.mxu0 %v5557
        %6653 = vmatpush2.bf16.msra.mxu0 %v5556
        %6654 = vmatprep.subr.bf16.mxu0 %v5549
        %6655 = vmatpush2.bf16.msra.mxu0 %v5548
        %6656 = vmatprep.mubr.bf16.mxu0 %v3300
        %6657 = vmatmul.mubr.bf16.gmra.mxu0 %v3299
        %v6658 = vpop.f32.mrf.mxu0
        %v6659 = vadd.f32 %v6618, %v6658
        %v6660 = vpop.f32.mrf.mxu0
        %v6661 = vadd.f32 %v6620, %v6660
        %v6662 = vpop.f32.mrf.mxu0
        %v6663 = vpop.f32.mrf.mxu0
        %6664 = vdwg.mxu0
        %6665 = vmatprep.subr.bf16.mxu0 %v5669
        %6666 = vmatpush1.bf16.msra.mxu0 %v5668
        %6667 = vmatprep.subr.bf16.mxu0 %v5661
        %6668 = vmatpush1.bf16.msra.mxu0 %v5660
        %6669 = vmatprep.subr.bf16.mxu0 %v5653
        %6670 = vmatpush1.bf16.msra.mxu0 %v5652
        %6671 = vmatprep.subr.bf16.mxu0 %v5645
        %6672 = vmatpush1.bf16.msra.mxu0 %v5644
        %6673 = vmatprep.subr.bf16.mxu0 %v5637
        %6674 = vmatpush1.bf16.msra.mxu0 %v5636
        %6675 = vmatprep.subr.bf16.mxu0 %v5629
        %6676 = vmatpush1.bf16.msra.mxu0 %v5628
        %6677 = vmatprep.subr.bf16.mxu0 %v5621
        %6678 = vmatpush1.bf16.msra.mxu0 %v5620
        %6679 = vmatprep.subr.bf16.mxu0 %v5613
        %6680 = vmatpush1.bf16.msra.mxu0 %v5612
        %6681 = vmatprep.subr.bf16.mxu0 %v5733
        %6682 = vmatpush2.bf16.msra.mxu0 %v5732
        %6683 = vmatprep.subr.bf16.mxu0 %v5725
        %6684 = vmatpush2.bf16.msra.mxu0 %v5724
        %6685 = vmatprep.subr.bf16.mxu0 %v5717
        %6686 = vmatpush2.bf16.msra.mxu0 %v5716
        %6687 = vmatprep.subr.bf16.mxu0 %v5709
        %6688 = vmatpush2.bf16.msra.mxu0 %v5708
        %6689 = vmatprep.subr.bf16.mxu0 %v5701
        %6690 = vmatpush2.bf16.msra.mxu0 %v5700
        %6691 = vmatprep.subr.bf16.mxu0 %v5693
        %6692 = vmatpush2.bf16.msra.mxu0 %v5692
        %6693 = vmatprep.subr.bf16.mxu0 %v5685
        %6694 = vmatpush2.bf16.msra.mxu0 %v5684
        %6695 = vmatprep.subr.bf16.mxu0 %v5677
        %6696 = vmatpush2.bf16.msra.mxu0 %v5676
        %6697 = vmatprep.mubr.bf16.mxu0 %v3302
        %6698 = vmatmul.mubr.bf16.gmra.mxu0 %v3301
        %v6699 = vpop.f32.mrf.mxu0
        %v6700 = vadd.f32 %v6659, %v6699
        %v6701 = vpop.f32.mrf.mxu0
        %v6702 = vadd.f32 %v6661, %v6701
        %v6703 = vpop.f32.mrf.mxu0
        %v6704 = vpop.f32.mrf.mxu0
        %6705 = vdwg.mxu0
        %6706 = vmatprep.subr.bf16.mxu0 %v5797
        %6707 = vmatpush1.bf16.msra.mxu0 %v5796
        %6708 = vmatprep.subr.bf16.mxu0 %v5789
        %6709 = vmatpush1.bf16.msra.mxu0 %v5788
        %6710 = vmatprep.subr.bf16.mxu0 %v5781
        %6711 = vmatpush1.bf16.msra.mxu0 %v5780
        %6712 = vmatprep.subr.bf16.mxu0 %v5773
        %6713 = vmatpush1.bf16.msra.mxu0 %v5772
        %6714 = vmatprep.subr.bf16.mxu0 %v5765
        %6715 = vmatpush1.bf16.msra.mxu0 %v5764
        %6716 = vmatprep.subr.bf16.mxu0 %v5757
        %6717 = vmatpush1.bf16.msra.mxu0 %v5756
        %6718 = vmatprep.subr.bf16.mxu0 %v5749
        %6719 = vmatpush1.bf16.msra.mxu0 %v5748
        %6720 = vmatprep.subr.bf16.mxu0 %v5741
        %6721 = vmatpush1.bf16.msra.mxu0 %v5740
        %6722 = vmatprep.subr.bf16.mxu0 %v5861
        %6723 = vmatpush2.bf16.msra.mxu0 %v5860
        %6724 = vmatprep.subr.bf16.mxu0 %v5853
        %6725 = vmatpush2.bf16.msra.mxu0 %v5852
        %6726 = vmatprep.subr.bf16.mxu0 %v5845
        %6727 = vmatpush2.bf16.msra.mxu0 %v5844
        %6728 = vmatprep.subr.bf16.mxu0 %v5837
        %6729 = vmatpush2.bf16.msra.mxu0 %v5836
        %6730 = vmatprep.subr.bf16.mxu0 %v5829
        %6731 = vmatpush2.bf16.msra.mxu0 %v5828
        %6732 = vmatprep.subr.bf16.mxu0 %v5821
        %6733 = vmatpush2.bf16.msra.mxu0 %v5820
        %6734 = vmatprep.subr.bf16.mxu0 %v5813
        %6735 = vmatpush2.bf16.msra.mxu0 %v5812
        %6736 = vmatprep.subr.bf16.mxu0 %v5805
        %6737 = vmatpush2.bf16.msra.mxu0 %v5804
        %6738 = vmatprep.mubr.bf16.mxu0 %v3304
        %6739 = vmatmul.mubr.bf16.gmra.mxu0 %v3303
        %v6740 = vpop.f32.mrf.mxu0
        %v6741 = vadd.f32 %v6700, %v6740
        %v6742 = vpop.f32.mrf.mxu0
        %v6743 = vadd.f32 %v6702, %v6742
        %v6744 = vpop.f32.mrf.mxu0
        %v6745 = vpop.f32.mrf.mxu0
        %6746 = vdwg.mxu0
        %6747 = vmatprep.subr.bf16.mxu0 %v5415
        %6748 = vmatpush1.bf16.msra.mxu0 %v5414
        %6749 = vmatprep.subr.bf16.mxu0 %v5407
        %6750 = vmatpush1.bf16.msra.mxu0 %v5406
        %6751 = vmatprep.subr.bf16.mxu0 %v5399
        %6752 = vmatpush1.bf16.msra.mxu0 %v5398
        %6753 = vmatprep.subr.bf16.mxu0 %v5391
        %6754 = vmatpush1.bf16.msra.mxu0 %v5390
        %6755 = vmatprep.subr.bf16.mxu0 %v5383
        %6756 = vmatpush1.bf16.msra.mxu0 %v5382
        %6757 = vmatprep.subr.bf16.mxu0 %v5375
        %6758 = vmatpush1.bf16.msra.mxu0 %v5374
        %6759 = vmatprep.subr.bf16.mxu0 %v5367
        %6760 = vmatpush1.bf16.msra.mxu0 %v5366
        %6761 = vmatprep.subr.bf16.mxu0 %v5359
        %6762 = vmatpush1.bf16.msra.mxu0 %v5358
        %6763 = vmatprep.subr.bf16.mxu0 %v5479
        %6764 = vmatpush2.bf16.msra.mxu0 %v5478
        %6765 = vmatprep.subr.bf16.mxu0 %v5471
        %6766 = vmatpush2.bf16.msra.mxu0 %v5470
        %6767 = vmatprep.subr.bf16.mxu0 %v5463
        %6768 = vmatpush2.bf16.msra.mxu0 %v5462
        %6769 = vmatprep.subr.bf16.mxu0 %v5455
        %6770 = vmatpush2.bf16.msra.mxu0 %v5454
        %6771 = vmatprep.subr.bf16.mxu0 %v5447
        %6772 = vmatpush2.bf16.msra.mxu0 %v5446
        %6773 = vmatprep.subr.bf16.mxu0 %v5439
        %6774 = vmatpush2.bf16.msra.mxu0 %v5438
        %6775 = vmatprep.subr.bf16.mxu0 %v5431
        %6776 = vmatpush2.bf16.msra.mxu0 %v5430
        %6777 = vmatprep.subr.bf16.mxu0 %v5423
        %6778 = vmatpush2.bf16.msra.mxu0 %v5422
        %6779 = vmatprep.mubr.bf16.mxu0 %v3298
        %6780 = vmatmul.mubr.bf16.gmra.mxu0 %v3297
        %v6781 = vpop.f32.mrf.mxu0
        %v6782 = vadd.f32 %v6398, %v6781
        %v6783 = vpop.f32.mrf.mxu0
        %v6784 = vadd.f32 %v6402, %v6783
        %v6785 = vpop.f32.mrf.mxu0
        %v6786 = vpop.f32.mrf.mxu0
        %6787 = vdwg.mxu0
        %6788 = vmatprep.subr.bf16.mxu0 %v5543
        %6789 = vmatpush1.bf16.msra.mxu0 %v5542
        %6790 = vmatprep.subr.bf16.mxu0 %v5535
        %6791 = vmatpush1.bf16.msra.mxu0 %v5534
        %6792 = vmatprep.subr.bf16.mxu0 %v5527
        %6793 = vmatpush1.bf16.msra.mxu0 %v5526
        %6794 = vmatprep.subr.bf16.mxu0 %v5519
        %6795 = vmatpush1.bf16.msra.mxu0 %v5518
        %6796 = vmatprep.subr.bf16.mxu0 %v5511
        %6797 = vmatpush1.bf16.msra.mxu0 %v5510
        %6798 = vmatprep.subr.bf16.mxu0 %v5503
        %6799 = vmatpush1.bf16.msra.mxu0 %v5502
        %6800 = vmatprep.subr.bf16.mxu0 %v5495
        %6801 = vmatpush1.bf16.msra.mxu0 %v5494
        %6802 = vmatprep.subr.bf16.mxu0 %v5487
        %6803 = vmatpush1.bf16.msra.mxu0 %v5486
        %6804 = vmatprep.subr.bf16.mxu0 %v5607
        %6805 = vmatpush2.bf16.msra.mxu0 %v5606
        %6806 = vmatprep.subr.bf16.mxu0 %v5599
        %6807 = vmatpush2.bf16.msra.mxu0 %v5598
        %6808 = vmatprep.subr.bf16.mxu0 %v5591
        %6809 = vmatpush2.bf16.msra.mxu0 %v5590
        %6810 = vmatprep.subr.bf16.mxu0 %v5583
        %6811 = vmatpush2.bf16.msra.mxu0 %v5582
        %6812 = vmatprep.subr.bf16.mxu0 %v5575
        %6813 = vmatpush2.bf16.msra.mxu0 %v5574
        %6814 = vmatprep.subr.bf16.mxu0 %v5567
        %6815 = vmatpush2.bf16.msra.mxu0 %v5566
        %6816 = vmatprep.subr.bf16.mxu0 %v5559
        %6817 = vmatpush2.bf16.msra.mxu0 %v5558
        %6818 = vmatprep.subr.bf16.mxu0 %v5551
        %6819 = vmatpush2.bf16.msra.mxu0 %v5550
        %6820 = vmatprep.mubr.bf16.mxu0 %v3300
        %6821 = vmatmul.mubr.bf16.gmra.mxu0 %v3299
        %v6822 = vpop.f32.mrf.mxu0
        %v6823 = vadd.f32 %v6782, %v6822
        %v6824 = vpop.f32.mrf.mxu0
        %v6825 = vadd.f32 %v6784, %v6824
        %v6826 = vpop.f32.mrf.mxu0
        %v6827 = vpop.f32.mrf.mxu0
        %6828 = vdwg.mxu0
        %6829 = vmatprep.subr.bf16.mxu0 %v5671
        %6830 = vmatpush1.bf16.msra.mxu0 %v5670
        %6831 = vmatprep.subr.bf16.mxu0 %v5663
        %6832 = vmatpush1.bf16.msra.mxu0 %v5662
        %6833 = vmatprep.subr.bf16.mxu0 %v5655
        %6834 = vmatpush1.bf16.msra.mxu0 %v5654
        %6835 = vmatprep.subr.bf16.mxu0 %v5647
        %6836 = vmatpush1.bf16.msra.mxu0 %v5646
        %6837 = vmatprep.subr.bf16.mxu0 %v5639
        %6838 = vmatpush1.bf16.msra.mxu0 %v5638
        %6839 = vmatprep.subr.bf16.mxu0 %v5631
        %6840 = vmatpush1.bf16.msra.mxu0 %v5630
        %6841 = vmatprep.subr.bf16.mxu0 %v5623
        %6842 = vmatpush1.bf16.msra.mxu0 %v5622
        %6843 = vmatprep.subr.bf16.mxu0 %v5615
        %6844 = vmatpush1.bf16.msra.mxu0 %v5614
        %6845 = vmatprep.subr.bf16.mxu0 %v5735
        %6846 = vmatpush2.bf16.msra.mxu0 %v5734
        %6847 = vmatprep.subr.bf16.mxu0 %v5727
        %6848 = vmatpush2.bf16.msra.mxu0 %v5726
        %6849 = vmatprep.subr.bf16.mxu0 %v5719
        %6850 = vmatpush2.bf16.msra.mxu0 %v5718
        %6851 = vmatprep.subr.bf16.mxu0 %v5711
        %6852 = vmatpush2.bf16.msra.mxu0 %v5710
        %6853 = vmatprep.subr.bf16.mxu0 %v5703
        %6854 = vmatpush2.bf16.msra.mxu0 %v5702
        %6855 = vmatprep.subr.bf16.mxu0 %v5695
        %6856 = vmatpush2.bf16.msra.mxu0 %v5694
        %6857 = vmatprep.subr.bf16.mxu0 %v5687
        %6858 = vmatpush2.bf16.msra.mxu0 %v5686
        %6859 = vmatprep.subr.bf16.mxu0 %v5679
        %6860 = vmatpush2.bf16.msra.mxu0 %v5678
        %6861 = vmatprep.mubr.bf16.mxu0 %v3302
        %6862 = vmatmul.mubr.bf16.gmra.mxu0 %v3301
        %v6863 = vpop.f32.mrf.mxu0
        %v6864 = vadd.f32 %v6823, %v6863
        %v6865 = vpop.f32.mrf.mxu0
        %v6866 = vadd.f32 %v6825, %v6865
        %v6867 = vpop.f32.mrf.mxu0
        %v6868 = vpop.f32.mrf.mxu0
        %6869 = vdwg.mxu0
        %6870 = vmatprep.subr.bf16.mxu0 %v5799
        %6871 = vmatpush1.bf16.msra.mxu0 %v5798
        %6872 = vmatprep.subr.bf16.mxu0 %v5791
        %6873 = vmatpush1.bf16.msra.mxu0 %v5790
        %6874 = vmatprep.subr.bf16.mxu0 %v5783
        %6875 = vmatpush1.bf16.msra.mxu0 %v5782
        %6876 = vmatprep.subr.bf16.mxu0 %v5775
        %6877 = vmatpush1.bf16.msra.mxu0 %v5774
        %6878 = vmatprep.subr.bf16.mxu0 %v5767
        %6879 = vmatpush1.bf16.msra.mxu0 %v5766
        %6880 = vmatprep.subr.bf16.mxu0 %v5759
        %6881 = vmatpush1.bf16.msra.mxu0 %v5758
        %6882 = vmatprep.subr.bf16.mxu0 %v5751
        %6883 = vmatpush1.bf16.msra.mxu0 %v5750
        %6884 = vmatprep.subr.bf16.mxu0 %v5743
        %6885 = vmatpush1.bf16.msra.mxu0 %v5742
        %6886 = vmatprep.subr.bf16.mxu0 %v5863
        %6887 = vmatpush2.bf16.msra.mxu0 %v5862
        %6888 = vmatprep.subr.bf16.mxu0 %v5855
        %6889 = vmatpush2.bf16.msra.mxu0 %v5854
        %6890 = vmatprep.subr.bf16.mxu0 %v5847
        %6891 = vmatpush2.bf16.msra.mxu0 %v5846
        %6892 = vmatprep.subr.bf16.mxu0 %v5839
        %6893 = vmatpush2.bf16.msra.mxu0 %v5838
        %6894 = vmatprep.subr.bf16.mxu0 %v5831
        %6895 = vmatpush2.bf16.msra.mxu0 %v5830
        %6896 = vmatprep.subr.bf16.mxu0 %v5823
        %6897 = vmatpush2.bf16.msra.mxu0 %v5822
        %6898 = vmatprep.subr.bf16.mxu0 %v5815
        %6899 = vmatpush2.bf16.msra.mxu0 %v5814
        %6900 = vmatprep.subr.bf16.mxu0 %v5807
        %6901 = vmatpush2.bf16.msra.mxu0 %v5806
        %6902 = vmatprep.mubr.bf16.mxu0 %v3304
        %6903 = vmatmul.mubr.bf16.gmra.mxu0 %v3303
        %v6904 = vpop.f32.mrf.mxu0
        %v6905 = vadd.f32 %v6864, %v6904
        %v6906 = vpop.f32.mrf.mxu0
        %v6907 = vadd.f32 %v6866, %v6906
        %v6908 = vpop.f32.mrf.mxu0
        %v6909 = vpop.f32.mrf.mxu0
        %6910 = vdwg.mxu0
        %6911 = vmatprep.subr.bf16.mxu0 %v5417
        %6912 = vmatpush1.bf16.msra.mxu0 %v5416
        %6913 = vmatprep.subr.bf16.mxu0 %v5409
        %6914 = vmatpush1.bf16.msra.mxu0 %v5408
        %6915 = vmatprep.subr.bf16.mxu0 %v5401
        %6916 = vmatpush1.bf16.msra.mxu0 %v5400
        %6917 = vmatprep.subr.bf16.mxu0 %v5393
        %6918 = vmatpush1.bf16.msra.mxu0 %v5392
        %6919 = vmatprep.subr.bf16.mxu0 %v5385
        %6920 = vmatpush1.bf16.msra.mxu0 %v5384
        %6921 = vmatprep.subr.bf16.mxu0 %v5377
        %6922 = vmatpush1.bf16.msra.mxu0 %v5376
        %6923 = vmatprep.subr.bf16.mxu0 %v5369
        %6924 = vmatpush1.bf16.msra.mxu0 %v5368
        %6925 = vmatprep.subr.bf16.mxu0 %v5361
        %6926 = vmatpush1.bf16.msra.mxu0 %v5360
        %6927 = vmatprep.subr.bf16.mxu0 %v5481
        %6928 = vmatpush2.bf16.msra.mxu0 %v5480
        %6929 = vmatprep.subr.bf16.mxu0 %v5473
        %6930 = vmatpush2.bf16.msra.mxu0 %v5472
        %6931 = vmatprep.subr.bf16.mxu0 %v5465
        %6932 = vmatpush2.bf16.msra.mxu0 %v5464
        %6933 = vmatprep.subr.bf16.mxu0 %v5457
        %6934 = vmatpush2.bf16.msra.mxu0 %v5456
        %6935 = vmatprep.subr.bf16.mxu0 %v5449
        %6936 = vmatpush2.bf16.msra.mxu0 %v5448
        %6937 = vmatprep.subr.bf16.mxu0 %v5441
        %6938 = vmatpush2.bf16.msra.mxu0 %v5440
        %6939 = vmatprep.subr.bf16.mxu0 %v5433
        %6940 = vmatpush2.bf16.msra.mxu0 %v5432
        %6941 = vmatprep.subr.bf16.mxu0 %v5425
        %6942 = vmatpush2.bf16.msra.mxu0 %v5424
        %6943 = vmatprep.mubr.bf16.mxu0 %v3298
        %6944 = vmatmul.mubr.bf16.gmra.mxu0 %v3297
        %v6945 = vpop.f32.mrf.mxu0
        %v6946 = vadd.f32 %v6406, %v6945
        %v6947 = vpop.f32.mrf.mxu0
        %v6948 = vadd.f32 %v6410, %v6947
        %v6949 = vpop.f32.mrf.mxu0
        %v6950 = vpop.f32.mrf.mxu0
        %6951 = vdwg.mxu0
        %6952 = vmatprep.subr.bf16.mxu0 %v5545
        %6953 = vmatpush1.bf16.msra.mxu0 %v5544
        %6954 = vmatprep.subr.bf16.mxu0 %v5537
        %6955 = vmatpush1.bf16.msra.mxu0 %v5536
        %6956 = vmatprep.subr.bf16.mxu0 %v5529
        %6957 = vmatpush1.bf16.msra.mxu0 %v5528
        %6958 = vmatprep.subr.bf16.mxu0 %v5521
        %6959 = vmatpush1.bf16.msra.mxu0 %v5520
        %6960 = vmatprep.subr.bf16.mxu0 %v5513
        %6961 = vmatpush1.bf16.msra.mxu0 %v5512
        %6962 = vmatprep.subr.bf16.mxu0 %v5505
        %6963 = vmatpush1.bf16.msra.mxu0 %v5504
        %6964 = vmatprep.subr.bf16.mxu0 %v5497
        %6965 = vmatpush1.bf16.msra.mxu0 %v5496
        %6966 = vmatprep.subr.bf16.mxu0 %v5489
        %6967 = vmatpush1.bf16.msra.mxu0 %v5488
        %6968 = vmatprep.subr.bf16.mxu0 %v5609
        %6969 = vmatpush2.bf16.msra.mxu0 %v5608
        %6970 = vmatprep.subr.bf16.mxu0 %v5601
        %6971 = vmatpush2.bf16.msra.mxu0 %v5600
        %6972 = vmatprep.subr.bf16.mxu0 %v5593
        %6973 = vmatpush2.bf16.msra.mxu0 %v5592
        %6974 = vmatprep.subr.bf16.mxu0 %v5585
        %6975 = vmatpush2.bf16.msra.mxu0 %v5584
        %6976 = vmatprep.subr.bf16.mxu0 %v5577
        %6977 = vmatpush2.bf16.msra.mxu0 %v5576
        %6978 = vmatprep.subr.bf16.mxu0 %v5569
        %6979 = vmatpush2.bf16.msra.mxu0 %v5568
        %6980 = vmatprep.subr.bf16.mxu0 %v5561
        %6981 = vmatpush2.bf16.msra.mxu0 %v5560
        %6982 = vmatprep.subr.bf16.mxu0 %v5553
        %6983 = vmatpush2.bf16.msra.mxu0 %v5552
        %6984 = vmatprep.mubr.bf16.mxu0 %v3300
        %6985 = vmatmul.mubr.bf16.gmra.mxu0 %v3299
        %v6986 = vpop.f32.mrf.mxu0
        %v6987 = vadd.f32 %v6946, %v6986
        %v6988 = vpop.f32.mrf.mxu0
        %v6989 = vadd.f32 %v6948, %v6988
        %v6990 = vpop.f32.mrf.mxu0
        %v6991 = vpop.f32.mrf.mxu0
        %6992 = vdwg.mxu0
        %6993 = vmatprep.subr.bf16.mxu0 %v5673
        %6994 = vmatpush1.bf16.msra.mxu0 %v5672
        %6995 = vmatprep.subr.bf16.mxu0 %v5665
        %6996 = vmatpush1.bf16.msra.mxu0 %v5664
        %6997 = vmatprep.subr.bf16.mxu0 %v5657
        %6998 = vmatpush1.bf16.msra.mxu0 %v5656
        %6999 = vmatprep.subr.bf16.mxu0 %v5649
        %7000 = vmatpush1.bf16.msra.mxu0 %v5648
        %7001 = vmatprep.subr.bf16.mxu0 %v5641
        %7002 = vmatpush1.bf16.msra.mxu0 %v5640
        %7003 = vmatprep.subr.bf16.mxu0 %v5633
        %7004 = vmatpush1.bf16.msra.mxu0 %v5632
        %7005 = vmatprep.subr.bf16.mxu0 %v5625
        %7006 = vmatpush1.bf16.msra.mxu0 %v5624
        %7007 = vmatprep.subr.bf16.mxu0 %v5617
        %7008 = vmatpush1.bf16.msra.mxu0 %v5616
        %7009 = vmatprep.subr.bf16.mxu0 %v5737
        %7010 = vmatpush2.bf16.msra.mxu0 %v5736
        %7011 = vmatprep.subr.bf16.mxu0 %v5729
        %7012 = vmatpush2.bf16.msra.mxu0 %v5728
        %7013 = vmatprep.subr.bf16.mxu0 %v5721
        %7014 = vmatpush2.bf16.msra.mxu0 %v5720
        %7015 = vmatprep.subr.bf16.mxu0 %v5713
        %7016 = vmatpush2.bf16.msra.mxu0 %v5712
        %7017 = vmatprep.subr.bf16.mxu0 %v5705
        %7018 = vmatpush2.bf16.msra.mxu0 %v5704
        %7019 = vmatprep.subr.bf16.mxu0 %v5697
        %7020 = vmatpush2.bf16.msra.mxu0 %v5696
        %7021 = vmatprep.subr.bf16.mxu0 %v5689
        %7022 = vmatpush2.bf16.msra.mxu0 %v5688
        %7023 = vmatprep.subr.bf16.mxu0 %v5681
        %7024 = vmatpush2.bf16.msra.mxu0 %v5680
        %7025 = vmatprep.mubr.bf16.mxu0 %v3302
        %7026 = vmatmul.mubr.bf16.gmra.mxu0 %v3301
        %v7027 = vpop.f32.mrf.mxu0
        %v7028 = vadd.f32 %v6987, %v7027
        %v7029 = vpop.f32.mrf.mxu0
        %v7030 = vadd.f32 %v6989, %v7029
        %v7031 = vpop.f32.mrf.mxu0
        %v7032 = vpop.f32.mrf.mxu0
        %7033 = vdwg.mxu0
        %7034 = vmatprep.subr.bf16.mxu0 %v5801
        %7035 = vmatpush1.bf16.msra.mxu0 %v5800
        %7036 = vmatprep.subr.bf16.mxu0 %v5793
        %7037 = vmatpush1.bf16.msra.mxu0 %v5792
        %7038 = vmatprep.subr.bf16.mxu0 %v5785
        %7039 = vmatpush1.bf16.msra.mxu0 %v5784
        %7040 = vmatprep.subr.bf16.mxu0 %v5777
        %7041 = vmatpush1.bf16.msra.mxu0 %v5776
        %7042 = vmatprep.subr.bf16.mxu0 %v5769
        %7043 = vmatpush1.bf16.msra.mxu0 %v5768
        %7044 = vmatprep.subr.bf16.mxu0 %v5761
        %7045 = vmatpush1.bf16.msra.mxu0 %v5760
        %7046 = vmatprep.subr.bf16.mxu0 %v5753
        %7047 = vmatpush1.bf16.msra.mxu0 %v5752
        %7048 = vmatprep.subr.bf16.mxu0 %v5745
        %7049 = vmatpush1.bf16.msra.mxu0 %v5744
        %7050 = vmatprep.subr.bf16.mxu0 %v5865
        %7051 = vmatpush2.bf16.msra.mxu0 %v5864
        %7052 = vmatprep.subr.bf16.mxu0 %v5857
        %7053 = vmatpush2.bf16.msra.mxu0 %v5856
        %7054 = vmatprep.subr.bf16.mxu0 %v5849
        %7055 = vmatpush2.bf16.msra.mxu0 %v5848
        %7056 = vmatprep.subr.bf16.mxu0 %v5841
        %7057 = vmatpush2.bf16.msra.mxu0 %v5840
        %7058 = vmatprep.subr.bf16.mxu0 %v5833
        %7059 = vmatpush2.bf16.msra.mxu0 %v5832
        %7060 = vmatprep.subr.bf16.mxu0 %v5825
        %7061 = vmatpush2.bf16.msra.mxu0 %v5824
        %7062 = vmatprep.subr.bf16.mxu0 %v5817
        %7063 = vmatpush2.bf16.msra.mxu0 %v5816
        %7064 = vmatprep.subr.bf16.mxu0 %v5809
        %7065 = vmatpush2.bf16.msra.mxu0 %v5808
        %7066 = vmatprep.mubr.bf16.mxu0 %v3304
        %7067 = vmatmul.mubr.bf16.gmra.mxu0 %v3303
        %v7068 = vpop.f32.mrf.mxu0
        %v7069 = vadd.f32 %v7028, %v7068
        %v7070 = vpop.f32.mrf.mxu0
        %v7071 = vadd.f32 %v7030, %v7070
        %v7072 = vpop.f32.mrf.mxu0
        %v7073 = vpop.f32.mrf.mxu0
        %7074 = vdwg.mxu0
        %v7075 = vmax.f32 %v6577, 0.0
        %v7076 = vmax.f32 %v6579, 0.0
        %v7077 = vmax.f32 %v6741, 0.0
        %v7078 = vmax.f32 %v6743, 0.0
        %v7079 = vmax.f32 %v6905, 0.0
        %v7080 = vmax.f32 %v6907, 0.0
        %v7081 = vmax.f32 %v7069, 0.0
        %v7082 = vmax.f32 %v7071, 0.0
        %v7083 = vpack.c.bf16 %v7075, %v7075
        %v7084 = vpack.c.bf16 %v7076, %v7076
        %v7085 = vpack.c.bf16 %v7077, %v7077
        %v7086 = vpack.c.bf16 %v7078, %v7078
        %v7087 = vpack.c.bf16 %v7079, %v7079
        %v7088 = vpack.c.bf16 %v7080, %v7080
        %v7089 = vpack.c.bf16 %v7081, %v7081
        %v7090 = vpack.c.bf16 %v7082, %v7082
        %v7091 = vld [vmem:[#allocation12] sm:$0xff]
        %v7092 = vld [vmem:[#allocation12 + $0x8] sm:$0xff]
        %v7093 = vld [vmem:[#allocation12 + $0x10] sm:$0xff]
        %v7094 = vld [vmem:[#allocation12 + $0x18] sm:$0xff]
        %v7095 = vld [vmem:[#allocation12 + $0x20] sm:$0xff]
        %v7096 = vld [vmem:[#allocation12 + $0x28] sm:$0xff]
        %v7097 = vld [vmem:[#allocation12 + $0x30] sm:$0xff]
        %v7098 = vld [vmem:[#allocation12 + $0x38] sm:$0xff]
        %v7099 = vld [vmem:[#allocation12 + $0x40] sm:$0xff]
        %v7100 = vld [vmem:[#allocation12 + $0x48] sm:$0xff]
        %v7101 = vld [vmem:[#allocation12 + $0x50] sm:$0xff]
        %v7102 = vld [vmem:[#allocation12 + $0x58] sm:$0xff]
        %v7103 = vld [vmem:[#allocation12 + $0x60] sm:$0xff]
        %v7104 = vld [vmem:[#allocation12 + $0x68] sm:$0xff]
        %v7105 = vld [vmem:[#allocation12 + $0x70] sm:$0xff]
        %v7106 = vld [vmem:[#allocation12 + $0x78] sm:$0xff]
        %v7107 = vld [vmem:[#allocation12 + $0x80] sm:$0xff]
        %v7108 = vld [vmem:[#allocation12 + $0x88] sm:$0xff]
        %v7109 = vld [vmem:[#allocation12 + $0x90] sm:$0xff]
        %v7110 = vld [vmem:[#allocation12 + $0x98] sm:$0xff]
        %v7111 = vld [vmem:[#allocation12 + $0xa0] sm:$0xff]
        %v7112 = vld [vmem:[#allocation12 + $0xa8] sm:$0xff]
        %v7113 = vld [vmem:[#allocation12 + $0xb0] sm:$0xff]
        %v7114 = vld [vmem:[#allocation12 + $0xb8] sm:$0xff]
        %v7115 = vld [vmem:[#allocation12 + $0xc0] sm:$0xff]
        %v7116 = vld [vmem:[#allocation12 + $0xc8] sm:$0xff]
        %v7117 = vld [vmem:[#allocation12 + $0xd0] sm:$0xff]
        %v7118 = vld [vmem:[#allocation12 + $0xd8] sm:$0xff]
        %v7119 = vld [vmem:[#allocation12 + $0xe0] sm:$0xff]
        %v7120 = vld [vmem:[#allocation12 + $0xe8] sm:$0xff]
        %v7121 = vld [vmem:[#allocation12 + $0xf0] sm:$0xff]
        %v7122 = vld [vmem:[#allocation12 + $0xf8] sm:$0xff]
        %v7123 = vld [vmem:[#allocation12 + $0x100] sm:$0xff]
        %v7124 = vld [vmem:[#allocation12 + $0x108] sm:$0xff]
        %v7125 = vld [vmem:[#allocation12 + $0x110] sm:$0xff]
        %v7126 = vld [vmem:[#allocation12 + $0x118] sm:$0xff]
        %v7127 = vld [vmem:[#allocation12 + $0x120] sm:$0xff]
        %v7128 = vld [vmem:[#allocation12 + $0x128] sm:$0xff]
        %v7129 = vld [vmem:[#allocation12 + $0x130] sm:$0xff]
        %v7130 = vld [vmem:[#allocation12 + $0x138] sm:$0xff]
        %v7131 = vld [vmem:[#allocation12 + $0x140] sm:$0xff]
        %v7132 = vld [vmem:[#allocation12 + $0x148] sm:$0xff]
        %v7133 = vld [vmem:[#allocation12 + $0x150] sm:$0xff]
        %v7134 = vld [vmem:[#allocation12 + $0x158] sm:$0xff]
        %v7135 = vld [vmem:[#allocation12 + $0x160] sm:$0xff]
        %v7136 = vld [vmem:[#allocation12 + $0x168] sm:$0xff]
        %v7137 = vld [vmem:[#allocation12 + $0x170] sm:$0xff]
        %v7138 = vld [vmem:[#allocation12 + $0x178] sm:$0xff]
        %v7139 = vld [vmem:[#allocation12 + $0x180] sm:$0xff]
        %v7140 = vld [vmem:[#allocation12 + $0x188] sm:$0xff]
        %v7141 = vld [vmem:[#allocation12 + $0x190] sm:$0xff]
        %v7142 = vld [vmem:[#allocation12 + $0x198] sm:$0xff]
        %v7143 = vld [vmem:[#allocation12 + $0x1a0] sm:$0xff]
        %v7144 = vld [vmem:[#allocation12 + $0x1a8] sm:$0xff]
        %v7145 = vld [vmem:[#allocation12 + $0x1b0] sm:$0xff]
        %v7146 = vld [vmem:[#allocation12 + $0x1b8] sm:$0xff]
        %v7147 = vld [vmem:[#allocation12 + $0x1c0] sm:$0xff]
        %v7148 = vld [vmem:[#allocation12 + $0x1c8] sm:$0xff]
        %v7149 = vld [vmem:[#allocation12 + $0x1d0] sm:$0xff]
        %v7150 = vld [vmem:[#allocation12 + $0x1d8] sm:$0xff]
        %v7151 = vld [vmem:[#allocation12 + $0x1e0] sm:$0xff]
        %v7152 = vld [vmem:[#allocation12 + $0x1e8] sm:$0xff]
        %v7153 = vld [vmem:[#allocation12 + $0x1f0] sm:$0xff]
        %v7154 = vld [vmem:[#allocation12 + $0x1f8] sm:$0xff]
        %v7155 = vld [vmem:[#allocation12 + $0x200] sm:$0xff]
        %v7156 = vld [vmem:[#allocation12 + $0x208] sm:$0xff]
        %v7157 = vld [vmem:[#allocation12 + $0x210] sm:$0xff]
        %v7158 = vld [vmem:[#allocation12 + $0x218] sm:$0xff]
        %v7159 = vld [vmem:[#allocation12 + $0x220] sm:$0xff]
        %v7160 = vld [vmem:[#allocation12 + $0x228] sm:$0xff]
        %v7161 = vld [vmem:[#allocation12 + $0x230] sm:$0xff]
        %v7162 = vld [vmem:[#allocation12 + $0x238] sm:$0xff]
        %v7163 = vld [vmem:[#allocation12 + $0x240] sm:$0xff]
        %v7164 = vld [vmem:[#allocation12 + $0x248] sm:$0xff]
        %v7165 = vld [vmem:[#allocation12 + $0x250] sm:$0xff]
        %v7166 = vld [vmem:[#allocation12 + $0x258] sm:$0xff]
        %v7167 = vld [vmem:[#allocation12 + $0x260] sm:$0xff]
        %v7168 = vld [vmem:[#allocation12 + $0x268] sm:$0xff]
        %v7169 = vld [vmem:[#allocation12 + $0x270] sm:$0xff]
        %v7170 = vld [vmem:[#allocation12 + $0x278] sm:$0xff]
        %v7171 = vld [vmem:[#allocation12 + $0x280] sm:$0xff]
        %v7172 = vld [vmem:[#allocation12 + $0x288] sm:$0xff]
        %v7173 = vld [vmem:[#allocation12 + $0x290] sm:$0xff]
        %v7174 = vld [vmem:[#allocation12 + $0x298] sm:$0xff]
        %v7175 = vld [vmem:[#allocation12 + $0x2a0] sm:$0xff]
        %v7176 = vld [vmem:[#allocation12 + $0x2a8] sm:$0xff]
        %v7177 = vld [vmem:[#allocation12 + $0x2b0] sm:$0xff]
        %v7178 = vld [vmem:[#allocation12 + $0x2b8] sm:$0xff]
        %v7179 = vld [vmem:[#allocation12 + $0x2c0] sm:$0xff]
        %v7180 = vld [vmem:[#allocation12 + $0x2c8] sm:$0xff]
        %v7181 = vld [vmem:[#allocation12 + $0x2d0] sm:$0xff]
        %v7182 = vld [vmem:[#allocation12 + $0x2d8] sm:$0xff]
        %v7183 = vld [vmem:[#allocation12 + $0x2e0] sm:$0xff]
        %v7184 = vld [vmem:[#allocation12 + $0x2e8] sm:$0xff]
        %v7185 = vld [vmem:[#allocation12 + $0x2f0] sm:$0xff]
        %v7186 = vld [vmem:[#allocation12 + $0x2f8] sm:$0xff]
        %v7187 = vld [vmem:[#allocation12 + $0x300] sm:$0xff]
        %v7188 = vld [vmem:[#allocation12 + $0x308] sm:$0xff]
        %v7189 = vld [vmem:[#allocation12 + $0x310] sm:$0xff]
        %v7190 = vld [vmem:[#allocation12 + $0x318] sm:$0xff]
        %v7191 = vld [vmem:[#allocation12 + $0x320] sm:$0xff]
        %v7192 = vld [vmem:[#allocation12 + $0x328] sm:$0xff]
        %v7193 = vld [vmem:[#allocation12 + $0x330] sm:$0xff]
        %v7194 = vld [vmem:[#allocation12 + $0x338] sm:$0xff]
        %v7195 = vld [vmem:[#allocation12 + $0x340] sm:$0xff]
        %v7196 = vld [vmem:[#allocation12 + $0x348] sm:$0xff]
        %v7197 = vld [vmem:[#allocation12 + $0x350] sm:$0xff]
        %v7198 = vld [vmem:[#allocation12 + $0x358] sm:$0xff]
        %v7199 = vld [vmem:[#allocation12 + $0x360] sm:$0xff]
        %v7200 = vld [vmem:[#allocation12 + $0x368] sm:$0xff]
        %v7201 = vld [vmem:[#allocation12 + $0x370] sm:$0xff]
        %v7202 = vld [vmem:[#allocation12 + $0x378] sm:$0xff]
        %v7203 = vld [vmem:[#allocation12 + $0x380] sm:$0xff]
        %v7204 = vld [vmem:[#allocation12 + $0x388] sm:$0xff]
        %v7205 = vld [vmem:[#allocation12 + $0x390] sm:$0xff]
        %v7206 = vld [vmem:[#allocation12 + $0x398] sm:$0xff]
        %v7207 = vld [vmem:[#allocation12 + $0x3a0] sm:$0xff]
        %v7208 = vld [vmem:[#allocation12 + $0x3a8] sm:$0xff]
        %v7209 = vld [vmem:[#allocation12 + $0x3b0] sm:$0xff]
        %v7210 = vld [vmem:[#allocation12 + $0x3b8] sm:$0xff]
        %v7211 = vld [vmem:[#allocation12 + $0x3c0] sm:$0xff]
        %v7212 = vld [vmem:[#allocation12 + $0x3c8] sm:$0xff]
        %v7213 = vld [vmem:[#allocation12 + $0x3d0] sm:$0xff]
        %v7214 = vld [vmem:[#allocation12 + $0x3d8] sm:$0xff]
        %v7215 = vld [vmem:[#allocation12 + $0x3e0] sm:$0xff]
        %v7216 = vld [vmem:[#allocation12 + $0x3e8] sm:$0xff]
        %v7217 = vld [vmem:[#allocation12 + $0x3f0] sm:$0xff]
        %v7218 = vld [vmem:[#allocation12 + $0x3f8] sm:$0xff]
        %v7219 = vld [vmem:[#allocation13] sm:$0x3]
        %v7348 = vunpack.c.l.b16 %v7091
        %v7349 = vunpack.c.h.b16 %v7091
        %v7350 = vunpack.c.l.b16 %v7092
        %v7351 = vunpack.c.h.b16 %v7092
        %v7352 = vunpack.c.l.b16 %v7093
        %v7353 = vunpack.c.h.b16 %v7093
        %v7354 = vunpack.c.l.b16 %v7094
        %v7355 = vunpack.c.h.b16 %v7094
        %v7356 = vunpack.c.l.b16 %v7095
        %v7357 = vunpack.c.h.b16 %v7095
        %v7358 = vunpack.c.l.b16 %v7096
        %v7359 = vunpack.c.h.b16 %v7096
        %v7360 = vunpack.c.l.b16 %v7097
        %v7361 = vunpack.c.h.b16 %v7097
        %v7362 = vunpack.c.l.b16 %v7098
        %v7363 = vunpack.c.h.b16 %v7098
        %v7364 = vunpack.c.l.b16 %v7099
        %v7365 = vunpack.c.h.b16 %v7099
        %v7366 = vunpack.c.l.b16 %v7100
        %v7367 = vunpack.c.h.b16 %v7100
        %v7368 = vunpack.c.l.b16 %v7101
        %v7369 = vunpack.c.h.b16 %v7101
        %v7370 = vunpack.c.l.b16 %v7102
        %v7371 = vunpack.c.h.b16 %v7102
        %v7372 = vunpack.c.l.b16 %v7103
        %v7373 = vunpack.c.h.b16 %v7103
        %v7374 = vunpack.c.l.b16 %v7104
        %v7375 = vunpack.c.h.b16 %v7104
        %v7376 = vunpack.c.l.b16 %v7105
        %v7377 = vunpack.c.h.b16 %v7105
        %v7378 = vunpack.c.l.b16 %v7106
        %v7379 = vunpack.c.h.b16 %v7106
        %v7380 = vunpack.c.l.b16 %v7107
        %v7381 = vunpack.c.h.b16 %v7107
        %v7382 = vunpack.c.l.b16 %v7108
        %v7383 = vunpack.c.h.b16 %v7108
        %v7384 = vunpack.c.l.b16 %v7109
        %v7385 = vunpack.c.h.b16 %v7109
        %v7386 = vunpack.c.l.b16 %v7110
        %v7387 = vunpack.c.h.b16 %v7110
        %v7388 = vunpack.c.l.b16 %v7111
        %v7389 = vunpack.c.h.b16 %v7111
        %v7390 = vunpack.c.l.b16 %v7112
        %v7391 = vunpack.c.h.b16 %v7112
        %v7392 = vunpack.c.l.b16 %v7113
        %v7393 = vunpack.c.h.b16 %v7113
        %v7394 = vunpack.c.l.b16 %v7114
        %v7395 = vunpack.c.h.b16 %v7114
        %v7396 = vunpack.c.l.b16 %v7115
        %v7397 = vunpack.c.h.b16 %v7115
        %v7398 = vunpack.c.l.b16 %v7116
        %v7399 = vunpack.c.h.b16 %v7116
        %v7400 = vunpack.c.l.b16 %v7117
        %v7401 = vunpack.c.h.b16 %v7117
        %v7402 = vunpack.c.l.b16 %v7118
        %v7403 = vunpack.c.h.b16 %v7118
        %v7404 = vunpack.c.l.b16 %v7119
        %v7405 = vunpack.c.h.b16 %v7119
        %v7406 = vunpack.c.l.b16 %v7120
        %v7407 = vunpack.c.h.b16 %v7120
        %v7408 = vunpack.c.l.b16 %v7121
        %v7409 = vunpack.c.h.b16 %v7121
        %v7410 = vunpack.c.l.b16 %v7122
        %v7411 = vunpack.c.h.b16 %v7122
        %v7412 = vunpack.c.l.b16 %v7123
        %v7413 = vunpack.c.h.b16 %v7123
        %v7414 = vunpack.c.l.b16 %v7124
        %v7415 = vunpack.c.h.b16 %v7124
        %v7416 = vunpack.c.l.b16 %v7125
        %v7417 = vunpack.c.h.b16 %v7125
        %v7418 = vunpack.c.l.b16 %v7126
        %v7419 = vunpack.c.h.b16 %v7126
        %v7420 = vunpack.c.l.b16 %v7127
        %v7421 = vunpack.c.h.b16 %v7127
        %v7422 = vunpack.c.l.b16 %v7128
        %v7423 = vunpack.c.h.b16 %v7128
        %v7424 = vunpack.c.l.b16 %v7129
        %v7425 = vunpack.c.h.b16 %v7129
        %v7426 = vunpack.c.l.b16 %v7130
        %v7427 = vunpack.c.h.b16 %v7130
        %v7428 = vunpack.c.l.b16 %v7131
        %v7429 = vunpack.c.h.b16 %v7131
        %v7430 = vunpack.c.l.b16 %v7132
        %v7431 = vunpack.c.h.b16 %v7132
        %v7432 = vunpack.c.l.b16 %v7133
        %v7433 = vunpack.c.h.b16 %v7133
        %v7434 = vunpack.c.l.b16 %v7134
        %v7435 = vunpack.c.h.b16 %v7134
        %v7436 = vunpack.c.l.b16 %v7135
        %v7437 = vunpack.c.h.b16 %v7135
        %v7438 = vunpack.c.l.b16 %v7136
        %v7439 = vunpack.c.h.b16 %v7136
        %v7440 = vunpack.c.l.b16 %v7137
        %v7441 = vunpack.c.h.b16 %v7137
        %v7442 = vunpack.c.l.b16 %v7138
        %v7443 = vunpack.c.h.b16 %v7138
        %v7444 = vunpack.c.l.b16 %v7139
        %v7445 = vunpack.c.h.b16 %v7139
        %v7446 = vunpack.c.l.b16 %v7140
        %v7447 = vunpack.c.h.b16 %v7140
        %v7448 = vunpack.c.l.b16 %v7141
        %v7449 = vunpack.c.h.b16 %v7141
        %v7450 = vunpack.c.l.b16 %v7142
        %v7451 = vunpack.c.h.b16 %v7142
        %v7452 = vunpack.c.l.b16 %v7143
        %v7453 = vunpack.c.h.b16 %v7143
        %v7454 = vunpack.c.l.b16 %v7144
        %v7455 = vunpack.c.h.b16 %v7144
        %v7456 = vunpack.c.l.b16 %v7145
        %v7457 = vunpack.c.h.b16 %v7145
        %v7458 = vunpack.c.l.b16 %v7146
        %v7459 = vunpack.c.h.b16 %v7146
        %v7460 = vunpack.c.l.b16 %v7147
        %v7461 = vunpack.c.h.b16 %v7147
        %v7462 = vunpack.c.l.b16 %v7148
        %v7463 = vunpack.c.h.b16 %v7148
        %v7464 = vunpack.c.l.b16 %v7149
        %v7465 = vunpack.c.h.b16 %v7149
        %v7466 = vunpack.c.l.b16 %v7150
        %v7467 = vunpack.c.h.b16 %v7150
        %v7468 = vunpack.c.l.b16 %v7151
        %v7469 = vunpack.c.h.b16 %v7151
        %v7470 = vunpack.c.l.b16 %v7152
        %v7471 = vunpack.c.h.b16 %v7152
        %v7472 = vunpack.c.l.b16 %v7153
        %v7473 = vunpack.c.h.b16 %v7153
        %v7474 = vunpack.c.l.b16 %v7154
        %v7475 = vunpack.c.h.b16 %v7154
        %v7476 = vunpack.c.l.b16 %v7155
        %v7477 = vunpack.c.h.b16 %v7155
        %v7478 = vunpack.c.l.b16 %v7156
        %v7479 = vunpack.c.h.b16 %v7156
        %v7480 = vunpack.c.l.b16 %v7157
        %v7481 = vunpack.c.h.b16 %v7157
        %v7482 = vunpack.c.l.b16 %v7158
        %v7483 = vunpack.c.h.b16 %v7158
        %v7484 = vunpack.c.l.b16 %v7159
        %v7485 = vunpack.c.h.b16 %v7159
        %v7486 = vunpack.c.l.b16 %v7160
        %v7487 = vunpack.c.h.b16 %v7160
        %v7488 = vunpack.c.l.b16 %v7161
        %v7489 = vunpack.c.h.b16 %v7161
        %v7490 = vunpack.c.l.b16 %v7162
        %v7491 = vunpack.c.h.b16 %v7162
        %v7492 = vunpack.c.l.b16 %v7163
        %v7493 = vunpack.c.h.b16 %v7163
        %v7494 = vunpack.c.l.b16 %v7164
        %v7495 = vunpack.c.h.b16 %v7164
        %v7496 = vunpack.c.l.b16 %v7165
        %v7497 = vunpack.c.h.b16 %v7165
        %v7498 = vunpack.c.l.b16 %v7166
        %v7499 = vunpack.c.h.b16 %v7166
        %v7500 = vunpack.c.l.b16 %v7167
        %v7501 = vunpack.c.h.b16 %v7167
        %v7502 = vunpack.c.l.b16 %v7168
        %v7503 = vunpack.c.h.b16 %v7168
        %v7504 = vunpack.c.l.b16 %v7169
        %v7505 = vunpack.c.h.b16 %v7169
        %v7506 = vunpack.c.l.b16 %v7170
        %v7507 = vunpack.c.h.b16 %v7170
        %v7508 = vunpack.c.l.b16 %v7171
        %v7509 = vunpack.c.h.b16 %v7171
        %v7510 = vunpack.c.l.b16 %v7172
        %v7511 = vunpack.c.h.b16 %v7172
        %v7512 = vunpack.c.l.b16 %v7173
        %v7513 = vunpack.c.h.b16 %v7173
        %v7514 = vunpack.c.l.b16 %v7174
        %v7515 = vunpack.c.h.b16 %v7174
        %v7516 = vunpack.c.l.b16 %v7175
        %v7517 = vunpack.c.h.b16 %v7175
        %v7518 = vunpack.c.l.b16 %v7176
        %v7519 = vunpack.c.h.b16 %v7176
        %v7520 = vunpack.c.l.b16 %v7177
        %v7521 = vunpack.c.h.b16 %v7177
        %v7522 = vunpack.c.l.b16 %v7178
        %v7523 = vunpack.c.h.b16 %v7178
        %v7524 = vunpack.c.l.b16 %v7179
        %v7525 = vunpack.c.h.b16 %v7179
        %v7526 = vunpack.c.l.b16 %v7180
        %v7527 = vunpack.c.h.b16 %v7180
        %v7528 = vunpack.c.l.b16 %v7181
        %v7529 = vunpack.c.h.b16 %v7181
        %v7530 = vunpack.c.l.b16 %v7182
        %v7531 = vunpack.c.h.b16 %v7182
        %v7532 = vunpack.c.l.b16 %v7183
        %v7533 = vunpack.c.h.b16 %v7183
        %v7534 = vunpack.c.l.b16 %v7184
        %v7535 = vunpack.c.h.b16 %v7184
        %v7536 = vunpack.c.l.b16 %v7185
        %v7537 = vunpack.c.h.b16 %v7185
        %v7538 = vunpack.c.l.b16 %v7186
        %v7539 = vunpack.c.h.b16 %v7186
        %v7540 = vunpack.c.l.b16 %v7187
        %v7541 = vunpack.c.h.b16 %v7187
        %v7542 = vunpack.c.l.b16 %v7188
        %v7543 = vunpack.c.h.b16 %v7188
        %v7544 = vunpack.c.l.b16 %v7189
        %v7545 = vunpack.c.h.b16 %v7189
        %v7546 = vunpack.c.l.b16 %v7190
        %v7547 = vunpack.c.h.b16 %v7190
        %v7548 = vunpack.c.l.b16 %v7191
        %v7549 = vunpack.c.h.b16 %v7191
        %v7550 = vunpack.c.l.b16 %v7192
        %v7551 = vunpack.c.h.b16 %v7192
        %v7552 = vunpack.c.l.b16 %v7193
        %v7553 = vunpack.c.h.b16 %v7193
        %v7554 = vunpack.c.l.b16 %v7194
        %v7555 = vunpack.c.h.b16 %v7194
        %v7556 = vunpack.c.l.b16 %v7195
        %v7557 = vunpack.c.h.b16 %v7195
        %v7558 = vunpack.c.l.b16 %v7196
        %v7559 = vunpack.c.h.b16 %v7196
        %v7560 = vunpack.c.l.b16 %v7197
        %v7561 = vunpack.c.h.b16 %v7197
        %v7562 = vunpack.c.l.b16 %v7198
        %v7563 = vunpack.c.h.b16 %v7198
        %v7564 = vunpack.c.l.b16 %v7199
        %v7565 = vunpack.c.h.b16 %v7199
        %v7566 = vunpack.c.l.b16 %v7200
        %v7567 = vunpack.c.h.b16 %v7200
        %v7568 = vunpack.c.l.b16 %v7201
        %v7569 = vunpack.c.h.b16 %v7201
        %v7570 = vunpack.c.l.b16 %v7202
        %v7571 = vunpack.c.h.b16 %v7202
        %v7572 = vunpack.c.l.b16 %v7203
        %v7573 = vunpack.c.h.b16 %v7203
        %v7574 = vunpack.c.l.b16 %v7204
        %v7575 = vunpack.c.h.b16 %v7204
        %v7576 = vunpack.c.l.b16 %v7205
        %v7577 = vunpack.c.h.b16 %v7205
        %v7578 = vunpack.c.l.b16 %v7206
        %v7579 = vunpack.c.h.b16 %v7206
        %v7580 = vunpack.c.l.b16 %v7207
        %v7581 = vunpack.c.h.b16 %v7207
        %v7582 = vunpack.c.l.b16 %v7208
        %v7583 = vunpack.c.h.b16 %v7208
        %v7584 = vunpack.c.l.b16 %v7209
        %v7585 = vunpack.c.h.b16 %v7209
        %v7586 = vunpack.c.l.b16 %v7210
        %v7587 = vunpack.c.h.b16 %v7210
        %v7588 = vunpack.c.l.b16 %v7211
        %v7589 = vunpack.c.h.b16 %v7211
        %v7590 = vunpack.c.l.b16 %v7212
        %v7591 = vunpack.c.h.b16 %v7212
        %v7592 = vunpack.c.l.b16 %v7213
        %v7593 = vunpack.c.h.b16 %v7213
        %v7594 = vunpack.c.l.b16 %v7214
        %v7595 = vunpack.c.h.b16 %v7214
        %v7596 = vunpack.c.l.b16 %v7215
        %v7597 = vunpack.c.h.b16 %v7215
        %v7598 = vunpack.c.l.b16 %v7216
        %v7599 = vunpack.c.h.b16 %v7216
        %v7600 = vunpack.c.l.b16 %v7217
        %v7601 = vunpack.c.h.b16 %v7217
        %v7602 = vunpack.c.l.b16 %v7218
        %v7603 = vunpack.c.h.b16 %v7218
        %v7604 = vpack.c.b16 %v7350, %v7348
        %v7605 = vpack.c.b16 %v7351, %v7349
        %v7606 = vpack.c.b16 %v7354, %v7352
        %v7607 = vpack.c.b16 %v7355, %v7353
        %v7608 = vpack.c.b16 %v7358, %v7356
        %v7609 = vpack.c.b16 %v7359, %v7357
        %v7610 = vpack.c.b16 %v7362, %v7360
        %v7611 = vpack.c.b16 %v7363, %v7361
        %v7612 = vpack.c.b16 %v7366, %v7364
        %v7613 = vpack.c.b16 %v7367, %v7365
        %v7614 = vpack.c.b16 %v7370, %v7368
        %v7615 = vpack.c.b16 %v7371, %v7369
        %v7616 = vpack.c.b16 %v7374, %v7372
        %v7617 = vpack.c.b16 %v7375, %v7373
        %v7618 = vpack.c.b16 %v7378, %v7376
        %v7619 = vpack.c.b16 %v7379, %v7377
        %v7620 = vpack.c.b16 %v7382, %v7380
        %v7621 = vpack.c.b16 %v7383, %v7381
        %v7622 = vpack.c.b16 %v7386, %v7384
        %v7623 = vpack.c.b16 %v7387, %v7385
        %v7624 = vpack.c.b16 %v7390, %v7388
        %v7625 = vpack.c.b16 %v7391, %v7389
        %v7626 = vpack.c.b16 %v7394, %v7392
        %v7627 = vpack.c.b16 %v7395, %v7393
        %v7628 = vpack.c.b16 %v7398, %v7396
        %v7629 = vpack.c.b16 %v7399, %v7397
        %v7630 = vpack.c.b16 %v7402, %v7400
        %v7631 = vpack.c.b16 %v7403, %v7401
        %v7632 = vpack.c.b16 %v7406, %v7404
        %v7633 = vpack.c.b16 %v7407, %v7405
        %v7634 = vpack.c.b16 %v7410, %v7408
        %v7635 = vpack.c.b16 %v7411, %v7409
        %v7636 = vpack.c.b16 %v7414, %v7412
        %v7637 = vpack.c.b16 %v7415, %v7413
        %v7638 = vpack.c.b16 %v7418, %v7416
        %v7639 = vpack.c.b16 %v7419, %v7417
        %v7640 = vpack.c.b16 %v7422, %v7420
        %v7641 = vpack.c.b16 %v7423, %v7421
        %v7642 = vpack.c.b16 %v7426, %v7424
        %v7643 = vpack.c.b16 %v7427, %v7425
        %v7644 = vpack.c.b16 %v7430, %v7428
        %v7645 = vpack.c.b16 %v7431, %v7429
        %v7646 = vpack.c.b16 %v7434, %v7432
        %v7647 = vpack.c.b16 %v7435, %v7433
        %v7648 = vpack.c.b16 %v7438, %v7436
        %v7649 = vpack.c.b16 %v7439, %v7437
        %v7650 = vpack.c.b16 %v7442, %v7440
        %v7651 = vpack.c.b16 %v7443, %v7441
        %v7652 = vpack.c.b16 %v7446, %v7444
        %v7653 = vpack.c.b16 %v7447, %v7445
        %v7654 = vpack.c.b16 %v7450, %v7448
        %v7655 = vpack.c.b16 %v7451, %v7449
        %v7656 = vpack.c.b16 %v7454, %v7452
        %v7657 = vpack.c.b16 %v7455, %v7453
        %v7658 = vpack.c.b16 %v7458, %v7456
        %v7659 = vpack.c.b16 %v7459, %v7457
        %v7660 = vpack.c.b16 %v7462, %v7460
        %v7661 = vpack.c.b16 %v7463, %v7461
        %v7662 = vpack.c.b16 %v7466, %v7464
        %v7663 = vpack.c.b16 %v7467, %v7465
        %v7664 = vpack.c.b16 %v7470, %v7468
        %v7665 = vpack.c.b16 %v7471, %v7469
        %v7666 = vpack.c.b16 %v7474, %v7472
        %v7667 = vpack.c.b16 %v7475, %v7473
        %v7668 = vpack.c.b16 %v7478, %v7476
        %v7669 = vpack.c.b16 %v7479, %v7477
        %v7670 = vpack.c.b16 %v7482, %v7480
        %v7671 = vpack.c.b16 %v7483, %v7481
        %v7672 = vpack.c.b16 %v7486, %v7484
        %v7673 = vpack.c.b16 %v7487, %v7485
        %v7674 = vpack.c.b16 %v7490, %v7488
        %v7675 = vpack.c.b16 %v7491, %v7489
        %v7676 = vpack.c.b16 %v7494, %v7492
        %v7677 = vpack.c.b16 %v7495, %v7493
        %v7678 = vpack.c.b16 %v7498, %v7496
        %v7679 = vpack.c.b16 %v7499, %v7497
        %v7680 = vpack.c.b16 %v7502, %v7500
        %v7681 = vpack.c.b16 %v7503, %v7501
        %v7682 = vpack.c.b16 %v7506, %v7504
        %v7683 = vpack.c.b16 %v7507, %v7505
        %v7684 = vpack.c.b16 %v7510, %v7508
        %v7685 = vpack.c.b16 %v7511, %v7509
        %v7686 = vpack.c.b16 %v7514, %v7512
        %v7687 = vpack.c.b16 %v7515, %v7513
        %v7688 = vpack.c.b16 %v7518, %v7516
        %v7689 = vpack.c.b16 %v7519, %v7517
        %v7690 = vpack.c.b16 %v7522, %v7520
        %v7691 = vpack.c.b16 %v7523, %v7521
        %v7692 = vpack.c.b16 %v7526, %v7524
        %v7693 = vpack.c.b16 %v7527, %v7525
        %v7694 = vpack.c.b16 %v7530, %v7528
        %v7695 = vpack.c.b16 %v7531, %v7529
        %v7696 = vpack.c.b16 %v7534, %v7532
        %v7697 = vpack.c.b16 %v7535, %v7533
        %v7698 = vpack.c.b16 %v7538, %v7536
        %v7699 = vpack.c.b16 %v7539, %v7537
        %v7700 = vpack.c.b16 %v7542, %v7540
        %v7701 = vpack.c.b16 %v7543, %v7541
        %v7702 = vpack.c.b16 %v7546, %v7544
        %v7703 = vpack.c.b16 %v7547, %v7545
        %v7704 = vpack.c.b16 %v7550, %v7548
        %v7705 = vpack.c.b16 %v7551, %v7549
        %v7706 = vpack.c.b16 %v7554, %v7552
        %v7707 = vpack.c.b16 %v7555, %v7553
        %v7708 = vpack.c.b16 %v7558, %v7556
        %v7709 = vpack.c.b16 %v7559, %v7557
        %v7710 = vpack.c.b16 %v7562, %v7560
        %v7711 = vpack.c.b16 %v7563, %v7561
        %v7712 = vpack.c.b16 %v7566, %v7564
        %v7713 = vpack.c.b16 %v7567, %v7565
        %v7714 = vpack.c.b16 %v7570, %v7568
        %v7715 = vpack.c.b16 %v7571, %v7569
        %v7716 = vpack.c.b16 %v7574, %v7572
        %v7717 = vpack.c.b16 %v7575, %v7573
        %v7718 = vpack.c.b16 %v7578, %v7576
        %v7719 = vpack.c.b16 %v7579, %v7577
        %v7720 = vpack.c.b16 %v7582, %v7580
        %v7721 = vpack.c.b16 %v7583, %v7581
        %v7722 = vpack.c.b16 %v7586, %v7584
        %v7723 = vpack.c.b16 %v7587, %v7585
        %v7724 = vpack.c.b16 %v7590, %v7588
        %v7725 = vpack.c.b16 %v7591, %v7589
        %v7726 = vpack.c.b16 %v7594, %v7592
        %v7727 = vpack.c.b16 %v7595, %v7593
        %v7728 = vpack.c.b16 %v7598, %v7596
        %v7729 = vpack.c.b16 %v7599, %v7597
        %v7730 = vpack.c.b16 %v7602, %v7600
        %v7731 = vpack.c.b16 %v7603, %v7601
        %v7861 = vlaneseq
        %v7862 = vshrl.u32 %v7861, 7
        %v7863 = vsub.s32 0, %v7862
        %v7864 = vrot.slane %v7219, %v7863
        %v7865 = vlaneseq
        %v7866 = vshrl.u32 %v7865, 7
        %v7867 = vsub.s32 1, %v7866
        %v7868 = vrot.slane %v7219, %v7867
        %7871 = vmatprep.subr.bf16.mxu0 %v7619
        %7872 = vmatpush1.bf16.msra.mxu0 %v7618
        %7873 = vmatprep.subr.bf16.mxu0 %v7617
        %7874 = vmatpush1.bf16.msra.mxu0 %v7616
        %7875 = vmatprep.subr.bf16.mxu0 %v7615
        %7876 = vmatpush1.bf16.msra.mxu0 %v7614
        %7877 = vmatprep.subr.bf16.mxu0 %v7613
        %7878 = vmatpush1.bf16.msra.mxu0 %v7612
        %7879 = vmatprep.subr.bf16.mxu0 %v7611
        %7880 = vmatpush1.bf16.msra.mxu0 %v7610
        %7881 = vmatprep.subr.bf16.mxu0 %v7609
        %7882 = vmatpush1.bf16.msra.mxu0 %v7608
        %7883 = vmatprep.subr.bf16.mxu0 %v7607
        %7884 = vmatpush1.bf16.msra.mxu0 %v7606
        %7885 = vmatprep.subr.bf16.mxu0 %v7605
        %7886 = vmatpush1.bf16.msra.mxu0 %v7604
        %7887 = vmatprep.subr.bf16.mxu0 %v7635
        %7888 = vmatpush2.bf16.msra.mxu0 %v7634
        %7889 = vmatprep.subr.bf16.mxu0 %v7633
        %7890 = vmatpush2.bf16.msra.mxu0 %v7632
        %7891 = vmatprep.subr.bf16.mxu0 %v7631
        %7892 = vmatpush2.bf16.msra.mxu0 %v7630
        %7893 = vmatprep.subr.bf16.mxu0 %v7629
        %7894 = vmatpush2.bf16.msra.mxu0 %v7628
        %7895 = vmatprep.subr.bf16.mxu0 %v7627
        %7896 = vmatpush2.bf16.msra.mxu0 %v7626
        %7897 = vmatprep.subr.bf16.mxu0 %v7625
        %7898 = vmatpush2.bf16.msra.mxu0 %v7624
        %7899 = vmatprep.subr.bf16.mxu0 %v7623
        %7900 = vmatpush2.bf16.msra.mxu0 %v7622
        %7901 = vmatprep.subr.bf16.mxu0 %v7621
        %7902 = vmatpush2.bf16.msra.mxu0 %v7620
        %7903 = vmatprep.mubr.bf16.mxu0 %v7084
        %7904 = vmatmul.mubr.bf16.gmra.mxu0 %v7083
        %v7905 = vpop.f32.mrf.mxu0
        %v7906 = vadd.f32 %v7864, %v7905
        %v7907 = vpop.f32.mrf.mxu0
        %v7908 = vadd.f32 %v7868, %v7907
        %v7909 = vpop.f32.mrf.mxu0
        %v7910 = vpop.f32.mrf.mxu0
        %7911 = vdwg.mxu0
        %7912 = vmatprep.subr.bf16.mxu0 %v7651
        %7913 = vmatpush1.bf16.msra.mxu0 %v7650
        %7914 = vmatprep.subr.bf16.mxu0 %v7649
        %7915 = vmatpush1.bf16.msra.mxu0 %v7648
        %7916 = vmatprep.subr.bf16.mxu0 %v7647
        %7917 = vmatpush1.bf16.msra.mxu0 %v7646
        %7918 = vmatprep.subr.bf16.mxu0 %v7645
        %7919 = vmatpush1.bf16.msra.mxu0 %v7644
        %7920 = vmatprep.subr.bf16.mxu0 %v7643
        %7921 = vmatpush1.bf16.msra.mxu0 %v7642
        %7922 = vmatprep.subr.bf16.mxu0 %v7641
        %7923 = vmatpush1.bf16.msra.mxu0 %v7640
        %7924 = vmatprep.subr.bf16.mxu0 %v7639
        %7925 = vmatpush1.bf16.msra.mxu0 %v7638
        %7926 = vmatprep.subr.bf16.mxu0 %v7637
        %7927 = vmatpush1.bf16.msra.mxu0 %v7636
        %7928 = vmatprep.subr.bf16.mxu0 %v7667
        %7929 = vmatpush2.bf16.msra.mxu0 %v7666
        %7930 = vmatprep.subr.bf16.mxu0 %v7665
        %7931 = vmatpush2.bf16.msra.mxu0 %v7664
        %7932 = vmatprep.subr.bf16.mxu0 %v7663
        %7933 = vmatpush2.bf16.msra.mxu0 %v7662
        %7934 = vmatprep.subr.bf16.mxu0 %v7661
        %7935 = vmatpush2.bf16.msra.mxu0 %v7660
        %7936 = vmatprep.subr.bf16.mxu0 %v7659
        %7937 = vmatpush2.bf16.msra.mxu0 %v7658
        %7938 = vmatprep.subr.bf16.mxu0 %v7657
        %7939 = vmatpush2.bf16.msra.mxu0 %v7656
        %7940 = vmatprep.subr.bf16.mxu0 %v7655
        %7941 = vmatpush2.bf16.msra.mxu0 %v7654
        %7942 = vmatprep.subr.bf16.mxu0 %v7653
        %7943 = vmatpush2.bf16.msra.mxu0 %v7652
        %7944 = vmatprep.mubr.bf16.mxu0 %v7086
        %7945 = vmatmul.mubr.bf16.gmra.mxu0 %v7085
        %v7946 = vpop.f32.mrf.mxu0
        %v7947 = vadd.f32 %v7906, %v7946
        %v7948 = vpop.f32.mrf.mxu0
        %v7949 = vadd.f32 %v7908, %v7948
        %v7950 = vpop.f32.mrf.mxu0
        %v7951 = vpop.f32.mrf.mxu0
        %7952 = vdwg.mxu0
        %7953 = vmatprep.subr.bf16.mxu0 %v7683
        %7954 = vmatpush1.bf16.msra.mxu0 %v7682
        %7955 = vmatprep.subr.bf16.mxu0 %v7681
        %7956 = vmatpush1.bf16.msra.mxu0 %v7680
        %7957 = vmatprep.subr.bf16.mxu0 %v7679
        %7958 = vmatpush1.bf16.msra.mxu0 %v7678
        %7959 = vmatprep.subr.bf16.mxu0 %v7677
        %7960 = vmatpush1.bf16.msra.mxu0 %v7676
        %7961 = vmatprep.subr.bf16.mxu0 %v7675
        %7962 = vmatpush1.bf16.msra.mxu0 %v7674
        %7963 = vmatprep.subr.bf16.mxu0 %v7673
        %7964 = vmatpush1.bf16.msra.mxu0 %v7672
        %7965 = vmatprep.subr.bf16.mxu0 %v7671
        %7966 = vmatpush1.bf16.msra.mxu0 %v7670
        %7967 = vmatprep.subr.bf16.mxu0 %v7669
        %7968 = vmatpush1.bf16.msra.mxu0 %v7668
        %7969 = vmatprep.subr.bf16.mxu0 %v7699
        %7970 = vmatpush2.bf16.msra.mxu0 %v7698
        %7971 = vmatprep.subr.bf16.mxu0 %v7697
        %7972 = vmatpush2.bf16.msra.mxu0 %v7696
        %7973 = vmatprep.subr.bf16.mxu0 %v7695
        %7974 = vmatpush2.bf16.msra.mxu0 %v7694
        %7975 = vmatprep.subr.bf16.mxu0 %v7693
        %7976 = vmatpush2.bf16.msra.mxu0 %v7692
        %7977 = vmatprep.subr.bf16.mxu0 %v7691
        %7978 = vmatpush2.bf16.msra.mxu0 %v7690
        %7979 = vmatprep.subr.bf16.mxu0 %v7689
        %7980 = vmatpush2.bf16.msra.mxu0 %v7688
        %7981 = vmatprep.subr.bf16.mxu0 %v7687
        %7982 = vmatpush2.bf16.msra.mxu0 %v7686
        %7983 = vmatprep.subr.bf16.mxu0 %v7685
        %7984 = vmatpush2.bf16.msra.mxu0 %v7684
        %7985 = vmatprep.mubr.bf16.mxu0 %v7088
        %7986 = vmatmul.mubr.bf16.gmra.mxu0 %v7087
        %v7987 = vpop.f32.mrf.mxu0
        %v7988 = vadd.f32 %v7947, %v7987
        %v7989 = vpop.f32.mrf.mxu0
        %v7990 = vadd.f32 %v7949, %v7989
        %v7991 = vpop.f32.mrf.mxu0
        %v7992 = vpop.f32.mrf.mxu0
        %7993 = vdwg.mxu0
        %7994 = vmatprep.subr.bf16.mxu0 %v7715
        %7995 = vmatpush1.bf16.msra.mxu0 %v7714
        %7996 = vmatprep.subr.bf16.mxu0 %v7713
        %7997 = vmatpush1.bf16.msra.mxu0 %v7712
        %7998 = vmatprep.subr.bf16.mxu0 %v7711
        %7999 = vmatpush1.bf16.msra.mxu0 %v7710
        %8000 = vmatprep.subr.bf16.mxu0 %v7709
        %8001 = vmatpush1.bf16.msra.mxu0 %v7708
        %8002 = vmatprep.subr.bf16.mxu0 %v7707
        %8003 = vmatpush1.bf16.msra.mxu0 %v7706
        %8004 = vmatprep.subr.bf16.mxu0 %v7705
        %8005 = vmatpush1.bf16.msra.mxu0 %v7704
        %8006 = vmatprep.subr.bf16.mxu0 %v7703
        %8007 = vmatpush1.bf16.msra.mxu0 %v7702
        %8008 = vmatprep.subr.bf16.mxu0 %v7701
        %8009 = vmatpush1.bf16.msra.mxu0 %v7700
        %8010 = vmatprep.subr.bf16.mxu0 %v7731
        %8011 = vmatpush2.bf16.msra.mxu0 %v7730
        %8012 = vmatprep.subr.bf16.mxu0 %v7729
        %8013 = vmatpush2.bf16.msra.mxu0 %v7728
        %8014 = vmatprep.subr.bf16.mxu0 %v7727
        %8015 = vmatpush2.bf16.msra.mxu0 %v7726
        %8016 = vmatprep.subr.bf16.mxu0 %v7725
        %8017 = vmatpush2.bf16.msra.mxu0 %v7724
        %8018 = vmatprep.subr.bf16.mxu0 %v7723
        %8019 = vmatpush2.bf16.msra.mxu0 %v7722
        %8020 = vmatprep.subr.bf16.mxu0 %v7721
        %8021 = vmatpush2.bf16.msra.mxu0 %v7720
        %8022 = vmatprep.subr.bf16.mxu0 %v7719
        %8023 = vmatpush2.bf16.msra.mxu0 %v7718
        %8024 = vmatprep.subr.bf16.mxu0 %v7717
        %8025 = vmatpush2.bf16.msra.mxu0 %v7716
        %8026 = vmatprep.mubr.bf16.mxu0 %v7090
        %8027 = vmatmul.mubr.bf16.gmra.mxu0 %v7089
        %v8028 = vpop.f32.mrf.mxu0
        %v8029 = vadd.f32 %v7988, %v8028
        %v8030 = vpop.f32.mrf.mxu0
        %v8031 = vadd.f32 %v7990, %v8030
        %v8032 = vpop.f32.mrf.mxu0
        %v8033 = vpop.f32.mrf.mxu0
        %8034 = vdwg.mxu0
        %v8035 = vmax.f32 %v8029, 0.0
        %v8036 = vmax.f32 %v8031, 0.0
        %v8037 = vpack.c.bf16 %v8035, %v8035
        %v8038 = vpack.c.bf16 %v8036, %v8036
        %v8039 = vld [vmem:[#allocation15] sm:$0xf]
        %v8040 = vld [vmem:[#allocation15 + $0x4] sm:$0xf]
        %v8041 = vld [vmem:[#allocation15 + $0x8] sm:$0xf]
        %v8042 = vld [vmem:[#allocation15 + $0xc] sm:$0xf]
        %v8043 = vld [vmem:[#allocation15 + $0x10] sm:$0xf]
        %v8044 = vld [vmem:[#allocation15 + $0x14] sm:$0xf]
        %v8045 = vld [vmem:[#allocation15 + $0x18] sm:$0xf]
        %v8046 = vld [vmem:[#allocation15 + $0x1c] sm:$0xf]
        %v8047 = vld [vmem:[#allocation15 + $0x20] sm:$0xf]
        %v8048 = vld [vmem:[#allocation15 + $0x24] sm:$0xf]
        %v8049 = vld [vmem:[#allocation15 + $0x28] sm:$0xf]
        %v8050 = vld [vmem:[#allocation15 + $0x2c] sm:$0xf]
        %v8051 = vld [vmem:[#allocation15 + $0x30] sm:$0xf]
        %v8052 = vld [vmem:[#allocation15 + $0x34] sm:$0xf]
        %v8053 = vld [vmem:[#allocation15 + $0x38] sm:$0xf]
        %v8054 = vld [vmem:[#allocation15 + $0x3c] sm:$0xf]
        %v8055 = vld [vmem:[#allocation15 + $0x40] sm:$0xf]
        %v8056 = vld [vmem:[#allocation15 + $0x44] sm:$0xf]
        %v8057 = vld [vmem:[#allocation15 + $0x48] sm:$0xf]
        %v8058 = vld [vmem:[#allocation15 + $0x4c] sm:$0xf]
        %v8059 = vld [vmem:[#allocation15 + $0x50] sm:$0xf]
        %v8060 = vld [vmem:[#allocation15 + $0x54] sm:$0xf]
        %v8061 = vld [vmem:[#allocation15 + $0x58] sm:$0xf]
        %v8062 = vld [vmem:[#allocation15 + $0x5c] sm:$0xf]
        %v8063 = vld [vmem:[#allocation15 + $0x60] sm:$0xf]
        %v8064 = vld [vmem:[#allocation15 + $0x64] sm:$0xf]
        %v8065 = vld [vmem:[#allocation15 + $0x68] sm:$0xf]
        %v8066 = vld [vmem:[#allocation15 + $0x6c] sm:$0xf]
        %v8067 = vld [vmem:[#allocation15 + $0x70] sm:$0xf]
        %v8068 = vld [vmem:[#allocation15 + $0x74] sm:$0xf]
        %v8069 = vld [vmem:[#allocation15 + $0x78] sm:$0xf]
        %v8070 = vld [vmem:[#allocation15 + $0x7c] sm:$0xf]
        %v8071 = vld [vmem:[#allocation16] sm:$0x1]
        %v8104 = vunpack.c.l.b16 %v8039
        %v8105 = vunpack.c.l.b16 %v8040
        %v8106 = vunpack.c.l.b16 %v8041
        %v8107 = vunpack.c.l.b16 %v8042
        %v8108 = vunpack.c.l.b16 %v8043
        %v8109 = vunpack.c.l.b16 %v8044
        %v8110 = vunpack.c.l.b16 %v8045
        %v8111 = vunpack.c.l.b16 %v8046
        %v8112 = vunpack.c.l.b16 %v8047
        %v8113 = vunpack.c.l.b16 %v8048
        %v8114 = vunpack.c.l.b16 %v8049
        %v8115 = vunpack.c.l.b16 %v8050
        %v8116 = vunpack.c.l.b16 %v8051
        %v8117 = vunpack.c.l.b16 %v8052
        %v8118 = vunpack.c.l.b16 %v8053
        %v8119 = vunpack.c.l.b16 %v8054
        %v8120 = vunpack.c.l.b16 %v8055
        %v8121 = vunpack.c.l.b16 %v8056
        %v8122 = vunpack.c.l.b16 %v8057
        %v8123 = vunpack.c.l.b16 %v8058
        %v8124 = vunpack.c.l.b16 %v8059
        %v8125 = vunpack.c.l.b16 %v8060
        %v8126 = vunpack.c.l.b16 %v8061
        %v8127 = vunpack.c.l.b16 %v8062
        %v8128 = vunpack.c.l.b16 %v8063
        %v8129 = vunpack.c.l.b16 %v8064
        %v8130 = vunpack.c.l.b16 %v8065
        %v8131 = vunpack.c.l.b16 %v8066
        %v8132 = vunpack.c.l.b16 %v8067
        %v8133 = vunpack.c.l.b16 %v8068
        %v8134 = vunpack.c.l.b16 %v8069
        %v8135 = vunpack.c.l.b16 %v8070
        %v8136 = vpack.c.b16 %v8105, %v8104
        %v8137 = vpack.c.b16 %v8107, %v8106
        %v8138 = vpack.c.b16 %v8109, %v8108
        %v8139 = vpack.c.b16 %v8111, %v8110
        %v8140 = vpack.c.b16 %v8113, %v8112
        %v8141 = vpack.c.b16 %v8115, %v8114
        %v8142 = vpack.c.b16 %v8117, %v8116
        %v8143 = vpack.c.b16 %v8119, %v8118
        %v8144 = vpack.c.b16 %v8121, %v8120
        %v8145 = vpack.c.b16 %v8123, %v8122
        %v8146 = vpack.c.b16 %v8125, %v8124
        %v8147 = vpack.c.b16 %v8127, %v8126
        %v8148 = vpack.c.b16 %v8129, %v8128
        %v8149 = vpack.c.b16 %v8131, %v8130
        %v8150 = vpack.c.b16 %v8133, %v8132
        %v8151 = vpack.c.b16 %v8135, %v8134
        %8168 = vmatprep.subr.bf16.mxu0 0
        %8169 = vmatpush1.bf16.msra.mxu0 %v8143
        %8170 = vmatprep.subr.bf16.mxu0 0
        %8171 = vmatpush1.bf16.msra.mxu0 %v8142
        %8172 = vmatprep.subr.bf16.mxu0 0
        %8173 = vmatpush1.bf16.msra.mxu0 %v8141
        %8174 = vmatprep.subr.bf16.mxu0 0
        %8175 = vmatpush1.bf16.msra.mxu0 %v8140
        %8176 = vmatprep.subr.bf16.mxu0 0
        %8177 = vmatpush1.bf16.msra.mxu0 %v8139
        %8178 = vmatprep.subr.bf16.mxu0 0
        %8179 = vmatpush1.bf16.msra.mxu0 %v8138
        %8180 = vmatprep.subr.bf16.mxu0 0
        %8181 = vmatpush1.bf16.msra.mxu0 %v8137
        %8182 = vmatprep.subr.bf16.mxu0 0
        %8183 = vmatpush1.bf16.msra.mxu0 %v8136
        %8184 = vmatprep.subr.bf16.mxu0 0
        %8185 = vmatpush2.bf16.msra.mxu0 %v8151
        %8186 = vmatprep.subr.bf16.mxu0 0
        %8187 = vmatpush2.bf16.msra.mxu0 %v8150
        %8188 = vmatprep.subr.bf16.mxu0 0
        %8189 = vmatpush2.bf16.msra.mxu0 %v8149
        %8190 = vmatprep.subr.bf16.mxu0 0
        %8191 = vmatpush2.bf16.msra.mxu0 %v8148
        %8192 = vmatprep.subr.bf16.mxu0 0
        %8193 = vmatpush2.bf16.msra.mxu0 %v8147
        %8194 = vmatprep.subr.bf16.mxu0 0
        %8195 = vmatpush2.bf16.msra.mxu0 %v8146
        %8196 = vmatprep.subr.bf16.mxu0 0
        %8197 = vmatpush2.bf16.msra.mxu0 %v8145
        %8198 = vmatprep.subr.bf16.mxu0 0
        %8199 = vmatpush2.bf16.msra.mxu0 %v8144
        %8200 = vmatprep.mubr.bf16.mxu0 %v8038
        %8201 = vmatmul.mubr.bf16.gmra.mxu0 %v8037
        %v8202 = vpop.f32.mrf.mxu0
        %v8203 = vadd.f32 %v8071, %v8202
        %v8204 = vpop.f32.mrf.mxu0
        %v8205 = vpop.f32.mrf.mxu0
        %v8206 = vpop.f32.mrf.mxu0
        %8207 = vdwg.mxu0
        %8208 = vst [vmem:[%s545] sm:$0x1] %v8203
        %p8209 = scmp.lt.s32.totalorder %s29, 3
        %s8210 = scalar_select %p8209, %s29, 3
        %s8211 = scalar_lea.vmem %s12, %s8210
        // Predicated region
        $region109: #{siamese_forward.1} parent=67 // pred_check
          %p8212 = pneg %p304
        $region110: #{siamese_forward.1} parent=67 // pred_check_branch
          %8214 = sbr.rel (%p8212) target = $region112
        $region111: #{siamese_forward.1} parent=67 // pred_region
          _
        $region112: #{siamese_forward.1} parent=67 // pred_fallthru
          _
      $region68: #{siamese_forward.1} parent=5 // pred_fallthru
        _
      %p8215 = scmp.le.s32.totalorder 2, %s24
      // Predicated region
      $region113: #{siamese_forward.1} parent=5 // pred_check
        %p8216 = pneg %p8215
      $region114: #{siamese_forward.1} parent=5 // pred_check_branch
        %8218 = sbr.rel (%p8216) target = $region116
      $region115: #{siamese_forward.1} parent=5 // pred_region
        %s8219 = ssub.s32 %s24, 2
        // Predicated region
        $region117: #{siamese_forward.1} parent=115 // pred_check
          %p8220 = pneg %p310
        $region118: #{siamese_forward.1} parent=115 // pred_check_branch
          %8222 = sbr.rel (%p8220) target = $region120
        $region119: #{siamese_forward.1} parent=115 // pred_region
          %p8223 = scmp.lt.s32.totalorder %s30, 3
          %s8224 = scalar_select %p8223, %s30, 3
          %s8225 = scalar_lea.vmem %s12, %s8224
        $region120: #{siamese_forward.1} parent=115 // pred_fallthru
          _
      $region116: #{siamese_forward.1} parent=5 // pred_fallthru
        _
    $region6: #{siamese_forward.1} parent=1 // loop_footer
      %s28 = sadd.s32 1, %s24
    $region7: #{siamese_forward.1} parent=1 // loop_footer_branch
      %23 = sbr.rel target = $region3
    $region8: #{siamese_forward.1} parent=1 // loop_exit
      _
    %8226 = vsyncpa [#allocation3], 1
    %s8227 = scalar_lea.sflag [#allocation3], 1
    %8228 = vsyncpa %s8227, 1
    %8229 = vsyncpa [#allocation5], 1
    %8230 = vsyncpa [#allocation8], 1
    %8231 = vsyncpa [#allocation11], 1
    %8232 = vsyncpa [#allocation14], 1
    %8233 = vsyncpa [#allocation17], 1

</llo_original>
